<compile_context>
chip_gen: v5e
topology: v5e:2x2
jax: 0.10.0
libtpu: 0.0.40
codegen_flags: <defaults>
</compile_context>

<pallas_src>
import jax
import jax.numpy as jnp
import numpy as np
from jax.experimental import pallas as pl
from jax.experimental.pallas import tpu as pltpu


# ----------------------------- Pallas kernel --------------------------------

def _make_encoder_kernel(num_layers):
    """refs: [tok, emb, wih0_t, whh0_t, b0, (w_cat, b)*(L-1)] -> [out, h_n, c_n] + xw scratch."""

    def kernel(*refs):
        tok_ref, emb_ref, wih0_ref, whh0_ref, b0_ref = refs[:5]
        n_in = 5 + 2 * (num_layers - 1)
        upper_refs = refs[5:n_in]                      # per layer>=1: w_cat (2H,4H) bf16, bias (1,4H) f32
        out_ref, hN_ref, cN_ref, xw_sc = refs[n_in:]

        S, B, H = out_ref.shape
        SB, V = tok_ref.shape[0], emb_ref.shape[0]

        # ---- fused embedding gather: one-hot @ table on the MXU (exact for bf16 rows) ----
        tok = tok_ref[...]                                                  # (S*B, 1) int32, time-major rows
        onehot = jnp.where(
            jax.lax.broadcasted_iota(jnp.int32, (SB, V), 1) == tok, 1.0, 0.0
        ).astype(jnp.bfloat16)                                              # (S*B, V)
        x_bf = jnp.dot(onehot, emb_ref[...],
                       preferred_element_type=jnp.float32).astype(jnp.bfloat16)   # (S*B, E)

        # ---- hoisted layer-0 input projection: one (S*B,E)@(E,4H) MXU pass + bias ----
        xw_sc[...] = (jnp.dot(x_bf, wih0_ref[...], preferred_element_type=jnp.float32)
                      + b0_ref[...])                                        # (S*B, 4H) f32

        def gate_step(gates, c_prev):
            # gate column order is [i, f, o, g]
            ifo = jax.nn.sigmoid(gates[:, :3 * H])
            g = jnp.tanh(gates[:, 3 * H:])
            c_new = ifo[:, H:2 * H] * c_prev + ifo[:, :H] * g
            h_new = ifo[:, 2 * H:] * jnp.tanh(c_new)
            return h_new, c_new

        zeros = jnp.zeros((B, H), jnp.float32)
        states = [(zeros, zeros) for _ in range(num_layers)]   # (h, c) per layer, vreg-resident

        # ---- wavefront over time: iteration k runs layer l at step t = k - l ----
        # All reads come from the previous iteration's states, so the layer chains issued
        # within one iteration are mutually independent and their latencies overlap.
        for k in range(S + num_layers - 1):
            new_states = list(states)
            for l in range(num_layers):
                t = k - l
                if not (0 <= t < S):
                    continue
                h_prev, c_prev = states[l]
                if l == 0:
                    gates = (xw_sc[t * B:(t + 1) * B, :]
                             + jnp.dot(h_prev.astype(jnp.bfloat16), whh0_ref[...],
                                       preferred_element_type=jnp.float32))
                else:
                    w_ref = upper_refs[2 * (l - 1)]
                    b_ref = upper_refs[2 * (l - 1) + 1]
                    h_below = states[l - 1][0]                 # layer l-1 output at step t
                    x_in = jnp.concatenate(
                        [h_below.astype(jnp.bfloat16), h_prev.astype(jnp.bfloat16)], axis=-1)
                    # single fused (B,2H)@(2H,4H) matmul: input proj + hidden proj
                    gates = (jnp.dot(x_in, w_ref[...], preferred_element_type=jnp.float32)
                             + b_ref[...])
                h_new, c_new = gate_step(gates, c_prev)
                new_states[l] = (h_new, c_new)
                if l == num_layers - 1:
                    out_ref[t] = h_new                         # time-major f32 output
            states = new_states

        for l in range(num_layers):
            hN_ref[l] = states[l][0]
            cN_ref[l] = states[l][1]

    return kernel


def _encoder_lstm_pallas(tok_col, params, S, B):
    """tok_col: (S*B, 1) int32 time-major rows. Returns (out (S,B,H), h_n (L,B,H), c_n (L,B,H))."""
    emb = params["embedding_bf16"]
    layers = params["lstm_kernel"]
    L = len(layers)
    H = layers[0]["whh_t"].shape[0]

    flat_inputs = [tok_col, emb,
                   layers[0]["wih_t"], layers[0]["whh_t"], layers[0]["bias"]]
    for lyr in layers[1:]:
        flat_inputs += [lyr["w_cat"], lyr["bias"]]

    vmem = pltpu.MemorySpace.VMEM
    out_shape = (
        jax.ShapeDtypeStruct((S, B, H), jnp.float32),     # outputs (time-major)
        jax.ShapeDtypeStruct((L, B, H), jnp.float32),     # h_n
        jax.ShapeDtypeStruct((L, B, H), jnp.float32),     # c_n
    )
    return pl.pallas_call(
        _make_encoder_kernel(L),
        out_shape=out_shape,
        in_specs=[pl.BlockSpec(memory_space=vmem) for _ in flat_inputs],
        out_specs=tuple(pl.BlockSpec(memory_space=vmem) for _ in out_shape),
        scratch_shapes=[
            pltpu.VMEM((S * B, 4 * H), jnp.float32),      # hoisted x @ W_ih0 + b0 (flat, 8-row aligned)
        ],
    )(*flat_inputs)


# ----------------------------- params ---------------------------------------

def init_encoder_params(key, vocab_size, embedding_size, hidden_size, num_layers):
    """Raw parameters in torch.nn.LSTM layout, gate order [i, f, g, o]."""
    keys = jax.random.split(key, 1 + 4 * num_layers)
    k = 1.0 / np.sqrt(hidden_size)
    emb = jax.random.normal(keys[0], (vocab_size, embedding_size), jnp.float32)
    emb = emb.at[0].set(0.0)                              # padding_idx=0
    layers = []
    for l in range(num_layers):
        in_dim = embedding_size if l == 0 else hidden_size
        kw = keys[1 + 4 * l: 1 + 4 * (l + 1)]
        layers.append({
            "w_ih": jax.random.uniform(kw[0], (4 * hidden_size, in_dim), jnp.float32, -k, k),
            "w_hh": jax.random.uniform(kw[1], (4 * hidden_size, hidden_size), jnp.float32, -k, k),
            "b_ih": jax.random.uniform(kw[2], (4 * hidden_size,), jnp.float32, -k, k),
            "b_hh": jax.random.uniform(kw[3], (4 * hidden_size,), jnp.float32, -k, k),
        })
    return {"embedding": emb, "lstm": layers}


def _permute_gate_cols(a, H):
    # torch gate order [i, f, g, o] -> kernel order [i, f, o, g] along the last axis.
    return jnp.concatenate([a[..., :2 * H], a[..., 3 * H:], a[..., 2 * H:3 * H]], axis=-1)


def prepare_encoder_params(raw):
    """Torch layout -> kernel layout: transpose to (in,4H), permute gates, sum biases,
    bf16 weights/table; for layers>=1 concatenate [W_ih; W_hh] into one (2H,4H) matrix."""
    H = raw["lstm"][0]["w_hh"].shape[1]
    layers = []
    for l, lyr in enumerate(raw["lstm"]):
        wih_t = _permute_gate_cols(lyr["w_ih"].T, H)
        whh_t = _permute_gate_cols(lyr["w_hh"].T, H)
        bias = _permute_gate_cols((lyr["b_ih"] + lyr["b_hh"]).reshape(1, 4 * H), H).astype(jnp.float32)
        if l == 0:
            layers.append({"wih_t": wih_t.astype(jnp.bfloat16),
                           "whh_t": whh_t.astype(jnp.bfloat16),
                           "bias": bias})
        else:
            layers.append({"w_cat": jnp.concatenate([wih_t, whh_t], axis=0).astype(jnp.bfloat16),
                           "bias": bias})
    return {"embedding_bf16": raw["embedding"].astype(jnp.bfloat16), "lstm_kernel": layers}


# ----------------------------- forward ---------------------------------------

def encoder_forward(tokens, params):
    """tokens: (B, S) int32 -> (outputs (B,S,H), (h_n, c_n) each (L,B,H)). batch_first."""
    B, S = tokens.shape
    # Tiny (256 B) int32 transpose so the in-kernel gather produces time-major rows directly.
    tok_col = jnp.transpose(tokens).reshape(S * B, 1).astype(jnp.int32)
    out_sbH, h_n, c_n = _encoder_lstm_pallas(tok_col, params, S, B)
    outputs = jnp.transpose(out_sbH, (1, 0, 2))            # (B, S, H) batch_first view (32 KB)
    return outputs, (h_n, c_n)


# ----------------------------- pure-JAX reference ----------------------------
# Mirrors the kernel precision policy (bf16 matmul operands, f32 accum/gates/carries).

def _lstm_layer_ref(x_sbK, w_ih, w_hh, b_ih, b_hh):
    S, B, _ = x_sbK.shape
    H = w_hh.shape[1]
    wih_t = w_ih.T.astype(jnp.bfloat16)
    whh_t = w_hh.T.astype(jnp.bfloat16)
    bias = (b_ih + b_hh).astype(jnp.float32)

    def step(carry, x_t):
        h, c = carry
        gates = (jnp.dot(x_t, wih_t, preferred_element_type=jnp.float32)
                 + jnp.dot(h.astype(jnp.bfloat16), whh_t, preferred_element_type=jnp.float32)
                 + bias)
        i = jax.nn.sigmoid(gates[:, :H])
        f = jax.nn.sigmoid(gates[:, H:2 * H])
        g = jnp.tanh(gates[:, 2 * H:3 * H])
        o = jax.nn.sigmoid(gates[:, 3 * H:])
        c_new = f * c + i * g
        h_new = o * jnp.tanh(c_new)
        return (h_new, c_new), h_new

    init = (jnp.zeros((B, H), jnp.float32), jnp.zeros((B, H), jnp.float32))
    (h_n, c_n), outs = jax.lax.scan(step, init, x_sbK)
    return outs, h_n, c_n


def encoder_forward_ref(tokens, raw_params):
    x = jnp.take(raw_params["embedding"], tokens.T, axis=0).astype(jnp.bfloat16)   # (S,B,E)
    hs, cs = [], []
    outs = None
    for lyr in raw_params["lstm"]:
        outs, h_n, c_n = _lstm_layer_ref(x, lyr["w_ih"], lyr["w_hh"], lyr["b_ih"], lyr["b_hh"])
        x = outs.astype(jnp.bfloat16)
        hs.append(h_n)
        cs.append(c_n)
    return jnp.transpose(outs, (1, 0, 2)), (jnp.stack(hs), jnp.stack(cs))


# ----------------------------- main ------------------------------------------

if __name__ == "__main__":
    B, S, E, H, L, V = 8, 8, 128, 128, 2, 64

    key = jax.random.PRNGKey(0)
    k_params, k_tok = jax.random.split(key)
    raw = init_encoder_params(k_params, V, E, H, L)
    params = prepare_encoder_params(raw)

    tokens = jax.random.randint(k_tok, (B, S), 0, V, dtype=jnp.int32)   # id 0 = padding
    # TODO(synk): like plain torch.nn.LSTM (no pack_padded_sequence), padding steps still
    # update h/c; no length masking is applied.

    fwd = jax.jit(encoder_forward)
    outputs, (h_n, c_n) = fwd(tokens, params)
    jax.block_until_ready((outputs, h_n, c_n))

    # correctness check against the precision-matched pure-JAX reference
    ref_out, (ref_h, ref_c) = encoder_forward_ref(tokens, raw)
    assert outputs.shape == (B, S, H)
    assert h_n.shape == (L, B, H) and c_n.shape == (L, B, H)
    np.testing.assert_allclose(np.asarray(outputs), np.asarray(ref_out), rtol=5e-3, atol=5e-3)
    np.testing.assert_allclose(np.asarray(h_n), np.asarray(ref_h), rtol=5e-3, atol=5e-3)
    np.testing.assert_allclose(np.asarray(c_n), np.asarray(ref_c), rtol=5e-3, atol=5e-3)

    print("KERNEL_OK")
</pallas_src>

<mosaic_0001>
module attributes {stable_mosaic.version = 11 : i64} {
  func.func @kernel(%arg0: memref<64x1xi32, #tpu.memory_space<vmem>>, %arg1: memref<64x128xbf16, #tpu.memory_space<vmem>>, %arg2: memref<128x512xbf16, #tpu.memory_space<vmem>>, %arg3: memref<128x512xbf16, #tpu.memory_space<vmem>>, %arg4: memref<1x512xf32, #tpu.memory_space<vmem>>, %arg5: memref<256x512xbf16, #tpu.memory_space<vmem>>, %arg6: memref<1x512xf32, #tpu.memory_space<vmem>>, %arg7: memref<8x8x128xf32, #tpu.memory_space<vmem>>, %arg8: memref<2x8x128xf32, #tpu.memory_space<vmem>>, %arg9: memref<2x8x128xf32, #tpu.memory_space<vmem>>, %arg10: memref<64x512xf32, #tpu.memory_space<vmem>>) attributes {dimension_semantics = [], scalar_prefetch = 0 : i64, scratch_operands = 1 : i64, tpu.core_type = #tpu.core_type<tc>} {
    %c0 = arith.constant 0 : index
    %c0_0 = arith.constant 0 : index
    %0 = vector.load %arg0[%c0, %c0_0] : memref<64x1xi32, #tpu.memory_space<vmem>>, vector<64x1xi32>
    %1 = tpu.iota {dimensions = array<i32: 1>} : vector<64x64xi32>
    %2 = vector.broadcast %0 : vector<64x1xi32> to vector<64x64xi32>
    %3 = arith.cmpi eq, %1, %2 : vector<64x64xi32>
    %cst = arith.constant 1.000000e+00 : f32
    %cst_1 = arith.constant 0.000000e+00 : f32
    %4 = vector.broadcast %cst : f32 to vector<64x64xf32>
    %5 = vector.broadcast %cst_1 : f32 to vector<64x64xf32>
    %6 = arith.select %3, %4, %5 : vector<64x64xi1>, vector<64x64xf32>
    %7 = arith.truncf %6 : vector<64x64xf32> to vector<64x64xbf16>
    %c0_2 = arith.constant 0 : index
    %c0_3 = arith.constant 0 : index
    %8 = vector.load %arg1[%c0_2, %c0_3] : memref<64x128xbf16, #tpu.memory_space<vmem>>, vector<64x128xbf16>
    %cst_4 = arith.constant dense<0.000000e+00> : vector<64x128xf32>
    %9 = tpu.matmul %7, %8, %cst_4 {dimension_numbers = #tpu.dot_dimension_numbers<[1], [0], [0], [1], [0, 0, 1, 1], [], []>} : vector<64x64xbf16>, vector<64x128xbf16>, vector<64x128xf32> -> vector<64x128xf32>
    %10 = arith.truncf %9 : vector<64x128xf32> to vector<64x128xbf16>
    %c0_5 = arith.constant 0 : index
    %c0_6 = arith.constant 0 : index
    %11 = vector.load %arg2[%c0_5, %c0_6] : memref<128x512xbf16, #tpu.memory_space<vmem>>, vector<128x512xbf16>
    %cst_7 = arith.constant dense<0.000000e+00> : vector<64x512xf32>
    %12 = tpu.matmul %10, %11, %cst_7 {dimension_numbers = #tpu.dot_dimension_numbers<[1], [0], [0], [1], [0, 0, 1, 1], [], []>} : vector<64x128xbf16>, vector<128x512xbf16>, vector<64x512xf32> -> vector<64x512xf32>
    %c0_8 = arith.constant 0 : index
    %c0_9 = arith.constant 0 : index
    %13 = vector.load %arg4[%c0_8, %c0_9] : memref<1x512xf32, #tpu.memory_space<vmem>>, vector<1x512xf32>
    %14 = vector.broadcast %13 : vector<1x512xf32> to vector<64x512xf32>
    %15 = arith.addf %12, %14 : vector<64x512xf32>
    %c0_10 = arith.constant 0 : index
    %c0_11 = arith.constant 0 : index
    %16 = vector.load %arg10[%c0_10, %c0_11] : memref<64x512xf32, #tpu.memory_space<vmem>>, vector<64x512xf32>
    tpu.vector_store %arg10[%c0_10, %c0_11], %15 {strides = array<i32>} : memref<64x512xf32, #tpu.memory_space<vmem>>, vector<64x512xf32>,
    %cst_12 = arith.constant 0.000000e+00 : f32
    %17 = vector.broadcast %cst_12 : f32 to vector<8x128xf32>
    %c0_13 = arith.constant 0 : index
    %c0_14 = arith.constant 0 : index
    %18 = vector.load %arg10[%c0_13, %c0_14] : memref<64x512xf32, #tpu.memory_space<vmem>>, vector<8x512xf32>
    %19 = arith.truncf %17 : vector<8x128xf32> to vector<8x128xbf16>
    %c0_15 = arith.constant 0 : index
    %c0_16 = arith.constant 0 : index
    %20 = vector.load %arg3[%c0_15, %c0_16] : memref<128x512xbf16, #tpu.memory_space<vmem>>, vector<128x512xbf16>
    %cst_17 = arith.constant dense<0.000000e+00> : vector<8x512xf32>
    %21 = tpu.matmul %19, %20, %cst_17 {dimension_numbers = #tpu.dot_dimension_numbers<[1], [0], [0], [1], [0, 0, 1, 1], [], []>} : vector<8x128xbf16>, vector<128x512xbf16>, vector<8x512xf32> -> vector<8x512xf32>
    %22 = arith.addf %18, %21 : vector<8x512xf32>
    %23 = vector.extract_strided_slice %22 {offsets = [0, 0], sizes = [8, 384], strides = [1, 1]} : vector<8x512xf32> to vector<8x384xf32>
    %24 = arith.negf %23 : vector<8x384xf32>
    %25 = math.exp %24 : vector<8x384xf32>
    %cst_18 = arith.constant 1.000000e+00 : f32
    %26 = vector.broadcast %cst_18 : f32 to vector<8x384xf32>
    %27 = arith.addf %26, %25 : vector<8x384xf32>
    %28 = arith.divf %26, %27 : vector<8x384xf32>
    %29 = vector.extract_strided_slice %22 {offsets = [0, 384], sizes = [8, 128], strides = [1, 1]} : vector<8x512xf32> to vector<8x128xf32>
    %30 = math.tanh %29 : vector<8x128xf32>
    %31 = vector.extract_strided_slice %28 {offsets = [0, 128], sizes = [8, 128], strides = [1, 1]} : vector<8x384xf32> to vector<8x128xf32>
    %32 = arith.mulf %31, %17 : vector<8x128xf32>
    %33 = vector.extract_strided_slice %28 {offsets = [0, 0], sizes = [8, 128], strides = [1, 1]} : vector<8x384xf32> to vector<8x128xf32>
    %34 = arith.mulf %33, %30 : vector<8x128xf32>
    %35 = arith.addf %32, %34 : vector<8x128xf32>
    %36 = vector.extract_strided_slice %28 {offsets = [0, 256], sizes = [8, 128], strides = [1, 1]} : vector<8x384xf32> to vector<8x128xf32>
    %37 = math.tanh %35 : vector<8x128xf32>
    %38 = arith.mulf %36, %37 : vector<8x128xf32>
    %c8 = arith.constant 8 : index
    %c0_19 = arith.constant 0 : index
    %39 = vector.load %arg10[%c8, %c0_19] : memref<64x512xf32, #tpu.memory_space<vmem>>, vector<8x512xf32>
    %40 = arith.truncf %38 : vector<8x128xf32> to vector<8x128xbf16>
    %c0_20 = arith.constant 0 : index
    %c0_21 = arith.constant 0 : index
    %41 = vector.load %arg3[%c0_20, %c0_21] : memref<128x512xbf16, #tpu.memory_space<vmem>>, vector<128x512xbf16>
    %cst_22 = arith.constant dense<0.000000e+00> : vector<8x512xf32>
    %42 = tpu.matmul %40, %41, %cst_22 {dimension_numbers = #tpu.dot_dimension_numbers<[1], [0], [0], [1], [0, 0, 1, 1], [], []>} : vector<8x128xbf16>, vector<128x512xbf16>, vector<8x512xf32> -> vector<8x512xf32>
    %43 = arith.addf %39, %42 : vector<8x512xf32>
    %44 = vector.extract_strided_slice %43 {offsets = [0, 0], sizes = [8, 384], strides = [1, 1]} : vector<8x512xf32> to vector<8x384xf32>
    %45 = arith.negf %44 : vector<8x384xf32>
    %46 = math.exp %45 : vector<8x384xf32>
    %cst_23 = arith.constant 1.000000e+00 : f32
    %47 = vector.broadcast %cst_23 : f32 to vector<8x384xf32>
    %48 = arith.addf %47, %46 : vector<8x384xf32>
    %49 = arith.divf %47, %48 : vector<8x384xf32>
    %50 = vector.extract_strided_slice %43 {offsets = [0, 384], sizes = [8, 128], strides = [1, 1]} : vector<8x512xf32> to vector<8x128xf32>
    %51 = math.tanh %50 : vector<8x128xf32>
    %52 = vector.extract_strided_slice %49 {offsets = [0, 128], sizes = [8, 128], strides = [1, 1]} : vector<8x384xf32> to vector<8x128xf32>
    %53 = arith.mulf %52, %35 : vector<8x128xf32>
    %54 = vector.extract_strided_slice %49 {offsets = [0, 0], sizes = [8, 128], strides = [1, 1]} : vector<8x384xf32> to vector<8x128xf32>
    %55 = arith.mulf %54, %51 : vector<8x128xf32>
    %56 = arith.addf %53, %55 : vector<8x128xf32>
    %57 = vector.extract_strided_slice %49 {offsets = [0, 256], sizes = [8, 128], strides = [1, 1]} : vector<8x384xf32> to vector<8x128xf32>
    %58 = math.tanh %56 : vector<8x128xf32>
    %59 = arith.mulf %57, %58 : vector<8x128xf32>
    %60 = arith.truncf %38 : vector<8x128xf32> to vector<8x128xbf16>
    %61 = arith.truncf %17 : vector<8x128xf32> to vector<8x128xbf16>
    %62 = tpu.concatenate %60, %61 in 1 : vector<8x128xbf16>, vector<8x128xbf16> -> vector<8x256xbf16>
    %c0_24 = arith.constant 0 : index
    %c0_25 = arith.constant 0 : index
    %63 = vector.load %arg5[%c0_24, %c0_25] : memref<256x512xbf16, #tpu.memory_space<vmem>>, vector<256x512xbf16>
    %cst_26 = arith.constant dense<0.000000e+00> : vector<8x512xf32>
    %64 = tpu.matmul %62, %63, %cst_26 {dimension_numbers = #tpu.dot_dimension_numbers<[1], [0], [0], [1], [0, 0, 1, 1], [], []>} : vector<8x256xbf16>, vector<256x512xbf16>, vector<8x512xf32> -> vector<8x512xf32>
    %c0_27 = arith.constant 0 : index
    %c0_28 = arith.constant 0 : index
    %65 = vector.load %arg6[%c0_27, %c0_28] : memref<1x512xf32, #tpu.memory_space<vmem>>, vector<1x512xf32>
    %66 = vector.broadcast %65 : vector<1x512xf32> to vector<8x512xf32>
    %67 = arith.addf %64, %66 : vector<8x512xf32>
    %68 = vector.extract_strided_slice %67 {offsets = [0, 0], sizes = [8, 384], strides = [1, 1]} : vector<8x512xf32> to vector<8x384xf32>
    %69 = arith.negf %68 : vector<8x384xf32>
    %70 = math.exp %69 : vector<8x384xf32>
    %cst_29 = arith.constant 1.000000e+00 : f32
    %71 = vector.broadcast %cst_29 : f32 to vector<8x384xf32>
    %72 = arith.addf %71, %70 : vector<8x384xf32>
    %73 = arith.divf %71, %72 : vector<8x384xf32>
    %74 = vector.extract_strided_slice %67 {offsets = [0, 384], sizes = [8, 128], strides = [1, 1]} : vector<8x512xf32> to vector<8x128xf32>
    %75 = math.tanh %74 : vector<8x128xf32>
    %76 = vector.extract_strided_slice %73 {offsets = [0, 128], sizes = [8, 128], strides = [1, 1]} : vector<8x384xf32> to vector<8x128xf32>
    %77 = arith.mulf %76, %17 : vector<8x128xf32>
    %78 = vector.extract_strided_slice %73 {offsets = [0, 0], sizes = [8, 128], strides = [1, 1]} : vector<8x384xf32> to vector<8x128xf32>
    %79 = arith.mulf %78, %75 : vector<8x128xf32>
    %80 = arith.addf %77, %79 : vector<8x128xf32>
    %81 = vector.extract_strided_slice %73 {offsets = [0, 256], sizes = [8, 128], strides = [1, 1]} : vector<8x384xf32> to vector<8x128xf32>
    %82 = math.tanh %80 : vector<8x128xf32>
    %83 = arith.mulf %81, %82 : vector<8x128xf32>
    %c0_30 = arith.constant 0 : index
    %c0_31 = arith.constant 0 : index
    %c0_32 = arith.constant 0 : index
    %84 = vector.load %arg7[%c0_30, %c0_31, %c0_32] : memref<8x8x128xf32, #tpu.memory_space<vmem>>, vector<1x8x128xf32>
    %85 = vector.shape_cast %84 : vector<1x8x128xf32> to vector<8x128xf32>
    %86 = vector.shape_cast %83 : vector<8x128xf32> to vector<1x8x128xf32>
    tpu.vector_store %arg7[%c0_30, %c0_31, %c0_32], %86 {strides = array<i32>} : memref<8x8x128xf32, #tpu.memory_space<vmem>>, vector<1x8x128xf32>,
    %c16 = arith.constant 16 : index
    %c0_33 = arith.constant 0 : index
    %87 = vector.load %arg10[%c16, %c0_33] : memref<64x512xf32, #tpu.memory_space<vmem>>, vector<8x512xf32>
    %88 = arith.truncf %59 : vector<8x128xf32> to vector<8x128xbf16>
    %c0_34 = arith.constant 0 : index
    %c0_35 = arith.constant 0 : index
    %89 = vector.load %arg3[%c0_34, %c0_35] : memref<128x512xbf16, #tpu.memory_space<vmem>>, vector<128x512xbf16>
    %cst_36 = arith.constant dense<0.000000e+00> : vector<8x512xf32>
    %90 = tpu.matmul %88, %89, %cst_36 {dimension_numbers = #tpu.dot_dimension_numbers<[1], [0], [0], [1], [0, 0, 1, 1], [], []>} : vector<8x128xbf16>, vector<128x512xbf16>, vector<8x512xf32> -> vector<8x512xf32>
    %91 = arith.addf %87, %90 : vector<8x512xf32>
    %92 = vector.extract_strided_slice %91 {offsets = [0, 0], sizes = [8, 384], strides = [1, 1]} : vector<8x512xf32> to vector<8x384xf32>
    %93 = arith.negf %92 : vector<8x384xf32>
    %94 = math.exp %93 : vector<8x384xf32>
    %cst_37 = arith.constant 1.000000e+00 : f32
    %95 = vector.broadcast %cst_37 : f32 to vector<8x384xf32>
    %96 = arith.addf %95, %94 : vector<8x384xf32>
    %97 = arith.divf %95, %96 : vector<8x384xf32>
    %98 = vector.extract_strided_slice %91 {offsets = [0, 384], sizes = [8, 128], strides = [1, 1]} : vector<8x512xf32> to vector<8x128xf32>
    %99 = math.tanh %98 : vector<8x128xf32>
    %100 = vector.extract_strided_slice %97 {offsets = [0, 128], sizes = [8, 128], strides = [1, 1]} : vector<8x384xf32> to vector<8x128xf32>
    %101 = arith.mulf %100, %56 : vector<8x128xf32>
    %102 = vector.extract_strided_slice %97 {offsets = [0, 0], sizes = [8, 128], strides = [1, 1]} : vector<8x384xf32> to vector<8x128xf32>
    %103 = arith.mulf %102, %99 : vector<8x128xf32>
    %104 = arith.addf %101, %103 : vector<8x128xf32>
    %105 = vector.extract_strided_slice %97 {offsets = [0, 256], sizes = [8, 128], strides = [1, 1]} : vector<8x384xf32> to vector<8x128xf32>
    %106 = math.tanh %104 : vector<8x128xf32>
    %107 = arith.mulf %105, %106 : vector<8x128xf32>
    %108 = arith.truncf %59 : vector<8x128xf32> to vector<8x128xbf16>
    %109 = arith.truncf %83 : vector<8x128xf32> to vector<8x128xbf16>
    %110 = tpu.concatenate %108, %109 in 1 : vector<8x128xbf16>, vector<8x128xbf16> -> vector<8x256xbf16>
    %c0_38 = arith.constant 0 : index
    %c0_39 = arith.constant 0 : index
    %111 = vector.load %arg5[%c0_38, %c0_39] : memref<256x512xbf16, #tpu.memory_space<vmem>>, vector<256x512xbf16>
    %cst_40 = arith.constant dense<0.000000e+00> : vector<8x512xf32>
    %112 = tpu.matmul %110, %111, %cst_40 {dimension_numbers = #tpu.dot_dimension_numbers<[1], [0], [0], [1], [0, 0, 1, 1], [], []>} : vector<8x256xbf16>, vector<256x512xbf16>, vector<8x512xf32> -> vector<8x512xf32>
    %c0_41 = arith.constant 0 : index
    %c0_42 = arith.constant 0 : index
    %113 = vector.load %arg6[%c0_41, %c0_42] : memref<1x512xf32, #tpu.memory_space<vmem>>, vector<1x512xf32>
    %114 = vector.broadcast %113 : vector<1x512xf32> to vector<8x512xf32>
    %115 = arith.addf %112, %114 : vector<8x512xf32>
    %116 = vector.extract_strided_slice %115 {offsets = [0, 0], sizes = [8, 384], strides = [1, 1]} : vector<8x512xf32> to vector<8x384xf32>
    %117 = arith.negf %116 : vector<8x384xf32>
    %118 = math.exp %117 : vector<8x384xf32>
    %cst_43 = arith.constant 1.000000e+00 : f32
    %119 = vector.broadcast %cst_43 : f32 to vector<8x384xf32>
    %120 = arith.addf %119, %118 : vector<8x384xf32>
    %121 = arith.divf %119, %120 : vector<8x384xf32>
    %122 = vector.extract_strided_slice %115 {offsets = [0, 384], sizes = [8, 128], strides = [1, 1]} : vector<8x512xf32> to vector<8x128xf32>
    %123 = math.tanh %122 : vector<8x128xf32>
    %124 = vector.extract_strided_slice %121 {offsets = [0, 128], sizes = [8, 128], strides = [1, 1]} : vector<8x384xf32> to vector<8x128xf32>
    %125 = arith.mulf %124, %80 : vector<8x128xf32>
    %126 = vector.extract_strided_slice %121 {offsets = [0, 0], sizes = [8, 128], strides = [1, 1]} : vector<8x384xf32> to vector<8x128xf32>
    %127 = arith.mulf %126, %123 : vector<8x128xf32>
    %128 = arith.addf %125, %127 : vector<8x128xf32>
    %129 = vector.extract_strided_slice %121 {offsets = [0, 256], sizes = [8, 128], strides = [1, 1]} : vector<8x384xf32> to vector<8x128xf32>
    %130 = math.tanh %128 : vector<8x128xf32>
    %131 = arith.mulf %129, %130 : vector<8x128xf32>
    %c1 = arith.constant 1 : index
    %c0_44 = arith.constant 0 : index
    %c0_45 = arith.constant 0 : index
    %132 = vector.load %arg7[%c1, %c0_44, %c0_45] : memref<8x8x128xf32, #tpu.memory_space<vmem>>, vector<1x8x128xf32>
    %133 = vector.shape_cast %132 : vector<1x8x128xf32> to vector<8x128xf32>
    %134 = vector.shape_cast %131 : vector<8x128xf32> to vector<1x8x128xf32>
    tpu.vector_store %arg7[%c1, %c0_44, %c0_45], %134 {strides = array<i32>} : memref<8x8x128xf32, #tpu.memory_space<vmem>>, vector<1x8x128xf32>,
    %c24 = arith.constant 24 : index
    %c0_46 = arith.constant 0 : index
    %135 = vector.load %arg10[%c24, %c0_46] : memref<64x512xf32, #tpu.memory_space<vmem>>, vector<8x512xf32>
    %136 = arith.truncf %107 : vector<8x128xf32> to vector<8x128xbf16>
    %c0_47 = arith.constant 0 : index
    %c0_48 = arith.constant 0 : index
    %137 = vector.load %arg3[%c0_47, %c0_48] : memref<128x512xbf16, #tpu.memory_space<vmem>>, vector<128x512xbf16>
    %cst_49 = arith.constant dense<0.000000e+00> : vector<8x512xf32>
    %138 = tpu.matmul %136, %137, %cst_49 {dimension_numbers = #tpu.dot_dimension_numbers<[1], [0], [0], [1], [0, 0, 1, 1], [], []>} : vector<8x128xbf16>, vector<128x512xbf16>, vector<8x512xf32> -> vector<8x512xf32>
    %139 = arith.addf %135, %138 : vector<8x512xf32>
    %140 = vector.extract_strided_slice %139 {offsets = [0, 0], sizes = [8, 384], strides = [1, 1]} : vector<8x512xf32> to vector<8x384xf32>
    %141 = arith.negf %140 : vector<8x384xf32>
    %142 = math.exp %141 : vector<8x384xf32>
    %cst_50 = arith.constant 1.000000e+00 : f32
    %143 = vector.broadcast %cst_50 : f32 to vector<8x384xf32>
    %144 = arith.addf %143, %142 : vector<8x384xf32>
    %145 = arith.divf %143, %144 : vector<8x384xf32>
    %146 = vector.extract_strided_slice %139 {offsets = [0, 384], sizes = [8, 128], strides = [1, 1]} : vector<8x512xf32> to vector<8x128xf32>
    %147 = math.tanh %146 : vector<8x128xf32>
    %148 = vector.extract_strided_slice %145 {offsets = [0, 128], sizes = [8, 128], strides = [1, 1]} : vector<8x384xf32> to vector<8x128xf32>
    %149 = arith.mulf %148, %104 : vector<8x128xf32>
    %150 = vector.extract_strided_slice %145 {offsets = [0, 0], sizes = [8, 128], strides = [1, 1]} : vector<8x384xf32> to vector<8x128xf32>
    %151 = arith.mulf %150, %147 : vector<8x128xf32>
    %152 = arith.addf %149, %151 : vector<8x128xf32>
    %153 = vector.extract_strided_slice %145 {offsets = [0, 256], sizes = [8, 128], strides = [1, 1]} : vector<8x384xf32> to vector<8x128xf32>
    %154 = math.tanh %152 : vector<8x128xf32>
    %155 = arith.mulf %153, %154 : vector<8x128xf32>
    %156 = arith.truncf %107 : vector<8x128xf32> to vector<8x128xbf16>
    %157 = arith.truncf %131 : vector<8x128xf32> to vector<8x128xbf16>
    %158 = tpu.concatenate %156, %157 in 1 : vector<8x128xbf16>, vector<8x128xbf16> -> vector<8x256xbf16>
    %c0_51 = arith.constant 0 : index
    %c0_52 = arith.constant 0 : index
    %159 = vector.load %arg5[%c0_51, %c0_52] : memref<256x512xbf16, #tpu.memory_space<vmem>>, vector<256x512xbf16>
    %cst_53 = arith.constant dense<0.000000e+00> : vector<8x512xf32>
    %160 = tpu.matmul %158, %159, %cst_53 {dimension_numbers = #tpu.dot_dimension_numbers<[1], [0], [0], [1], [0, 0, 1, 1], [], []>} : vector<8x256xbf16>, vector<256x512xbf16>, vector<8x512xf32> -> vector<8x512xf32>
    %c0_54 = arith.constant 0 : index
    %c0_55 = arith.constant 0 : index
    %161 = vector.load %arg6[%c0_54, %c0_55] : memref<1x512xf32, #tpu.memory_space<vmem>>, vector<1x512xf32>
    %162 = vector.broadcast %161 : vector<1x512xf32> to vector<8x512xf32>
    %163 = arith.addf %160, %162 : vector<8x512xf32>
    %164 = vector.extract_strided_slice %163 {offsets = [0, 0], sizes = [8, 384], strides = [1, 1]} : vector<8x512xf32> to vector<8x384xf32>
    %165 = arith.negf %164 : vector<8x384xf32>
    %166 = math.exp %165 : vector<8x384xf32>
    %cst_56 = arith.constant 1.000000e+00 : f32
    %167 = vector.broadcast %cst_56 : f32 to vector<8x384xf32>
    %168 = arith.addf %167, %166 : vector<8x384xf32>
    %169 = arith.divf %167, %168 : vector<8x384xf32>
    %170 = vector.extract_strided_slice %163 {offsets = [0, 384], sizes = [8, 128], strides = [1, 1]} : vector<8x512xf32> to vector<8x128xf32>
    %171 = math.tanh %170 : vector<8x128xf32>
    %172 = vector.extract_strided_slice %169 {offsets = [0, 128], sizes = [8, 128], strides = [1, 1]} : vector<8x384xf32> to vector<8x128xf32>
    %173 = arith.mulf %172, %128 : vector<8x128xf32>
    %174 = vector.extract_strided_slice %169 {offsets = [0, 0], sizes = [8, 128], strides = [1, 1]} : vector<8x384xf32> to vector<8x128xf32>
    %175 = arith.mulf %174, %171 : vector<8x128xf32>
    %176 = arith.addf %173, %175 : vector<8x128xf32>
    %177 = vector.extract_strided_slice %169 {offsets = [0, 256], sizes = [8, 128], strides = [1, 1]} : vector<8x384xf32> to vector<8x128xf32>
    %178 = math.tanh %176 : vector<8x128xf32>
    %179 = arith.mulf %177, %178 : vector<8x128xf32>
    %c2 = arith.constant 2 : index
    %c0_57 = arith.constant 0 : index
    %c0_58 = arith.constant 0 : index
    %180 = vector.load %arg7[%c2, %c0_57, %c0_58] : memref<8x8x128xf32, #tpu.memory_space<vmem>>, vector<1x8x128xf32>
    %181 = vector.shape_cast %180 : vector<1x8x128xf32> to vector<8x128xf32>
    %182 = vector.shape_cast %179 : vector<8x128xf32> to vector<1x8x128xf32>
    tpu.vector_store %arg7[%c2, %c0_57, %c0_58], %182 {strides = array<i32>} : memref<8x8x128xf32, #tpu.memory_space<vmem>>, vector<1x8x128xf32>,
    %c32 = arith.constant 32 : index
    %c0_59 = arith.constant 0 : index
    %183 = vector.load %arg10[%c32, %c0_59] : memref<64x512xf32, #tpu.memory_space<vmem>>, vector<8x512xf32>
    %184 = arith.truncf %155 : vector<8x128xf32> to vector<8x128xbf16>
    %c0_60 = arith.constant 0 : index
    %c0_61 = arith.constant 0 : index
    %185 = vector.load %arg3[%c0_60, %c0_61] : memref<128x512xbf16, #tpu.memory_space<vmem>>, vector<128x512xbf16>
    %cst_62 = arith.constant dense<0.000000e+00> : vector<8x512xf32>
    %186 = tpu.matmul %184, %185, %cst_62 {dimension_numbers = #tpu.dot_dimension_numbers<[1], [0], [0], [1], [0, 0, 1, 1], [], []>} : vector<8x128xbf16>, vector<128x512xbf16>, vector<8x512xf32> -> vector<8x512xf32>
    %187 = arith.addf %183, %186 : vector<8x512xf32>
    %188 = vector.extract_strided_slice %187 {offsets = [0, 0], sizes = [8, 384], strides = [1, 1]} : vector<8x512xf32> to vector<8x384xf32>
    %189 = arith.negf %188 : vector<8x384xf32>
    %190 = math.exp %189 : vector<8x384xf32>
    %cst_63 = arith.constant 1.000000e+00 : f32
    %191 = vector.broadcast %cst_63 : f32 to vector<8x384xf32>
    %192 = arith.addf %191, %190 : vector<8x384xf32>
    %193 = arith.divf %191, %192 : vector<8x384xf32>
    %194 = vector.extract_strided_slice %187 {offsets = [0, 384], sizes = [8, 128], strides = [1, 1]} : vector<8x512xf32> to vector<8x128xf32>
    %195 = math.tanh %194 : vector<8x128xf32>
    %196 = vector.extract_strided_slice %193 {offsets = [0, 128], sizes = [8, 128], strides = [1, 1]} : vector<8x384xf32> to vector<8x128xf32>
    %197 = arith.mulf %196, %152 : vector<8x128xf32>
    %198 = vector.extract_strided_slice %193 {offsets = [0, 0], sizes = [8, 128], strides = [1, 1]} : vector<8x384xf32> to vector<8x128xf32>
    %199 = arith.mulf %198, %195 : vector<8x128xf32>
    %200 = arith.addf %197, %199 : vector<8x128xf32>
    %201 = vector.extract_strided_slice %193 {offsets = [0, 256], sizes = [8, 128], strides = [1, 1]} : vector<8x384xf32> to vector<8x128xf32>
    %202 = math.tanh %200 : vector<8x128xf32>
    %203 = arith.mulf %201, %202 : vector<8x128xf32>
    %204 = arith.truncf %155 : vector<8x128xf32> to vector<8x128xbf16>
    %205 = arith.truncf %179 : vector<8x128xf32> to vector<8x128xbf16>
    %206 = tpu.concatenate %204, %205 in 1 : vector<8x128xbf16>, vector<8x128xbf16> -> vector<8x256xbf16>
    %c0_64 = arith.constant 0 : index
    %c0_65 = arith.constant 0 : index
    %207 = vector.load %arg5[%c0_64, %c0_65] : memref<256x512xbf16, #tpu.memory_space<vmem>>, vector<256x512xbf16>
    %cst_66 = arith.constant dense<0.000000e+00> : vector<8x512xf32>
    %208 = tpu.matmul %206, %207, %cst_66 {dimension_numbers = #tpu.dot_dimension_numbers<[1], [0], [0], [1], [0, 0, 1, 1], [], []>} : vector<8x256xbf16>, vector<256x512xbf16>, vector<8x512xf32> -> vector<8x512xf32>
    %c0_67 = arith.constant 0 : index
    %c0_68 = arith.constant 0 : index
    %209 = vector.load %arg6[%c0_67, %c0_68] : memref<1x512xf32, #tpu.memory_space<vmem>>, vector<1x512xf32>
    %210 = vector.broadcast %209 : vector<1x512xf32> to vector<8x512xf32>
    %211 = arith.addf %208, %210 : vector<8x512xf32>
    %212 = vector.extract_strided_slice %211 {offsets = [0, 0], sizes = [8, 384], strides = [1, 1]} : vector<8x512xf32> to vector<8x384xf32>
    %213 = arith.negf %212 : vector<8x384xf32>
    %214 = math.exp %213 : vector<8x384xf32>
    %cst_69 = arith.constant 1.000000e+00 : f32
    %215 = vector.broadcast %cst_69 : f32 to vector<8x384xf32>
    %216 = arith.addf %215, %214 : vector<8x384xf32>
    %217 = arith.divf %215, %216 : vector<8x384xf32>
    %218 = vector.extract_strided_slice %211 {offsets = [0, 384], sizes = [8, 128], strides = [1, 1]} : vector<8x512xf32> to vector<8x128xf32>
    %219 = math.tanh %218 : vector<8x128xf32>
    %220 = vector.extract_strided_slice %217 {offsets = [0, 128], sizes = [8, 128], strides = [1, 1]} : vector<8x384xf32> to vector<8x128xf32>
    %221 = arith.mulf %220, %176 : vector<8x128xf32>
    %222 = vector.extract_strided_slice %217 {offsets = [0, 0], sizes = [8, 128], strides = [1, 1]} : vector<8x384xf32> to vector<8x128xf32>
    %223 = arith.mulf %222, %219 : vector<8x128xf32>
    %224 = arith.addf %221, %223 : vector<8x128xf32>
    %225 = vector.extract_strided_slice %217 {offsets = [0, 256], sizes = [8, 128], strides = [1, 1]} : vector<8x384xf32> to vector<8x128xf32>
    %226 = math.tanh %224 : vector<8x128xf32>
    %227 = arith.mulf %225, %226 : vector<8x128xf32>
    %c3 = arith.constant 3 : index
    %c0_70 = arith.constant 0 : index
    %c0_71 = arith.constant 0 : index
    %228 = vector.load %arg7[%c3, %c0_70, %c0_71] : memref<8x8x128xf32, #tpu.memory_space<vmem>>, vector<1x8x128xf32>
    %229 = vector.shape_cast %228 : vector<1x8x128xf32> to vector<8x128xf32>
    %230 = vector.shape_cast %227 : vector<8x128xf32> to vector<1x8x128xf32>
    tpu.vector_store %arg7[%c3, %c0_70, %c0_71], %230 {strides = array<i32>} : memref<8x8x128xf32, #tpu.memory_space<vmem>>, vector<1x8x128xf32>,
    %c40 = arith.constant 40 : index
    %c0_72 = arith.constant 0 : index
    %231 = vector.load %arg10[%c40, %c0_72] : memref<64x512xf32, #tpu.memory_space<vmem>>, vector<8x512xf32>
    %232 = arith.truncf %203 : vector<8x128xf32> to vector<8x128xbf16>
    %c0_73 = arith.constant 0 : index
    %c0_74 = arith.constant 0 : index
    %233 = vector.load %arg3[%c0_73, %c0_74] : memref<128x512xbf16, #tpu.memory_space<vmem>>, vector<128x512xbf16>
    %cst_75 = arith.constant dense<0.000000e+00> : vector<8x512xf32>
    %234 = tpu.matmul %232, %233, %cst_75 {dimension_numbers = #tpu.dot_dimension_numbers<[1], [0], [0], [1], [0, 0, 1, 1], [], []>} : vector<8x128xbf16>, vector<128x512xbf16>, vector<8x512xf32> -> vector<8x512xf32>
    %235 = arith.addf %231, %234 : vector<8x512xf32>
    %236 = vector.extract_strided_slice %235 {offsets = [0, 0], sizes = [8, 384], strides = [1, 1]} : vector<8x512xf32> to vector<8x384xf32>
    %237 = arith.negf %236 : vector<8x384xf32>
    %238 = math.exp %237 : vector<8x384xf32>
    %cst_76 = arith.constant 1.000000e+00 : f32
    %239 = vector.broadcast %cst_76 : f32 to vector<8x384xf32>
    %240 = arith.addf %239, %238 : vector<8x384xf32>
    %241 = arith.divf %239, %240 : vector<8x384xf32>
    %242 = vector.extract_strided_slice %235 {offsets = [0, 384], sizes = [8, 128], strides = [1, 1]} : vector<8x512xf32> to vector<8x128xf32>
    %243 = math.tanh %242 : vector<8x128xf32>
    %244 = vector.extract_strided_slice %241 {offsets = [0, 128], sizes = [8, 128], strides = [1, 1]} : vector<8x384xf32> to vector<8x128xf32>
    %245 = arith.mulf %244, %200 : vector<8x128xf32>
    %246 = vector.extract_strided_slice %241 {offsets = [0, 0], sizes = [8, 128], strides = [1, 1]} : vector<8x384xf32> to vector<8x128xf32>
    %247 = arith.mulf %246, %243 : vector<8x128xf32>
    %248 = arith.addf %245, %247 : vector<8x128xf32>
    %249 = vector.extract_strided_slice %241 {offsets = [0, 256], sizes = [8, 128], strides = [1, 1]} : vector<8x384xf32> to vector<8x128xf32>
    %250 = math.tanh %248 : vector<8x128xf32>
    %251 = arith.mulf %249, %250 : vector<8x128xf32>
    %252 = arith.truncf %203 : vector<8x128xf32> to vector<8x128xbf16>
    %253 = arith.truncf %227 : vector<8x128xf32> to vector<8x128xbf16>
    %254 = tpu.concatenate %252, %253 in 1 : vector<8x128xbf16>, vector<8x128xbf16> -> vector<8x256xbf16>
    %c0_77 = arith.constant 0 : index
    %c0_78 = arith.constant 0 : index
    %255 = vector.load %arg5[%c0_77, %c0_78] : memref<256x512xbf16, #tpu.memory_space<vmem>>, vector<256x512xbf16>
    %cst_79 = arith.constant dense<0.000000e+00> : vector<8x512xf32>
    %256 = tpu.matmul %254, %255, %cst_79 {dimension_numbers = #tpu.dot_dimension_numbers<[1], [0], [0], [1], [0, 0, 1, 1], [], []>} : vector<8x256xbf16>, vector<256x512xbf16>, vector<8x512xf32> -> vector<8x512xf32>
    %c0_80 = arith.constant 0 : index
    %c0_81 = arith.constant 0 : index
    %257 = vector.load %arg6[%c0_80, %c0_81] : memref<1x512xf32, #tpu.memory_space<vmem>>, vector<1x512xf32>
    %258 = vector.broadcast %257 : vector<1x512xf32> to vector<8x512xf32>
    %259 = arith.addf %256, %258 : vector<8x512xf32>
    %260 = vector.extract_strided_slice %259 {offsets = [0, 0], sizes = [8, 384], strides = [1, 1]} : vector<8x512xf32> to vector<8x384xf32>
    %261 = arith.negf %260 : vector<8x384xf32>
    %262 = math.exp %261 : vector<8x384xf32>
    %cst_82 = arith.constant 1.000000e+00 : f32
    %263 = vector.broadcast %cst_82 : f32 to vector<8x384xf32>
    %264 = arith.addf %263, %262 : vector<8x384xf32>
    %265 = arith.divf %263, %264 : vector<8x384xf32>
    %266 = vector.extract_strided_slice %259 {offsets = [0, 384], sizes = [8, 128], strides = [1, 1]} : vector<8x512xf32> to vector<8x128xf32>
    %267 = math.tanh %266 : vector<8x128xf32>
    %268 = vector.extract_strided_slice %265 {offsets = [0, 128], sizes = [8, 128], strides = [1, 1]} : vector<8x384xf32> to vector<8x128xf32>
    %269 = arith.mulf %268, %224 : vector<8x128xf32>
    %270 = vector.extract_strided_slice %265 {offsets = [0, 0], sizes = [8, 128], strides = [1, 1]} : vector<8x384xf32> to vector<8x128xf32>
    %271 = arith.mulf %270, %267 : vector<8x128xf32>
    %272 = arith.addf %269, %271 : vector<8x128xf32>
    %273 = vector.extract_strided_slice %265 {offsets = [0, 256], sizes = [8, 128], strides = [1, 1]} : vector<8x384xf32> to vector<8x128xf32>
    %274 = math.tanh %272 : vector<8x128xf32>
    %275 = arith.mulf %273, %274 : vector<8x128xf32>
    %c4 = arith.constant 4 : index
    %c0_83 = arith.constant 0 : index
    %c0_84 = arith.constant 0 : index
    %276 = vector.load %arg7[%c4, %c0_83, %c0_84] : memref<8x8x128xf32, #tpu.memory_space<vmem>>, vector<1x8x128xf32>
    %277 = vector.shape_cast %276 : vector<1x8x128xf32> to vector<8x128xf32>
    %278 = vector.shape_cast %275 : vector<8x128xf32> to vector<1x8x128xf32>
    tpu.vector_store %arg7[%c4, %c0_83, %c0_84], %278 {strides = array<i32>} : memref<8x8x128xf32, #tpu.memory_space<vmem>>, vector<1x8x128xf32>,
    %c48 = arith.constant 48 : index
    %c0_85 = arith.constant 0 : index
    %279 = vector.load %arg10[%c48, %c0_85] : memref<64x512xf32, #tpu.memory_space<vmem>>, vector<8x512xf32>
    %280 = arith.truncf %251 : vector<8x128xf32> to vector<8x128xbf16>
    %c0_86 = arith.constant 0 : index
    %c0_87 = arith.constant 0 : index
    %281 = vector.load %arg3[%c0_86, %c0_87] : memref<128x512xbf16, #tpu.memory_space<vmem>>, vector<128x512xbf16>
    %cst_88 = arith.constant dense<0.000000e+00> : vector<8x512xf32>
    %282 = tpu.matmul %280, %281, %cst_88 {dimension_numbers = #tpu.dot_dimension_numbers<[1], [0], [0], [1], [0, 0, 1, 1], [], []>} : vector<8x128xbf16>, vector<128x512xbf16>, vector<8x512xf32> -> vector<8x512xf32>
    %283 = arith.addf %279, %282 : vector<8x512xf32>
    %284 = vector.extract_strided_slice %283 {offsets = [0, 0], sizes = [8, 384], strides = [1, 1]} : vector<8x512xf32> to vector<8x384xf32>
    %285 = arith.negf %284 : vector<8x384xf32>
    %286 = math.exp %285 : vector<8x384xf32>
    %cst_89 = arith.constant 1.000000e+00 : f32
    %287 = vector.broadcast %cst_89 : f32 to vector<8x384xf32>
    %288 = arith.addf %287, %286 : vector<8x384xf32>
    %289 = arith.divf %287, %288 : vector<8x384xf32>
    %290 = vector.extract_strided_slice %283 {offsets = [0, 384], sizes = [8, 128], strides = [1, 1]} : vector<8x512xf32> to vector<8x128xf32>
    %291 = math.tanh %290 : vector<8x128xf32>
    %292 = vector.extract_strided_slice %289 {offsets = [0, 128], sizes = [8, 128], strides = [1, 1]} : vector<8x384xf32> to vector<8x128xf32>
    %293 = arith.mulf %292, %248 : vector<8x128xf32>
    %294 = vector.extract_strided_slice %289 {offsets = [0, 0], sizes = [8, 128], strides = [1, 1]} : vector<8x384xf32> to vector<8x128xf32>
    %295 = arith.mulf %294, %291 : vector<8x128xf32>
    %296 = arith.addf %293, %295 : vector<8x128xf32>
    %297 = vector.extract_strided_slice %289 {offsets = [0, 256], sizes = [8, 128], strides = [1, 1]} : vector<8x384xf32> to vector<8x128xf32>
    %298 = math.tanh %296 : vector<8x128xf32>
    %299 = arith.mulf %297, %298 : vector<8x128xf32>
    %300 = arith.truncf %251 : vector<8x128xf32> to vector<8x128xbf16>
    %301 = arith.truncf %275 : vector<8x128xf32> to vector<8x128xbf16>
    %302 = tpu.concatenate %300, %301 in 1 : vector<8x128xbf16>, vector<8x128xbf16> -> vector<8x256xbf16>
    %c0_90 = arith.constant 0 : index
    %c0_91 = arith.constant 0 : index
    %303 = vector.load %arg5[%c0_90, %c0_91] : memref<256x512xbf16, #tpu.memory_space<vmem>>, vector<256x512xbf16>
    %cst_92 = arith.constant dense<0.000000e+00> : vector<8x512xf32>
    %304 = tpu.matmul %302, %303, %cst_92 {dimension_numbers = #tpu.dot_dimension_numbers<[1], [0], [0], [1], [0, 0, 1, 1], [], []>} : vector<8x256xbf16>, vector<256x512xbf16>, vector<8x512xf32> -> vector<8x512xf32>
    %c0_93 = arith.constant 0 : index
    %c0_94 = arith.constant 0 : index
    %305 = vector.load %arg6[%c0_93, %c0_94] : memref<1x512xf32, #tpu.memory_space<vmem>>, vector<1x512xf32>
    %306 = vector.broadcast %305 : vector<1x512xf32> to vector<8x512xf32>
    %307 = arith.addf %304, %306 : vector<8x512xf32>
    %308 = vector.extract_strided_slice %307 {offsets = [0, 0], sizes = [8, 384], strides = [1, 1]} : vector<8x512xf32> to vector<8x384xf32>
    %309 = arith.negf %308 : vector<8x384xf32>
    %310 = math.exp %309 : vector<8x384xf32>
    %cst_95 = arith.constant 1.000000e+00 : f32
    %311 = vector.broadcast %cst_95 : f32 to vector<8x384xf32>
    %312 = arith.addf %311, %310 : vector<8x384xf32>
    %313 = arith.divf %311, %312 : vector<8x384xf32>
    %314 = vector.extract_strided_slice %307 {offsets = [0, 384], sizes = [8, 128], strides = [1, 1]} : vector<8x512xf32> to vector<8x128xf32>
    %315 = math.tanh %314 : vector<8x128xf32>
    %316 = vector.extract_strided_slice %313 {offsets = [0, 128], sizes = [8, 128], strides = [1, 1]} : vector<8x384xf32> to vector<8x128xf32>
    %317 = arith.mulf %316, %272 : vector<8x128xf32>
    %318 = vector.extract_strided_slice %313 {offsets = [0, 0], sizes = [8, 128], strides = [1, 1]} : vector<8x384xf32> to vector<8x128xf32>
    %319 = arith.mulf %318, %315 : vector<8x128xf32>
    %320 = arith.addf %317, %319 : vector<8x128xf32>
    %321 = vector.extract_strided_slice %313 {offsets = [0, 256], sizes = [8, 128], strides = [1, 1]} : vector<8x384xf32> to vector<8x128xf32>
    %322 = math.tanh %320 : vector<8x128xf32>
    %323 = arith.mulf %321, %322 : vector<8x128xf32>
    %c5 = arith.constant 5 : index
    %c0_96 = arith.constant 0 : index
    %c0_97 = arith.constant 0 : index
    %324 = vector.load %arg7[%c5, %c0_96, %c0_97] : memref<8x8x128xf32, #tpu.memory_space<vmem>>, vector<1x8x128xf32>
    %325 = vector.shape_cast %324 : vector<1x8x128xf32> to vector<8x128xf32>
    %326 = vector.shape_cast %323 : vector<8x128xf32> to vector<1x8x128xf32>
    tpu.vector_store %arg7[%c5, %c0_96, %c0_97], %326 {strides = array<i32>} : memref<8x8x128xf32, #tpu.memory_space<vmem>>, vector<1x8x128xf32>,
    %c56 = arith.constant 56 : index
    %c0_98 = arith.constant 0 : index
    %327 = vector.load %arg10[%c56, %c0_98] : memref<64x512xf32, #tpu.memory_space<vmem>>, vector<8x512xf32>
    %328 = arith.truncf %299 : vector<8x128xf32> to vector<8x128xbf16>
    %c0_99 = arith.constant 0 : index
    %c0_100 = arith.constant 0 : index
    %329 = vector.load %arg3[%c0_99, %c0_100] : memref<128x512xbf16, #tpu.memory_space<vmem>>, vector<128x512xbf16>
    %cst_101 = arith.constant dense<0.000000e+00> : vector<8x512xf32>
    %330 = tpu.matmul %328, %329, %cst_101 {dimension_numbers = #tpu.dot_dimension_numbers<[1], [0], [0], [1], [0, 0, 1, 1], [], []>} : vector<8x128xbf16>, vector<128x512xbf16>, vector<8x512xf32> -> vector<8x512xf32>
    %331 = arith.addf %327, %330 : vector<8x512xf32>
    %332 = vector.extract_strided_slice %331 {offsets = [0, 0], sizes = [8, 384], strides = [1, 1]} : vector<8x512xf32> to vector<8x384xf32>
    %333 = arith.negf %332 : vector<8x384xf32>
    %334 = math.exp %333 : vector<8x384xf32>
    %cst_102 = arith.constant 1.000000e+00 : f32
    %335 = vector.broadcast %cst_102 : f32 to vector<8x384xf32>
    %336 = arith.addf %335, %334 : vector<8x384xf32>
    %337 = arith.divf %335, %336 : vector<8x384xf32>
    %338 = vector.extract_strided_slice %331 {offsets = [0, 384], sizes = [8, 128], strides = [1, 1]} : vector<8x512xf32> to vector<8x128xf32>
    %339 = math.tanh %338 : vector<8x128xf32>
    %340 = vector.extract_strided_slice %337 {offsets = [0, 128], sizes = [8, 128], strides = [1, 1]} : vector<8x384xf32> to vector<8x128xf32>
    %341 = arith.mulf %340, %296 : vector<8x128xf32>
    %342 = vector.extract_strided_slice %337 {offsets = [0, 0], sizes = [8, 128], strides = [1, 1]} : vector<8x384xf32> to vector<8x128xf32>
    %343 = arith.mulf %342, %339 : vector<8x128xf32>
    %344 = arith.addf %341, %343 : vector<8x128xf32>
    %345 = vector.extract_strided_slice %337 {offsets = [0, 256], sizes = [8, 128], strides = [1, 1]} : vector<8x384xf32> to vector<8x128xf32>
    %346 = math.tanh %344 : vector<8x128xf32>
    %347 = arith.mulf %345, %346 : vector<8x128xf32>
    %348 = arith.truncf %299 : vector<8x128xf32> to vector<8x128xbf16>
    %349 = arith.truncf %323 : vector<8x128xf32> to vector<8x128xbf16>
    %350 = tpu.concatenate %348, %349 in 1 : vector<8x128xbf16>, vector<8x128xbf16> -> vector<8x256xbf16>
    %c0_103 = arith.constant 0 : index
    %c0_104 = arith.constant 0 : index
    %351 = vector.load %arg5[%c0_103, %c0_104] : memref<256x512xbf16, #tpu.memory_space<vmem>>, vector<256x512xbf16>
    %cst_105 = arith.constant dense<0.000000e+00> : vector<8x512xf32>
    %352 = tpu.matmul %350, %351, %cst_105 {dimension_numbers = #tpu.dot_dimension_numbers<[1], [0], [0], [1], [0, 0, 1, 1], [], []>} : vector<8x256xbf16>, vector<256x512xbf16>, vector<8x512xf32> -> vector<8x512xf32>
    %c0_106 = arith.constant 0 : index
    %c0_107 = arith.constant 0 : index
    %353 = vector.load %arg6[%c0_106, %c0_107] : memref<1x512xf32, #tpu.memory_space<vmem>>, vector<1x512xf32>
    %354 = vector.broadcast %353 : vector<1x512xf32> to vector<8x512xf32>
    %355 = arith.addf %352, %354 : vector<8x512xf32>
    %356 = vector.extract_strided_slice %355 {offsets = [0, 0], sizes = [8, 384], strides = [1, 1]} : vector<8x512xf32> to vector<8x384xf32>
    %357 = arith.negf %356 : vector<8x384xf32>
    %358 = math.exp %357 : vector<8x384xf32>
    %cst_108 = arith.constant 1.000000e+00 : f32
    %359 = vector.broadcast %cst_108 : f32 to vector<8x384xf32>
    %360 = arith.addf %359, %358 : vector<8x384xf32>
    %361 = arith.divf %359, %360 : vector<8x384xf32>
    %362 = vector.extract_strided_slice %355 {offsets = [0, 384], sizes = [8, 128], strides = [1, 1]} : vector<8x512xf32> to vector<8x128xf32>
    %363 = math.tanh %362 : vector<8x128xf32>
    %364 = vector.extract_strided_slice %361 {offsets = [0, 128], sizes = [8, 128], strides = [1, 1]} : vector<8x384xf32> to vector<8x128xf32>
    %365 = arith.mulf %364, %320 : vector<8x128xf32>
    %366 = vector.extract_strided_slice %361 {offsets = [0, 0], sizes = [8, 128], strides = [1, 1]} : vector<8x384xf32> to vector<8x128xf32>
    %367 = arith.mulf %366, %363 : vector<8x128xf32>
    %368 = arith.addf %365, %367 : vector<8x128xf32>
    %369 = vector.extract_strided_slice %361 {offsets = [0, 256], sizes = [8, 128], strides = [1, 1]} : vector<8x384xf32> to vector<8x128xf32>
    %370 = math.tanh %368 : vector<8x128xf32>
    %371 = arith.mulf %369, %370 : vector<8x128xf32>
    %c6 = arith.constant 6 : index
    %c0_109 = arith.constant 0 : index
    %c0_110 = arith.constant 0 : index
    %372 = vector.load %arg7[%c6, %c0_109, %c0_110] : memref<8x8x128xf32, #tpu.memory_space<vmem>>, vector<1x8x128xf32>
    %373 = vector.shape_cast %372 : vector<1x8x128xf32> to vector<8x128xf32>
    %374 = vector.shape_cast %371 : vector<8x128xf32> to vector<1x8x128xf32>
    tpu.vector_store %arg7[%c6, %c0_109, %c0_110], %374 {strides = array<i32>} : memref<8x8x128xf32, #tpu.memory_space<vmem>>, vector<1x8x128xf32>,
    %375 = arith.truncf %347 : vector<8x128xf32> to vector<8x128xbf16>
    %376 = arith.truncf %371 : vector<8x128xf32> to vector<8x128xbf16>
    %377 = tpu.concatenate %375, %376 in 1 : vector<8x128xbf16>, vector<8x128xbf16> -> vector<8x256xbf16>
    %c0_111 = arith.constant 0 : index
    %c0_112 = arith.constant 0 : index
    %378 = vector.load %arg5[%c0_111, %c0_112] : memref<256x512xbf16, #tpu.memory_space<vmem>>, vector<256x512xbf16>
    %cst_113 = arith.constant dense<0.000000e+00> : vector<8x512xf32>
    %379 = tpu.matmul %377, %378, %cst_113 {dimension_numbers = #tpu.dot_dimension_numbers<[1], [0], [0], [1], [0, 0, 1, 1], [], []>} : vector<8x256xbf16>, vector<256x512xbf16>, vector<8x512xf32> -> vector<8x512xf32>
    %c0_114 = arith.constant 0 : index
    %c0_115 = arith.constant 0 : index
    %380 = vector.load %arg6[%c0_114, %c0_115] : memref<1x512xf32, #tpu.memory_space<vmem>>, vector<1x512xf32>
    %381 = vector.broadcast %380 : vector<1x512xf32> to vector<8x512xf32>
    %382 = arith.addf %379, %381 : vector<8x512xf32>
    %383 = vector.extract_strided_slice %382 {offsets = [0, 0], sizes = [8, 384], strides = [1, 1]} : vector<8x512xf32> to vector<8x384xf32>
    %384 = arith.negf %383 : vector<8x384xf32>
    %385 = math.exp %384 : vector<8x384xf32>
    %cst_116 = arith.constant 1.000000e+00 : f32
    %386 = vector.broadcast %cst_116 : f32 to vector<8x384xf32>
    %387 = arith.addf %386, %385 : vector<8x384xf32>
    %388 = arith.divf %386, %387 : vector<8x384xf32>
    %389 = vector.extract_strided_slice %382 {offsets = [0, 384], sizes = [8, 128], strides = [1, 1]} : vector<8x512xf32> to vector<8x128xf32>
    %390 = math.tanh %389 : vector<8x128xf32>
    %391 = vector.extract_strided_slice %388 {offsets = [0, 128], sizes = [8, 128], strides = [1, 1]} : vector<8x384xf32> to vector<8x128xf32>
    %392 = arith.mulf %391, %368 : vector<8x128xf32>
    %393 = vector.extract_strided_slice %388 {offsets = [0, 0], sizes = [8, 128], strides = [1, 1]} : vector<8x384xf32> to vector<8x128xf32>
    %394 = arith.mulf %393, %390 : vector<8x128xf32>
    %395 = arith.addf %392, %394 : vector<8x128xf32>
    %396 = vector.extract_strided_slice %388 {offsets = [0, 256], sizes = [8, 128], strides = [1, 1]} : vector<8x384xf32> to vector<8x128xf32>
    %397 = math.tanh %395 : vector<8x128xf32>
    %398 = arith.mulf %396, %397 : vector<8x128xf32>
    %c7 = arith.constant 7 : index
    %c0_117 = arith.constant 0 : index
    %c0_118 = arith.constant 0 : index
    %399 = vector.load %arg7[%c7, %c0_117, %c0_118] : memref<8x8x128xf32, #tpu.memory_space<vmem>>, vector<1x8x128xf32>
    %400 = vector.shape_cast %399 : vector<1x8x128xf32> to vector<8x128xf32>
    %401 = vector.shape_cast %398 : vector<8x128xf32> to vector<1x8x128xf32>
    tpu.vector_store %arg7[%c7, %c0_117, %c0_118], %401 {strides = array<i32>} : memref<8x8x128xf32, #tpu.memory_space<vmem>>, vector<1x8x128xf32>,
    %c0_119 = arith.constant 0 : index
    %c0_120 = arith.constant 0 : index
    %c0_121 = arith.constant 0 : index
    %402 = vector.load %arg8[%c0_119, %c0_120, %c0_121] : memref<2x8x128xf32, #tpu.memory_space<vmem>>, vector<1x8x128xf32>
    %403 = vector.shape_cast %402 : vector<1x8x128xf32> to vector<8x128xf32>
    %404 = vector.shape_cast %347 : vector<8x128xf32> to vector<1x8x128xf32>
    tpu.vector_store %arg8[%c0_119, %c0_120, %c0_121], %404 {strides = array<i32>} : memref<2x8x128xf32, #tpu.memory_space<vmem>>, vector<1x8x128xf32>,
    %c0_122 = arith.constant 0 : index
    %c0_123 = arith.constant 0 : index
    %c0_124 = arith.constant 0 : index
    %405 = vector.load %arg9[%c0_122, %c0_123, %c0_124] : memref<2x8x128xf32, #tpu.memory_space<vmem>>, vector<1x8x128xf32>
    %406 = vector.shape_cast %405 : vector<1x8x128xf32> to vector<8x128xf32>
    %407 = vector.shape_cast %344 : vector<8x128xf32> to vector<1x8x128xf32>
    tpu.vector_store %arg9[%c0_122, %c0_123, %c0_124], %407 {strides = array<i32>} : memref<2x8x128xf32, #tpu.memory_space<vmem>>, vector<1x8x128xf32>,
    %c1_125 = arith.constant 1 : index
    %c0_126 = arith.constant 0 : index
    %c0_127 = arith.constant 0 : index
    %408 = vector.load %arg8[%c1_125, %c0_126, %c0_127] : memref<2x8x128xf32, #tpu.memory_space<vmem>>, vector<1x8x128xf32>
    %409 = vector.shape_cast %408 : vector<1x8x128xf32> to vector<8x128xf32>
    %410 = vector.shape_cast %398 : vector<8x128xf32> to vector<1x8x128xf32>
    tpu.vector_store %arg8[%c1_125, %c0_126, %c0_127], %410 {strides = array<i32>} : memref<2x8x128xf32, #tpu.memory_space<vmem>>, vector<1x8x128xf32>,
    %c1_128 = arith.constant 1 : index
    %c0_129 = arith.constant 0 : index
    %c0_130 = arith.constant 0 : index
    %411 = vector.load %arg9[%c1_128, %c0_129, %c0_130] : memref<2x8x128xf32, #tpu.memory_space<vmem>>, vector<1x8x128xf32>
    %412 = vector.shape_cast %411 : vector<1x8x128xf32> to vector<8x128xf32>
    %413 = vector.shape_cast %395 : vector<8x128xf32> to vector<1x8x128xf32>
    tpu.vector_store %arg9[%c1_128, %c0_129, %c0_130], %413 {strides = array<i32>} : memref<2x8x128xf32, #tpu.memory_space<vmem>>, vector<1x8x128xf32>,
    return
  }
}

</mosaic_0001>

<llo_original>
// kernel: encoder_forward.1
$region0: #{encoder_forward.1}
  #allocation0 [shape = 'u32[]', space=smem, size = 0x4, offset = 0x4, fixed_abs, tag = 'smem constant byte address 0x4 - core index']
  #allocation1 [shape = 'u32[72,128]{1,0:T(1,128)}', space=vmem, size = 0x9000, scoped, tag = 'internal scratch']
  #allocation2 [shape = 'f32[64,512]{1,0:T(8,128)}', space=vmem, size = 0x20000, scoped, tag = 'scratch operand']
  %s0 = inlined_call_operand.vmem [shape: s32[64,1], index: 0, kind: input, shape index: {}]
  %s1 = inlined_call_operand.vmem [shape: bf16[64,128], index: 1, kind: input, shape index: {}]
  %s2 = inlined_call_operand.hbm [shape: bf16[128,512], index: 2, kind: input, shape index: {}]
  %s3 = inlined_call_operand.hbm [shape: bf16[128,512], index: 3, kind: input, shape index: {}]
  %s4 = inlined_call_operand.vmem [shape: f32[1,512], index: 4, kind: input, shape index: {}]
  %s5 = inlined_call_operand.hbm [shape: bf16[256,512], index: 5, kind: input, shape index: {}]
  %s6 = inlined_call_operand.vmem [shape: f32[1,512], index: 6, kind: input, shape index: {}]
  %s7 = inlined_call_operand.vmem [shape: f32[8,8,128], index: 7, kind: output, shape index: {0}]
  %s8 = inlined_call_operand.hbm [shape: f32[2,8,128], index: 8, kind: output, shape index: {1}]
  %s9 = inlined_call_operand.hbm [shape: f32[2,8,128], index: 9, kind: output, shape index: {2}]
  %10 = xla_tuple %s7, %s8, %s9
  %s11 = sld [smem:[#allocation0]]
  $region66: #{encoder_forward.1} parent=0
    _
  %s13 = ssub.s32 1, %s11
  %s14 = scalar_select 0, %s13, %s11
  $region1: #{encoder_forward.1} parent=0
    #allocation3 [shape = 'u8[131072]{0}', space=vmem, size = 0x20000, scoped, tag = 'input window, operand 2, single buffered']
    #allocation4 [shape = 's32[1]{0}', space=sflag, size = 0x4, scoped, tag = 'scoped memory for encoder_forward.1']
    #allocation5 [shape = 's32[1]{0}', space=sflag, size = 0x4, scoped, tag = 'scoped memory for encoder_forward.1']
    #allocation6 [shape = 'u8[131072]{0}', space=vmem, size = 0x20000, scoped, tag = 'input window, operand 3, single buffered']
    #allocation7 [shape = 's32[1]{0}', space=sflag, size = 0x4, scoped, tag = 'scoped memory for encoder_forward.1']
    #allocation8 [shape = 'u8[262144]{0}', space=vmem, size = 0x40000, scoped, tag = 'input window, operand 5, single buffered']
    #allocation9 [shape = 'u8[8192]{0}', space=vmem, size = 0x2000, scoped, tag = 'output window, operand 1, single buffered']
    #allocation10 [shape = 'u8[8192]{0}', space=vmem, size = 0x2000, scoped, tag = 'output window, operand 2, single buffered']
    #allocation11 [shape = 's32[1]{0}', space=sflag, size = 0x4, scoped, tag = 'scoped memory for encoder_forward.1']
    %15 = vsyncpa [#allocation4], 0
    %16 = vsyncpa [#allocation7], 0
    %17 = vsyncpa [#allocation5], 0
    %18 = vsyncpa [#allocation11], 0
    // Predicated region
    $region2: #{encoder_forward.1} parent=1 // pred_check
      _
    $region3: #{encoder_forward.1} parent=1 // pred_check_branch
      %20 = sbr.rel (0) target = $region5
    $region4: #{encoder_forward.1} parent=1 // pred_region
      _
    $region5: #{encoder_forward.1} parent=1 // pred_fallthru
      _
    // Predicated region
    $region6: #{encoder_forward.1} parent=1 // pred_check
      _
    $region7: #{encoder_forward.1} parent=1 // pred_check_branch
      %22 = sbr.rel (0) target = $region9
    $region8: #{encoder_forward.1} parent=1 // pred_region
      _
    $region9: #{encoder_forward.1} parent=1 // pred_fallthru
      _
    // Predicated region
    $region10: #{encoder_forward.1} parent=1 // pred_check
      _
    $region11: #{encoder_forward.1} parent=1 // pred_check_branch
      %24 = sbr.rel (0) target = $region13
    $region12: #{encoder_forward.1} parent=1 // pred_region
      %26 = vsyncadd [#allocation4], 0
      %s27 = sshll.u32 %s2, 4
      %s28 = int_to_ptr.hbm [resolvable:$true] %s27
      %s29 = sshll.u32 [#allocation3], 4
      %s30 = int_to_ptr.vmem [resolvable:$true] %s29
      %35 = dma.hbm_to_vmem [thread:$0]  %s28, 4096, %s30, [#allocation4], 256, 256, 16
    $region13: #{encoder_forward.1} parent=1 // pred_fallthru
      _
    // Predicated region
    $region14: #{encoder_forward.1} parent=1 // pred_check
      _
    $region15: #{encoder_forward.1} parent=1 // pred_check_branch
      %37 = sbr.rel (0) target = $region17
    $region16: #{encoder_forward.1} parent=1 // pred_region
      %39 = vsyncadd [#allocation7], 0
      %s40 = sshll.u32 %s3, 4
      %s41 = int_to_ptr.hbm [resolvable:$true] %s40
      %s42 = sshll.u32 [#allocation6], 4
      %s43 = int_to_ptr.vmem [resolvable:$true] %s42
      %48 = dma.hbm_to_vmem [thread:$0]  %s41, 4096, %s43, [#allocation7], 256, 256, 16
    $region17: #{encoder_forward.1} parent=1 // pred_fallthru
      _
    // Predicated region
    $region18: #{encoder_forward.1} parent=1 // pred_check
      _
    $region19: #{encoder_forward.1} parent=1 // pred_check_branch
      %50 = sbr.rel (0) target = $region21
    $region20: #{encoder_forward.1} parent=1 // pred_region
      _
    $region21: #{encoder_forward.1} parent=1 // pred_fallthru
      _
    // Predicated region
    $region22: #{encoder_forward.1} parent=1 // pred_check
      _
    $region23: #{encoder_forward.1} parent=1 // pred_check_branch
      %52 = sbr.rel (0) target = $region25
    $region24: #{encoder_forward.1} parent=1 // pred_region
      %54 = vsyncadd [#allocation7], 0
      %s55 = sshll.u32 %s5, 4
      %s56 = int_to_ptr.hbm [resolvable:$true] %s55
      %s57 = sshll.u32 [#allocation8], 4
      %s58 = int_to_ptr.vmem [resolvable:$true] %s57
      %63 = dma.hbm_to_vmem [thread:$0]  %s56, 8192, %s58, [#allocation7], 256, 256, 16
    $region25: #{encoder_forward.1} parent=1 // pred_fallthru
      _
    // Predicated region
    $region26: #{encoder_forward.1} parent=1 // pred_check
      _
    $region27: #{encoder_forward.1} parent=1 // pred_check_branch
      %65 = sbr.rel (0) target = $region29
    $region28: #{encoder_forward.1} parent=1 // pred_region
      _
    $region29: #{encoder_forward.1} parent=1 // pred_fallthru
      _
    // Predicated region
    $region30: #{encoder_forward.1} parent=1 // pred_check
      _
    $region31: #{encoder_forward.1} parent=1 // pred_check_branch
      %67 = sbr.rel (0) target = $region33
    $region32: #{encoder_forward.1} parent=1 // pred_region
      %69 = dma.done [#allocation4], 4096
    $region33: #{encoder_forward.1} parent=1 // pred_fallthru
      _
    // Predicated region
    $region34: #{encoder_forward.1} parent=1 // pred_check
      _
    $region35: #{encoder_forward.1} parent=1 // pred_check_branch
      %71 = sbr.rel (0) target = $region37
    $region36: #{encoder_forward.1} parent=1 // pred_region
      %73 = dma.done [#allocation7], 4096
    $region37: #{encoder_forward.1} parent=1 // pred_fallthru
      _
    // Predicated region
    $region38: #{encoder_forward.1} parent=1 // pred_check
      _
    $region39: #{encoder_forward.1} parent=1 // pred_check_branch
      %75 = sbr.rel (0) target = $region41
    $region40: #{encoder_forward.1} parent=1 // pred_region
      %77 = dma.done [#allocation7], 8192
    $region41: #{encoder_forward.1} parent=1 // pred_fallthru
      _
    %v79 = vld [vmem:[%s0] sm:$0xff]
    %v80 = vld [vmem:[%s0 + $0x8] sm:$0xff]
    %v81 = vld [vmem:[%s0 + $0x10] sm:$0xff]
    %v82 = vld [vmem:[%s0 + $0x18] sm:$0xff]
    %v83 = vld [vmem:[%s0 + $0x20] sm:$0xff]
    %v84 = vld [vmem:[%s0 + $0x28] sm:$0xff]
    %v85 = vld [vmem:[%s0 + $0x30] sm:$0xff]
    %v86 = vld [vmem:[%s0 + $0x38] sm:$0xff]
    %v87 = vlaneseq
    %v88 = vand.u32 %v87, 127
    %89 = vset.pattern.permute.xlu0 0
    %90 = vperm.xlu0 %89, %v79
    %v91 = vpop.permute.xlu0 %90
    %92 = vset.pattern.permute.xlu0 0
    %93 = vperm.xlu0 %92, %v80
    %v94 = vpop.permute.xlu0 %93
    %95 = vset.pattern.permute.xlu0 0
    %96 = vperm.xlu0 %95, %v81
    %v97 = vpop.permute.xlu0 %96
    %98 = vset.pattern.permute.xlu0 0
    %99 = vperm.xlu0 %98, %v82
    %v100 = vpop.permute.xlu0 %99
    %101 = vset.pattern.permute.xlu0 0
    %102 = vperm.xlu0 %101, %v83
    %v103 = vpop.permute.xlu0 %102
    %104 = vset.pattern.permute.xlu0 0
    %105 = vperm.xlu0 %104, %v84
    %v106 = vpop.permute.xlu0 %105
    %107 = vset.pattern.permute.xlu0 0
    %108 = vperm.xlu0 %107, %v85
    %v109 = vpop.permute.xlu0 %108
    %110 = vset.pattern.permute.xlu0 0
    %111 = vperm.xlu0 %110, %v86
    %v112 = vpop.permute.xlu0 %111
    %vm113 = vcmp.eq.s32.totalorder %v88, %v91
    %vm114 = vcmp.eq.s32.totalorder %v88, %v94
    %vm115 = vcmp.eq.s32.totalorder %v88, %v97
    %vm116 = vcmp.eq.s32.totalorder %v88, %v100
    %vm117 = vcmp.eq.s32.totalorder %v88, %v103
    %vm118 = vcmp.eq.s32.totalorder %v88, %v106
    %vm119 = vcmp.eq.s32.totalorder %v88, %v109
    %vm120 = vcmp.eq.s32.totalorder %v88, %v112
    %v121 = vsel %vm113, 1.0, 0.0
    %v122 = vsel %vm114, 1.0, 0.0
    %v123 = vsel %vm115, 1.0, 0.0
    %v124 = vsel %vm116, 1.0, 0.0
    %v125 = vsel %vm117, 1.0, 0.0
    %v126 = vsel %vm118, 1.0, 0.0
    %v127 = vsel %vm119, 1.0, 0.0
    %v128 = vsel %vm120, 1.0, 0.0
    %v129 = vpack.c.bf16 %v122, %v121
    %v130 = vpack.c.bf16 %v124, %v123
    %v131 = vpack.c.bf16 %v126, %v125
    %v132 = vpack.c.bf16 %v128, %v127
    %v133 = vld [vmem:[%s1] sm:$0xf]
    %v134 = vld [vmem:[%s1 + $0x4] sm:$0xf]
    %v135 = vld [vmem:[%s1 + $0x8] sm:$0xf]
    %v136 = vld [vmem:[%s1 + $0xc] sm:$0xf]
    %v137 = vld [vmem:[%s1 + $0x10] sm:$0xf]
    %v138 = vld [vmem:[%s1 + $0x14] sm:$0xf]
    %v139 = vld [vmem:[%s1 + $0x18] sm:$0xf]
    %v140 = vld [vmem:[%s1 + $0x1c] sm:$0xf]
    %v149 = vunpack.c.l.b16 %v133
    %v150 = vunpack.c.l.b16 %v134
    %v151 = vunpack.c.l.b16 %v135
    %v152 = vunpack.c.l.b16 %v136
    %v153 = vunpack.c.l.b16 %v137
    %v154 = vunpack.c.l.b16 %v138
    %v155 = vunpack.c.l.b16 %v139
    %v156 = vunpack.c.l.b16 %v140
    %v157 = vpack.c.b16 %v150, %v149
    %v158 = vpack.c.b16 %v152, %v151
    %v159 = vpack.c.b16 %v154, %v153
    %v160 = vpack.c.b16 %v156, %v155
    %vm165 = vcmask 523264
    %v167 = vsel %vm165, %v129, 0
    %v170 = vsel %vm165, %v130, 0
    %v173 = vsel %vm165, %v131, 0
    %v176 = vsel %vm165, %v132, 0
    %178 = vmatpush.bf16.msra.mxu0 0
    %179 = vmatpush.bf16.msra.mxu0 0
    %180 = vmatpush.bf16.msra.mxu0 0
    %181 = vmatpush.bf16.msra.mxu0 0
    %182 = vmatpush.bf16.msra.mxu0 %v160
    %183 = vmatpush.bf16.msra.mxu0 %v159
    %184 = vmatpush.bf16.msra.mxu0 %v158
    %185 = vmatpush.bf16.msra.mxu0 %v157
    %186 = vmatmul.bf16.gmra.mxu0 %v167
    %v187 = vpop.f32.mrf.mxu0
    %v188 = vadd.f32 0.0, %v187
    %v189 = vpop.f32.mrf.mxu0
    %v190 = vadd.f32 0.0, %v189
    %191 = vmatmul.bf16.gmra.mxu0 %v170
    %v192 = vpop.f32.mrf.mxu0
    %v193 = vadd.f32 0.0, %v192
    %v194 = vpop.f32.mrf.mxu0
    %v195 = vadd.f32 0.0, %v194
    %196 = vmatmul.bf16.gmra.mxu0 %v173
    %v197 = vpop.f32.mrf.mxu0
    %v198 = vadd.f32 0.0, %v197
    %v199 = vpop.f32.mrf.mxu0
    %v200 = vadd.f32 0.0, %v199
    %201 = vmatmul.bf16.gmra.mxu0 %v176
    %v202 = vpop.f32.mrf.mxu0
    %v203 = vadd.f32 0.0, %v202
    %v204 = vpop.f32.mrf.mxu0
    %v205 = vadd.f32 0.0, %v204
    %206 = vdwg.mxu0
    %v207 = vpack.c.bf16 %v190, %v188
    %v208 = vpack.c.bf16 %v195, %v193
    %v209 = vpack.c.bf16 %v200, %v198
    %v210 = vpack.c.bf16 %v205, %v203
    %v211 = vld [vmem:[#allocation3] sm:$0xff]
    %v212 = vld [vmem:[#allocation3 + $0x8] sm:$0xff]
    %v213 = vld [vmem:[#allocation3 + $0x10] sm:$0xff]
    %v214 = vld [vmem:[#allocation3 + $0x18] sm:$0xff]
    %v215 = vld [vmem:[#allocation3 + $0x20] sm:$0xff]
    %v216 = vld [vmem:[#allocation3 + $0x28] sm:$0xff]
    %v217 = vld [vmem:[#allocation3 + $0x30] sm:$0xff]
    %v218 = vld [vmem:[#allocation3 + $0x38] sm:$0xff]
    %v219 = vld [vmem:[#allocation3 + $0x40] sm:$0xff]
    %v220 = vld [vmem:[#allocation3 + $0x48] sm:$0xff]
    %v221 = vld [vmem:[#allocation3 + $0x50] sm:$0xff]
    %v222 = vld [vmem:[#allocation3 + $0x58] sm:$0xff]
    %v223 = vld [vmem:[#allocation3 + $0x60] sm:$0xff]
    %v224 = vld [vmem:[#allocation3 + $0x68] sm:$0xff]
    %v225 = vld [vmem:[#allocation3 + $0x70] sm:$0xff]
    %v226 = vld [vmem:[#allocation3 + $0x78] sm:$0xff]
    %v227 = vld [vmem:[#allocation3 + $0x80] sm:$0xff]
    %v228 = vld [vmem:[#allocation3 + $0x88] sm:$0xff]
    %v229 = vld [vmem:[#allocation3 + $0x90] sm:$0xff]
    %v230 = vld [vmem:[#allocation3 + $0x98] sm:$0xff]
    %v231 = vld [vmem:[#allocation3 + $0xa0] sm:$0xff]
    %v232 = vld [vmem:[#allocation3 + $0xa8] sm:$0xff]
    %v233 = vld [vmem:[#allocation3 + $0xb0] sm:$0xff]
    %v234 = vld [vmem:[#allocation3 + $0xb8] sm:$0xff]
    %v235 = vld [vmem:[#allocation3 + $0xc0] sm:$0xff]
    %v236 = vld [vmem:[#allocation3 + $0xc8] sm:$0xff]
    %v237 = vld [vmem:[#allocation3 + $0xd0] sm:$0xff]
    %v238 = vld [vmem:[#allocation3 + $0xd8] sm:$0xff]
    %v239 = vld [vmem:[#allocation3 + $0xe0] sm:$0xff]
    %v240 = vld [vmem:[#allocation3 + $0xe8] sm:$0xff]
    %v241 = vld [vmem:[#allocation3 + $0xf0] sm:$0xff]
    %v242 = vld [vmem:[#allocation3 + $0xf8] sm:$0xff]
    %v243 = vld [vmem:[%s4] sm:$0xf]
    %v245 = vperm.slane %v243, 0
    %v246 = vperm.slane %v243, 1
    %v247 = vperm.slane %v243, 2
    %v248 = vperm.slane %v243, 3
    %v285 = vunpack.c.l.b16 %v211
    %v286 = vunpack.c.h.b16 %v211
    %v287 = vunpack.c.l.b16 %v212
    %v288 = vunpack.c.h.b16 %v212
    %v289 = vunpack.c.l.b16 %v213
    %v290 = vunpack.c.h.b16 %v213
    %v291 = vunpack.c.l.b16 %v214
    %v292 = vunpack.c.h.b16 %v214
    %v293 = vunpack.c.l.b16 %v215
    %v294 = vunpack.c.h.b16 %v215
    %v295 = vunpack.c.l.b16 %v216
    %v296 = vunpack.c.h.b16 %v216
    %v297 = vunpack.c.l.b16 %v217
    %v298 = vunpack.c.h.b16 %v217
    %v299 = vunpack.c.l.b16 %v218
    %v300 = vunpack.c.h.b16 %v218
    %v301 = vunpack.c.l.b16 %v219
    %v302 = vunpack.c.h.b16 %v219
    %v303 = vunpack.c.l.b16 %v220
    %v304 = vunpack.c.h.b16 %v220
    %v305 = vunpack.c.l.b16 %v221
    %v306 = vunpack.c.h.b16 %v221
    %v307 = vunpack.c.l.b16 %v222
    %v308 = vunpack.c.h.b16 %v222
    %v309 = vunpack.c.l.b16 %v223
    %v310 = vunpack.c.h.b16 %v223
    %v311 = vunpack.c.l.b16 %v224
    %v312 = vunpack.c.h.b16 %v224
    %v313 = vunpack.c.l.b16 %v225
    %v314 = vunpack.c.h.b16 %v225
    %v315 = vunpack.c.l.b16 %v226
    %v316 = vunpack.c.h.b16 %v226
    %v317 = vunpack.c.l.b16 %v227
    %v318 = vunpack.c.h.b16 %v227
    %v319 = vunpack.c.l.b16 %v228
    %v320 = vunpack.c.h.b16 %v228
    %v321 = vunpack.c.l.b16 %v229
    %v322 = vunpack.c.h.b16 %v229
    %v323 = vunpack.c.l.b16 %v230
    %v324 = vunpack.c.h.b16 %v230
    %v325 = vunpack.c.l.b16 %v231
    %v326 = vunpack.c.h.b16 %v231
    %v327 = vunpack.c.l.b16 %v232
    %v328 = vunpack.c.h.b16 %v232
    %v329 = vunpack.c.l.b16 %v233
    %v330 = vunpack.c.h.b16 %v233
    %v331 = vunpack.c.l.b16 %v234
    %v332 = vunpack.c.h.b16 %v234
    %v333 = vunpack.c.l.b16 %v235
    %v334 = vunpack.c.h.b16 %v235
    %v335 = vunpack.c.l.b16 %v236
    %v336 = vunpack.c.h.b16 %v236
    %v337 = vunpack.c.l.b16 %v237
    %v338 = vunpack.c.h.b16 %v237
    %v339 = vunpack.c.l.b16 %v238
    %v340 = vunpack.c.h.b16 %v238
    %v341 = vunpack.c.l.b16 %v239
    %v342 = vunpack.c.h.b16 %v239
    %v343 = vunpack.c.l.b16 %v240
    %v344 = vunpack.c.h.b16 %v240
    %v345 = vunpack.c.l.b16 %v241
    %v346 = vunpack.c.h.b16 %v241
    %v347 = vunpack.c.l.b16 %v242
    %v348 = vunpack.c.h.b16 %v242
    %v349 = vpack.c.b16 %v289, %v285
    %v350 = vpack.c.b16 %v290, %v286
    %v351 = vpack.c.b16 %v291, %v287
    %v352 = vpack.c.b16 %v292, %v288
    %v353 = vpack.c.b16 %v297, %v293
    %v354 = vpack.c.b16 %v298, %v294
    %v355 = vpack.c.b16 %v299, %v295
    %v356 = vpack.c.b16 %v300, %v296
    %v357 = vpack.c.b16 %v305, %v301
    %v358 = vpack.c.b16 %v306, %v302
    %v359 = vpack.c.b16 %v307, %v303
    %v360 = vpack.c.b16 %v308, %v304
    %v361 = vpack.c.b16 %v313, %v309
    %v362 = vpack.c.b16 %v314, %v310
    %v363 = vpack.c.b16 %v315, %v311
    %v364 = vpack.c.b16 %v316, %v312
    %v365 = vpack.c.b16 %v321, %v317
    %v366 = vpack.c.b16 %v322, %v318
    %v367 = vpack.c.b16 %v323, %v319
    %v368 = vpack.c.b16 %v324, %v320
    %v369 = vpack.c.b16 %v329, %v325
    %v370 = vpack.c.b16 %v330, %v326
    %v371 = vpack.c.b16 %v331, %v327
    %v372 = vpack.c.b16 %v332, %v328
    %v373 = vpack.c.b16 %v337, %v333
    %v374 = vpack.c.b16 %v338, %v334
    %v375 = vpack.c.b16 %v339, %v335
    %v376 = vpack.c.b16 %v340, %v336
    %v377 = vpack.c.b16 %v345, %v341
    %v378 = vpack.c.b16 %v346, %v342
    %v379 = vpack.c.b16 %v347, %v343
    %v380 = vpack.c.b16 %v348, %v344
    %413 = vmatpush.bf16.msra.mxu0 %v377
    %414 = vmatpush.bf16.msra.mxu0 %v373
    %415 = vmatpush.bf16.msra.mxu0 %v369
    %416 = vmatpush.bf16.msra.mxu0 %v365
    %417 = vmatpush.bf16.msra.mxu0 %v361
    %418 = vmatpush.bf16.msra.mxu0 %v357
    %419 = vmatpush.bf16.msra.mxu0 %v353
    %420 = vmatpush.bf16.msra.mxu0 %v349
    %421 = vmatmul.bf16.gmra.mxu0 %v207
    %v422 = vpop.f32.mrf.mxu0
    %v423 = vadd.f32 %v245, %v422
    %v424 = vpop.f32.mrf.mxu0
    %v425 = vadd.f32 %v245, %v424
    %426 = vmatmul.bf16.gmra.mxu0 %v208
    %v427 = vpop.f32.mrf.mxu0
    %v428 = vadd.f32 %v245, %v427
    %v429 = vpop.f32.mrf.mxu0
    %v430 = vadd.f32 %v245, %v429
    %431 = vmatmul.bf16.gmra.mxu0 %v209
    %v432 = vpop.f32.mrf.mxu0
    %v433 = vadd.f32 %v245, %v432
    %v434 = vpop.f32.mrf.mxu0
    %v435 = vadd.f32 %v245, %v434
    %436 = vmatmul.bf16.gmra.mxu0 %v210
    %v437 = vpop.f32.mrf.mxu0
    %v438 = vadd.f32 %v245, %v437
    %v439 = vpop.f32.mrf.mxu0
    %v440 = vadd.f32 %v245, %v439
    %441 = vdwg.mxu0
    %442 = vmatpush.bf16.msra.mxu0 %v378
    %443 = vmatpush.bf16.msra.mxu0 %v374
    %444 = vmatpush.bf16.msra.mxu0 %v370
    %445 = vmatpush.bf16.msra.mxu0 %v366
    %446 = vmatpush.bf16.msra.mxu0 %v362
    %447 = vmatpush.bf16.msra.mxu0 %v358
    %448 = vmatpush.bf16.msra.mxu0 %v354
    %449 = vmatpush.bf16.msra.mxu0 %v350
    %450 = vmatmul.bf16.gmra.mxu0 %v207
    %v451 = vpop.f32.mrf.mxu0
    %v452 = vadd.f32 %v246, %v451
    %v453 = vpop.f32.mrf.mxu0
    %v454 = vadd.f32 %v246, %v453
    %455 = vmatmul.bf16.gmra.mxu0 %v208
    %v456 = vpop.f32.mrf.mxu0
    %v457 = vadd.f32 %v246, %v456
    %v458 = vpop.f32.mrf.mxu0
    %v459 = vadd.f32 %v246, %v458
    %460 = vmatmul.bf16.gmra.mxu0 %v209
    %v461 = vpop.f32.mrf.mxu0
    %v462 = vadd.f32 %v246, %v461
    %v463 = vpop.f32.mrf.mxu0
    %v464 = vadd.f32 %v246, %v463
    %465 = vmatmul.bf16.gmra.mxu0 %v210
    %v466 = vpop.f32.mrf.mxu0
    %v467 = vadd.f32 %v246, %v466
    %v468 = vpop.f32.mrf.mxu0
    %v469 = vadd.f32 %v246, %v468
    %470 = vdwg.mxu0
    %471 = vmatpush.bf16.msra.mxu0 %v379
    %472 = vmatpush.bf16.msra.mxu0 %v375
    %473 = vmatpush.bf16.msra.mxu0 %v371
    %474 = vmatpush.bf16.msra.mxu0 %v367
    %475 = vmatpush.bf16.msra.mxu0 %v363
    %476 = vmatpush.bf16.msra.mxu0 %v359
    %477 = vmatpush.bf16.msra.mxu0 %v355
    %478 = vmatpush.bf16.msra.mxu0 %v351
    %479 = vmatmul.bf16.gmra.mxu0 %v207
    %v480 = vpop.f32.mrf.mxu0
    %v481 = vadd.f32 %v247, %v480
    %v482 = vpop.f32.mrf.mxu0
    %v483 = vadd.f32 %v247, %v482
    %484 = vmatmul.bf16.gmra.mxu0 %v208
    %v485 = vpop.f32.mrf.mxu0
    %v486 = vadd.f32 %v247, %v485
    %v487 = vpop.f32.mrf.mxu0
    %v488 = vadd.f32 %v247, %v487
    %489 = vmatmul.bf16.gmra.mxu0 %v209
    %v490 = vpop.f32.mrf.mxu0
    %v491 = vadd.f32 %v247, %v490
    %v492 = vpop.f32.mrf.mxu0
    %v493 = vadd.f32 %v247, %v492
    %494 = vmatmul.bf16.gmra.mxu0 %v210
    %v495 = vpop.f32.mrf.mxu0
    %v496 = vadd.f32 %v247, %v495
    %v497 = vpop.f32.mrf.mxu0
    %v498 = vadd.f32 %v247, %v497
    %499 = vdwg.mxu0
    %500 = vmatpush.bf16.msra.mxu0 %v380
    %501 = vmatpush.bf16.msra.mxu0 %v376
    %502 = vmatpush.bf16.msra.mxu0 %v372
    %503 = vmatpush.bf16.msra.mxu0 %v368
    %504 = vmatpush.bf16.msra.mxu0 %v364
    %505 = vmatpush.bf16.msra.mxu0 %v360
    %506 = vmatpush.bf16.msra.mxu0 %v356
    %507 = vmatpush.bf16.msra.mxu0 %v352
    %508 = vmatmul.bf16.gmra.mxu0 %v207
    %v509 = vpop.f32.mrf.mxu0
    %v510 = vadd.f32 %v248, %v509
    %v511 = vpop.f32.mrf.mxu0
    %v512 = vadd.f32 %v248, %v511
    %513 = vmatmul.bf16.gmra.mxu0 %v208
    %v514 = vpop.f32.mrf.mxu0
    %v515 = vadd.f32 %v248, %v514
    %v516 = vpop.f32.mrf.mxu0
    %v517 = vadd.f32 %v248, %v516
    %518 = vmatmul.bf16.gmra.mxu0 %v209
    %v519 = vpop.f32.mrf.mxu0
    %v520 = vadd.f32 %v248, %v519
    %v521 = vpop.f32.mrf.mxu0
    %v522 = vadd.f32 %v248, %v521
    %523 = vmatmul.bf16.gmra.mxu0 %v210
    %v524 = vpop.f32.mrf.mxu0
    %v525 = vadd.f32 %v248, %v524
    %v526 = vpop.f32.mrf.mxu0
    %v527 = vadd.f32 %v248, %v526
    %528 = vdwg.mxu0
    %529 = vst [vmem:[#allocation2] sm:$0xff] %v423
    %530 = vst [vmem:[#allocation2 + $0x8] sm:$0xff] %v452
    %531 = vst [vmem:[#allocation2 + $0x10] sm:$0xff] %v481
    %532 = vst [vmem:[#allocation2 + $0x18] sm:$0xff] %v510
    %533 = vst [vmem:[#allocation2 + $0x20] sm:$0xff] %v425
    %534 = vst [vmem:[#allocation2 + $0x28] sm:$0xff] %v454
    %535 = vst [vmem:[#allocation2 + $0x30] sm:$0xff] %v483
    %536 = vst [vmem:[#allocation2 + $0x38] sm:$0xff] %v512
    %537 = vst [vmem:[#allocation2 + $0x40] sm:$0xff] %v428
    %538 = vst [vmem:[#allocation2 + $0x48] sm:$0xff] %v457
    %539 = vst [vmem:[#allocation2 + $0x50] sm:$0xff] %v486
    %540 = vst [vmem:[#allocation2 + $0x58] sm:$0xff] %v515
    %541 = vst [vmem:[#allocation2 + $0x60] sm:$0xff] %v430
    %542 = vst [vmem:[#allocation2 + $0x68] sm:$0xff] %v459
    %543 = vst [vmem:[#allocation2 + $0x70] sm:$0xff] %v488
    %544 = vst [vmem:[#allocation2 + $0x78] sm:$0xff] %v517
    %545 = vst [vmem:[#allocation2 + $0x80] sm:$0xff] %v433
    %546 = vst [vmem:[#allocation2 + $0x88] sm:$0xff] %v462
    %547 = vst [vmem:[#allocation2 + $0x90] sm:$0xff] %v491
    %548 = vst [vmem:[#allocation2 + $0x98] sm:$0xff] %v520
    %549 = vst [vmem:[#allocation2 + $0xa0] sm:$0xff] %v435
    %550 = vst [vmem:[#allocation2 + $0xa8] sm:$0xff] %v464
    %551 = vst [vmem:[#allocation2 + $0xb0] sm:$0xff] %v493
    %552 = vst [vmem:[#allocation2 + $0xb8] sm:$0xff] %v522
    %553 = vst [vmem:[#allocation2 + $0xc0] sm:$0xff] %v438
    %554 = vst [vmem:[#allocation2 + $0xc8] sm:$0xff] %v467
    %555 = vst [vmem:[#allocation2 + $0xd0] sm:$0xff] %v496
    %556 = vst [vmem:[#allocation2 + $0xd8] sm:$0xff] %v525
    %557 = vst [vmem:[#allocation2 + $0xe0] sm:$0xff] %v440
    %558 = vst [vmem:[#allocation2 + $0xe8] sm:$0xff] %v469
    %559 = vst [vmem:[#allocation2 + $0xf0] sm:$0xff] %v498
    %560 = vst [vmem:[#allocation2 + $0xf8] sm:$0xff] %v527
    %v561 = vld [vmem:[#allocation2] sm:$0xff]
    %v562 = vld [vmem:[#allocation2 + $0x8] sm:$0xff]
    %v563 = vld [vmem:[#allocation2 + $0x10] sm:$0xff]
    %v564 = vld [vmem:[#allocation2 + $0x18] sm:$0xff]
    %v565 = vld [vmem:[#allocation6] sm:$0xff]
    %v566 = vld [vmem:[#allocation6 + $0x8] sm:$0xff]
    %v567 = vld [vmem:[#allocation6 + $0x10] sm:$0xff]
    %v568 = vld [vmem:[#allocation6 + $0x18] sm:$0xff]
    %v569 = vld [vmem:[#allocation6 + $0x20] sm:$0xff]
    %v570 = vld [vmem:[#allocation6 + $0x28] sm:$0xff]
    %v571 = vld [vmem:[#allocation6 + $0x30] sm:$0xff]
    %v572 = vld [vmem:[#allocation6 + $0x38] sm:$0xff]
    %v573 = vld [vmem:[#allocation6 + $0x40] sm:$0xff]
    %v574 = vld [vmem:[#allocation6 + $0x48] sm:$0xff]
    %v575 = vld [vmem:[#allocation6 + $0x50] sm:$0xff]
    %v576 = vld [vmem:[#allocation6 + $0x58] sm:$0xff]
    %v577 = vld [vmem:[#allocation6 + $0x60] sm:$0xff]
    %v578 = vld [vmem:[#allocation6 + $0x68] sm:$0xff]
    %v579 = vld [vmem:[#allocation6 + $0x70] sm:$0xff]
    %v580 = vld [vmem:[#allocation6 + $0x78] sm:$0xff]
    %v581 = vld [vmem:[#allocation6 + $0x80] sm:$0xff]
    %v582 = vld [vmem:[#allocation6 + $0x88] sm:$0xff]
    %v583 = vld [vmem:[#allocation6 + $0x90] sm:$0xff]
    %v584 = vld [vmem:[#allocation6 + $0x98] sm:$0xff]
    %v585 = vld [vmem:[#allocation6 + $0xa0] sm:$0xff]
    %v586 = vld [vmem:[#allocation6 + $0xa8] sm:$0xff]
    %v587 = vld [vmem:[#allocation6 + $0xb0] sm:$0xff]
    %v588 = vld [vmem:[#allocation6 + $0xb8] sm:$0xff]
    %v589 = vld [vmem:[#allocation6 + $0xc0] sm:$0xff]
    %v590 = vld [vmem:[#allocation6 + $0xc8] sm:$0xff]
    %v591 = vld [vmem:[#allocation6 + $0xd0] sm:$0xff]
    %v592 = vld [vmem:[#allocation6 + $0xd8] sm:$0xff]
    %v593 = vld [vmem:[#allocation6 + $0xe0] sm:$0xff]
    %v594 = vld [vmem:[#allocation6 + $0xe8] sm:$0xff]
    %v595 = vld [vmem:[#allocation6 + $0xf0] sm:$0xff]
    %v596 = vld [vmem:[#allocation6 + $0xf8] sm:$0xff]
    %v629 = vunpack.c.l.b16 %v565
    %v630 = vunpack.c.h.b16 %v565
    %v631 = vunpack.c.l.b16 %v566
    %v632 = vunpack.c.h.b16 %v566
    %v633 = vunpack.c.l.b16 %v567
    %v634 = vunpack.c.h.b16 %v567
    %v635 = vunpack.c.l.b16 %v568
    %v636 = vunpack.c.h.b16 %v568
    %v637 = vunpack.c.l.b16 %v569
    %v638 = vunpack.c.h.b16 %v569
    %v639 = vunpack.c.l.b16 %v570
    %v640 = vunpack.c.h.b16 %v570
    %v641 = vunpack.c.l.b16 %v571
    %v642 = vunpack.c.h.b16 %v571
    %v643 = vunpack.c.l.b16 %v572
    %v644 = vunpack.c.h.b16 %v572
    %v645 = vunpack.c.l.b16 %v573
    %v646 = vunpack.c.h.b16 %v573
    %v647 = vunpack.c.l.b16 %v574
    %v648 = vunpack.c.h.b16 %v574
    %v649 = vunpack.c.l.b16 %v575
    %v650 = vunpack.c.h.b16 %v575
    %v651 = vunpack.c.l.b16 %v576
    %v652 = vunpack.c.h.b16 %v576
    %v653 = vunpack.c.l.b16 %v577
    %v654 = vunpack.c.h.b16 %v577
    %v655 = vunpack.c.l.b16 %v578
    %v656 = vunpack.c.h.b16 %v578
    %v657 = vunpack.c.l.b16 %v579
    %v658 = vunpack.c.h.b16 %v579
    %v659 = vunpack.c.l.b16 %v580
    %v660 = vunpack.c.h.b16 %v580
    %v661 = vunpack.c.l.b16 %v581
    %v662 = vunpack.c.h.b16 %v581
    %v663 = vunpack.c.l.b16 %v582
    %v664 = vunpack.c.h.b16 %v582
    %v665 = vunpack.c.l.b16 %v583
    %v666 = vunpack.c.h.b16 %v583
    %v667 = vunpack.c.l.b16 %v584
    %v668 = vunpack.c.h.b16 %v584
    %v669 = vunpack.c.l.b16 %v585
    %v670 = vunpack.c.h.b16 %v585
    %v671 = vunpack.c.l.b16 %v586
    %v672 = vunpack.c.h.b16 %v586
    %v673 = vunpack.c.l.b16 %v587
    %v674 = vunpack.c.h.b16 %v587
    %v675 = vunpack.c.l.b16 %v588
    %v676 = vunpack.c.h.b16 %v588
    %v677 = vunpack.c.l.b16 %v589
    %v678 = vunpack.c.h.b16 %v589
    %v679 = vunpack.c.l.b16 %v590
    %v680 = vunpack.c.h.b16 %v590
    %v681 = vunpack.c.l.b16 %v591
    %v682 = vunpack.c.h.b16 %v591
    %v683 = vunpack.c.l.b16 %v592
    %v684 = vunpack.c.h.b16 %v592
    %v685 = vunpack.c.l.b16 %v593
    %v686 = vunpack.c.h.b16 %v593
    %v687 = vunpack.c.l.b16 %v594
    %v688 = vunpack.c.h.b16 %v594
    %v689 = vunpack.c.l.b16 %v595
    %v690 = vunpack.c.h.b16 %v595
    %v691 = vunpack.c.l.b16 %v596
    %v692 = vunpack.c.h.b16 %v596
    %v693 = vpack.c.b16 %v633, %v629
    %v694 = vpack.c.b16 %v634, %v630
    %v695 = vpack.c.b16 %v635, %v631
    %v696 = vpack.c.b16 %v636, %v632
    %v697 = vpack.c.b16 %v641, %v637
    %v698 = vpack.c.b16 %v642, %v638
    %v699 = vpack.c.b16 %v643, %v639
    %v700 = vpack.c.b16 %v644, %v640
    %v701 = vpack.c.b16 %v649, %v645
    %v702 = vpack.c.b16 %v650, %v646
    %v703 = vpack.c.b16 %v651, %v647
    %v704 = vpack.c.b16 %v652, %v648
    %v705 = vpack.c.b16 %v657, %v653
    %v706 = vpack.c.b16 %v658, %v654
    %v707 = vpack.c.b16 %v659, %v655
    %v708 = vpack.c.b16 %v660, %v656
    %v709 = vpack.c.b16 %v665, %v661
    %v710 = vpack.c.b16 %v666, %v662
    %v711 = vpack.c.b16 %v667, %v663
    %v712 = vpack.c.b16 %v668, %v664
    %v713 = vpack.c.b16 %v673, %v669
    %v714 = vpack.c.b16 %v674, %v670
    %v715 = vpack.c.b16 %v675, %v671
    %v716 = vpack.c.b16 %v676, %v672
    %v717 = vpack.c.b16 %v681, %v677
    %v718 = vpack.c.b16 %v682, %v678
    %v719 = vpack.c.b16 %v683, %v679
    %v720 = vpack.c.b16 %v684, %v680
    %v721 = vpack.c.b16 %v689, %v685
    %v722 = vpack.c.b16 %v690, %v686
    %v723 = vpack.c.b16 %v691, %v687
    %v724 = vpack.c.b16 %v692, %v688
    %757 = vmatpush.bf16.msra.mxu0 %v721
    %758 = vmatpush.bf16.msra.mxu0 %v717
    %759 = vmatpush.bf16.msra.mxu0 %v713
    %760 = vmatpush.bf16.msra.mxu0 %v709
    %761 = vmatpush.bf16.msra.mxu0 %v705
    %762 = vmatpush.bf16.msra.mxu0 %v701
    %763 = vmatpush.bf16.msra.mxu0 %v697
    %764 = vmatpush.bf16.msra.mxu0 %v693
    %765 = vmatmul.bf16.gmra.mxu0 0
    %v766 = vpop.f32.mrf.mxu0
    %v767 = vadd.f32 0.0, %v766
    %v768 = vpop.f32.mrf.mxu0
    %769 = vdwg.mxu0
    %770 = vmatpush.bf16.msra.mxu0 %v722
    %771 = vmatpush.bf16.msra.mxu0 %v718
    %772 = vmatpush.bf16.msra.mxu0 %v714
    %773 = vmatpush.bf16.msra.mxu0 %v710
    %774 = vmatpush.bf16.msra.mxu0 %v706
    %775 = vmatpush.bf16.msra.mxu0 %v702
    %776 = vmatpush.bf16.msra.mxu0 %v698
    %777 = vmatpush.bf16.msra.mxu0 %v694
    %778 = vmatmul.bf16.gmra.mxu0 0
    %v779 = vpop.f32.mrf.mxu0
    %v780 = vadd.f32 0.0, %v779
    %v781 = vpop.f32.mrf.mxu0
    %782 = vdwg.mxu0
    %783 = vmatpush.bf16.msra.mxu0 %v723
    %784 = vmatpush.bf16.msra.mxu0 %v719
    %785 = vmatpush.bf16.msra.mxu0 %v715
    %786 = vmatpush.bf16.msra.mxu0 %v711
    %787 = vmatpush.bf16.msra.mxu0 %v707
    %788 = vmatpush.bf16.msra.mxu0 %v703
    %789 = vmatpush.bf16.msra.mxu0 %v699
    %790 = vmatpush.bf16.msra.mxu0 %v695
    %791 = vmatmul.bf16.gmra.mxu0 0
    %v792 = vpop.f32.mrf.mxu0
    %v793 = vadd.f32 0.0, %v792
    %v794 = vpop.f32.mrf.mxu0
    %795 = vdwg.mxu0
    %796 = vmatpush.bf16.msra.mxu0 %v724
    %797 = vmatpush.bf16.msra.mxu0 %v720
    %798 = vmatpush.bf16.msra.mxu0 %v716
    %799 = vmatpush.bf16.msra.mxu0 %v712
    %800 = vmatpush.bf16.msra.mxu0 %v708
    %801 = vmatpush.bf16.msra.mxu0 %v704
    %802 = vmatpush.bf16.msra.mxu0 %v700
    %803 = vmatpush.bf16.msra.mxu0 %v696
    %804 = vmatmul.bf16.gmra.mxu0 0
    %v805 = vpop.f32.mrf.mxu0
    %v806 = vadd.f32 0.0, %v805
    %v807 = vpop.f32.mrf.mxu0
    %808 = vdwg.mxu0
    %v809 = vadd.f32 %v561, %v767
    %v810 = vadd.f32 %v562, %v780
    %v811 = vadd.f32 %v563, %v793
    %v812 = vadd.f32 %v564, %v806
    %v813 = vxor.u32 %v809, 2147483648
    %v814 = vxor.u32 %v810, 2147483648
    %v815 = vxor.u32 %v811, 2147483648
    %v816 = vmul.f32 %v813, 1.442695
    %v817 = vpow.pop %v816
    %v818 = vmul.f32 %v814, 1.442695
    %v819 = vpow.pop %v818
    %v820 = vmul.f32 %v815, 1.442695
    %v821 = vpow.pop %v820
    %v822 = vadd.f32 %v817, 1.0
    %v823 = vadd.f32 %v819, 1.0
    %v824 = vadd.f32 %v821, 1.0
    %v825 = vrcp.pop %v822
    %v826 = vmul.f32 %v822, %v825
    %v827 = vsub.f32 1.0, %v826
    %v828 = vmul.f32 %v825, %v827
    %v829 = vadd.f32 %v825, %v828
    %vm830 = vweird.f32 %v822
    %vm831 = vweird.f32 %v825
    %vm832 = vmor %vm830, %vm831
    %v833 = vsel %vm832, %v825, %v829
    %v834 = vand.u32 2147483647, %v822
    %vm835 = vcmp.eq.f32.partialorder %v834, 8.507059e+37
    %v836 = vand.u32 %v822, 2147483648
    %v837 = vor.u32 1.1754944e-38, %v836
    %v838 = vsel %vm835, %v837, %v833
    %v839 = vmul.f32 1.0, %v838
    %v840 = vrcp.pop %v823
    %v841 = vmul.f32 %v823, %v840
    %v842 = vsub.f32 1.0, %v841
    %v843 = vmul.f32 %v840, %v842
    %v844 = vadd.f32 %v840, %v843
    %vm845 = vweird.f32 %v823
    %vm846 = vweird.f32 %v840
    %vm847 = vmor %vm845, %vm846
    %v848 = vsel %vm847, %v840, %v844
    %v849 = vand.u32 2147483647, %v823
    %vm850 = vcmp.eq.f32.partialorder %v849, 8.507059e+37
    %v851 = vand.u32 %v823, 2147483648
    %v852 = vor.u32 1.1754944e-38, %v851
    %v853 = vsel %vm850, %v852, %v848
    %v854 = vmul.f32 1.0, %v853
    %v855 = vrcp.pop %v824
    %v856 = vmul.f32 %v824, %v855
    %v857 = vsub.f32 1.0, %v856
    %v858 = vmul.f32 %v855, %v857
    %v859 = vadd.f32 %v855, %v858
    %vm860 = vweird.f32 %v824
    %vm861 = vweird.f32 %v855
    %vm862 = vmor %vm860, %vm861
    %v863 = vsel %vm862, %v855, %v859
    %v864 = vand.u32 2147483647, %v824
    %vm865 = vcmp.eq.f32.partialorder %v864, 8.507059e+37
    %v866 = vand.u32 %v824, 2147483648
    %v867 = vor.u32 1.1754944e-38, %v866
    %v868 = vsel %vm865, %v867, %v863
    %v869 = vmul.f32 1.0, %v868
    %v870 = vtanh.pop %v812
    %v871 = vmul.f32 %v854, 0.0
    %v872 = vmul.f32 %v839, %v870
    %v873 = vadd.f32 %v871, %v872
    %v874 = vtanh.pop %v873
    %v875 = vmul.f32 %v869, %v874
    %v876 = vld [vmem:[#allocation2 + $0x20] sm:$0xff]
    %v877 = vld [vmem:[#allocation2 + $0x28] sm:$0xff]
    %v878 = vld [vmem:[#allocation2 + $0x30] sm:$0xff]
    %v879 = vld [vmem:[#allocation2 + $0x38] sm:$0xff]
    %v880 = vpack.c.bf16 %v875, %v875
    %881 = vmatpush.bf16.msra.mxu0 %v721
    %882 = vmatpush.bf16.msra.mxu0 %v717
    %883 = vmatpush.bf16.msra.mxu0 %v713
    %884 = vmatpush.bf16.msra.mxu0 %v709
    %885 = vmatpush.bf16.msra.mxu0 %v705
    %886 = vmatpush.bf16.msra.mxu0 %v701
    %887 = vmatpush.bf16.msra.mxu0 %v697
    %888 = vmatpush.bf16.msra.mxu0 %v693
    %889 = vmatmul.bf16.gmra.mxu0 %v880
    %v890 = vpop.f32.mrf.mxu0
    %v891 = vadd.f32 0.0, %v890
    %v892 = vpop.f32.mrf.mxu0
    %893 = vdwg.mxu0
    %894 = vmatpush.bf16.msra.mxu0 %v722
    %895 = vmatpush.bf16.msra.mxu0 %v718
    %896 = vmatpush.bf16.msra.mxu0 %v714
    %897 = vmatpush.bf16.msra.mxu0 %v710
    %898 = vmatpush.bf16.msra.mxu0 %v706
    %899 = vmatpush.bf16.msra.mxu0 %v702
    %900 = vmatpush.bf16.msra.mxu0 %v698
    %901 = vmatpush.bf16.msra.mxu0 %v694
    %902 = vmatmul.bf16.gmra.mxu0 %v880
    %v903 = vpop.f32.mrf.mxu0
    %v904 = vadd.f32 0.0, %v903
    %v905 = vpop.f32.mrf.mxu0
    %906 = vdwg.mxu0
    %907 = vmatpush.bf16.msra.mxu0 %v723
    %908 = vmatpush.bf16.msra.mxu0 %v719
    %909 = vmatpush.bf16.msra.mxu0 %v715
    %910 = vmatpush.bf16.msra.mxu0 %v711
    %911 = vmatpush.bf16.msra.mxu0 %v707
    %912 = vmatpush.bf16.msra.mxu0 %v703
    %913 = vmatpush.bf16.msra.mxu0 %v699
    %914 = vmatpush.bf16.msra.mxu0 %v695
    %915 = vmatmul.bf16.gmra.mxu0 %v880
    %v916 = vpop.f32.mrf.mxu0
    %v917 = vadd.f32 0.0, %v916
    %v918 = vpop.f32.mrf.mxu0
    %919 = vdwg.mxu0
    %920 = vmatpush.bf16.msra.mxu0 %v724
    %921 = vmatpush.bf16.msra.mxu0 %v720
    %922 = vmatpush.bf16.msra.mxu0 %v716
    %923 = vmatpush.bf16.msra.mxu0 %v712
    %924 = vmatpush.bf16.msra.mxu0 %v708
    %925 = vmatpush.bf16.msra.mxu0 %v704
    %926 = vmatpush.bf16.msra.mxu0 %v700
    %927 = vmatpush.bf16.msra.mxu0 %v696
    %928 = vmatmul.bf16.gmra.mxu0 %v880
    %v929 = vpop.f32.mrf.mxu0
    %v930 = vadd.f32 0.0, %v929
    %v931 = vpop.f32.mrf.mxu0
    %932 = vdwg.mxu0
    %v933 = vadd.f32 %v876, %v891
    %v934 = vadd.f32 %v877, %v904
    %v935 = vadd.f32 %v878, %v917
    %v936 = vadd.f32 %v879, %v930
    %v937 = vxor.u32 %v933, 2147483648
    %v938 = vxor.u32 %v934, 2147483648
    %v939 = vxor.u32 %v935, 2147483648
    %v940 = vmul.f32 %v937, 1.442695
    %v941 = vpow.pop %v940
    %v942 = vmul.f32 %v938, 1.442695
    %v943 = vpow.pop %v942
    %v944 = vmul.f32 %v939, 1.442695
    %v945 = vpow.pop %v944
    %v946 = vadd.f32 %v941, 1.0
    %v947 = vadd.f32 %v943, 1.0
    %v948 = vadd.f32 %v945, 1.0
    %v949 = vrcp.pop %v946
    %v950 = vmul.f32 %v946, %v949
    %v951 = vsub.f32 1.0, %v950
    %v952 = vmul.f32 %v949, %v951
    %v953 = vadd.f32 %v949, %v952
    %vm954 = vweird.f32 %v946
    %vm955 = vweird.f32 %v949
    %vm956 = vmor %vm954, %vm955
    %v957 = vsel %vm956, %v949, %v953
    %v958 = vand.u32 2147483647, %v946
    %vm959 = vcmp.eq.f32.partialorder %v958, 8.507059e+37
    %v960 = vand.u32 %v946, 2147483648
    %v961 = vor.u32 1.1754944e-38, %v960
    %v962 = vsel %vm959, %v961, %v957
    %v963 = vmul.f32 1.0, %v962
    %v964 = vrcp.pop %v947
    %v965 = vmul.f32 %v947, %v964
    %v966 = vsub.f32 1.0, %v965
    %v967 = vmul.f32 %v964, %v966
    %v968 = vadd.f32 %v964, %v967
    %vm969 = vweird.f32 %v947
    %vm970 = vweird.f32 %v964
    %vm971 = vmor %vm969, %vm970
    %v972 = vsel %vm971, %v964, %v968
    %v973 = vand.u32 2147483647, %v947
    %vm974 = vcmp.eq.f32.partialorder %v973, 8.507059e+37
    %v975 = vand.u32 %v947, 2147483648
    %v976 = vor.u32 1.1754944e-38, %v975
    %v977 = vsel %vm974, %v976, %v972
    %v978 = vmul.f32 1.0, %v977
    %v979 = vrcp.pop %v948
    %v980 = vmul.f32 %v948, %v979
    %v981 = vsub.f32 1.0, %v980
    %v982 = vmul.f32 %v979, %v981
    %v983 = vadd.f32 %v979, %v982
    %vm984 = vweird.f32 %v948
    %vm985 = vweird.f32 %v979
    %vm986 = vmor %vm984, %vm985
    %v987 = vsel %vm986, %v979, %v983
    %v988 = vand.u32 2147483647, %v948
    %vm989 = vcmp.eq.f32.partialorder %v988, 8.507059e+37
    %v990 = vand.u32 %v948, 2147483648
    %v991 = vor.u32 1.1754944e-38, %v990
    %v992 = vsel %vm989, %v991, %v987
    %v993 = vmul.f32 1.0, %v992
    %v994 = vtanh.pop %v936
    %v995 = vmul.f32 %v978, %v873
    %v996 = vmul.f32 %v963, %v994
    %v997 = vadd.f32 %v995, %v996
    %v998 = vtanh.pop %v997
    %v999 = vmul.f32 %v993, %v998
    %v1000 = vld [vmem:[#allocation8] sm:$0xff]
    %v1001 = vld [vmem:[#allocation8 + $0x8] sm:$0xff]
    %v1002 = vld [vmem:[#allocation8 + $0x10] sm:$0xff]
    %v1003 = vld [vmem:[#allocation8 + $0x18] sm:$0xff]
    %v1004 = vld [vmem:[#allocation8 + $0x20] sm:$0xff]
    %v1005 = vld [vmem:[#allocation8 + $0x28] sm:$0xff]
    %v1006 = vld [vmem:[#allocation8 + $0x30] sm:$0xff]
    %v1007 = vld [vmem:[#allocation8 + $0x38] sm:$0xff]
    %v1008 = vld [vmem:[#allocation8 + $0x40] sm:$0xff]
    %v1009 = vld [vmem:[#allocation8 + $0x48] sm:$0xff]
    %v1010 = vld [vmem:[#allocation8 + $0x50] sm:$0xff]
    %v1011 = vld [vmem:[#allocation8 + $0x58] sm:$0xff]
    %v1012 = vld [vmem:[#allocation8 + $0x60] sm:$0xff]
    %v1013 = vld [vmem:[#allocation8 + $0x68] sm:$0xff]
    %v1014 = vld [vmem:[#allocation8 + $0x70] sm:$0xff]
    %v1015 = vld [vmem:[#allocation8 + $0x78] sm:$0xff]
    %v1016 = vld [vmem:[#allocation8 + $0x80] sm:$0xff]
    %v1017 = vld [vmem:[#allocation8 + $0x88] sm:$0xff]
    %v1018 = vld [vmem:[#allocation8 + $0x90] sm:$0xff]
    %v1019 = vld [vmem:[#allocation8 + $0x98] sm:$0xff]
    %v1020 = vld [vmem:[#allocation8 + $0xa0] sm:$0xff]
    %v1021 = vld [vmem:[#allocation8 + $0xa8] sm:$0xff]
    %v1022 = vld [vmem:[#allocation8 + $0xb0] sm:$0xff]
    %v1023 = vld [vmem:[#allocation8 + $0xb8] sm:$0xff]
    %v1024 = vld [vmem:[#allocation8 + $0xc0] sm:$0xff]
    %v1025 = vld [vmem:[#allocation8 + $0xc8] sm:$0xff]
    %v1026 = vld [vmem:[#allocation8 + $0xd0] sm:$0xff]
    %v1027 = vld [vmem:[#allocation8 + $0xd8] sm:$0xff]
    %v1028 = vld [vmem:[#allocation8 + $0xe0] sm:$0xff]
    %v1029 = vld [vmem:[#allocation8 + $0xe8] sm:$0xff]
    %v1030 = vld [vmem:[#allocation8 + $0xf0] sm:$0xff]
    %v1031 = vld [vmem:[#allocation8 + $0xf8] sm:$0xff]
    %v1032 = vld [vmem:[#allocation8 + $0x100] sm:$0xff]
    %v1033 = vld [vmem:[#allocation8 + $0x108] sm:$0xff]
    %v1034 = vld [vmem:[#allocation8 + $0x110] sm:$0xff]
    %v1035 = vld [vmem:[#allocation8 + $0x118] sm:$0xff]
    %v1036 = vld [vmem:[#allocation8 + $0x120] sm:$0xff]
    %v1037 = vld [vmem:[#allocation8 + $0x128] sm:$0xff]
    %v1038 = vld [vmem:[#allocation8 + $0x130] sm:$0xff]
    %v1039 = vld [vmem:[#allocation8 + $0x138] sm:$0xff]
    %v1040 = vld [vmem:[#allocation8 + $0x140] sm:$0xff]
    %v1041 = vld [vmem:[#allocation8 + $0x148] sm:$0xff]
    %v1042 = vld [vmem:[#allocation8 + $0x150] sm:$0xff]
    %v1043 = vld [vmem:[#allocation8 + $0x158] sm:$0xff]
    %v1044 = vld [vmem:[#allocation8 + $0x160] sm:$0xff]
    %v1045 = vld [vmem:[#allocation8 + $0x168] sm:$0xff]
    %v1046 = vld [vmem:[#allocation8 + $0x170] sm:$0xff]
    %v1047 = vld [vmem:[#allocation8 + $0x178] sm:$0xff]
    %v1048 = vld [vmem:[#allocation8 + $0x180] sm:$0xff]
    %v1049 = vld [vmem:[#allocation8 + $0x188] sm:$0xff]
    %v1050 = vld [vmem:[#allocation8 + $0x190] sm:$0xff]
    %v1051 = vld [vmem:[#allocation8 + $0x198] sm:$0xff]
    %v1052 = vld [vmem:[#allocation8 + $0x1a0] sm:$0xff]
    %v1053 = vld [vmem:[#allocation8 + $0x1a8] sm:$0xff]
    %v1054 = vld [vmem:[#allocation8 + $0x1b0] sm:$0xff]
    %v1055 = vld [vmem:[#allocation8 + $0x1b8] sm:$0xff]
    %v1056 = vld [vmem:[#allocation8 + $0x1c0] sm:$0xff]
    %v1057 = vld [vmem:[#allocation8 + $0x1c8] sm:$0xff]
    %v1058 = vld [vmem:[#allocation8 + $0x1d0] sm:$0xff]
    %v1059 = vld [vmem:[#allocation8 + $0x1d8] sm:$0xff]
    %v1060 = vld [vmem:[#allocation8 + $0x1e0] sm:$0xff]
    %v1061 = vld [vmem:[#allocation8 + $0x1e8] sm:$0xff]
    %v1062 = vld [vmem:[#allocation8 + $0x1f0] sm:$0xff]
    %v1063 = vld [vmem:[#allocation8 + $0x1f8] sm:$0xff]
    %v1064 = vld [vmem:[%s6] sm:$0xf]
    %v1066 = vperm.slane %v1064, 0
    %v1067 = vperm.slane %v1064, 1
    %v1068 = vperm.slane %v1064, 2
    %v1069 = vperm.slane %v1064, 3
    %v1138 = vunpack.c.l.b16 %v1000
    %v1139 = vunpack.c.h.b16 %v1000
    %v1140 = vunpack.c.l.b16 %v1001
    %v1141 = vunpack.c.h.b16 %v1001
    %v1142 = vunpack.c.l.b16 %v1002
    %v1143 = vunpack.c.h.b16 %v1002
    %v1144 = vunpack.c.l.b16 %v1003
    %v1145 = vunpack.c.h.b16 %v1003
    %v1146 = vunpack.c.l.b16 %v1004
    %v1147 = vunpack.c.h.b16 %v1004
    %v1148 = vunpack.c.l.b16 %v1005
    %v1149 = vunpack.c.h.b16 %v1005
    %v1150 = vunpack.c.l.b16 %v1006
    %v1151 = vunpack.c.h.b16 %v1006
    %v1152 = vunpack.c.l.b16 %v1007
    %v1153 = vunpack.c.h.b16 %v1007
    %v1154 = vunpack.c.l.b16 %v1008
    %v1155 = vunpack.c.h.b16 %v1008
    %v1156 = vunpack.c.l.b16 %v1009
    %v1157 = vunpack.c.h.b16 %v1009
    %v1158 = vunpack.c.l.b16 %v1010
    %v1159 = vunpack.c.h.b16 %v1010
    %v1160 = vunpack.c.l.b16 %v1011
    %v1161 = vunpack.c.h.b16 %v1011
    %v1162 = vunpack.c.l.b16 %v1012
    %v1163 = vunpack.c.h.b16 %v1012
    %v1164 = vunpack.c.l.b16 %v1013
    %v1165 = vunpack.c.h.b16 %v1013
    %v1166 = vunpack.c.l.b16 %v1014
    %v1167 = vunpack.c.h.b16 %v1014
    %v1168 = vunpack.c.l.b16 %v1015
    %v1169 = vunpack.c.h.b16 %v1015
    %v1170 = vunpack.c.l.b16 %v1016
    %v1171 = vunpack.c.h.b16 %v1016
    %v1172 = vunpack.c.l.b16 %v1017
    %v1173 = vunpack.c.h.b16 %v1017
    %v1174 = vunpack.c.l.b16 %v1018
    %v1175 = vunpack.c.h.b16 %v1018
    %v1176 = vunpack.c.l.b16 %v1019
    %v1177 = vunpack.c.h.b16 %v1019
    %v1178 = vunpack.c.l.b16 %v1020
    %v1179 = vunpack.c.h.b16 %v1020
    %v1180 = vunpack.c.l.b16 %v1021
    %v1181 = vunpack.c.h.b16 %v1021
    %v1182 = vunpack.c.l.b16 %v1022
    %v1183 = vunpack.c.h.b16 %v1022
    %v1184 = vunpack.c.l.b16 %v1023
    %v1185 = vunpack.c.h.b16 %v1023
    %v1186 = vunpack.c.l.b16 %v1024
    %v1187 = vunpack.c.h.b16 %v1024
    %v1188 = vunpack.c.l.b16 %v1025
    %v1189 = vunpack.c.h.b16 %v1025
    %v1190 = vunpack.c.l.b16 %v1026
    %v1191 = vunpack.c.h.b16 %v1026
    %v1192 = vunpack.c.l.b16 %v1027
    %v1193 = vunpack.c.h.b16 %v1027
    %v1194 = vunpack.c.l.b16 %v1028
    %v1195 = vunpack.c.h.b16 %v1028
    %v1196 = vunpack.c.l.b16 %v1029
    %v1197 = vunpack.c.h.b16 %v1029
    %v1198 = vunpack.c.l.b16 %v1030
    %v1199 = vunpack.c.h.b16 %v1030
    %v1200 = vunpack.c.l.b16 %v1031
    %v1201 = vunpack.c.h.b16 %v1031
    %v1202 = vunpack.c.l.b16 %v1032
    %v1203 = vunpack.c.h.b16 %v1032
    %v1204 = vunpack.c.l.b16 %v1033
    %v1205 = vunpack.c.h.b16 %v1033
    %v1206 = vunpack.c.l.b16 %v1034
    %v1207 = vunpack.c.h.b16 %v1034
    %v1208 = vunpack.c.l.b16 %v1035
    %v1209 = vunpack.c.h.b16 %v1035
    %v1210 = vunpack.c.l.b16 %v1036
    %v1211 = vunpack.c.h.b16 %v1036
    %v1212 = vunpack.c.l.b16 %v1037
    %v1213 = vunpack.c.h.b16 %v1037
    %v1214 = vunpack.c.l.b16 %v1038
    %v1215 = vunpack.c.h.b16 %v1038
    %v1216 = vunpack.c.l.b16 %v1039
    %v1217 = vunpack.c.h.b16 %v1039
    %v1218 = vunpack.c.l.b16 %v1040
    %v1219 = vunpack.c.h.b16 %v1040
    %v1220 = vunpack.c.l.b16 %v1041
    %v1221 = vunpack.c.h.b16 %v1041
    %v1222 = vunpack.c.l.b16 %v1042
    %v1223 = vunpack.c.h.b16 %v1042
    %v1224 = vunpack.c.l.b16 %v1043
    %v1225 = vunpack.c.h.b16 %v1043
    %v1226 = vunpack.c.l.b16 %v1044
    %v1227 = vunpack.c.h.b16 %v1044
    %v1228 = vunpack.c.l.b16 %v1045
    %v1229 = vunpack.c.h.b16 %v1045
    %v1230 = vunpack.c.l.b16 %v1046
    %v1231 = vunpack.c.h.b16 %v1046
    %v1232 = vunpack.c.l.b16 %v1047
    %v1233 = vunpack.c.h.b16 %v1047
    %v1234 = vunpack.c.l.b16 %v1048
    %v1235 = vunpack.c.h.b16 %v1048
    %v1236 = vunpack.c.l.b16 %v1049
    %v1237 = vunpack.c.h.b16 %v1049
    %v1238 = vunpack.c.l.b16 %v1050
    %v1239 = vunpack.c.h.b16 %v1050
    %v1240 = vunpack.c.l.b16 %v1051
    %v1241 = vunpack.c.h.b16 %v1051
    %v1242 = vunpack.c.l.b16 %v1052
    %v1243 = vunpack.c.h.b16 %v1052
    %v1244 = vunpack.c.l.b16 %v1053
    %v1245 = vunpack.c.h.b16 %v1053
    %v1246 = vunpack.c.l.b16 %v1054
    %v1247 = vunpack.c.h.b16 %v1054
    %v1248 = vunpack.c.l.b16 %v1055
    %v1249 = vunpack.c.h.b16 %v1055
    %v1250 = vunpack.c.l.b16 %v1056
    %v1251 = vunpack.c.h.b16 %v1056
    %v1252 = vunpack.c.l.b16 %v1057
    %v1253 = vunpack.c.h.b16 %v1057
    %v1254 = vunpack.c.l.b16 %v1058
    %v1255 = vunpack.c.h.b16 %v1058
    %v1256 = vunpack.c.l.b16 %v1059
    %v1257 = vunpack.c.h.b16 %v1059
    %v1258 = vunpack.c.l.b16 %v1060
    %v1259 = vunpack.c.h.b16 %v1060
    %v1260 = vunpack.c.l.b16 %v1061
    %v1261 = vunpack.c.h.b16 %v1061
    %v1262 = vunpack.c.l.b16 %v1062
    %v1263 = vunpack.c.h.b16 %v1062
    %v1264 = vunpack.c.l.b16 %v1063
    %v1265 = vunpack.c.h.b16 %v1063
    %v1266 = vpack.c.b16 %v1142, %v1138
    %v1267 = vpack.c.b16 %v1143, %v1139
    %v1268 = vpack.c.b16 %v1144, %v1140
    %v1269 = vpack.c.b16 %v1145, %v1141
    %v1270 = vpack.c.b16 %v1150, %v1146
    %v1271 = vpack.c.b16 %v1151, %v1147
    %v1272 = vpack.c.b16 %v1152, %v1148
    %v1273 = vpack.c.b16 %v1153, %v1149
    %v1274 = vpack.c.b16 %v1158, %v1154
    %v1275 = vpack.c.b16 %v1159, %v1155
    %v1276 = vpack.c.b16 %v1160, %v1156
    %v1277 = vpack.c.b16 %v1161, %v1157
    %v1278 = vpack.c.b16 %v1166, %v1162
    %v1279 = vpack.c.b16 %v1167, %v1163
    %v1280 = vpack.c.b16 %v1168, %v1164
    %v1281 = vpack.c.b16 %v1169, %v1165
    %v1282 = vpack.c.b16 %v1174, %v1170
    %v1283 = vpack.c.b16 %v1175, %v1171
    %v1284 = vpack.c.b16 %v1176, %v1172
    %v1285 = vpack.c.b16 %v1177, %v1173
    %v1286 = vpack.c.b16 %v1182, %v1178
    %v1287 = vpack.c.b16 %v1183, %v1179
    %v1288 = vpack.c.b16 %v1184, %v1180
    %v1289 = vpack.c.b16 %v1185, %v1181
    %v1290 = vpack.c.b16 %v1190, %v1186
    %v1291 = vpack.c.b16 %v1191, %v1187
    %v1292 = vpack.c.b16 %v1192, %v1188
    %v1293 = vpack.c.b16 %v1193, %v1189
    %v1294 = vpack.c.b16 %v1198, %v1194
    %v1295 = vpack.c.b16 %v1199, %v1195
    %v1296 = vpack.c.b16 %v1200, %v1196
    %v1297 = vpack.c.b16 %v1201, %v1197
    %v1298 = vpack.c.b16 %v1206, %v1202
    %v1299 = vpack.c.b16 %v1207, %v1203
    %v1300 = vpack.c.b16 %v1208, %v1204
    %v1301 = vpack.c.b16 %v1209, %v1205
    %v1302 = vpack.c.b16 %v1214, %v1210
    %v1303 = vpack.c.b16 %v1215, %v1211
    %v1304 = vpack.c.b16 %v1216, %v1212
    %v1305 = vpack.c.b16 %v1217, %v1213
    %v1306 = vpack.c.b16 %v1222, %v1218
    %v1307 = vpack.c.b16 %v1223, %v1219
    %v1308 = vpack.c.b16 %v1224, %v1220
    %v1309 = vpack.c.b16 %v1225, %v1221
    %v1310 = vpack.c.b16 %v1230, %v1226
    %v1311 = vpack.c.b16 %v1231, %v1227
    %v1312 = vpack.c.b16 %v1232, %v1228
    %v1313 = vpack.c.b16 %v1233, %v1229
    %v1314 = vpack.c.b16 %v1238, %v1234
    %v1315 = vpack.c.b16 %v1239, %v1235
    %v1316 = vpack.c.b16 %v1240, %v1236
    %v1317 = vpack.c.b16 %v1241, %v1237
    %v1318 = vpack.c.b16 %v1246, %v1242
    %v1319 = vpack.c.b16 %v1247, %v1243
    %v1320 = vpack.c.b16 %v1248, %v1244
    %v1321 = vpack.c.b16 %v1249, %v1245
    %v1322 = vpack.c.b16 %v1254, %v1250
    %v1323 = vpack.c.b16 %v1255, %v1251
    %v1324 = vpack.c.b16 %v1256, %v1252
    %v1325 = vpack.c.b16 %v1257, %v1253
    %v1326 = vpack.c.b16 %v1262, %v1258
    %v1327 = vpack.c.b16 %v1263, %v1259
    %v1328 = vpack.c.b16 %v1264, %v1260
    %v1329 = vpack.c.b16 %v1265, %v1261
    %1394 = vmatpush.bf16.msra.mxu0 %v1294
    %1395 = vmatpush.bf16.msra.mxu0 %v1290
    %1396 = vmatpush.bf16.msra.mxu0 %v1286
    %1397 = vmatpush.bf16.msra.mxu0 %v1282
    %1398 = vmatpush.bf16.msra.mxu0 %v1278
    %1399 = vmatpush.bf16.msra.mxu0 %v1274
    %1400 = vmatpush.bf16.msra.mxu0 %v1270
    %1401 = vmatpush.bf16.msra.mxu0 %v1266
    %1402 = vmatmul.bf16.gmra.mxu0 %v880
    %v1403 = vpop.f32.mrf.mxu0
    %v1404 = vadd.f32 %v1066, %v1403
    %v1405 = vpop.f32.mrf.mxu0
    %1406 = vdwg.mxu0
    %1407 = vmatpush.bf16.msra.mxu0 %v1326
    %1408 = vmatpush.bf16.msra.mxu0 %v1322
    %1409 = vmatpush.bf16.msra.mxu0 %v1318
    %1410 = vmatpush.bf16.msra.mxu0 %v1314
    %1411 = vmatpush.bf16.msra.mxu0 %v1310
    %1412 = vmatpush.bf16.msra.mxu0 %v1306
    %1413 = vmatpush.bf16.msra.mxu0 %v1302
    %1414 = vmatpush.bf16.msra.mxu0 %v1298
    %1415 = vmatmul.bf16.gmra.mxu0 0
    %v1416 = vpop.f32.mrf.mxu0
    %v1417 = vadd.f32 %v1404, %v1416
    %v1418 = vpop.f32.mrf.mxu0
    %1419 = vdwg.mxu0
    %1420 = vmatpush.bf16.msra.mxu0 %v1295
    %1421 = vmatpush.bf16.msra.mxu0 %v1291
    %1422 = vmatpush.bf16.msra.mxu0 %v1287
    %1423 = vmatpush.bf16.msra.mxu0 %v1283
    %1424 = vmatpush.bf16.msra.mxu0 %v1279
    %1425 = vmatpush.bf16.msra.mxu0 %v1275
    %1426 = vmatpush.bf16.msra.mxu0 %v1271
    %1427 = vmatpush.bf16.msra.mxu0 %v1267
    %1428 = vmatmul.bf16.gmra.mxu0 %v880
    %v1429 = vpop.f32.mrf.mxu0
    %v1430 = vadd.f32 %v1067, %v1429
    %v1431 = vpop.f32.mrf.mxu0
    %1432 = vdwg.mxu0
    %1433 = vmatpush.bf16.msra.mxu0 %v1327
    %1434 = vmatpush.bf16.msra.mxu0 %v1323
    %1435 = vmatpush.bf16.msra.mxu0 %v1319
    %1436 = vmatpush.bf16.msra.mxu0 %v1315
    %1437 = vmatpush.bf16.msra.mxu0 %v1311
    %1438 = vmatpush.bf16.msra.mxu0 %v1307
    %1439 = vmatpush.bf16.msra.mxu0 %v1303
    %1440 = vmatpush.bf16.msra.mxu0 %v1299
    %1441 = vmatmul.bf16.gmra.mxu0 0
    %v1442 = vpop.f32.mrf.mxu0
    %v1443 = vadd.f32 %v1430, %v1442
    %v1444 = vpop.f32.mrf.mxu0
    %1445 = vdwg.mxu0
    %1446 = vmatpush.bf16.msra.mxu0 %v1296
    %1447 = vmatpush.bf16.msra.mxu0 %v1292
    %1448 = vmatpush.bf16.msra.mxu0 %v1288
    %1449 = vmatpush.bf16.msra.mxu0 %v1284
    %1450 = vmatpush.bf16.msra.mxu0 %v1280
    %1451 = vmatpush.bf16.msra.mxu0 %v1276
    %1452 = vmatpush.bf16.msra.mxu0 %v1272
    %1453 = vmatpush.bf16.msra.mxu0 %v1268
    %1454 = vmatmul.bf16.gmra.mxu0 %v880
    %v1455 = vpop.f32.mrf.mxu0
    %v1456 = vadd.f32 %v1068, %v1455
    %v1457 = vpop.f32.mrf.mxu0
    %1458 = vdwg.mxu0
    %1459 = vmatpush.bf16.msra.mxu0 %v1328
    %1460 = vmatpush.bf16.msra.mxu0 %v1324
    %1461 = vmatpush.bf16.msra.mxu0 %v1320
    %1462 = vmatpush.bf16.msra.mxu0 %v1316
    %1463 = vmatpush.bf16.msra.mxu0 %v1312
    %1464 = vmatpush.bf16.msra.mxu0 %v1308
    %1465 = vmatpush.bf16.msra.mxu0 %v1304
    %1466 = vmatpush.bf16.msra.mxu0 %v1300
    %1467 = vmatmul.bf16.gmra.mxu0 0
    %v1468 = vpop.f32.mrf.mxu0
    %v1469 = vadd.f32 %v1456, %v1468
    %v1470 = vpop.f32.mrf.mxu0
    %1471 = vdwg.mxu0
    %1472 = vmatpush.bf16.msra.mxu0 %v1297
    %1473 = vmatpush.bf16.msra.mxu0 %v1293
    %1474 = vmatpush.bf16.msra.mxu0 %v1289
    %1475 = vmatpush.bf16.msra.mxu0 %v1285
    %1476 = vmatpush.bf16.msra.mxu0 %v1281
    %1477 = vmatpush.bf16.msra.mxu0 %v1277
    %1478 = vmatpush.bf16.msra.mxu0 %v1273
    %1479 = vmatpush.bf16.msra.mxu0 %v1269
    %1480 = vmatmul.bf16.gmra.mxu0 %v880
    %v1481 = vpop.f32.mrf.mxu0
    %v1482 = vadd.f32 %v1069, %v1481
    %v1483 = vpop.f32.mrf.mxu0
    %1484 = vdwg.mxu0
    %1485 = vmatpush.bf16.msra.mxu0 %v1329
    %1486 = vmatpush.bf16.msra.mxu0 %v1325
    %1487 = vmatpush.bf16.msra.mxu0 %v1321
    %1488 = vmatpush.bf16.msra.mxu0 %v1317
    %1489 = vmatpush.bf16.msra.mxu0 %v1313
    %1490 = vmatpush.bf16.msra.mxu0 %v1309
    %1491 = vmatpush.bf16.msra.mxu0 %v1305
    %1492 = vmatpush.bf16.msra.mxu0 %v1301
    %1493 = vmatmul.bf16.gmra.mxu0 0
    %v1494 = vpop.f32.mrf.mxu0
    %v1495 = vadd.f32 %v1482, %v1494
    %v1496 = vpop.f32.mrf.mxu0
    %1497 = vdwg.mxu0
    %v1498 = vxor.u32 %v1417, 2147483648
    %v1499 = vxor.u32 %v1443, 2147483648
    %v1500 = vxor.u32 %v1469, 2147483648
    %v1501 = vmul.f32 %v1498, 1.442695
    %v1502 = vpow.pop %v1501
    %v1503 = vmul.f32 %v1499, 1.442695
    %v1504 = vpow.pop %v1503
    %v1505 = vmul.f32 %v1500, 1.442695
    %v1506 = vpow.pop %v1505
    %v1507 = vadd.f32 %v1502, 1.0
    %v1508 = vadd.f32 %v1504, 1.0
    %v1509 = vadd.f32 %v1506, 1.0
    %v1510 = vrcp.pop %v1507
    %v1511 = vmul.f32 %v1507, %v1510
    %v1512 = vsub.f32 1.0, %v1511
    %v1513 = vmul.f32 %v1510, %v1512
    %v1514 = vadd.f32 %v1510, %v1513
    %vm1515 = vweird.f32 %v1507
    %vm1516 = vweird.f32 %v1510
    %vm1517 = vmor %vm1515, %vm1516
    %v1518 = vsel %vm1517, %v1510, %v1514
    %v1519 = vand.u32 2147483647, %v1507
    %vm1520 = vcmp.eq.f32.partialorder %v1519, 8.507059e+37
    %v1521 = vand.u32 %v1507, 2147483648
    %v1522 = vor.u32 1.1754944e-38, %v1521
    %v1523 = vsel %vm1520, %v1522, %v1518
    %v1524 = vmul.f32 1.0, %v1523
    %v1525 = vrcp.pop %v1508
    %v1526 = vmul.f32 %v1508, %v1525
    %v1527 = vsub.f32 1.0, %v1526
    %v1528 = vmul.f32 %v1525, %v1527
    %v1529 = vadd.f32 %v1525, %v1528
    %vm1530 = vweird.f32 %v1508
    %vm1531 = vweird.f32 %v1525
    %vm1532 = vmor %vm1530, %vm1531
    %v1533 = vsel %vm1532, %v1525, %v1529
    %v1534 = vand.u32 2147483647, %v1508
    %vm1535 = vcmp.eq.f32.partialorder %v1534, 8.507059e+37
    %v1536 = vand.u32 %v1508, 2147483648
    %v1537 = vor.u32 1.1754944e-38, %v1536
    %v1538 = vsel %vm1535, %v1537, %v1533
    %v1539 = vmul.f32 1.0, %v1538
    %v1540 = vrcp.pop %v1509
    %v1541 = vmul.f32 %v1509, %v1540
    %v1542 = vsub.f32 1.0, %v1541
    %v1543 = vmul.f32 %v1540, %v1542
    %v1544 = vadd.f32 %v1540, %v1543
    %vm1545 = vweird.f32 %v1509
    %vm1546 = vweird.f32 %v1540
    %vm1547 = vmor %vm1545, %vm1546
    %v1548 = vsel %vm1547, %v1540, %v1544
    %v1549 = vand.u32 2147483647, %v1509
    %vm1550 = vcmp.eq.f32.partialorder %v1549, 8.507059e+37
    %v1551 = vand.u32 %v1509, 2147483648
    %v1552 = vor.u32 1.1754944e-38, %v1551
    %v1553 = vsel %vm1550, %v1552, %v1548
    %v1554 = vmul.f32 1.0, %v1553
    %v1555 = vtanh.pop %v1495
    %v1556 = vmul.f32 %v1539, 0.0
    %v1557 = vmul.f32 %v1524, %v1555
    %v1558 = vadd.f32 %v1556, %v1557
    %v1559 = vtanh.pop %v1558
    %v1560 = vmul.f32 %v1554, %v1559
    %1561 = vst [vmem:[%s7] sm:$0xff] %v1560
    %v1562 = vld [vmem:[#allocation2 + $0x40] sm:$0xff]
    %v1563 = vld [vmem:[#allocation2 + $0x48] sm:$0xff]
    %v1564 = vld [vmem:[#allocation2 + $0x50] sm:$0xff]
    %v1565 = vld [vmem:[#allocation2 + $0x58] sm:$0xff]
    %v1566 = vpack.c.bf16 %v999, %v999
    %v1567 = vld [vmem:[#allocation6] sm:$0xff]
    %v1568 = vld [vmem:[#allocation6 + $0x8] sm:$0xff]
    %v1569 = vld [vmem:[#allocation6 + $0x10] sm:$0xff]
    %v1570 = vld [vmem:[#allocation6 + $0x18] sm:$0xff]
    %v1571 = vld [vmem:[#allocation6 + $0x20] sm:$0xff]
    %v1572 = vld [vmem:[#allocation6 + $0x28] sm:$0xff]
    %v1573 = vld [vmem:[#allocation6 + $0x30] sm:$0xff]
    %v1574 = vld [vmem:[#allocation6 + $0x38] sm:$0xff]
    %v1575 = vld [vmem:[#allocation6 + $0x40] sm:$0xff]
    %v1576 = vld [vmem:[#allocation6 + $0x48] sm:$0xff]
    %v1577 = vld [vmem:[#allocation6 + $0x50] sm:$0xff]
    %v1578 = vld [vmem:[#allocation6 + $0x58] sm:$0xff]
    %v1579 = vld [vmem:[#allocation6 + $0x60] sm:$0xff]
    %v1580 = vld [vmem:[#allocation6 + $0x68] sm:$0xff]
    %v1581 = vld [vmem:[#allocation6 + $0x70] sm:$0xff]
    %v1582 = vld [vmem:[#allocation6 + $0x78] sm:$0xff]
    %v1583 = vld [vmem:[#allocation6 + $0x80] sm:$0xff]
    %v1584 = vld [vmem:[#allocation6 + $0x88] sm:$0xff]
    %v1585 = vld [vmem:[#allocation6 + $0x90] sm:$0xff]
    %v1586 = vld [vmem:[#allocation6 + $0x98] sm:$0xff]
    %v1587 = vld [vmem:[#allocation6 + $0xa0] sm:$0xff]
    %v1588 = vld [vmem:[#allocation6 + $0xa8] sm:$0xff]
    %v1589 = vld [vmem:[#allocation6 + $0xb0] sm:$0xff]
    %v1590 = vld [vmem:[#allocation6 + $0xb8] sm:$0xff]
    %v1591 = vld [vmem:[#allocation6 + $0xc0] sm:$0xff]
    %v1592 = vld [vmem:[#allocation6 + $0xc8] sm:$0xff]
    %v1593 = vld [vmem:[#allocation6 + $0xd0] sm:$0xff]
    %v1594 = vld [vmem:[#allocation6 + $0xd8] sm:$0xff]
    %v1595 = vld [vmem:[#allocation6 + $0xe0] sm:$0xff]
    %v1596 = vld [vmem:[#allocation6 + $0xe8] sm:$0xff]
    %v1597 = vld [vmem:[#allocation6 + $0xf0] sm:$0xff]
    %v1598 = vld [vmem:[#allocation6 + $0xf8] sm:$0xff]
    %v1631 = vunpack.c.l.b16 %v1567
    %v1632 = vunpack.c.h.b16 %v1567
    %v1633 = vunpack.c.l.b16 %v1568
    %v1634 = vunpack.c.h.b16 %v1568
    %v1635 = vunpack.c.l.b16 %v1569
    %v1636 = vunpack.c.h.b16 %v1569
    %v1637 = vunpack.c.l.b16 %v1570
    %v1638 = vunpack.c.h.b16 %v1570
    %v1639 = vunpack.c.l.b16 %v1571
    %v1640 = vunpack.c.h.b16 %v1571
    %v1641 = vunpack.c.l.b16 %v1572
    %v1642 = vunpack.c.h.b16 %v1572
    %v1643 = vunpack.c.l.b16 %v1573
    %v1644 = vunpack.c.h.b16 %v1573
    %v1645 = vunpack.c.l.b16 %v1574
    %v1646 = vunpack.c.h.b16 %v1574
    %v1647 = vunpack.c.l.b16 %v1575
    %v1648 = vunpack.c.h.b16 %v1575
    %v1649 = vunpack.c.l.b16 %v1576
    %v1650 = vunpack.c.h.b16 %v1576
    %v1651 = vunpack.c.l.b16 %v1577
    %v1652 = vunpack.c.h.b16 %v1577
    %v1653 = vunpack.c.l.b16 %v1578
    %v1654 = vunpack.c.h.b16 %v1578
    %v1655 = vunpack.c.l.b16 %v1579
    %v1656 = vunpack.c.h.b16 %v1579
    %v1657 = vunpack.c.l.b16 %v1580
    %v1658 = vunpack.c.h.b16 %v1580
    %v1659 = vunpack.c.l.b16 %v1581
    %v1660 = vunpack.c.h.b16 %v1581
    %v1661 = vunpack.c.l.b16 %v1582
    %v1662 = vunpack.c.h.b16 %v1582
    %v1663 = vunpack.c.l.b16 %v1583
    %v1664 = vunpack.c.h.b16 %v1583
    %v1665 = vunpack.c.l.b16 %v1584
    %v1666 = vunpack.c.h.b16 %v1584
    %v1667 = vunpack.c.l.b16 %v1585
    %v1668 = vunpack.c.h.b16 %v1585
    %v1669 = vunpack.c.l.b16 %v1586
    %v1670 = vunpack.c.h.b16 %v1586
    %v1671 = vunpack.c.l.b16 %v1587
    %v1672 = vunpack.c.h.b16 %v1587
    %v1673 = vunpack.c.l.b16 %v1588
    %v1674 = vunpack.c.h.b16 %v1588
    %v1675 = vunpack.c.l.b16 %v1589
    %v1676 = vunpack.c.h.b16 %v1589
    %v1677 = vunpack.c.l.b16 %v1590
    %v1678 = vunpack.c.h.b16 %v1590
    %v1679 = vunpack.c.l.b16 %v1591
    %v1680 = vunpack.c.h.b16 %v1591
    %v1681 = vunpack.c.l.b16 %v1592
    %v1682 = vunpack.c.h.b16 %v1592
    %v1683 = vunpack.c.l.b16 %v1593
    %v1684 = vunpack.c.h.b16 %v1593
    %v1685 = vunpack.c.l.b16 %v1594
    %v1686 = vunpack.c.h.b16 %v1594
    %v1687 = vunpack.c.l.b16 %v1595
    %v1688 = vunpack.c.h.b16 %v1595
    %v1689 = vunpack.c.l.b16 %v1596
    %v1690 = vunpack.c.h.b16 %v1596
    %v1691 = vunpack.c.l.b16 %v1597
    %v1692 = vunpack.c.h.b16 %v1597
    %v1693 = vunpack.c.l.b16 %v1598
    %v1694 = vunpack.c.h.b16 %v1598
    %v1695 = vpack.c.b16 %v1635, %v1631
    %v1696 = vpack.c.b16 %v1636, %v1632
    %v1697 = vpack.c.b16 %v1637, %v1633
    %v1698 = vpack.c.b16 %v1638, %v1634
    %v1699 = vpack.c.b16 %v1643, %v1639
    %v1700 = vpack.c.b16 %v1644, %v1640
    %v1701 = vpack.c.b16 %v1645, %v1641
    %v1702 = vpack.c.b16 %v1646, %v1642
    %v1703 = vpack.c.b16 %v1651, %v1647
    %v1704 = vpack.c.b16 %v1652, %v1648
    %v1705 = vpack.c.b16 %v1653, %v1649
    %v1706 = vpack.c.b16 %v1654, %v1650
    %v1707 = vpack.c.b16 %v1659, %v1655
    %v1708 = vpack.c.b16 %v1660, %v1656
    %v1709 = vpack.c.b16 %v1661, %v1657
    %v1710 = vpack.c.b16 %v1662, %v1658
    %v1711 = vpack.c.b16 %v1667, %v1663
    %v1712 = vpack.c.b16 %v1668, %v1664
    %v1713 = vpack.c.b16 %v1669, %v1665
    %v1714 = vpack.c.b16 %v1670, %v1666
    %v1715 = vpack.c.b16 %v1675, %v1671
    %v1716 = vpack.c.b16 %v1676, %v1672
    %v1717 = vpack.c.b16 %v1677, %v1673
    %v1718 = vpack.c.b16 %v1678, %v1674
    %v1719 = vpack.c.b16 %v1683, %v1679
    %v1720 = vpack.c.b16 %v1684, %v1680
    %v1721 = vpack.c.b16 %v1685, %v1681
    %v1722 = vpack.c.b16 %v1686, %v1682
    %v1723 = vpack.c.b16 %v1691, %v1687
    %v1724 = vpack.c.b16 %v1692, %v1688
    %v1725 = vpack.c.b16 %v1693, %v1689
    %v1726 = vpack.c.b16 %v1694, %v1690
    %1759 = vmatpush.bf16.msra.mxu0 %v1723
    %1760 = vmatpush.bf16.msra.mxu0 %v1719
    %1761 = vmatpush.bf16.msra.mxu0 %v1715
    %1762 = vmatpush.bf16.msra.mxu0 %v1711
    %1763 = vmatpush.bf16.msra.mxu0 %v1707
    %1764 = vmatpush.bf16.msra.mxu0 %v1703
    %1765 = vmatpush.bf16.msra.mxu0 %v1699
    %1766 = vmatpush.bf16.msra.mxu0 %v1695
    %1767 = vmatmul.bf16.gmra.mxu0 %v1566
    %v1768 = vpop.f32.mrf.mxu0
    %v1769 = vadd.f32 0.0, %v1768
    %v1770 = vpop.f32.mrf.mxu0
    %1771 = vdwg.mxu0
    %1772 = vmatpush.bf16.msra.mxu0 %v1724
    %1773 = vmatpush.bf16.msra.mxu0 %v1720
    %1774 = vmatpush.bf16.msra.mxu0 %v1716
    %1775 = vmatpush.bf16.msra.mxu0 %v1712
    %1776 = vmatpush.bf16.msra.mxu0 %v1708
    %1777 = vmatpush.bf16.msra.mxu0 %v1704
    %1778 = vmatpush.bf16.msra.mxu0 %v1700
    %1779 = vmatpush.bf16.msra.mxu0 %v1696
    %1780 = vmatmul.bf16.gmra.mxu0 %v1566
    %v1781 = vpop.f32.mrf.mxu0
    %v1782 = vadd.f32 0.0, %v1781
    %v1783 = vpop.f32.mrf.mxu0
    %1784 = vdwg.mxu0
    %1785 = vmatpush.bf16.msra.mxu0 %v1725
    %1786 = vmatpush.bf16.msra.mxu0 %v1721
    %1787 = vmatpush.bf16.msra.mxu0 %v1717
    %1788 = vmatpush.bf16.msra.mxu0 %v1713
    %1789 = vmatpush.bf16.msra.mxu0 %v1709
    %1790 = vmatpush.bf16.msra.mxu0 %v1705
    %1791 = vmatpush.bf16.msra.mxu0 %v1701
    %1792 = vmatpush.bf16.msra.mxu0 %v1697
    %1793 = vmatmul.bf16.gmra.mxu0 %v1566
    %v1794 = vpop.f32.mrf.mxu0
    %v1795 = vadd.f32 0.0, %v1794
    %v1796 = vpop.f32.mrf.mxu0
    %1797 = vdwg.mxu0
    %1798 = vmatpush.bf16.msra.mxu0 %v1726
    %1799 = vmatpush.bf16.msra.mxu0 %v1722
    %1800 = vmatpush.bf16.msra.mxu0 %v1718
    %1801 = vmatpush.bf16.msra.mxu0 %v1714
    %1802 = vmatpush.bf16.msra.mxu0 %v1710
    %1803 = vmatpush.bf16.msra.mxu0 %v1706
    %1804 = vmatpush.bf16.msra.mxu0 %v1702
    %1805 = vmatpush.bf16.msra.mxu0 %v1698
    %1806 = vmatmul.bf16.gmra.mxu0 %v1566
    %v1807 = vpop.f32.mrf.mxu0
    %v1808 = vadd.f32 0.0, %v1807
    %v1809 = vpop.f32.mrf.mxu0
    %1810 = vdwg.mxu0
    %v1811 = vadd.f32 %v1562, %v1769
    %v1812 = vadd.f32 %v1563, %v1782
    %v1813 = vadd.f32 %v1564, %v1795
    %v1814 = vadd.f32 %v1565, %v1808
    %v1815 = vxor.u32 %v1811, 2147483648
    %v1816 = vxor.u32 %v1812, 2147483648
    %v1817 = vxor.u32 %v1813, 2147483648
    %v1818 = vmul.f32 %v1815, 1.442695
    %v1819 = vpow.pop %v1818
    %v1820 = vmul.f32 %v1816, 1.442695
    %v1821 = vpow.pop %v1820
    %v1822 = vmul.f32 %v1817, 1.442695
    %v1823 = vpow.pop %v1822
    %v1824 = vadd.f32 %v1819, 1.0
    %v1825 = vadd.f32 %v1821, 1.0
    %v1826 = vadd.f32 %v1823, 1.0
    %v1827 = vrcp.pop %v1824
    %v1828 = vmul.f32 %v1824, %v1827
    %v1829 = vsub.f32 1.0, %v1828
    %v1830 = vmul.f32 %v1827, %v1829
    %v1831 = vadd.f32 %v1827, %v1830
    %vm1832 = vweird.f32 %v1824
    %vm1833 = vweird.f32 %v1827
    %vm1834 = vmor %vm1832, %vm1833
    %v1835 = vsel %vm1834, %v1827, %v1831
    %v1836 = vand.u32 2147483647, %v1824
    %vm1837 = vcmp.eq.f32.partialorder %v1836, 8.507059e+37
    %v1838 = vand.u32 %v1824, 2147483648
    %v1839 = vor.u32 1.1754944e-38, %v1838
    %v1840 = vsel %vm1837, %v1839, %v1835
    %v1841 = vmul.f32 1.0, %v1840
    %v1842 = vrcp.pop %v1825
    %v1843 = vmul.f32 %v1825, %v1842
    %v1844 = vsub.f32 1.0, %v1843
    %v1845 = vmul.f32 %v1842, %v1844
    %v1846 = vadd.f32 %v1842, %v1845
    %vm1847 = vweird.f32 %v1825
    %vm1848 = vweird.f32 %v1842
    %vm1849 = vmor %vm1847, %vm1848
    %v1850 = vsel %vm1849, %v1842, %v1846
    %v1851 = vand.u32 2147483647, %v1825
    %vm1852 = vcmp.eq.f32.partialorder %v1851, 8.507059e+37
    %v1853 = vand.u32 %v1825, 2147483648
    %v1854 = vor.u32 1.1754944e-38, %v1853
    %v1855 = vsel %vm1852, %v1854, %v1850
    %v1856 = vmul.f32 1.0, %v1855
    %v1857 = vrcp.pop %v1826
    %v1858 = vmul.f32 %v1826, %v1857
    %v1859 = vsub.f32 1.0, %v1858
    %v1860 = vmul.f32 %v1857, %v1859
    %v1861 = vadd.f32 %v1857, %v1860
    %vm1862 = vweird.f32 %v1826
    %vm1863 = vweird.f32 %v1857
    %vm1864 = vmor %vm1862, %vm1863
    %v1865 = vsel %vm1864, %v1857, %v1861
    %v1866 = vand.u32 2147483647, %v1826
    %vm1867 = vcmp.eq.f32.partialorder %v1866, 8.507059e+37
    %v1868 = vand.u32 %v1826, 2147483648
    %v1869 = vor.u32 1.1754944e-38, %v1868
    %v1870 = vsel %vm1867, %v1869, %v1865
    %v1871 = vmul.f32 1.0, %v1870
    %v1872 = vtanh.pop %v1814
    %v1873 = vmul.f32 %v1856, %v997
    %v1874 = vmul.f32 %v1841, %v1872
    %v1875 = vadd.f32 %v1873, %v1874
    %v1876 = vtanh.pop %v1875
    %v1877 = vmul.f32 %v1871, %v1876
    %v1878 = vpack.c.bf16 %v1560, %v1560
    %v1879 = vld [vmem:[#allocation8] sm:$0xff]
    %v1880 = vld [vmem:[#allocation8 + $0x8] sm:$0xff]
    %v1881 = vld [vmem:[#allocation8 + $0x10] sm:$0xff]
    %v1882 = vld [vmem:[#allocation8 + $0x18] sm:$0xff]
    %v1883 = vld [vmem:[#allocation8 + $0x20] sm:$0xff]
    %v1884 = vld [vmem:[#allocation8 + $0x28] sm:$0xff]
    %v1885 = vld [vmem:[#allocation8 + $0x30] sm:$0xff]
    %v1886 = vld [vmem:[#allocation8 + $0x38] sm:$0xff]
    %v1887 = vld [vmem:[#allocation8 + $0x40] sm:$0xff]
    %v1888 = vld [vmem:[#allocation8 + $0x48] sm:$0xff]
    %v1889 = vld [vmem:[#allocation8 + $0x50] sm:$0xff]
    %v1890 = vld [vmem:[#allocation8 + $0x58] sm:$0xff]
    %v1891 = vld [vmem:[#allocation8 + $0x60] sm:$0xff]
    %v1892 = vld [vmem:[#allocation8 + $0x68] sm:$0xff]
    %v1893 = vld [vmem:[#allocation8 + $0x70] sm:$0xff]
    %v1894 = vld [vmem:[#allocation8 + $0x78] sm:$0xff]
    %v1895 = vld [vmem:[#allocation8 + $0x80] sm:$0xff]
    %v1896 = vld [vmem:[#allocation8 + $0x88] sm:$0xff]
    %v1897 = vld [vmem:[#allocation8 + $0x90] sm:$0xff]
    %v1898 = vld [vmem:[#allocation8 + $0x98] sm:$0xff]
    %v1899 = vld [vmem:[#allocation8 + $0xa0] sm:$0xff]
    %v1900 = vld [vmem:[#allocation8 + $0xa8] sm:$0xff]
    %v1901 = vld [vmem:[#allocation8 + $0xb0] sm:$0xff]
    %v1902 = vld [vmem:[#allocation8 + $0xb8] sm:$0xff]
    %v1903 = vld [vmem:[#allocation8 + $0xc0] sm:$0xff]
    %v1904 = vld [vmem:[#allocation8 + $0xc8] sm:$0xff]
    %v1905 = vld [vmem:[#allocation8 + $0xd0] sm:$0xff]
    %v1906 = vld [vmem:[#allocation8 + $0xd8] sm:$0xff]
    %v1907 = vld [vmem:[#allocation8 + $0xe0] sm:$0xff]
    %v1908 = vld [vmem:[#allocation8 + $0xe8] sm:$0xff]
    %v1909 = vld [vmem:[#allocation8 + $0xf0] sm:$0xff]
    %v1910 = vld [vmem:[#allocation8 + $0xf8] sm:$0xff]
    %v1911 = vld [vmem:[#allocation8 + $0x100] sm:$0xff]
    %v1912 = vld [vmem:[#allocation8 + $0x108] sm:$0xff]
    %v1913 = vld [vmem:[#allocation8 + $0x110] sm:$0xff]
    %v1914 = vld [vmem:[#allocation8 + $0x118] sm:$0xff]
    %v1915 = vld [vmem:[#allocation8 + $0x120] sm:$0xff]
    %v1916 = vld [vmem:[#allocation8 + $0x128] sm:$0xff]
    %v1917 = vld [vmem:[#allocation8 + $0x130] sm:$0xff]
    %v1918 = vld [vmem:[#allocation8 + $0x138] sm:$0xff]
    %v1919 = vld [vmem:[#allocation8 + $0x140] sm:$0xff]
    %v1920 = vld [vmem:[#allocation8 + $0x148] sm:$0xff]
    %v1921 = vld [vmem:[#allocation8 + $0x150] sm:$0xff]
    %v1922 = vld [vmem:[#allocation8 + $0x158] sm:$0xff]
    %v1923 = vld [vmem:[#allocation8 + $0x160] sm:$0xff]
    %v1924 = vld [vmem:[#allocation8 + $0x168] sm:$0xff]
    %v1925 = vld [vmem:[#allocation8 + $0x170] sm:$0xff]
    %v1926 = vld [vmem:[#allocation8 + $0x178] sm:$0xff]
    %v1927 = vld [vmem:[#allocation8 + $0x180] sm:$0xff]
    %v1928 = vld [vmem:[#allocation8 + $0x188] sm:$0xff]
    %v1929 = vld [vmem:[#allocation8 + $0x190] sm:$0xff]
    %v1930 = vld [vmem:[#allocation8 + $0x198] sm:$0xff]
    %v1931 = vld [vmem:[#allocation8 + $0x1a0] sm:$0xff]
    %v1932 = vld [vmem:[#allocation8 + $0x1a8] sm:$0xff]
    %v1933 = vld [vmem:[#allocation8 + $0x1b0] sm:$0xff]
    %v1934 = vld [vmem:[#allocation8 + $0x1b8] sm:$0xff]
    %v1935 = vld [vmem:[#allocation8 + $0x1c0] sm:$0xff]
    %v1936 = vld [vmem:[#allocation8 + $0x1c8] sm:$0xff]
    %v1937 = vld [vmem:[#allocation8 + $0x1d0] sm:$0xff]
    %v1938 = vld [vmem:[#allocation8 + $0x1d8] sm:$0xff]
    %v1939 = vld [vmem:[#allocation8 + $0x1e0] sm:$0xff]
    %v1940 = vld [vmem:[#allocation8 + $0x1e8] sm:$0xff]
    %v1941 = vld [vmem:[#allocation8 + $0x1f0] sm:$0xff]
    %v1942 = vld [vmem:[#allocation8 + $0x1f8] sm:$0xff]
    %v1943 = vld [vmem:[%s6] sm:$0xf]
    %v1945 = vperm.slane %v1943, 0
    %v1946 = vperm.slane %v1943, 1
    %v1947 = vperm.slane %v1943, 2
    %v1948 = vperm.slane %v1943, 3
    %v2017 = vunpack.c.l.b16 %v1879
    %v2018 = vunpack.c.h.b16 %v1879
    %v2019 = vunpack.c.l.b16 %v1880
    %v2020 = vunpack.c.h.b16 %v1880
    %v2021 = vunpack.c.l.b16 %v1881
    %v2022 = vunpack.c.h.b16 %v1881
    %v2023 = vunpack.c.l.b16 %v1882
    %v2024 = vunpack.c.h.b16 %v1882
    %v2025 = vunpack.c.l.b16 %v1883
    %v2026 = vunpack.c.h.b16 %v1883
    %v2027 = vunpack.c.l.b16 %v1884
    %v2028 = vunpack.c.h.b16 %v1884
    %v2029 = vunpack.c.l.b16 %v1885
    %v2030 = vunpack.c.h.b16 %v1885
    %v2031 = vunpack.c.l.b16 %v1886
    %v2032 = vunpack.c.h.b16 %v1886
    %v2033 = vunpack.c.l.b16 %v1887
    %v2034 = vunpack.c.h.b16 %v1887
    %v2035 = vunpack.c.l.b16 %v1888
    %v2036 = vunpack.c.h.b16 %v1888
    %v2037 = vunpack.c.l.b16 %v1889
    %v2038 = vunpack.c.h.b16 %v1889
    %v2039 = vunpack.c.l.b16 %v1890
    %v2040 = vunpack.c.h.b16 %v1890
    %v2041 = vunpack.c.l.b16 %v1891
    %v2042 = vunpack.c.h.b16 %v1891
    %v2043 = vunpack.c.l.b16 %v1892
    %v2044 = vunpack.c.h.b16 %v1892
    %v2045 = vunpack.c.l.b16 %v1893
    %v2046 = vunpack.c.h.b16 %v1893
    %v2047 = vunpack.c.l.b16 %v1894
    %v2048 = vunpack.c.h.b16 %v1894
    %v2049 = vunpack.c.l.b16 %v1895
    %v2050 = vunpack.c.h.b16 %v1895
    %v2051 = vunpack.c.l.b16 %v1896
    %v2052 = vunpack.c.h.b16 %v1896
    %v2053 = vunpack.c.l.b16 %v1897
    %v2054 = vunpack.c.h.b16 %v1897
    %v2055 = vunpack.c.l.b16 %v1898
    %v2056 = vunpack.c.h.b16 %v1898
    %v2057 = vunpack.c.l.b16 %v1899
    %v2058 = vunpack.c.h.b16 %v1899
    %v2059 = vunpack.c.l.b16 %v1900
    %v2060 = vunpack.c.h.b16 %v1900
    %v2061 = vunpack.c.l.b16 %v1901
    %v2062 = vunpack.c.h.b16 %v1901
    %v2063 = vunpack.c.l.b16 %v1902
    %v2064 = vunpack.c.h.b16 %v1902
    %v2065 = vunpack.c.l.b16 %v1903
    %v2066 = vunpack.c.h.b16 %v1903
    %v2067 = vunpack.c.l.b16 %v1904
    %v2068 = vunpack.c.h.b16 %v1904
    %v2069 = vunpack.c.l.b16 %v1905
    %v2070 = vunpack.c.h.b16 %v1905
    %v2071 = vunpack.c.l.b16 %v1906
    %v2072 = vunpack.c.h.b16 %v1906
    %v2073 = vunpack.c.l.b16 %v1907
    %v2074 = vunpack.c.h.b16 %v1907
    %v2075 = vunpack.c.l.b16 %v1908
    %v2076 = vunpack.c.h.b16 %v1908
    %v2077 = vunpack.c.l.b16 %v1909
    %v2078 = vunpack.c.h.b16 %v1909
    %v2079 = vunpack.c.l.b16 %v1910
    %v2080 = vunpack.c.h.b16 %v1910
    %v2081 = vunpack.c.l.b16 %v1911
    %v2082 = vunpack.c.h.b16 %v1911
    %v2083 = vunpack.c.l.b16 %v1912
    %v2084 = vunpack.c.h.b16 %v1912
    %v2085 = vunpack.c.l.b16 %v1913
    %v2086 = vunpack.c.h.b16 %v1913
    %v2087 = vunpack.c.l.b16 %v1914
    %v2088 = vunpack.c.h.b16 %v1914
    %v2089 = vunpack.c.l.b16 %v1915
    %v2090 = vunpack.c.h.b16 %v1915
    %v2091 = vunpack.c.l.b16 %v1916
    %v2092 = vunpack.c.h.b16 %v1916
    %v2093 = vunpack.c.l.b16 %v1917
    %v2094 = vunpack.c.h.b16 %v1917
    %v2095 = vunpack.c.l.b16 %v1918
    %v2096 = vunpack.c.h.b16 %v1918
    %v2097 = vunpack.c.l.b16 %v1919
    %v2098 = vunpack.c.h.b16 %v1919
    %v2099 = vunpack.c.l.b16 %v1920
    %v2100 = vunpack.c.h.b16 %v1920
    %v2101 = vunpack.c.l.b16 %v1921
    %v2102 = vunpack.c.h.b16 %v1921
    %v2103 = vunpack.c.l.b16 %v1922
    %v2104 = vunpack.c.h.b16 %v1922
    %v2105 = vunpack.c.l.b16 %v1923
    %v2106 = vunpack.c.h.b16 %v1923
    %v2107 = vunpack.c.l.b16 %v1924
    %v2108 = vunpack.c.h.b16 %v1924
    %v2109 = vunpack.c.l.b16 %v1925
    %v2110 = vunpack.c.h.b16 %v1925
    %v2111 = vunpack.c.l.b16 %v1926
    %v2112 = vunpack.c.h.b16 %v1926
    %v2113 = vunpack.c.l.b16 %v1927
    %v2114 = vunpack.c.h.b16 %v1927
    %v2115 = vunpack.c.l.b16 %v1928
    %v2116 = vunpack.c.h.b16 %v1928
    %v2117 = vunpack.c.l.b16 %v1929
    %v2118 = vunpack.c.h.b16 %v1929
    %v2119 = vunpack.c.l.b16 %v1930
    %v2120 = vunpack.c.h.b16 %v1930
    %v2121 = vunpack.c.l.b16 %v1931
    %v2122 = vunpack.c.h.b16 %v1931
    %v2123 = vunpack.c.l.b16 %v1932
    %v2124 = vunpack.c.h.b16 %v1932
    %v2125 = vunpack.c.l.b16 %v1933
    %v2126 = vunpack.c.h.b16 %v1933
    %v2127 = vunpack.c.l.b16 %v1934
    %v2128 = vunpack.c.h.b16 %v1934
    %v2129 = vunpack.c.l.b16 %v1935
    %v2130 = vunpack.c.h.b16 %v1935
    %v2131 = vunpack.c.l.b16 %v1936
    %v2132 = vunpack.c.h.b16 %v1936
    %v2133 = vunpack.c.l.b16 %v1937
    %v2134 = vunpack.c.h.b16 %v1937
    %v2135 = vunpack.c.l.b16 %v1938
    %v2136 = vunpack.c.h.b16 %v1938
    %v2137 = vunpack.c.l.b16 %v1939
    %v2138 = vunpack.c.h.b16 %v1939
    %v2139 = vunpack.c.l.b16 %v1940
    %v2140 = vunpack.c.h.b16 %v1940
    %v2141 = vunpack.c.l.b16 %v1941
    %v2142 = vunpack.c.h.b16 %v1941
    %v2143 = vunpack.c.l.b16 %v1942
    %v2144 = vunpack.c.h.b16 %v1942
    %v2145 = vpack.c.b16 %v2021, %v2017
    %v2146 = vpack.c.b16 %v2022, %v2018
    %v2147 = vpack.c.b16 %v2023, %v2019
    %v2148 = vpack.c.b16 %v2024, %v2020
    %v2149 = vpack.c.b16 %v2029, %v2025
    %v2150 = vpack.c.b16 %v2030, %v2026
    %v2151 = vpack.c.b16 %v2031, %v2027
    %v2152 = vpack.c.b16 %v2032, %v2028
    %v2153 = vpack.c.b16 %v2037, %v2033
    %v2154 = vpack.c.b16 %v2038, %v2034
    %v2155 = vpack.c.b16 %v2039, %v2035
    %v2156 = vpack.c.b16 %v2040, %v2036
    %v2157 = vpack.c.b16 %v2045, %v2041
    %v2158 = vpack.c.b16 %v2046, %v2042
    %v2159 = vpack.c.b16 %v2047, %v2043
    %v2160 = vpack.c.b16 %v2048, %v2044
    %v2161 = vpack.c.b16 %v2053, %v2049
    %v2162 = vpack.c.b16 %v2054, %v2050
    %v2163 = vpack.c.b16 %v2055, %v2051
    %v2164 = vpack.c.b16 %v2056, %v2052
    %v2165 = vpack.c.b16 %v2061, %v2057
    %v2166 = vpack.c.b16 %v2062, %v2058
    %v2167 = vpack.c.b16 %v2063, %v2059
    %v2168 = vpack.c.b16 %v2064, %v2060
    %v2169 = vpack.c.b16 %v2069, %v2065
    %v2170 = vpack.c.b16 %v2070, %v2066
    %v2171 = vpack.c.b16 %v2071, %v2067
    %v2172 = vpack.c.b16 %v2072, %v2068
    %v2173 = vpack.c.b16 %v2077, %v2073
    %v2174 = vpack.c.b16 %v2078, %v2074
    %v2175 = vpack.c.b16 %v2079, %v2075
    %v2176 = vpack.c.b16 %v2080, %v2076
    %v2177 = vpack.c.b16 %v2085, %v2081
    %v2178 = vpack.c.b16 %v2086, %v2082
    %v2179 = vpack.c.b16 %v2087, %v2083
    %v2180 = vpack.c.b16 %v2088, %v2084
    %v2181 = vpack.c.b16 %v2093, %v2089
    %v2182 = vpack.c.b16 %v2094, %v2090
    %v2183 = vpack.c.b16 %v2095, %v2091
    %v2184 = vpack.c.b16 %v2096, %v2092
    %v2185 = vpack.c.b16 %v2101, %v2097
    %v2186 = vpack.c.b16 %v2102, %v2098
    %v2187 = vpack.c.b16 %v2103, %v2099
    %v2188 = vpack.c.b16 %v2104, %v2100
    %v2189 = vpack.c.b16 %v2109, %v2105
    %v2190 = vpack.c.b16 %v2110, %v2106
    %v2191 = vpack.c.b16 %v2111, %v2107
    %v2192 = vpack.c.b16 %v2112, %v2108
    %v2193 = vpack.c.b16 %v2117, %v2113
    %v2194 = vpack.c.b16 %v2118, %v2114
    %v2195 = vpack.c.b16 %v2119, %v2115
    %v2196 = vpack.c.b16 %v2120, %v2116
    %v2197 = vpack.c.b16 %v2125, %v2121
    %v2198 = vpack.c.b16 %v2126, %v2122
    %v2199 = vpack.c.b16 %v2127, %v2123
    %v2200 = vpack.c.b16 %v2128, %v2124
    %v2201 = vpack.c.b16 %v2133, %v2129
    %v2202 = vpack.c.b16 %v2134, %v2130
    %v2203 = vpack.c.b16 %v2135, %v2131
    %v2204 = vpack.c.b16 %v2136, %v2132
    %v2205 = vpack.c.b16 %v2141, %v2137
    %v2206 = vpack.c.b16 %v2142, %v2138
    %v2207 = vpack.c.b16 %v2143, %v2139
    %v2208 = vpack.c.b16 %v2144, %v2140
    %2273 = vmatpush.bf16.msra.mxu0 %v2173
    %2274 = vmatpush.bf16.msra.mxu0 %v2169
    %2275 = vmatpush.bf16.msra.mxu0 %v2165
    %2276 = vmatpush.bf16.msra.mxu0 %v2161
    %2277 = vmatpush.bf16.msra.mxu0 %v2157
    %2278 = vmatpush.bf16.msra.mxu0 %v2153
    %2279 = vmatpush.bf16.msra.mxu0 %v2149
    %2280 = vmatpush.bf16.msra.mxu0 %v2145
    %2281 = vmatmul.bf16.gmra.mxu0 %v1566
    %v2282 = vpop.f32.mrf.mxu0
    %v2283 = vadd.f32 %v1945, %v2282
    %v2284 = vpop.f32.mrf.mxu0
    %2285 = vdwg.mxu0
    %2286 = vmatpush.bf16.msra.mxu0 %v2205
    %2287 = vmatpush.bf16.msra.mxu0 %v2201
    %2288 = vmatpush.bf16.msra.mxu0 %v2197
    %2289 = vmatpush.bf16.msra.mxu0 %v2193
    %2290 = vmatpush.bf16.msra.mxu0 %v2189
    %2291 = vmatpush.bf16.msra.mxu0 %v2185
    %2292 = vmatpush.bf16.msra.mxu0 %v2181
    %2293 = vmatpush.bf16.msra.mxu0 %v2177
    %2294 = vmatmul.bf16.gmra.mxu0 %v1878
    %v2295 = vpop.f32.mrf.mxu0
    %v2296 = vadd.f32 %v2283, %v2295
    %v2297 = vpop.f32.mrf.mxu0
    %2298 = vdwg.mxu0
    %2299 = vmatpush.bf16.msra.mxu0 %v2174
    %2300 = vmatpush.bf16.msra.mxu0 %v2170
    %2301 = vmatpush.bf16.msra.mxu0 %v2166
    %2302 = vmatpush.bf16.msra.mxu0 %v2162
    %2303 = vmatpush.bf16.msra.mxu0 %v2158
    %2304 = vmatpush.bf16.msra.mxu0 %v2154
    %2305 = vmatpush.bf16.msra.mxu0 %v2150
    %2306 = vmatpush.bf16.msra.mxu0 %v2146
    %2307 = vmatmul.bf16.gmra.mxu0 %v1566
    %v2308 = vpop.f32.mrf.mxu0
    %v2309 = vadd.f32 %v1946, %v2308
    %v2310 = vpop.f32.mrf.mxu0
    %2311 = vdwg.mxu0
    %2312 = vmatpush.bf16.msra.mxu0 %v2206
    %2313 = vmatpush.bf16.msra.mxu0 %v2202
    %2314 = vmatpush.bf16.msra.mxu0 %v2198
    %2315 = vmatpush.bf16.msra.mxu0 %v2194
    %2316 = vmatpush.bf16.msra.mxu0 %v2190
    %2317 = vmatpush.bf16.msra.mxu0 %v2186
    %2318 = vmatpush.bf16.msra.mxu0 %v2182
    %2319 = vmatpush.bf16.msra.mxu0 %v2178
    %2320 = vmatmul.bf16.gmra.mxu0 %v1878
    %v2321 = vpop.f32.mrf.mxu0
    %v2322 = vadd.f32 %v2309, %v2321
    %v2323 = vpop.f32.mrf.mxu0
    %2324 = vdwg.mxu0
    %2325 = vmatpush.bf16.msra.mxu0 %v2175
    %2326 = vmatpush.bf16.msra.mxu0 %v2171
    %2327 = vmatpush.bf16.msra.mxu0 %v2167
    %2328 = vmatpush.bf16.msra.mxu0 %v2163
    %2329 = vmatpush.bf16.msra.mxu0 %v2159
    %2330 = vmatpush.bf16.msra.mxu0 %v2155
    %2331 = vmatpush.bf16.msra.mxu0 %v2151
    %2332 = vmatpush.bf16.msra.mxu0 %v2147
    %2333 = vmatmul.bf16.gmra.mxu0 %v1566
    %v2334 = vpop.f32.mrf.mxu0
    %v2335 = vadd.f32 %v1947, %v2334
    %v2336 = vpop.f32.mrf.mxu0
    %2337 = vdwg.mxu0
    %2338 = vmatpush.bf16.msra.mxu0 %v2207
    %2339 = vmatpush.bf16.msra.mxu0 %v2203
    %2340 = vmatpush.bf16.msra.mxu0 %v2199
    %2341 = vmatpush.bf16.msra.mxu0 %v2195
    %2342 = vmatpush.bf16.msra.mxu0 %v2191
    %2343 = vmatpush.bf16.msra.mxu0 %v2187
    %2344 = vmatpush.bf16.msra.mxu0 %v2183
    %2345 = vmatpush.bf16.msra.mxu0 %v2179
    %2346 = vmatmul.bf16.gmra.mxu0 %v1878
    %v2347 = vpop.f32.mrf.mxu0
    %v2348 = vadd.f32 %v2335, %v2347
    %v2349 = vpop.f32.mrf.mxu0
    %2350 = vdwg.mxu0
    %2351 = vmatpush.bf16.msra.mxu0 %v2176
    %2352 = vmatpush.bf16.msra.mxu0 %v2172
    %2353 = vmatpush.bf16.msra.mxu0 %v2168
    %2354 = vmatpush.bf16.msra.mxu0 %v2164
    %2355 = vmatpush.bf16.msra.mxu0 %v2160
    %2356 = vmatpush.bf16.msra.mxu0 %v2156
    %2357 = vmatpush.bf16.msra.mxu0 %v2152
    %2358 = vmatpush.bf16.msra.mxu0 %v2148
    %2359 = vmatmul.bf16.gmra.mxu0 %v1566
    %v2360 = vpop.f32.mrf.mxu0
    %v2361 = vadd.f32 %v1948, %v2360
    %v2362 = vpop.f32.mrf.mxu0
    %2363 = vdwg.mxu0
    %2364 = vmatpush.bf16.msra.mxu0 %v2208
    %2365 = vmatpush.bf16.msra.mxu0 %v2204
    %2366 = vmatpush.bf16.msra.mxu0 %v2200
    %2367 = vmatpush.bf16.msra.mxu0 %v2196
    %2368 = vmatpush.bf16.msra.mxu0 %v2192
    %2369 = vmatpush.bf16.msra.mxu0 %v2188
    %2370 = vmatpush.bf16.msra.mxu0 %v2184
    %2371 = vmatpush.bf16.msra.mxu0 %v2180
    %2372 = vmatmul.bf16.gmra.mxu0 %v1878
    %v2373 = vpop.f32.mrf.mxu0
    %v2374 = vadd.f32 %v2361, %v2373
    %v2375 = vpop.f32.mrf.mxu0
    %2376 = vdwg.mxu0
    %v2377 = vxor.u32 %v2296, 2147483648
    %v2378 = vxor.u32 %v2322, 2147483648
    %v2379 = vxor.u32 %v2348, 2147483648
    %v2380 = vmul.f32 %v2377, 1.442695
    %v2381 = vpow.pop %v2380
    %v2382 = vmul.f32 %v2378, 1.442695
    %v2383 = vpow.pop %v2382
    %v2384 = vmul.f32 %v2379, 1.442695
    %v2385 = vpow.pop %v2384
    %v2386 = vadd.f32 %v2381, 1.0
    %v2387 = vadd.f32 %v2383, 1.0
    %v2388 = vadd.f32 %v2385, 1.0
    %v2389 = vrcp.pop %v2386
    %v2390 = vmul.f32 %v2386, %v2389
    %v2391 = vsub.f32 1.0, %v2390
    %v2392 = vmul.f32 %v2389, %v2391
    %v2393 = vadd.f32 %v2389, %v2392
    %vm2394 = vweird.f32 %v2386
    %vm2395 = vweird.f32 %v2389
    %vm2396 = vmor %vm2394, %vm2395
    %v2397 = vsel %vm2396, %v2389, %v2393
    %v2398 = vand.u32 2147483647, %v2386
    %vm2399 = vcmp.eq.f32.partialorder %v2398, 8.507059e+37
    %v2400 = vand.u32 %v2386, 2147483648
    %v2401 = vor.u32 1.1754944e-38, %v2400
    %v2402 = vsel %vm2399, %v2401, %v2397
    %v2403 = vmul.f32 1.0, %v2402
    %v2404 = vrcp.pop %v2387
    %v2405 = vmul.f32 %v2387, %v2404
    %v2406 = vsub.f32 1.0, %v2405
    %v2407 = vmul.f32 %v2404, %v2406
    %v2408 = vadd.f32 %v2404, %v2407
    %vm2409 = vweird.f32 %v2387
    %vm2410 = vweird.f32 %v2404
    %vm2411 = vmor %vm2409, %vm2410
    %v2412 = vsel %vm2411, %v2404, %v2408
    %v2413 = vand.u32 2147483647, %v2387
    %vm2414 = vcmp.eq.f32.partialorder %v2413, 8.507059e+37
    %v2415 = vand.u32 %v2387, 2147483648
    %v2416 = vor.u32 1.1754944e-38, %v2415
    %v2417 = vsel %vm2414, %v2416, %v2412
    %v2418 = vmul.f32 1.0, %v2417
    %v2419 = vrcp.pop %v2388
    %v2420 = vmul.f32 %v2388, %v2419
    %v2421 = vsub.f32 1.0, %v2420
    %v2422 = vmul.f32 %v2419, %v2421
    %v2423 = vadd.f32 %v2419, %v2422
    %vm2424 = vweird.f32 %v2388
    %vm2425 = vweird.f32 %v2419
    %vm2426 = vmor %vm2424, %vm2425
    %v2427 = vsel %vm2426, %v2419, %v2423
    %v2428 = vand.u32 2147483647, %v2388
    %vm2429 = vcmp.eq.f32.partialorder %v2428, 8.507059e+37
    %v2430 = vand.u32 %v2388, 2147483648
    %v2431 = vor.u32 1.1754944e-38, %v2430
    %v2432 = vsel %vm2429, %v2431, %v2427
    %v2433 = vmul.f32 1.0, %v2432
    %v2434 = vtanh.pop %v2374
    %v2435 = vmul.f32 %v2418, %v1558
    %v2436 = vmul.f32 %v2403, %v2434
    %v2437 = vadd.f32 %v2435, %v2436
    %v2438 = vtanh.pop %v2437
    %v2439 = vmul.f32 %v2433, %v2438
    %s2440 = scalar_lea.vmem %s7, 8
    %2441 = vst [vmem:[%s2440] sm:$0xff] %v2439
    %v2442 = vld [vmem:[#allocation2 + $0x60] sm:$0xff]
    %v2443 = vld [vmem:[#allocation2 + $0x68] sm:$0xff]
    %v2444 = vld [vmem:[#allocation2 + $0x70] sm:$0xff]
    %v2445 = vld [vmem:[#allocation2 + $0x78] sm:$0xff]
    %v2446 = vpack.c.bf16 %v1877, %v1877
    %v2447 = vld [vmem:[#allocation6] sm:$0xff]
    %v2448 = vld [vmem:[#allocation6 + $0x8] sm:$0xff]
    %v2449 = vld [vmem:[#allocation6 + $0x10] sm:$0xff]
    %v2450 = vld [vmem:[#allocation6 + $0x18] sm:$0xff]
    %v2451 = vld [vmem:[#allocation6 + $0x20] sm:$0xff]
    %v2452 = vld [vmem:[#allocation6 + $0x28] sm:$0xff]
    %v2453 = vld [vmem:[#allocation6 + $0x30] sm:$0xff]
    %v2454 = vld [vmem:[#allocation6 + $0x38] sm:$0xff]
    %v2455 = vld [vmem:[#allocation6 + $0x40] sm:$0xff]
    %v2456 = vld [vmem:[#allocation6 + $0x48] sm:$0xff]
    %v2457 = vld [vmem:[#allocation6 + $0x50] sm:$0xff]
    %v2458 = vld [vmem:[#allocation6 + $0x58] sm:$0xff]
    %v2459 = vld [vmem:[#allocation6 + $0x60] sm:$0xff]
    %v2460 = vld [vmem:[#allocation6 + $0x68] sm:$0xff]
    %v2461 = vld [vmem:[#allocation6 + $0x70] sm:$0xff]
    %v2462 = vld [vmem:[#allocation6 + $0x78] sm:$0xff]
    %v2463 = vld [vmem:[#allocation6 + $0x80] sm:$0xff]
    %v2464 = vld [vmem:[#allocation6 + $0x88] sm:$0xff]
    %v2465 = vld [vmem:[#allocation6 + $0x90] sm:$0xff]
    %v2466 = vld [vmem:[#allocation6 + $0x98] sm:$0xff]
    %v2467 = vld [vmem:[#allocation6 + $0xa0] sm:$0xff]
    %v2468 = vld [vmem:[#allocation6 + $0xa8] sm:$0xff]
    %v2469 = vld [vmem:[#allocation6 + $0xb0] sm:$0xff]
    %v2470 = vld [vmem:[#allocation6 + $0xb8] sm:$0xff]
    %v2471 = vld [vmem:[#allocation6 + $0xc0] sm:$0xff]
    %v2472 = vld [vmem:[#allocation6 + $0xc8] sm:$0xff]
    %v2473 = vld [vmem:[#allocation6 + $0xd0] sm:$0xff]
    %v2474 = vld [vmem:[#allocation6 + $0xd8] sm:$0xff]
    %v2475 = vld [vmem:[#allocation6 + $0xe0] sm:$0xff]
    %v2476 = vld [vmem:[#allocation6 + $0xe8] sm:$0xff]
    %v2477 = vld [vmem:[#allocation6 + $0xf0] sm:$0xff]
    %v2478 = vld [vmem:[#allocation6 + $0xf8] sm:$0xff]
    %v2511 = vunpack.c.l.b16 %v2447
    %v2512 = vunpack.c.h.b16 %v2447
    %v2513 = vunpack.c.l.b16 %v2448
    %v2514 = vunpack.c.h.b16 %v2448
    %v2515 = vunpack.c.l.b16 %v2449
    %v2516 = vunpack.c.h.b16 %v2449
    %v2517 = vunpack.c.l.b16 %v2450
    %v2518 = vunpack.c.h.b16 %v2450
    %v2519 = vunpack.c.l.b16 %v2451
    %v2520 = vunpack.c.h.b16 %v2451
    %v2521 = vunpack.c.l.b16 %v2452
    %v2522 = vunpack.c.h.b16 %v2452
    %v2523 = vunpack.c.l.b16 %v2453
    %v2524 = vunpack.c.h.b16 %v2453
    %v2525 = vunpack.c.l.b16 %v2454
    %v2526 = vunpack.c.h.b16 %v2454
    %v2527 = vunpack.c.l.b16 %v2455
    %v2528 = vunpack.c.h.b16 %v2455
    %v2529 = vunpack.c.l.b16 %v2456
    %v2530 = vunpack.c.h.b16 %v2456
    %v2531 = vunpack.c.l.b16 %v2457
    %v2532 = vunpack.c.h.b16 %v2457
    %v2533 = vunpack.c.l.b16 %v2458
    %v2534 = vunpack.c.h.b16 %v2458
    %v2535 = vunpack.c.l.b16 %v2459
    %v2536 = vunpack.c.h.b16 %v2459
    %v2537 = vunpack.c.l.b16 %v2460
    %v2538 = vunpack.c.h.b16 %v2460
    %v2539 = vunpack.c.l.b16 %v2461
    %v2540 = vunpack.c.h.b16 %v2461
    %v2541 = vunpack.c.l.b16 %v2462
    %v2542 = vunpack.c.h.b16 %v2462
    %v2543 = vunpack.c.l.b16 %v2463
    %v2544 = vunpack.c.h.b16 %v2463
    %v2545 = vunpack.c.l.b16 %v2464
    %v2546 = vunpack.c.h.b16 %v2464
    %v2547 = vunpack.c.l.b16 %v2465
    %v2548 = vunpack.c.h.b16 %v2465
    %v2549 = vunpack.c.l.b16 %v2466
    %v2550 = vunpack.c.h.b16 %v2466
    %v2551 = vunpack.c.l.b16 %v2467
    %v2552 = vunpack.c.h.b16 %v2467
    %v2553 = vunpack.c.l.b16 %v2468
    %v2554 = vunpack.c.h.b16 %v2468
    %v2555 = vunpack.c.l.b16 %v2469
    %v2556 = vunpack.c.h.b16 %v2469
    %v2557 = vunpack.c.l.b16 %v2470
    %v2558 = vunpack.c.h.b16 %v2470
    %v2559 = vunpack.c.l.b16 %v2471
    %v2560 = vunpack.c.h.b16 %v2471
    %v2561 = vunpack.c.l.b16 %v2472
    %v2562 = vunpack.c.h.b16 %v2472
    %v2563 = vunpack.c.l.b16 %v2473
    %v2564 = vunpack.c.h.b16 %v2473
    %v2565 = vunpack.c.l.b16 %v2474
    %v2566 = vunpack.c.h.b16 %v2474
    %v2567 = vunpack.c.l.b16 %v2475
    %v2568 = vunpack.c.h.b16 %v2475
    %v2569 = vunpack.c.l.b16 %v2476
    %v2570 = vunpack.c.h.b16 %v2476
    %v2571 = vunpack.c.l.b16 %v2477
    %v2572 = vunpack.c.h.b16 %v2477
    %v2573 = vunpack.c.l.b16 %v2478
    %v2574 = vunpack.c.h.b16 %v2478
    %v2575 = vpack.c.b16 %v2515, %v2511
    %v2576 = vpack.c.b16 %v2516, %v2512
    %v2577 = vpack.c.b16 %v2517, %v2513
    %v2578 = vpack.c.b16 %v2518, %v2514
    %v2579 = vpack.c.b16 %v2523, %v2519
    %v2580 = vpack.c.b16 %v2524, %v2520
    %v2581 = vpack.c.b16 %v2525, %v2521
    %v2582 = vpack.c.b16 %v2526, %v2522
    %v2583 = vpack.c.b16 %v2531, %v2527
    %v2584 = vpack.c.b16 %v2532, %v2528
    %v2585 = vpack.c.b16 %v2533, %v2529
    %v2586 = vpack.c.b16 %v2534, %v2530
    %v2587 = vpack.c.b16 %v2539, %v2535
    %v2588 = vpack.c.b16 %v2540, %v2536
    %v2589 = vpack.c.b16 %v2541, %v2537
    %v2590 = vpack.c.b16 %v2542, %v2538
    %v2591 = vpack.c.b16 %v2547, %v2543
    %v2592 = vpack.c.b16 %v2548, %v2544
    %v2593 = vpack.c.b16 %v2549, %v2545
    %v2594 = vpack.c.b16 %v2550, %v2546
    %v2595 = vpack.c.b16 %v2555, %v2551
    %v2596 = vpack.c.b16 %v2556, %v2552
    %v2597 = vpack.c.b16 %v2557, %v2553
    %v2598 = vpack.c.b16 %v2558, %v2554
    %v2599 = vpack.c.b16 %v2563, %v2559
    %v2600 = vpack.c.b16 %v2564, %v2560
    %v2601 = vpack.c.b16 %v2565, %v2561
    %v2602 = vpack.c.b16 %v2566, %v2562
    %v2603 = vpack.c.b16 %v2571, %v2567
    %v2604 = vpack.c.b16 %v2572, %v2568
    %v2605 = vpack.c.b16 %v2573, %v2569
    %v2606 = vpack.c.b16 %v2574, %v2570
    %2639 = vmatpush.bf16.msra.mxu0 %v2603
    %2640 = vmatpush.bf16.msra.mxu0 %v2599
    %2641 = vmatpush.bf16.msra.mxu0 %v2595
    %2642 = vmatpush.bf16.msra.mxu0 %v2591
    %2643 = vmatpush.bf16.msra.mxu0 %v2587
    %2644 = vmatpush.bf16.msra.mxu0 %v2583
    %2645 = vmatpush.bf16.msra.mxu0 %v2579
    %2646 = vmatpush.bf16.msra.mxu0 %v2575
    %2647 = vmatmul.bf16.gmra.mxu0 %v2446
    %v2648 = vpop.f32.mrf.mxu0
    %v2649 = vadd.f32 0.0, %v2648
    %v2650 = vpop.f32.mrf.mxu0
    %2651 = vdwg.mxu0
    %2652 = vmatpush.bf16.msra.mxu0 %v2604
    %2653 = vmatpush.bf16.msra.mxu0 %v2600
    %2654 = vmatpush.bf16.msra.mxu0 %v2596
    %2655 = vmatpush.bf16.msra.mxu0 %v2592
    %2656 = vmatpush.bf16.msra.mxu0 %v2588
    %2657 = vmatpush.bf16.msra.mxu0 %v2584
    %2658 = vmatpush.bf16.msra.mxu0 %v2580
    %2659 = vmatpush.bf16.msra.mxu0 %v2576
    %2660 = vmatmul.bf16.gmra.mxu0 %v2446
    %v2661 = vpop.f32.mrf.mxu0
    %v2662 = vadd.f32 0.0, %v2661
    %v2663 = vpop.f32.mrf.mxu0
    %2664 = vdwg.mxu0
    %2665 = vmatpush.bf16.msra.mxu0 %v2605
    %2666 = vmatpush.bf16.msra.mxu0 %v2601
    %2667 = vmatpush.bf16.msra.mxu0 %v2597
    %2668 = vmatpush.bf16.msra.mxu0 %v2593
    %2669 = vmatpush.bf16.msra.mxu0 %v2589
    %2670 = vmatpush.bf16.msra.mxu0 %v2585
    %2671 = vmatpush.bf16.msra.mxu0 %v2581
    %2672 = vmatpush.bf16.msra.mxu0 %v2577
    %2673 = vmatmul.bf16.gmra.mxu0 %v2446
    %v2674 = vpop.f32.mrf.mxu0
    %v2675 = vadd.f32 0.0, %v2674
    %v2676 = vpop.f32.mrf.mxu0
    %2677 = vdwg.mxu0
    %2678 = vmatpush.bf16.msra.mxu0 %v2606
    %2679 = vmatpush.bf16.msra.mxu0 %v2602
    %2680 = vmatpush.bf16.msra.mxu0 %v2598
    %2681 = vmatpush.bf16.msra.mxu0 %v2594
    %2682 = vmatpush.bf16.msra.mxu0 %v2590
    %2683 = vmatpush.bf16.msra.mxu0 %v2586
    %2684 = vmatpush.bf16.msra.mxu0 %v2582
    %2685 = vmatpush.bf16.msra.mxu0 %v2578
    %2686 = vmatmul.bf16.gmra.mxu0 %v2446
    %v2687 = vpop.f32.mrf.mxu0
    %v2688 = vadd.f32 0.0, %v2687
    %v2689 = vpop.f32.mrf.mxu0
    %2690 = vdwg.mxu0
    %v2691 = vadd.f32 %v2442, %v2649
    %v2692 = vadd.f32 %v2443, %v2662
    %v2693 = vadd.f32 %v2444, %v2675
    %v2694 = vadd.f32 %v2445, %v2688
    %v2695 = vxor.u32 %v2691, 2147483648
    %v2696 = vxor.u32 %v2692, 2147483648
    %v2697 = vxor.u32 %v2693, 2147483648
    %v2698 = vmul.f32 %v2695, 1.442695
    %v2699 = vpow.pop %v2698
    %v2700 = vmul.f32 %v2696, 1.442695
    %v2701 = vpow.pop %v2700
    %v2702 = vmul.f32 %v2697, 1.442695
    %v2703 = vpow.pop %v2702
    %v2704 = vadd.f32 %v2699, 1.0
    %v2705 = vadd.f32 %v2701, 1.0
    %v2706 = vadd.f32 %v2703, 1.0
    %v2707 = vrcp.pop %v2704
    %v2708 = vmul.f32 %v2704, %v2707
    %v2709 = vsub.f32 1.0, %v2708
    %v2710 = vmul.f32 %v2707, %v2709
    %v2711 = vadd.f32 %v2707, %v2710
    %vm2712 = vweird.f32 %v2704
    %vm2713 = vweird.f32 %v2707
    %vm2714 = vmor %vm2712, %vm2713
    %v2715 = vsel %vm2714, %v2707, %v2711
    %v2716 = vand.u32 2147483647, %v2704
    %vm2717 = vcmp.eq.f32.partialorder %v2716, 8.507059e+37
    %v2718 = vand.u32 %v2704, 2147483648
    %v2719 = vor.u32 1.1754944e-38, %v2718
    %v2720 = vsel %vm2717, %v2719, %v2715
    %v2721 = vmul.f32 1.0, %v2720
    %v2722 = vrcp.pop %v2705
    %v2723 = vmul.f32 %v2705, %v2722
    %v2724 = vsub.f32 1.0, %v2723
    %v2725 = vmul.f32 %v2722, %v2724
    %v2726 = vadd.f32 %v2722, %v2725
    %vm2727 = vweird.f32 %v2705
    %vm2728 = vweird.f32 %v2722
    %vm2729 = vmor %vm2727, %vm2728
    %v2730 = vsel %vm2729, %v2722, %v2726
    %v2731 = vand.u32 2147483647, %v2705
    %vm2732 = vcmp.eq.f32.partialorder %v2731, 8.507059e+37
    %v2733 = vand.u32 %v2705, 2147483648
    %v2734 = vor.u32 1.1754944e-38, %v2733
    %v2735 = vsel %vm2732, %v2734, %v2730
    %v2736 = vmul.f32 1.0, %v2735
    %v2737 = vrcp.pop %v2706
    %v2738 = vmul.f32 %v2706, %v2737
    %v2739 = vsub.f32 1.0, %v2738
    %v2740 = vmul.f32 %v2737, %v2739
    %v2741 = vadd.f32 %v2737, %v2740
    %vm2742 = vweird.f32 %v2706
    %vm2743 = vweird.f32 %v2737
    %vm2744 = vmor %vm2742, %vm2743
    %v2745 = vsel %vm2744, %v2737, %v2741
    %v2746 = vand.u32 2147483647, %v2706
    %vm2747 = vcmp.eq.f32.partialorder %v2746, 8.507059e+37
    %v2748 = vand.u32 %v2706, 2147483648
    %v2749 = vor.u32 1.1754944e-38, %v2748
    %v2750 = vsel %vm2747, %v2749, %v2745
    %v2751 = vmul.f32 1.0, %v2750
    %v2752 = vtanh.pop %v2694
    %v2753 = vmul.f32 %v2736, %v1875
    %v2754 = vmul.f32 %v2721, %v2752
    %v2755 = vadd.f32 %v2753, %v2754
    %v2756 = vtanh.pop %v2755
    %v2757 = vmul.f32 %v2751, %v2756
    %v2758 = vpack.c.bf16 %v2439, %v2439
    %v2759 = vld [vmem:[#allocation8] sm:$0xff]
    %v2760 = vld [vmem:[#allocation8 + $0x8] sm:$0xff]
    %v2761 = vld [vmem:[#allocation8 + $0x10] sm:$0xff]
    %v2762 = vld [vmem:[#allocation8 + $0x18] sm:$0xff]
    %v2763 = vld [vmem:[#allocation8 + $0x20] sm:$0xff]
    %v2764 = vld [vmem:[#allocation8 + $0x28] sm:$0xff]
    %v2765 = vld [vmem:[#allocation8 + $0x30] sm:$0xff]
    %v2766 = vld [vmem:[#allocation8 + $0x38] sm:$0xff]
    %v2767 = vld [vmem:[#allocation8 + $0x40] sm:$0xff]
    %v2768 = vld [vmem:[#allocation8 + $0x48] sm:$0xff]
    %v2769 = vld [vmem:[#allocation8 + $0x50] sm:$0xff]
    %v2770 = vld [vmem:[#allocation8 + $0x58] sm:$0xff]
    %v2771 = vld [vmem:[#allocation8 + $0x60] sm:$0xff]
    %v2772 = vld [vmem:[#allocation8 + $0x68] sm:$0xff]
    %v2773 = vld [vmem:[#allocation8 + $0x70] sm:$0xff]
    %v2774 = vld [vmem:[#allocation8 + $0x78] sm:$0xff]
    %v2775 = vld [vmem:[#allocation8 + $0x80] sm:$0xff]
    %v2776 = vld [vmem:[#allocation8 + $0x88] sm:$0xff]
    %v2777 = vld [vmem:[#allocation8 + $0x90] sm:$0xff]
    %v2778 = vld [vmem:[#allocation8 + $0x98] sm:$0xff]
    %v2779 = vld [vmem:[#allocation8 + $0xa0] sm:$0xff]
    %v2780 = vld [vmem:[#allocation8 + $0xa8] sm:$0xff]
    %v2781 = vld [vmem:[#allocation8 + $0xb0] sm:$0xff]
    %v2782 = vld [vmem:[#allocation8 + $0xb8] sm:$0xff]
    %v2783 = vld [vmem:[#allocation8 + $0xc0] sm:$0xff]
    %v2784 = vld [vmem:[#allocation8 + $0xc8] sm:$0xff]
    %v2785 = vld [vmem:[#allocation8 + $0xd0] sm:$0xff]
    %v2786 = vld [vmem:[#allocation8 + $0xd8] sm:$0xff]
    %v2787 = vld [vmem:[#allocation8 + $0xe0] sm:$0xff]
    %v2788 = vld [vmem:[#allocation8 + $0xe8] sm:$0xff]
    %v2789 = vld [vmem:[#allocation8 + $0xf0] sm:$0xff]
    %v2790 = vld [vmem:[#allocation8 + $0xf8] sm:$0xff]
    %v2791 = vld [vmem:[#allocation8 + $0x100] sm:$0xff]
    %v2792 = vld [vmem:[#allocation8 + $0x108] sm:$0xff]
    %v2793 = vld [vmem:[#allocation8 + $0x110] sm:$0xff]
    %v2794 = vld [vmem:[#allocation8 + $0x118] sm:$0xff]
    %v2795 = vld [vmem:[#allocation8 + $0x120] sm:$0xff]
    %v2796 = vld [vmem:[#allocation8 + $0x128] sm:$0xff]
    %v2797 = vld [vmem:[#allocation8 + $0x130] sm:$0xff]
    %v2798 = vld [vmem:[#allocation8 + $0x138] sm:$0xff]
    %v2799 = vld [vmem:[#allocation8 + $0x140] sm:$0xff]
    %v2800 = vld [vmem:[#allocation8 + $0x148] sm:$0xff]
    %v2801 = vld [vmem:[#allocation8 + $0x150] sm:$0xff]
    %v2802 = vld [vmem:[#allocation8 + $0x158] sm:$0xff]
    %v2803 = vld [vmem:[#allocation8 + $0x160] sm:$0xff]
    %v2804 = vld [vmem:[#allocation8 + $0x168] sm:$0xff]
    %v2805 = vld [vmem:[#allocation8 + $0x170] sm:$0xff]
    %v2806 = vld [vmem:[#allocation8 + $0x178] sm:$0xff]
    %v2807 = vld [vmem:[#allocation8 + $0x180] sm:$0xff]
    %v2808 = vld [vmem:[#allocation8 + $0x188] sm:$0xff]
    %v2809 = vld [vmem:[#allocation8 + $0x190] sm:$0xff]
    %v2810 = vld [vmem:[#allocation8 + $0x198] sm:$0xff]
    %v2811 = vld [vmem:[#allocation8 + $0x1a0] sm:$0xff]
    %v2812 = vld [vmem:[#allocation8 + $0x1a8] sm:$0xff]
    %v2813 = vld [vmem:[#allocation8 + $0x1b0] sm:$0xff]
    %v2814 = vld [vmem:[#allocation8 + $0x1b8] sm:$0xff]
    %v2815 = vld [vmem:[#allocation8 + $0x1c0] sm:$0xff]
    %v2816 = vld [vmem:[#allocation8 + $0x1c8] sm:$0xff]
    %v2817 = vld [vmem:[#allocation8 + $0x1d0] sm:$0xff]
    %v2818 = vld [vmem:[#allocation8 + $0x1d8] sm:$0xff]
    %v2819 = vld [vmem:[#allocation8 + $0x1e0] sm:$0xff]
    %v2820 = vld [vmem:[#allocation8 + $0x1e8] sm:$0xff]
    %v2821 = vld [vmem:[#allocation8 + $0x1f0] sm:$0xff]
    %v2822 = vld [vmem:[#allocation8 + $0x1f8] sm:$0xff]
    %v2823 = vld [vmem:[%s6] sm:$0xf]
    %v2825 = vperm.slane %v2823, 0
    %v2826 = vperm.slane %v2823, 1
    %v2827 = vperm.slane %v2823, 2
    %v2828 = vperm.slane %v2823, 3
    %v2897 = vunpack.c.l.b16 %v2759
    %v2898 = vunpack.c.h.b16 %v2759
    %v2899 = vunpack.c.l.b16 %v2760
    %v2900 = vunpack.c.h.b16 %v2760
    %v2901 = vunpack.c.l.b16 %v2761
    %v2902 = vunpack.c.h.b16 %v2761
    %v2903 = vunpack.c.l.b16 %v2762
    %v2904 = vunpack.c.h.b16 %v2762
    %v2905 = vunpack.c.l.b16 %v2763
    %v2906 = vunpack.c.h.b16 %v2763
    %v2907 = vunpack.c.l.b16 %v2764
    %v2908 = vunpack.c.h.b16 %v2764
    %v2909 = vunpack.c.l.b16 %v2765
    %v2910 = vunpack.c.h.b16 %v2765
    %v2911 = vunpack.c.l.b16 %v2766
    %v2912 = vunpack.c.h.b16 %v2766
    %v2913 = vunpack.c.l.b16 %v2767
    %v2914 = vunpack.c.h.b16 %v2767
    %v2915 = vunpack.c.l.b16 %v2768
    %v2916 = vunpack.c.h.b16 %v2768
    %v2917 = vunpack.c.l.b16 %v2769
    %v2918 = vunpack.c.h.b16 %v2769
    %v2919 = vunpack.c.l.b16 %v2770
    %v2920 = vunpack.c.h.b16 %v2770
    %v2921 = vunpack.c.l.b16 %v2771
    %v2922 = vunpack.c.h.b16 %v2771
    %v2923 = vunpack.c.l.b16 %v2772
    %v2924 = vunpack.c.h.b16 %v2772
    %v2925 = vunpack.c.l.b16 %v2773
    %v2926 = vunpack.c.h.b16 %v2773
    %v2927 = vunpack.c.l.b16 %v2774
    %v2928 = vunpack.c.h.b16 %v2774
    %v2929 = vunpack.c.l.b16 %v2775
    %v2930 = vunpack.c.h.b16 %v2775
    %v2931 = vunpack.c.l.b16 %v2776
    %v2932 = vunpack.c.h.b16 %v2776
    %v2933 = vunpack.c.l.b16 %v2777
    %v2934 = vunpack.c.h.b16 %v2777
    %v2935 = vunpack.c.l.b16 %v2778
    %v2936 = vunpack.c.h.b16 %v2778
    %v2937 = vunpack.c.l.b16 %v2779
    %v2938 = vunpack.c.h.b16 %v2779
    %v2939 = vunpack.c.l.b16 %v2780
    %v2940 = vunpack.c.h.b16 %v2780
    %v2941 = vunpack.c.l.b16 %v2781
    %v2942 = vunpack.c.h.b16 %v2781
    %v2943 = vunpack.c.l.b16 %v2782
    %v2944 = vunpack.c.h.b16 %v2782
    %v2945 = vunpack.c.l.b16 %v2783
    %v2946 = vunpack.c.h.b16 %v2783
    %v2947 = vunpack.c.l.b16 %v2784
    %v2948 = vunpack.c.h.b16 %v2784
    %v2949 = vunpack.c.l.b16 %v2785
    %v2950 = vunpack.c.h.b16 %v2785
    %v2951 = vunpack.c.l.b16 %v2786
    %v2952 = vunpack.c.h.b16 %v2786
    %v2953 = vunpack.c.l.b16 %v2787
    %v2954 = vunpack.c.h.b16 %v2787
    %v2955 = vunpack.c.l.b16 %v2788
    %v2956 = vunpack.c.h.b16 %v2788
    %v2957 = vunpack.c.l.b16 %v2789
    %v2958 = vunpack.c.h.b16 %v2789
    %v2959 = vunpack.c.l.b16 %v2790
    %v2960 = vunpack.c.h.b16 %v2790
    %v2961 = vunpack.c.l.b16 %v2791
    %v2962 = vunpack.c.h.b16 %v2791
    %v2963 = vunpack.c.l.b16 %v2792
    %v2964 = vunpack.c.h.b16 %v2792
    %v2965 = vunpack.c.l.b16 %v2793
    %v2966 = vunpack.c.h.b16 %v2793
    %v2967 = vunpack.c.l.b16 %v2794
    %v2968 = vunpack.c.h.b16 %v2794
    %v2969 = vunpack.c.l.b16 %v2795
    %v2970 = vunpack.c.h.b16 %v2795
    %v2971 = vunpack.c.l.b16 %v2796
    %v2972 = vunpack.c.h.b16 %v2796
    %v2973 = vunpack.c.l.b16 %v2797
    %v2974 = vunpack.c.h.b16 %v2797
    %v2975 = vunpack.c.l.b16 %v2798
    %v2976 = vunpack.c.h.b16 %v2798
    %v2977 = vunpack.c.l.b16 %v2799
    %v2978 = vunpack.c.h.b16 %v2799
    %v2979 = vunpack.c.l.b16 %v2800
    %v2980 = vunpack.c.h.b16 %v2800
    %v2981 = vunpack.c.l.b16 %v2801
    %v2982 = vunpack.c.h.b16 %v2801
    %v2983 = vunpack.c.l.b16 %v2802
    %v2984 = vunpack.c.h.b16 %v2802
    %v2985 = vunpack.c.l.b16 %v2803
    %v2986 = vunpack.c.h.b16 %v2803
    %v2987 = vunpack.c.l.b16 %v2804
    %v2988 = vunpack.c.h.b16 %v2804
    %v2989 = vunpack.c.l.b16 %v2805
    %v2990 = vunpack.c.h.b16 %v2805
    %v2991 = vunpack.c.l.b16 %v2806
    %v2992 = vunpack.c.h.b16 %v2806
    %v2993 = vunpack.c.l.b16 %v2807
    %v2994 = vunpack.c.h.b16 %v2807
    %v2995 = vunpack.c.l.b16 %v2808
    %v2996 = vunpack.c.h.b16 %v2808
    %v2997 = vunpack.c.l.b16 %v2809
    %v2998 = vunpack.c.h.b16 %v2809
    %v2999 = vunpack.c.l.b16 %v2810
    %v3000 = vunpack.c.h.b16 %v2810
    %v3001 = vunpack.c.l.b16 %v2811
    %v3002 = vunpack.c.h.b16 %v2811
    %v3003 = vunpack.c.l.b16 %v2812
    %v3004 = vunpack.c.h.b16 %v2812
    %v3005 = vunpack.c.l.b16 %v2813
    %v3006 = vunpack.c.h.b16 %v2813
    %v3007 = vunpack.c.l.b16 %v2814
    %v3008 = vunpack.c.h.b16 %v2814
    %v3009 = vunpack.c.l.b16 %v2815
    %v3010 = vunpack.c.h.b16 %v2815
    %v3011 = vunpack.c.l.b16 %v2816
    %v3012 = vunpack.c.h.b16 %v2816
    %v3013 = vunpack.c.l.b16 %v2817
    %v3014 = vunpack.c.h.b16 %v2817
    %v3015 = vunpack.c.l.b16 %v2818
    %v3016 = vunpack.c.h.b16 %v2818
    %v3017 = vunpack.c.l.b16 %v2819
    %v3018 = vunpack.c.h.b16 %v2819
    %v3019 = vunpack.c.l.b16 %v2820
    %v3020 = vunpack.c.h.b16 %v2820
    %v3021 = vunpack.c.l.b16 %v2821
    %v3022 = vunpack.c.h.b16 %v2821
    %v3023 = vunpack.c.l.b16 %v2822
    %v3024 = vunpack.c.h.b16 %v2822
    %v3025 = vpack.c.b16 %v2901, %v2897
    %v3026 = vpack.c.b16 %v2902, %v2898
    %v3027 = vpack.c.b16 %v2903, %v2899
    %v3028 = vpack.c.b16 %v2904, %v2900
    %v3029 = vpack.c.b16 %v2909, %v2905
    %v3030 = vpack.c.b16 %v2910, %v2906
    %v3031 = vpack.c.b16 %v2911, %v2907
    %v3032 = vpack.c.b16 %v2912, %v2908
    %v3033 = vpack.c.b16 %v2917, %v2913
    %v3034 = vpack.c.b16 %v2918, %v2914
    %v3035 = vpack.c.b16 %v2919, %v2915
    %v3036 = vpack.c.b16 %v2920, %v2916
    %v3037 = vpack.c.b16 %v2925, %v2921
    %v3038 = vpack.c.b16 %v2926, %v2922
    %v3039 = vpack.c.b16 %v2927, %v2923
    %v3040 = vpack.c.b16 %v2928, %v2924
    %v3041 = vpack.c.b16 %v2933, %v2929
    %v3042 = vpack.c.b16 %v2934, %v2930
    %v3043 = vpack.c.b16 %v2935, %v2931
    %v3044 = vpack.c.b16 %v2936, %v2932
    %v3045 = vpack.c.b16 %v2941, %v2937
    %v3046 = vpack.c.b16 %v2942, %v2938
    %v3047 = vpack.c.b16 %v2943, %v2939
    %v3048 = vpack.c.b16 %v2944, %v2940
    %v3049 = vpack.c.b16 %v2949, %v2945
    %v3050 = vpack.c.b16 %v2950, %v2946
    %v3051 = vpack.c.b16 %v2951, %v2947
    %v3052 = vpack.c.b16 %v2952, %v2948
    %v3053 = vpack.c.b16 %v2957, %v2953
    %v3054 = vpack.c.b16 %v2958, %v2954
    %v3055 = vpack.c.b16 %v2959, %v2955
    %v3056 = vpack.c.b16 %v2960, %v2956
    %v3057 = vpack.c.b16 %v2965, %v2961
    %v3058 = vpack.c.b16 %v2966, %v2962
    %v3059 = vpack.c.b16 %v2967, %v2963
    %v3060 = vpack.c.b16 %v2968, %v2964
    %v3061 = vpack.c.b16 %v2973, %v2969
    %v3062 = vpack.c.b16 %v2974, %v2970
    %v3063 = vpack.c.b16 %v2975, %v2971
    %v3064 = vpack.c.b16 %v2976, %v2972
    %v3065 = vpack.c.b16 %v2981, %v2977
    %v3066 = vpack.c.b16 %v2982, %v2978
    %v3067 = vpack.c.b16 %v2983, %v2979
    %v3068 = vpack.c.b16 %v2984, %v2980
    %v3069 = vpack.c.b16 %v2989, %v2985
    %v3070 = vpack.c.b16 %v2990, %v2986
    %v3071 = vpack.c.b16 %v2991, %v2987
    %v3072 = vpack.c.b16 %v2992, %v2988
    %v3073 = vpack.c.b16 %v2997, %v2993
    %v3074 = vpack.c.b16 %v2998, %v2994
    %v3075 = vpack.c.b16 %v2999, %v2995
    %v3076 = vpack.c.b16 %v3000, %v2996
    %v3077 = vpack.c.b16 %v3005, %v3001
    %v3078 = vpack.c.b16 %v3006, %v3002
    %v3079 = vpack.c.b16 %v3007, %v3003
    %v3080 = vpack.c.b16 %v3008, %v3004
    %v3081 = vpack.c.b16 %v3013, %v3009
    %v3082 = vpack.c.b16 %v3014, %v3010
    %v3083 = vpack.c.b16 %v3015, %v3011
    %v3084 = vpack.c.b16 %v3016, %v3012
    %v3085 = vpack.c.b16 %v3021, %v3017
    %v3086 = vpack.c.b16 %v3022, %v3018
    %v3087 = vpack.c.b16 %v3023, %v3019
    %v3088 = vpack.c.b16 %v3024, %v3020
    %3153 = vmatpush.bf16.msra.mxu0 %v3053
    %3154 = vmatpush.bf16.msra.mxu0 %v3049
    %3155 = vmatpush.bf16.msra.mxu0 %v3045
    %3156 = vmatpush.bf16.msra.mxu0 %v3041
    %3157 = vmatpush.bf16.msra.mxu0 %v3037
    %3158 = vmatpush.bf16.msra.mxu0 %v3033
    %3159 = vmatpush.bf16.msra.mxu0 %v3029
    %3160 = vmatpush.bf16.msra.mxu0 %v3025
    %3161 = vmatmul.bf16.gmra.mxu0 %v2446
    %v3162 = vpop.f32.mrf.mxu0
    %v3163 = vadd.f32 %v2825, %v3162
    %v3164 = vpop.f32.mrf.mxu0
    %3165 = vdwg.mxu0
    %3166 = vmatpush.bf16.msra.mxu0 %v3085
    %3167 = vmatpush.bf16.msra.mxu0 %v3081
    %3168 = vmatpush.bf16.msra.mxu0 %v3077
    %3169 = vmatpush.bf16.msra.mxu0 %v3073
    %3170 = vmatpush.bf16.msra.mxu0 %v3069
    %3171 = vmatpush.bf16.msra.mxu0 %v3065
    %3172 = vmatpush.bf16.msra.mxu0 %v3061
    %3173 = vmatpush.bf16.msra.mxu0 %v3057
    %3174 = vmatmul.bf16.gmra.mxu0 %v2758
    %v3175 = vpop.f32.mrf.mxu0
    %v3176 = vadd.f32 %v3163, %v3175
    %v3177 = vpop.f32.mrf.mxu0
    %3178 = vdwg.mxu0
    %3179 = vmatpush.bf16.msra.mxu0 %v3054
    %3180 = vmatpush.bf16.msra.mxu0 %v3050
    %3181 = vmatpush.bf16.msra.mxu0 %v3046
    %3182 = vmatpush.bf16.msra.mxu0 %v3042
    %3183 = vmatpush.bf16.msra.mxu0 %v3038
    %3184 = vmatpush.bf16.msra.mxu0 %v3034
    %3185 = vmatpush.bf16.msra.mxu0 %v3030
    %3186 = vmatpush.bf16.msra.mxu0 %v3026
    %3187 = vmatmul.bf16.gmra.mxu0 %v2446
    %v3188 = vpop.f32.mrf.mxu0
    %v3189 = vadd.f32 %v2826, %v3188
    %v3190 = vpop.f32.mrf.mxu0
    %3191 = vdwg.mxu0
    %3192 = vmatpush.bf16.msra.mxu0 %v3086
    %3193 = vmatpush.bf16.msra.mxu0 %v3082
    %3194 = vmatpush.bf16.msra.mxu0 %v3078
    %3195 = vmatpush.bf16.msra.mxu0 %v3074
    %3196 = vmatpush.bf16.msra.mxu0 %v3070
    %3197 = vmatpush.bf16.msra.mxu0 %v3066
    %3198 = vmatpush.bf16.msra.mxu0 %v3062
    %3199 = vmatpush.bf16.msra.mxu0 %v3058
    %3200 = vmatmul.bf16.gmra.mxu0 %v2758
    %v3201 = vpop.f32.mrf.mxu0
    %v3202 = vadd.f32 %v3189, %v3201
    %v3203 = vpop.f32.mrf.mxu0
    %3204 = vdwg.mxu0
    %3205 = vmatpush.bf16.msra.mxu0 %v3055
    %3206 = vmatpush.bf16.msra.mxu0 %v3051
    %3207 = vmatpush.bf16.msra.mxu0 %v3047
    %3208 = vmatpush.bf16.msra.mxu0 %v3043
    %3209 = vmatpush.bf16.msra.mxu0 %v3039
    %3210 = vmatpush.bf16.msra.mxu0 %v3035
    %3211 = vmatpush.bf16.msra.mxu0 %v3031
    %3212 = vmatpush.bf16.msra.mxu0 %v3027
    %3213 = vmatmul.bf16.gmra.mxu0 %v2446
    %v3214 = vpop.f32.mrf.mxu0
    %v3215 = vadd.f32 %v2827, %v3214
    %v3216 = vpop.f32.mrf.mxu0
    %3217 = vdwg.mxu0
    %3218 = vmatpush.bf16.msra.mxu0 %v3087
    %3219 = vmatpush.bf16.msra.mxu0 %v3083
    %3220 = vmatpush.bf16.msra.mxu0 %v3079
    %3221 = vmatpush.bf16.msra.mxu0 %v3075
    %3222 = vmatpush.bf16.msra.mxu0 %v3071
    %3223 = vmatpush.bf16.msra.mxu0 %v3067
    %3224 = vmatpush.bf16.msra.mxu0 %v3063
    %3225 = vmatpush.bf16.msra.mxu0 %v3059
    %3226 = vmatmul.bf16.gmra.mxu0 %v2758
    %v3227 = vpop.f32.mrf.mxu0
    %v3228 = vadd.f32 %v3215, %v3227
    %v3229 = vpop.f32.mrf.mxu0
    %3230 = vdwg.mxu0
    %3231 = vmatpush.bf16.msra.mxu0 %v3056
    %3232 = vmatpush.bf16.msra.mxu0 %v3052
    %3233 = vmatpush.bf16.msra.mxu0 %v3048
    %3234 = vmatpush.bf16.msra.mxu0 %v3044
    %3235 = vmatpush.bf16.msra.mxu0 %v3040
    %3236 = vmatpush.bf16.msra.mxu0 %v3036
    %3237 = vmatpush.bf16.msra.mxu0 %v3032
    %3238 = vmatpush.bf16.msra.mxu0 %v3028
    %3239 = vmatmul.bf16.gmra.mxu0 %v2446
    %v3240 = vpop.f32.mrf.mxu0
    %v3241 = vadd.f32 %v2828, %v3240
    %v3242 = vpop.f32.mrf.mxu0
    %3243 = vdwg.mxu0
    %3244 = vmatpush.bf16.msra.mxu0 %v3088
    %3245 = vmatpush.bf16.msra.mxu0 %v3084
    %3246 = vmatpush.bf16.msra.mxu0 %v3080
    %3247 = vmatpush.bf16.msra.mxu0 %v3076
    %3248 = vmatpush.bf16.msra.mxu0 %v3072
    %3249 = vmatpush.bf16.msra.mxu0 %v3068
    %3250 = vmatpush.bf16.msra.mxu0 %v3064
    %3251 = vmatpush.bf16.msra.mxu0 %v3060
    %3252 = vmatmul.bf16.gmra.mxu0 %v2758
    %v3253 = vpop.f32.mrf.mxu0
    %v3254 = vadd.f32 %v3241, %v3253
    %v3255 = vpop.f32.mrf.mxu0
    %3256 = vdwg.mxu0
    %v3257 = vxor.u32 %v3176, 2147483648
    %v3258 = vxor.u32 %v3202, 2147483648
    %v3259 = vxor.u32 %v3228, 2147483648
    %v3260 = vmul.f32 %v3257, 1.442695
    %v3261 = vpow.pop %v3260
    %v3262 = vmul.f32 %v3258, 1.442695
    %v3263 = vpow.pop %v3262
    %v3264 = vmul.f32 %v3259, 1.442695
    %v3265 = vpow.pop %v3264
    %v3266 = vadd.f32 %v3261, 1.0
    %v3267 = vadd.f32 %v3263, 1.0
    %v3268 = vadd.f32 %v3265, 1.0
    %v3269 = vrcp.pop %v3266
    %v3270 = vmul.f32 %v3266, %v3269
    %v3271 = vsub.f32 1.0, %v3270
    %v3272 = vmul.f32 %v3269, %v3271
    %v3273 = vadd.f32 %v3269, %v3272
    %vm3274 = vweird.f32 %v3266
    %vm3275 = vweird.f32 %v3269
    %vm3276 = vmor %vm3274, %vm3275
    %v3277 = vsel %vm3276, %v3269, %v3273
    %v3278 = vand.u32 2147483647, %v3266
    %vm3279 = vcmp.eq.f32.partialorder %v3278, 8.507059e+37
    %v3280 = vand.u32 %v3266, 2147483648
    %v3281 = vor.u32 1.1754944e-38, %v3280
    %v3282 = vsel %vm3279, %v3281, %v3277
    %v3283 = vmul.f32 1.0, %v3282
    %v3284 = vrcp.pop %v3267
    %v3285 = vmul.f32 %v3267, %v3284
    %v3286 = vsub.f32 1.0, %v3285
    %v3287 = vmul.f32 %v3284, %v3286
    %v3288 = vadd.f32 %v3284, %v3287
    %vm3289 = vweird.f32 %v3267
    %vm3290 = vweird.f32 %v3284
    %vm3291 = vmor %vm3289, %vm3290
    %v3292 = vsel %vm3291, %v3284, %v3288
    %v3293 = vand.u32 2147483647, %v3267
    %vm3294 = vcmp.eq.f32.partialorder %v3293, 8.507059e+37
    %v3295 = vand.u32 %v3267, 2147483648
    %v3296 = vor.u32 1.1754944e-38, %v3295
    %v3297 = vsel %vm3294, %v3296, %v3292
    %v3298 = vmul.f32 1.0, %v3297
    %v3299 = vrcp.pop %v3268
    %v3300 = vmul.f32 %v3268, %v3299
    %v3301 = vsub.f32 1.0, %v3300
    %v3302 = vmul.f32 %v3299, %v3301
    %v3303 = vadd.f32 %v3299, %v3302
    %vm3304 = vweird.f32 %v3268
    %vm3305 = vweird.f32 %v3299
    %vm3306 = vmor %vm3304, %vm3305
    %v3307 = vsel %vm3306, %v3299, %v3303
    %v3308 = vand.u32 2147483647, %v3268
    %vm3309 = vcmp.eq.f32.partialorder %v3308, 8.507059e+37
    %v3310 = vand.u32 %v3268, 2147483648
    %v3311 = vor.u32 1.1754944e-38, %v3310
    %v3312 = vsel %vm3309, %v3311, %v3307
    %v3313 = vmul.f32 1.0, %v3312
    %v3314 = vtanh.pop %v3254
    %v3315 = vmul.f32 %v3298, %v2437
    %v3316 = vmul.f32 %v3283, %v3314
    %v3317 = vadd.f32 %v3315, %v3316
    %v3318 = vtanh.pop %v3317
    %v3319 = vmul.f32 %v3313, %v3318
    %s3320 = scalar_lea.vmem %s7, 16
    %3321 = vst [vmem:[%s3320] sm:$0xff] %v3319
    %v3322 = vld [vmem:[#allocation2 + $0x80] sm:$0xff]
    %v3323 = vld [vmem:[#allocation2 + $0x88] sm:$0xff]
    %v3324 = vld [vmem:[#allocation2 + $0x90] sm:$0xff]
    %v3325 = vld [vmem:[#allocation2 + $0x98] sm:$0xff]
    %v3326 = vpack.c.bf16 %v2757, %v2757
    %v3327 = vld [vmem:[#allocation6] sm:$0xff]
    %v3328 = vld [vmem:[#allocation6 + $0x8] sm:$0xff]
    %v3329 = vld [vmem:[#allocation6 + $0x10] sm:$0xff]
    %v3330 = vld [vmem:[#allocation6 + $0x18] sm:$0xff]
    %v3331 = vld [vmem:[#allocation6 + $0x20] sm:$0xff]
    %v3332 = vld [vmem:[#allocation6 + $0x28] sm:$0xff]
    %v3333 = vld [vmem:[#allocation6 + $0x30] sm:$0xff]
    %v3334 = vld [vmem:[#allocation6 + $0x38] sm:$0xff]
    %v3335 = vld [vmem:[#allocation6 + $0x40] sm:$0xff]
    %v3336 = vld [vmem:[#allocation6 + $0x48] sm:$0xff]
    %v3337 = vld [vmem:[#allocation6 + $0x50] sm:$0xff]
    %v3338 = vld [vmem:[#allocation6 + $0x58] sm:$0xff]
    %v3339 = vld [vmem:[#allocation6 + $0x60] sm:$0xff]
    %v3340 = vld [vmem:[#allocation6 + $0x68] sm:$0xff]
    %v3341 = vld [vmem:[#allocation6 + $0x70] sm:$0xff]
    %v3342 = vld [vmem:[#allocation6 + $0x78] sm:$0xff]
    %v3343 = vld [vmem:[#allocation6 + $0x80] sm:$0xff]
    %v3344 = vld [vmem:[#allocation6 + $0x88] sm:$0xff]
    %v3345 = vld [vmem:[#allocation6 + $0x90] sm:$0xff]
    %v3346 = vld [vmem:[#allocation6 + $0x98] sm:$0xff]
    %v3347 = vld [vmem:[#allocation6 + $0xa0] sm:$0xff]
    %v3348 = vld [vmem:[#allocation6 + $0xa8] sm:$0xff]
    %v3349 = vld [vmem:[#allocation6 + $0xb0] sm:$0xff]
    %v3350 = vld [vmem:[#allocation6 + $0xb8] sm:$0xff]
    %v3351 = vld [vmem:[#allocation6 + $0xc0] sm:$0xff]
    %v3352 = vld [vmem:[#allocation6 + $0xc8] sm:$0xff]
    %v3353 = vld [vmem:[#allocation6 + $0xd0] sm:$0xff]
    %v3354 = vld [vmem:[#allocation6 + $0xd8] sm:$0xff]
    %v3355 = vld [vmem:[#allocation6 + $0xe0] sm:$0xff]
    %v3356 = vld [vmem:[#allocation6 + $0xe8] sm:$0xff]
    %v3357 = vld [vmem:[#allocation6 + $0xf0] sm:$0xff]
    %v3358 = vld [vmem:[#allocation6 + $0xf8] sm:$0xff]
    %v3391 = vunpack.c.l.b16 %v3327
    %v3392 = vunpack.c.h.b16 %v3327
    %v3393 = vunpack.c.l.b16 %v3328
    %v3394 = vunpack.c.h.b16 %v3328
    %v3395 = vunpack.c.l.b16 %v3329
    %v3396 = vunpack.c.h.b16 %v3329
    %v3397 = vunpack.c.l.b16 %v3330
    %v3398 = vunpack.c.h.b16 %v3330
    %v3399 = vunpack.c.l.b16 %v3331
    %v3400 = vunpack.c.h.b16 %v3331
    %v3401 = vunpack.c.l.b16 %v3332
    %v3402 = vunpack.c.h.b16 %v3332
    %v3403 = vunpack.c.l.b16 %v3333
    %v3404 = vunpack.c.h.b16 %v3333
    %v3405 = vunpack.c.l.b16 %v3334
    %v3406 = vunpack.c.h.b16 %v3334
    %v3407 = vunpack.c.l.b16 %v3335
    %v3408 = vunpack.c.h.b16 %v3335
    %v3409 = vunpack.c.l.b16 %v3336
    %v3410 = vunpack.c.h.b16 %v3336
    %v3411 = vunpack.c.l.b16 %v3337
    %v3412 = vunpack.c.h.b16 %v3337
    %v3413 = vunpack.c.l.b16 %v3338
    %v3414 = vunpack.c.h.b16 %v3338
    %v3415 = vunpack.c.l.b16 %v3339
    %v3416 = vunpack.c.h.b16 %v3339
    %v3417 = vunpack.c.l.b16 %v3340
    %v3418 = vunpack.c.h.b16 %v3340
    %v3419 = vunpack.c.l.b16 %v3341
    %v3420 = vunpack.c.h.b16 %v3341
    %v3421 = vunpack.c.l.b16 %v3342
    %v3422 = vunpack.c.h.b16 %v3342
    %v3423 = vunpack.c.l.b16 %v3343
    %v3424 = vunpack.c.h.b16 %v3343
    %v3425 = vunpack.c.l.b16 %v3344
    %v3426 = vunpack.c.h.b16 %v3344
    %v3427 = vunpack.c.l.b16 %v3345
    %v3428 = vunpack.c.h.b16 %v3345
    %v3429 = vunpack.c.l.b16 %v3346
    %v3430 = vunpack.c.h.b16 %v3346
    %v3431 = vunpack.c.l.b16 %v3347
    %v3432 = vunpack.c.h.b16 %v3347
    %v3433 = vunpack.c.l.b16 %v3348
    %v3434 = vunpack.c.h.b16 %v3348
    %v3435 = vunpack.c.l.b16 %v3349
    %v3436 = vunpack.c.h.b16 %v3349
    %v3437 = vunpack.c.l.b16 %v3350
    %v3438 = vunpack.c.h.b16 %v3350
    %v3439 = vunpack.c.l.b16 %v3351
    %v3440 = vunpack.c.h.b16 %v3351
    %v3441 = vunpack.c.l.b16 %v3352
    %v3442 = vunpack.c.h.b16 %v3352
    %v3443 = vunpack.c.l.b16 %v3353
    %v3444 = vunpack.c.h.b16 %v3353
    %v3445 = vunpack.c.l.b16 %v3354
    %v3446 = vunpack.c.h.b16 %v3354
    %v3447 = vunpack.c.l.b16 %v3355
    %v3448 = vunpack.c.h.b16 %v3355
    %v3449 = vunpack.c.l.b16 %v3356
    %v3450 = vunpack.c.h.b16 %v3356
    %v3451 = vunpack.c.l.b16 %v3357
    %v3452 = vunpack.c.h.b16 %v3357
    %v3453 = vunpack.c.l.b16 %v3358
    %v3454 = vunpack.c.h.b16 %v3358
    %v3455 = vpack.c.b16 %v3395, %v3391
    %v3456 = vpack.c.b16 %v3396, %v3392
    %v3457 = vpack.c.b16 %v3397, %v3393
    %v3458 = vpack.c.b16 %v3398, %v3394
    %v3459 = vpack.c.b16 %v3403, %v3399
    %v3460 = vpack.c.b16 %v3404, %v3400
    %v3461 = vpack.c.b16 %v3405, %v3401
    %v3462 = vpack.c.b16 %v3406, %v3402
    %v3463 = vpack.c.b16 %v3411, %v3407
    %v3464 = vpack.c.b16 %v3412, %v3408
    %v3465 = vpack.c.b16 %v3413, %v3409
    %v3466 = vpack.c.b16 %v3414, %v3410
    %v3467 = vpack.c.b16 %v3419, %v3415
    %v3468 = vpack.c.b16 %v3420, %v3416
    %v3469 = vpack.c.b16 %v3421, %v3417
    %v3470 = vpack.c.b16 %v3422, %v3418
    %v3471 = vpack.c.b16 %v3427, %v3423
    %v3472 = vpack.c.b16 %v3428, %v3424
    %v3473 = vpack.c.b16 %v3429, %v3425
    %v3474 = vpack.c.b16 %v3430, %v3426
    %v3475 = vpack.c.b16 %v3435, %v3431
    %v3476 = vpack.c.b16 %v3436, %v3432
    %v3477 = vpack.c.b16 %v3437, %v3433
    %v3478 = vpack.c.b16 %v3438, %v3434
    %v3479 = vpack.c.b16 %v3443, %v3439
    %v3480 = vpack.c.b16 %v3444, %v3440
    %v3481 = vpack.c.b16 %v3445, %v3441
    %v3482 = vpack.c.b16 %v3446, %v3442
    %v3483 = vpack.c.b16 %v3451, %v3447
    %v3484 = vpack.c.b16 %v3452, %v3448
    %v3485 = vpack.c.b16 %v3453, %v3449
    %v3486 = vpack.c.b16 %v3454, %v3450
    %3519 = vmatpush.bf16.msra.mxu0 %v3483
    %3520 = vmatpush.bf16.msra.mxu0 %v3479
    %3521 = vmatpush.bf16.msra.mxu0 %v3475
    %3522 = vmatpush.bf16.msra.mxu0 %v3471
    %3523 = vmatpush.bf16.msra.mxu0 %v3467
    %3524 = vmatpush.bf16.msra.mxu0 %v3463
    %3525 = vmatpush.bf16.msra.mxu0 %v3459
    %3526 = vmatpush.bf16.msra.mxu0 %v3455
    %3527 = vmatmul.bf16.gmra.mxu0 %v3326
    %v3528 = vpop.f32.mrf.mxu0
    %v3529 = vadd.f32 0.0, %v3528
    %v3530 = vpop.f32.mrf.mxu0
    %3531 = vdwg.mxu0
    %3532 = vmatpush.bf16.msra.mxu0 %v3484
    %3533 = vmatpush.bf16.msra.mxu0 %v3480
    %3534 = vmatpush.bf16.msra.mxu0 %v3476
    %3535 = vmatpush.bf16.msra.mxu0 %v3472
    %3536 = vmatpush.bf16.msra.mxu0 %v3468
    %3537 = vmatpush.bf16.msra.mxu0 %v3464
    %3538 = vmatpush.bf16.msra.mxu0 %v3460
    %3539 = vmatpush.bf16.msra.mxu0 %v3456
    %3540 = vmatmul.bf16.gmra.mxu0 %v3326
    %v3541 = vpop.f32.mrf.mxu0
    %v3542 = vadd.f32 0.0, %v3541
    %v3543 = vpop.f32.mrf.mxu0
    %3544 = vdwg.mxu0
    %3545 = vmatpush.bf16.msra.mxu0 %v3485
    %3546 = vmatpush.bf16.msra.mxu0 %v3481
    %3547 = vmatpush.bf16.msra.mxu0 %v3477
    %3548 = vmatpush.bf16.msra.mxu0 %v3473
    %3549 = vmatpush.bf16.msra.mxu0 %v3469
    %3550 = vmatpush.bf16.msra.mxu0 %v3465
    %3551 = vmatpush.bf16.msra.mxu0 %v3461
    %3552 = vmatpush.bf16.msra.mxu0 %v3457
    %3553 = vmatmul.bf16.gmra.mxu0 %v3326
    %v3554 = vpop.f32.mrf.mxu0
    %v3555 = vadd.f32 0.0, %v3554
    %v3556 = vpop.f32.mrf.mxu0
    %3557 = vdwg.mxu0
    %3558 = vmatpush.bf16.msra.mxu0 %v3486
    %3559 = vmatpush.bf16.msra.mxu0 %v3482
    %3560 = vmatpush.bf16.msra.mxu0 %v3478
    %3561 = vmatpush.bf16.msra.mxu0 %v3474
    %3562 = vmatpush.bf16.msra.mxu0 %v3470
    %3563 = vmatpush.bf16.msra.mxu0 %v3466
    %3564 = vmatpush.bf16.msra.mxu0 %v3462
    %3565 = vmatpush.bf16.msra.mxu0 %v3458
    %3566 = vmatmul.bf16.gmra.mxu0 %v3326
    %v3567 = vpop.f32.mrf.mxu0
    %v3568 = vadd.f32 0.0, %v3567
    %v3569 = vpop.f32.mrf.mxu0
    %3570 = vdwg.mxu0
    %v3571 = vadd.f32 %v3322, %v3529
    %v3572 = vadd.f32 %v3323, %v3542
    %v3573 = vadd.f32 %v3324, %v3555
    %v3574 = vadd.f32 %v3325, %v3568
    %v3575 = vxor.u32 %v3571, 2147483648
    %v3576 = vxor.u32 %v3572, 2147483648
    %v3577 = vxor.u32 %v3573, 2147483648
    %v3578 = vmul.f32 %v3575, 1.442695
    %v3579 = vpow.pop %v3578
    %v3580 = vmul.f32 %v3576, 1.442695
    %v3581 = vpow.pop %v3580
    %v3582 = vmul.f32 %v3577, 1.442695
    %v3583 = vpow.pop %v3582
    %v3584 = vadd.f32 %v3579, 1.0
    %v3585 = vadd.f32 %v3581, 1.0
    %v3586 = vadd.f32 %v3583, 1.0
    %v3587 = vrcp.pop %v3584
    %v3588 = vmul.f32 %v3584, %v3587
    %v3589 = vsub.f32 1.0, %v3588
    %v3590 = vmul.f32 %v3587, %v3589
    %v3591 = vadd.f32 %v3587, %v3590
    %vm3592 = vweird.f32 %v3584
    %vm3593 = vweird.f32 %v3587
    %vm3594 = vmor %vm3592, %vm3593
    %v3595 = vsel %vm3594, %v3587, %v3591
    %v3596 = vand.u32 2147483647, %v3584
    %vm3597 = vcmp.eq.f32.partialorder %v3596, 8.507059e+37
    %v3598 = vand.u32 %v3584, 2147483648
    %v3599 = vor.u32 1.1754944e-38, %v3598
    %v3600 = vsel %vm3597, %v3599, %v3595
    %v3601 = vmul.f32 1.0, %v3600
    %v3602 = vrcp.pop %v3585
    %v3603 = vmul.f32 %v3585, %v3602
    %v3604 = vsub.f32 1.0, %v3603
    %v3605 = vmul.f32 %v3602, %v3604
    %v3606 = vadd.f32 %v3602, %v3605
    %vm3607 = vweird.f32 %v3585
    %vm3608 = vweird.f32 %v3602
    %vm3609 = vmor %vm3607, %vm3608
    %v3610 = vsel %vm3609, %v3602, %v3606
    %v3611 = vand.u32 2147483647, %v3585
    %vm3612 = vcmp.eq.f32.partialorder %v3611, 8.507059e+37
    %v3613 = vand.u32 %v3585, 2147483648
    %v3614 = vor.u32 1.1754944e-38, %v3613
    %v3615 = vsel %vm3612, %v3614, %v3610
    %v3616 = vmul.f32 1.0, %v3615
    %v3617 = vrcp.pop %v3586
    %v3618 = vmul.f32 %v3586, %v3617
    %v3619 = vsub.f32 1.0, %v3618
    %v3620 = vmul.f32 %v3617, %v3619
    %v3621 = vadd.f32 %v3617, %v3620
    %vm3622 = vweird.f32 %v3586
    %vm3623 = vweird.f32 %v3617
    %vm3624 = vmor %vm3622, %vm3623
    %v3625 = vsel %vm3624, %v3617, %v3621
    %v3626 = vand.u32 2147483647, %v3586
    %vm3627 = vcmp.eq.f32.partialorder %v3626, 8.507059e+37
    %v3628 = vand.u32 %v3586, 2147483648
    %v3629 = vor.u32 1.1754944e-38, %v3628
    %v3630 = vsel %vm3627, %v3629, %v3625
    %v3631 = vmul.f32 1.0, %v3630
    %v3632 = vtanh.pop %v3574
    %v3633 = vmul.f32 %v3616, %v2755
    %v3634 = vmul.f32 %v3601, %v3632
    %v3635 = vadd.f32 %v3633, %v3634
    %v3636 = vtanh.pop %v3635
    %v3637 = vmul.f32 %v3631, %v3636
    %v3638 = vpack.c.bf16 %v3319, %v3319
    %v3639 = vld [vmem:[#allocation8] sm:$0xff]
    %v3640 = vld [vmem:[#allocation8 + $0x8] sm:$0xff]
    %v3641 = vld [vmem:[#allocation8 + $0x10] sm:$0xff]
    %v3642 = vld [vmem:[#allocation8 + $0x18] sm:$0xff]
    %v3643 = vld [vmem:[#allocation8 + $0x20] sm:$0xff]
    %v3644 = vld [vmem:[#allocation8 + $0x28] sm:$0xff]
    %v3645 = vld [vmem:[#allocation8 + $0x30] sm:$0xff]
    %v3646 = vld [vmem:[#allocation8 + $0x38] sm:$0xff]
    %v3647 = vld [vmem:[#allocation8 + $0x40] sm:$0xff]
    %v3648 = vld [vmem:[#allocation8 + $0x48] sm:$0xff]
    %v3649 = vld [vmem:[#allocation8 + $0x50] sm:$0xff]
    %v3650 = vld [vmem:[#allocation8 + $0x58] sm:$0xff]
    %v3651 = vld [vmem:[#allocation8 + $0x60] sm:$0xff]
    %v3652 = vld [vmem:[#allocation8 + $0x68] sm:$0xff]
    %v3653 = vld [vmem:[#allocation8 + $0x70] sm:$0xff]
    %v3654 = vld [vmem:[#allocation8 + $0x78] sm:$0xff]
    %v3655 = vld [vmem:[#allocation8 + $0x80] sm:$0xff]
    %v3656 = vld [vmem:[#allocation8 + $0x88] sm:$0xff]
    %v3657 = vld [vmem:[#allocation8 + $0x90] sm:$0xff]
    %v3658 = vld [vmem:[#allocation8 + $0x98] sm:$0xff]
    %v3659 = vld [vmem:[#allocation8 + $0xa0] sm:$0xff]
    %v3660 = vld [vmem:[#allocation8 + $0xa8] sm:$0xff]
    %v3661 = vld [vmem:[#allocation8 + $0xb0] sm:$0xff]
    %v3662 = vld [vmem:[#allocation8 + $0xb8] sm:$0xff]
    %v3663 = vld [vmem:[#allocation8 + $0xc0] sm:$0xff]
    %v3664 = vld [vmem:[#allocation8 + $0xc8] sm:$0xff]
    %v3665 = vld [vmem:[#allocation8 + $0xd0] sm:$0xff]
    %v3666 = vld [vmem:[#allocation8 + $0xd8] sm:$0xff]
    %v3667 = vld [vmem:[#allocation8 + $0xe0] sm:$0xff]
    %v3668 = vld [vmem:[#allocation8 + $0xe8] sm:$0xff]
    %v3669 = vld [vmem:[#allocation8 + $0xf0] sm:$0xff]
    %v3670 = vld [vmem:[#allocation8 + $0xf8] sm:$0xff]
    %v3671 = vld [vmem:[#allocation8 + $0x100] sm:$0xff]
    %v3672 = vld [vmem:[#allocation8 + $0x108] sm:$0xff]
    %v3673 = vld [vmem:[#allocation8 + $0x110] sm:$0xff]
    %v3674 = vld [vmem:[#allocation8 + $0x118] sm:$0xff]
    %v3675 = vld [vmem:[#allocation8 + $0x120] sm:$0xff]
    %v3676 = vld [vmem:[#allocation8 + $0x128] sm:$0xff]
    %v3677 = vld [vmem:[#allocation8 + $0x130] sm:$0xff]
    %v3678 = vld [vmem:[#allocation8 + $0x138] sm:$0xff]
    %v3679 = vld [vmem:[#allocation8 + $0x140] sm:$0xff]
    %v3680 = vld [vmem:[#allocation8 + $0x148] sm:$0xff]
    %v3681 = vld [vmem:[#allocation8 + $0x150] sm:$0xff]
    %v3682 = vld [vmem:[#allocation8 + $0x158] sm:$0xff]
    %v3683 = vld [vmem:[#allocation8 + $0x160] sm:$0xff]
    %v3684 = vld [vmem:[#allocation8 + $0x168] sm:$0xff]
    %v3685 = vld [vmem:[#allocation8 + $0x170] sm:$0xff]
    %v3686 = vld [vmem:[#allocation8 + $0x178] sm:$0xff]
    %v3687 = vld [vmem:[#allocation8 + $0x180] sm:$0xff]
    %v3688 = vld [vmem:[#allocation8 + $0x188] sm:$0xff]
    %v3689 = vld [vmem:[#allocation8 + $0x190] sm:$0xff]
    %v3690 = vld [vmem:[#allocation8 + $0x198] sm:$0xff]
    %v3691 = vld [vmem:[#allocation8 + $0x1a0] sm:$0xff]
    %v3692 = vld [vmem:[#allocation8 + $0x1a8] sm:$0xff]
    %v3693 = vld [vmem:[#allocation8 + $0x1b0] sm:$0xff]
    %v3694 = vld [vmem:[#allocation8 + $0x1b8] sm:$0xff]
    %v3695 = vld [vmem:[#allocation8 + $0x1c0] sm:$0xff]
    %v3696 = vld [vmem:[#allocation8 + $0x1c8] sm:$0xff]
    %v3697 = vld [vmem:[#allocation8 + $0x1d0] sm:$0xff]
    %v3698 = vld [vmem:[#allocation8 + $0x1d8] sm:$0xff]
    %v3699 = vld [vmem:[#allocation8 + $0x1e0] sm:$0xff]
    %v3700 = vld [vmem:[#allocation8 + $0x1e8] sm:$0xff]
    %v3701 = vld [vmem:[#allocation8 + $0x1f0] sm:$0xff]
    %v3702 = vld [vmem:[#allocation8 + $0x1f8] sm:$0xff]
    %v3703 = vld [vmem:[%s6] sm:$0xf]
    %v3705 = vperm.slane %v3703, 0
    %v3706 = vperm.slane %v3703, 1
    %v3707 = vperm.slane %v3703, 2
    %v3708 = vperm.slane %v3703, 3
    %v3777 = vunpack.c.l.b16 %v3639
    %v3778 = vunpack.c.h.b16 %v3639
    %v3779 = vunpack.c.l.b16 %v3640
    %v3780 = vunpack.c.h.b16 %v3640
    %v3781 = vunpack.c.l.b16 %v3641
    %v3782 = vunpack.c.h.b16 %v3641
    %v3783 = vunpack.c.l.b16 %v3642
    %v3784 = vunpack.c.h.b16 %v3642
    %v3785 = vunpack.c.l.b16 %v3643
    %v3786 = vunpack.c.h.b16 %v3643
    %v3787 = vunpack.c.l.b16 %v3644
    %v3788 = vunpack.c.h.b16 %v3644
    %v3789 = vunpack.c.l.b16 %v3645
    %v3790 = vunpack.c.h.b16 %v3645
    %v3791 = vunpack.c.l.b16 %v3646
    %v3792 = vunpack.c.h.b16 %v3646
    %v3793 = vunpack.c.l.b16 %v3647
    %v3794 = vunpack.c.h.b16 %v3647
    %v3795 = vunpack.c.l.b16 %v3648
    %v3796 = vunpack.c.h.b16 %v3648
    %v3797 = vunpack.c.l.b16 %v3649
    %v3798 = vunpack.c.h.b16 %v3649
    %v3799 = vunpack.c.l.b16 %v3650
    %v3800 = vunpack.c.h.b16 %v3650
    %v3801 = vunpack.c.l.b16 %v3651
    %v3802 = vunpack.c.h.b16 %v3651
    %v3803 = vunpack.c.l.b16 %v3652
    %v3804 = vunpack.c.h.b16 %v3652
    %v3805 = vunpack.c.l.b16 %v3653
    %v3806 = vunpack.c.h.b16 %v3653
    %v3807 = vunpack.c.l.b16 %v3654
    %v3808 = vunpack.c.h.b16 %v3654
    %v3809 = vunpack.c.l.b16 %v3655
    %v3810 = vunpack.c.h.b16 %v3655
    %v3811 = vunpack.c.l.b16 %v3656
    %v3812 = vunpack.c.h.b16 %v3656
    %v3813 = vunpack.c.l.b16 %v3657
    %v3814 = vunpack.c.h.b16 %v3657
    %v3815 = vunpack.c.l.b16 %v3658
    %v3816 = vunpack.c.h.b16 %v3658
    %v3817 = vunpack.c.l.b16 %v3659
    %v3818 = vunpack.c.h.b16 %v3659
    %v3819 = vunpack.c.l.b16 %v3660
    %v3820 = vunpack.c.h.b16 %v3660
    %v3821 = vunpack.c.l.b16 %v3661
    %v3822 = vunpack.c.h.b16 %v3661
    %v3823 = vunpack.c.l.b16 %v3662
    %v3824 = vunpack.c.h.b16 %v3662
    %v3825 = vunpack.c.l.b16 %v3663
    %v3826 = vunpack.c.h.b16 %v3663
    %v3827 = vunpack.c.l.b16 %v3664
    %v3828 = vunpack.c.h.b16 %v3664
    %v3829 = vunpack.c.l.b16 %v3665
    %v3830 = vunpack.c.h.b16 %v3665
    %v3831 = vunpack.c.l.b16 %v3666
    %v3832 = vunpack.c.h.b16 %v3666
    %v3833 = vunpack.c.l.b16 %v3667
    %v3834 = vunpack.c.h.b16 %v3667
    %v3835 = vunpack.c.l.b16 %v3668
    %v3836 = vunpack.c.h.b16 %v3668
    %v3837 = vunpack.c.l.b16 %v3669
    %v3838 = vunpack.c.h.b16 %v3669
    %v3839 = vunpack.c.l.b16 %v3670
    %v3840 = vunpack.c.h.b16 %v3670
    %v3841 = vunpack.c.l.b16 %v3671
    %v3842 = vunpack.c.h.b16 %v3671
    %v3843 = vunpack.c.l.b16 %v3672
    %v3844 = vunpack.c.h.b16 %v3672
    %v3845 = vunpack.c.l.b16 %v3673
    %v3846 = vunpack.c.h.b16 %v3673
    %v3847 = vunpack.c.l.b16 %v3674
    %v3848 = vunpack.c.h.b16 %v3674
    %v3849 = vunpack.c.l.b16 %v3675
    %v3850 = vunpack.c.h.b16 %v3675
    %v3851 = vunpack.c.l.b16 %v3676
    %v3852 = vunpack.c.h.b16 %v3676
    %v3853 = vunpack.c.l.b16 %v3677
    %v3854 = vunpack.c.h.b16 %v3677
    %v3855 = vunpack.c.l.b16 %v3678
    %v3856 = vunpack.c.h.b16 %v3678
    %v3857 = vunpack.c.l.b16 %v3679
    %v3858 = vunpack.c.h.b16 %v3679
    %v3859 = vunpack.c.l.b16 %v3680
    %v3860 = vunpack.c.h.b16 %v3680
    %v3861 = vunpack.c.l.b16 %v3681
    %v3862 = vunpack.c.h.b16 %v3681
    %v3863 = vunpack.c.l.b16 %v3682
    %v3864 = vunpack.c.h.b16 %v3682
    %v3865 = vunpack.c.l.b16 %v3683
    %v3866 = vunpack.c.h.b16 %v3683
    %v3867 = vunpack.c.l.b16 %v3684
    %v3868 = vunpack.c.h.b16 %v3684
    %v3869 = vunpack.c.l.b16 %v3685
    %v3870 = vunpack.c.h.b16 %v3685
    %v3871 = vunpack.c.l.b16 %v3686
    %v3872 = vunpack.c.h.b16 %v3686
    %v3873 = vunpack.c.l.b16 %v3687
    %v3874 = vunpack.c.h.b16 %v3687
    %v3875 = vunpack.c.l.b16 %v3688
    %v3876 = vunpack.c.h.b16 %v3688
    %v3877 = vunpack.c.l.b16 %v3689
    %v3878 = vunpack.c.h.b16 %v3689
    %v3879 = vunpack.c.l.b16 %v3690
    %v3880 = vunpack.c.h.b16 %v3690
    %v3881 = vunpack.c.l.b16 %v3691
    %v3882 = vunpack.c.h.b16 %v3691
    %v3883 = vunpack.c.l.b16 %v3692
    %v3884 = vunpack.c.h.b16 %v3692
    %v3885 = vunpack.c.l.b16 %v3693
    %v3886 = vunpack.c.h.b16 %v3693
    %v3887 = vunpack.c.l.b16 %v3694
    %v3888 = vunpack.c.h.b16 %v3694
    %v3889 = vunpack.c.l.b16 %v3695
    %v3890 = vunpack.c.h.b16 %v3695
    %v3891 = vunpack.c.l.b16 %v3696
    %v3892 = vunpack.c.h.b16 %v3696
    %v3893 = vunpack.c.l.b16 %v3697
    %v3894 = vunpack.c.h.b16 %v3697
    %v3895 = vunpack.c.l.b16 %v3698
    %v3896 = vunpack.c.h.b16 %v3698
    %v3897 = vunpack.c.l.b16 %v3699
    %v3898 = vunpack.c.h.b16 %v3699
    %v3899 = vunpack.c.l.b16 %v3700
    %v3900 = vunpack.c.h.b16 %v3700
    %v3901 = vunpack.c.l.b16 %v3701
    %v3902 = vunpack.c.h.b16 %v3701
    %v3903 = vunpack.c.l.b16 %v3702
    %v3904 = vunpack.c.h.b16 %v3702
    %v3905 = vpack.c.b16 %v3781, %v3777
    %v3906 = vpack.c.b16 %v3782, %v3778
    %v3907 = vpack.c.b16 %v3783, %v3779
    %v3908 = vpack.c.b16 %v3784, %v3780
    %v3909 = vpack.c.b16 %v3789, %v3785
    %v3910 = vpack.c.b16 %v3790, %v3786
    %v3911 = vpack.c.b16 %v3791, %v3787
    %v3912 = vpack.c.b16 %v3792, %v3788
    %v3913 = vpack.c.b16 %v3797, %v3793
    %v3914 = vpack.c.b16 %v3798, %v3794
    %v3915 = vpack.c.b16 %v3799, %v3795
    %v3916 = vpack.c.b16 %v3800, %v3796
    %v3917 = vpack.c.b16 %v3805, %v3801
    %v3918 = vpack.c.b16 %v3806, %v3802
    %v3919 = vpack.c.b16 %v3807, %v3803
    %v3920 = vpack.c.b16 %v3808, %v3804
    %v3921 = vpack.c.b16 %v3813, %v3809
    %v3922 = vpack.c.b16 %v3814, %v3810
    %v3923 = vpack.c.b16 %v3815, %v3811
    %v3924 = vpack.c.b16 %v3816, %v3812
    %v3925 = vpack.c.b16 %v3821, %v3817
    %v3926 = vpack.c.b16 %v3822, %v3818
    %v3927 = vpack.c.b16 %v3823, %v3819
    %v3928 = vpack.c.b16 %v3824, %v3820
    %v3929 = vpack.c.b16 %v3829, %v3825
    %v3930 = vpack.c.b16 %v3830, %v3826
    %v3931 = vpack.c.b16 %v3831, %v3827
    %v3932 = vpack.c.b16 %v3832, %v3828
    %v3933 = vpack.c.b16 %v3837, %v3833
    %v3934 = vpack.c.b16 %v3838, %v3834
    %v3935 = vpack.c.b16 %v3839, %v3835
    %v3936 = vpack.c.b16 %v3840, %v3836
    %v3937 = vpack.c.b16 %v3845, %v3841
    %v3938 = vpack.c.b16 %v3846, %v3842
    %v3939 = vpack.c.b16 %v3847, %v3843
    %v3940 = vpack.c.b16 %v3848, %v3844
    %v3941 = vpack.c.b16 %v3853, %v3849
    %v3942 = vpack.c.b16 %v3854, %v3850
    %v3943 = vpack.c.b16 %v3855, %v3851
    %v3944 = vpack.c.b16 %v3856, %v3852
    %v3945 = vpack.c.b16 %v3861, %v3857
    %v3946 = vpack.c.b16 %v3862, %v3858
    %v3947 = vpack.c.b16 %v3863, %v3859
    %v3948 = vpack.c.b16 %v3864, %v3860
    %v3949 = vpack.c.b16 %v3869, %v3865
    %v3950 = vpack.c.b16 %v3870, %v3866
    %v3951 = vpack.c.b16 %v3871, %v3867
    %v3952 = vpack.c.b16 %v3872, %v3868
    %v3953 = vpack.c.b16 %v3877, %v3873
    %v3954 = vpack.c.b16 %v3878, %v3874
    %v3955 = vpack.c.b16 %v3879, %v3875
    %v3956 = vpack.c.b16 %v3880, %v3876
    %v3957 = vpack.c.b16 %v3885, %v3881
    %v3958 = vpack.c.b16 %v3886, %v3882
    %v3959 = vpack.c.b16 %v3887, %v3883
    %v3960 = vpack.c.b16 %v3888, %v3884
    %v3961 = vpack.c.b16 %v3893, %v3889
    %v3962 = vpack.c.b16 %v3894, %v3890
    %v3963 = vpack.c.b16 %v3895, %v3891
    %v3964 = vpack.c.b16 %v3896, %v3892
    %v3965 = vpack.c.b16 %v3901, %v3897
    %v3966 = vpack.c.b16 %v3902, %v3898
    %v3967 = vpack.c.b16 %v3903, %v3899
    %v3968 = vpack.c.b16 %v3904, %v3900
    %4033 = vmatpush.bf16.msra.mxu0 %v3933
    %4034 = vmatpush.bf16.msra.mxu0 %v3929
    %4035 = vmatpush.bf16.msra.mxu0 %v3925
    %4036 = vmatpush.bf16.msra.mxu0 %v3921
    %4037 = vmatpush.bf16.msra.mxu0 %v3917
    %4038 = vmatpush.bf16.msra.mxu0 %v3913
    %4039 = vmatpush.bf16.msra.mxu0 %v3909
    %4040 = vmatpush.bf16.msra.mxu0 %v3905
    %4041 = vmatmul.bf16.gmra.mxu0 %v3326
    %v4042 = vpop.f32.mrf.mxu0
    %v4043 = vadd.f32 %v3705, %v4042
    %v4044 = vpop.f32.mrf.mxu0
    %4045 = vdwg.mxu0
    %4046 = vmatpush.bf16.msra.mxu0 %v3965
    %4047 = vmatpush.bf16.msra.mxu0 %v3961
    %4048 = vmatpush.bf16.msra.mxu0 %v3957
    %4049 = vmatpush.bf16.msra.mxu0 %v3953
    %4050 = vmatpush.bf16.msra.mxu0 %v3949
    %4051 = vmatpush.bf16.msra.mxu0 %v3945
    %4052 = vmatpush.bf16.msra.mxu0 %v3941
    %4053 = vmatpush.bf16.msra.mxu0 %v3937
    %4054 = vmatmul.bf16.gmra.mxu0 %v3638
    %v4055 = vpop.f32.mrf.mxu0
    %v4056 = vadd.f32 %v4043, %v4055
    %v4057 = vpop.f32.mrf.mxu0
    %4058 = vdwg.mxu0
    %4059 = vmatpush.bf16.msra.mxu0 %v3934
    %4060 = vmatpush.bf16.msra.mxu0 %v3930
    %4061 = vmatpush.bf16.msra.mxu0 %v3926
    %4062 = vmatpush.bf16.msra.mxu0 %v3922
    %4063 = vmatpush.bf16.msra.mxu0 %v3918
    %4064 = vmatpush.bf16.msra.mxu0 %v3914
    %4065 = vmatpush.bf16.msra.mxu0 %v3910
    %4066 = vmatpush.bf16.msra.mxu0 %v3906
    %4067 = vmatmul.bf16.gmra.mxu0 %v3326
    %v4068 = vpop.f32.mrf.mxu0
    %v4069 = vadd.f32 %v3706, %v4068
    %v4070 = vpop.f32.mrf.mxu0
    %4071 = vdwg.mxu0
    %4072 = vmatpush.bf16.msra.mxu0 %v3966
    %4073 = vmatpush.bf16.msra.mxu0 %v3962
    %4074 = vmatpush.bf16.msra.mxu0 %v3958
    %4075 = vmatpush.bf16.msra.mxu0 %v3954
    %4076 = vmatpush.bf16.msra.mxu0 %v3950
    %4077 = vmatpush.bf16.msra.mxu0 %v3946
    %4078 = vmatpush.bf16.msra.mxu0 %v3942
    %4079 = vmatpush.bf16.msra.mxu0 %v3938
    %4080 = vmatmul.bf16.gmra.mxu0 %v3638
    %v4081 = vpop.f32.mrf.mxu0
    %v4082 = vadd.f32 %v4069, %v4081
    %v4083 = vpop.f32.mrf.mxu0
    %4084 = vdwg.mxu0
    %4085 = vmatpush.bf16.msra.mxu0 %v3935
    %4086 = vmatpush.bf16.msra.mxu0 %v3931
    %4087 = vmatpush.bf16.msra.mxu0 %v3927
    %4088 = vmatpush.bf16.msra.mxu0 %v3923
    %4089 = vmatpush.bf16.msra.mxu0 %v3919
    %4090 = vmatpush.bf16.msra.mxu0 %v3915
    %4091 = vmatpush.bf16.msra.mxu0 %v3911
    %4092 = vmatpush.bf16.msra.mxu0 %v3907
    %4093 = vmatmul.bf16.gmra.mxu0 %v3326
    %v4094 = vpop.f32.mrf.mxu0
    %v4095 = vadd.f32 %v3707, %v4094
    %v4096 = vpop.f32.mrf.mxu0
    %4097 = vdwg.mxu0
    %4098 = vmatpush.bf16.msra.mxu0 %v3967
    %4099 = vmatpush.bf16.msra.mxu0 %v3963
    %4100 = vmatpush.bf16.msra.mxu0 %v3959
    %4101 = vmatpush.bf16.msra.mxu0 %v3955
    %4102 = vmatpush.bf16.msra.mxu0 %v3951
    %4103 = vmatpush.bf16.msra.mxu0 %v3947
    %4104 = vmatpush.bf16.msra.mxu0 %v3943
    %4105 = vmatpush.bf16.msra.mxu0 %v3939
    %4106 = vmatmul.bf16.gmra.mxu0 %v3638
    %v4107 = vpop.f32.mrf.mxu0
    %v4108 = vadd.f32 %v4095, %v4107
    %v4109 = vpop.f32.mrf.mxu0
    %4110 = vdwg.mxu0
    %4111 = vmatpush.bf16.msra.mxu0 %v3936
    %4112 = vmatpush.bf16.msra.mxu0 %v3932
    %4113 = vmatpush.bf16.msra.mxu0 %v3928
    %4114 = vmatpush.bf16.msra.mxu0 %v3924
    %4115 = vmatpush.bf16.msra.mxu0 %v3920
    %4116 = vmatpush.bf16.msra.mxu0 %v3916
    %4117 = vmatpush.bf16.msra.mxu0 %v3912
    %4118 = vmatpush.bf16.msra.mxu0 %v3908
    %4119 = vmatmul.bf16.gmra.mxu0 %v3326
    %v4120 = vpop.f32.mrf.mxu0
    %v4121 = vadd.f32 %v3708, %v4120
    %v4122 = vpop.f32.mrf.mxu0
    %4123 = vdwg.mxu0
    %4124 = vmatpush.bf16.msra.mxu0 %v3968
    %4125 = vmatpush.bf16.msra.mxu0 %v3964
    %4126 = vmatpush.bf16.msra.mxu0 %v3960
    %4127 = vmatpush.bf16.msra.mxu0 %v3956
    %4128 = vmatpush.bf16.msra.mxu0 %v3952
    %4129 = vmatpush.bf16.msra.mxu0 %v3948
    %4130 = vmatpush.bf16.msra.mxu0 %v3944
    %4131 = vmatpush.bf16.msra.mxu0 %v3940
    %4132 = vmatmul.bf16.gmra.mxu0 %v3638
    %v4133 = vpop.f32.mrf.mxu0
    %v4134 = vadd.f32 %v4121, %v4133
    %v4135 = vpop.f32.mrf.mxu0
    %4136 = vdwg.mxu0
    %v4137 = vxor.u32 %v4056, 2147483648
    %v4138 = vxor.u32 %v4082, 2147483648
    %v4139 = vxor.u32 %v4108, 2147483648
    %v4140 = vmul.f32 %v4137, 1.442695
    %v4141 = vpow.pop %v4140
    %v4142 = vmul.f32 %v4138, 1.442695
    %v4143 = vpow.pop %v4142
    %v4144 = vmul.f32 %v4139, 1.442695
    %v4145 = vpow.pop %v4144
    %v4146 = vadd.f32 %v4141, 1.0
    %v4147 = vadd.f32 %v4143, 1.0
    %v4148 = vadd.f32 %v4145, 1.0
    %v4149 = vrcp.pop %v4146
    %v4150 = vmul.f32 %v4146, %v4149
    %v4151 = vsub.f32 1.0, %v4150
    %v4152 = vmul.f32 %v4149, %v4151
    %v4153 = vadd.f32 %v4149, %v4152
    %vm4154 = vweird.f32 %v4146
    %vm4155 = vweird.f32 %v4149
    %vm4156 = vmor %vm4154, %vm4155
    %v4157 = vsel %vm4156, %v4149, %v4153
    %v4158 = vand.u32 2147483647, %v4146
    %vm4159 = vcmp.eq.f32.partialorder %v4158, 8.507059e+37
    %v4160 = vand.u32 %v4146, 2147483648
    %v4161 = vor.u32 1.1754944e-38, %v4160
    %v4162 = vsel %vm4159, %v4161, %v4157
    %v4163 = vmul.f32 1.0, %v4162
    %v4164 = vrcp.pop %v4147
    %v4165 = vmul.f32 %v4147, %v4164
    %v4166 = vsub.f32 1.0, %v4165
    %v4167 = vmul.f32 %v4164, %v4166
    %v4168 = vadd.f32 %v4164, %v4167
    %vm4169 = vweird.f32 %v4147
    %vm4170 = vweird.f32 %v4164
    %vm4171 = vmor %vm4169, %vm4170
    %v4172 = vsel %vm4171, %v4164, %v4168
    %v4173 = vand.u32 2147483647, %v4147
    %vm4174 = vcmp.eq.f32.partialorder %v4173, 8.507059e+37
    %v4175 = vand.u32 %v4147, 2147483648
    %v4176 = vor.u32 1.1754944e-38, %v4175
    %v4177 = vsel %vm4174, %v4176, %v4172
    %v4178 = vmul.f32 1.0, %v4177
    %v4179 = vrcp.pop %v4148
    %v4180 = vmul.f32 %v4148, %v4179
    %v4181 = vsub.f32 1.0, %v4180
    %v4182 = vmul.f32 %v4179, %v4181
    %v4183 = vadd.f32 %v4179, %v4182
    %vm4184 = vweird.f32 %v4148
    %vm4185 = vweird.f32 %v4179
    %vm4186 = vmor %vm4184, %vm4185
    %v4187 = vsel %vm4186, %v4179, %v4183
    %v4188 = vand.u32 2147483647, %v4148
    %vm4189 = vcmp.eq.f32.partialorder %v4188, 8.507059e+37
    %v4190 = vand.u32 %v4148, 2147483648
    %v4191 = vor.u32 1.1754944e-38, %v4190
    %v4192 = vsel %vm4189, %v4191, %v4187
    %v4193 = vmul.f32 1.0, %v4192
    %v4194 = vtanh.pop %v4134
    %v4195 = vmul.f32 %v4178, %v3317
    %v4196 = vmul.f32 %v4163, %v4194
    %v4197 = vadd.f32 %v4195, %v4196
    %v4198 = vtanh.pop %v4197
    %v4199 = vmul.f32 %v4193, %v4198
    %s4200 = scalar_lea.vmem %s7, 24
    %4201 = vst [vmem:[%s4200] sm:$0xff] %v4199
    %v4202 = vld [vmem:[#allocation2 + $0xa0] sm:$0xff]
    %v4203 = vld [vmem:[#allocation2 + $0xa8] sm:$0xff]
    %v4204 = vld [vmem:[#allocation2 + $0xb0] sm:$0xff]
    %v4205 = vld [vmem:[#allocation2 + $0xb8] sm:$0xff]
    %v4206 = vpack.c.bf16 %v3637, %v3637
    %v4207 = vld [vmem:[#allocation6] sm:$0xff]
    %v4208 = vld [vmem:[#allocation6 + $0x8] sm:$0xff]
    %v4209 = vld [vmem:[#allocation6 + $0x10] sm:$0xff]
    %v4210 = vld [vmem:[#allocation6 + $0x18] sm:$0xff]
    %v4211 = vld [vmem:[#allocation6 + $0x20] sm:$0xff]
    %v4212 = vld [vmem:[#allocation6 + $0x28] sm:$0xff]
    %v4213 = vld [vmem:[#allocation6 + $0x30] sm:$0xff]
    %v4214 = vld [vmem:[#allocation6 + $0x38] sm:$0xff]
    %v4215 = vld [vmem:[#allocation6 + $0x40] sm:$0xff]
    %v4216 = vld [vmem:[#allocation6 + $0x48] sm:$0xff]
    %v4217 = vld [vmem:[#allocation6 + $0x50] sm:$0xff]
    %v4218 = vld [vmem:[#allocation6 + $0x58] sm:$0xff]
    %v4219 = vld [vmem:[#allocation6 + $0x60] sm:$0xff]
    %v4220 = vld [vmem:[#allocation6 + $0x68] sm:$0xff]
    %v4221 = vld [vmem:[#allocation6 + $0x70] sm:$0xff]
    %v4222 = vld [vmem:[#allocation6 + $0x78] sm:$0xff]
    %v4223 = vld [vmem:[#allocation6 + $0x80] sm:$0xff]
    %v4224 = vld [vmem:[#allocation6 + $0x88] sm:$0xff]
    %v4225 = vld [vmem:[#allocation6 + $0x90] sm:$0xff]
    %v4226 = vld [vmem:[#allocation6 + $0x98] sm:$0xff]
    %v4227 = vld [vmem:[#allocation6 + $0xa0] sm:$0xff]
    %v4228 = vld [vmem:[#allocation6 + $0xa8] sm:$0xff]
    %v4229 = vld [vmem:[#allocation6 + $0xb0] sm:$0xff]
    %v4230 = vld [vmem:[#allocation6 + $0xb8] sm:$0xff]
    %v4231 = vld [vmem:[#allocation6 + $0xc0] sm:$0xff]
    %v4232 = vld [vmem:[#allocation6 + $0xc8] sm:$0xff]
    %v4233 = vld [vmem:[#allocation6 + $0xd0] sm:$0xff]
    %v4234 = vld [vmem:[#allocation6 + $0xd8] sm:$0xff]
    %v4235 = vld [vmem:[#allocation6 + $0xe0] sm:$0xff]
    %v4236 = vld [vmem:[#allocation6 + $0xe8] sm:$0xff]
    %v4237 = vld [vmem:[#allocation6 + $0xf0] sm:$0xff]
    %v4238 = vld [vmem:[#allocation6 + $0xf8] sm:$0xff]
    %v4271 = vunpack.c.l.b16 %v4207
    %v4272 = vunpack.c.h.b16 %v4207
    %v4273 = vunpack.c.l.b16 %v4208
    %v4274 = vunpack.c.h.b16 %v4208
    %v4275 = vunpack.c.l.b16 %v4209
    %v4276 = vunpack.c.h.b16 %v4209
    %v4277 = vunpack.c.l.b16 %v4210
    %v4278 = vunpack.c.h.b16 %v4210
    %v4279 = vunpack.c.l.b16 %v4211
    %v4280 = vunpack.c.h.b16 %v4211
    %v4281 = vunpack.c.l.b16 %v4212
    %v4282 = vunpack.c.h.b16 %v4212
    %v4283 = vunpack.c.l.b16 %v4213
    %v4284 = vunpack.c.h.b16 %v4213
    %v4285 = vunpack.c.l.b16 %v4214
    %v4286 = vunpack.c.h.b16 %v4214
    %v4287 = vunpack.c.l.b16 %v4215
    %v4288 = vunpack.c.h.b16 %v4215
    %v4289 = vunpack.c.l.b16 %v4216
    %v4290 = vunpack.c.h.b16 %v4216
    %v4291 = vunpack.c.l.b16 %v4217
    %v4292 = vunpack.c.h.b16 %v4217
    %v4293 = vunpack.c.l.b16 %v4218
    %v4294 = vunpack.c.h.b16 %v4218
    %v4295 = vunpack.c.l.b16 %v4219
    %v4296 = vunpack.c.h.b16 %v4219
    %v4297 = vunpack.c.l.b16 %v4220
    %v4298 = vunpack.c.h.b16 %v4220
    %v4299 = vunpack.c.l.b16 %v4221
    %v4300 = vunpack.c.h.b16 %v4221
    %v4301 = vunpack.c.l.b16 %v4222
    %v4302 = vunpack.c.h.b16 %v4222
    %v4303 = vunpack.c.l.b16 %v4223
    %v4304 = vunpack.c.h.b16 %v4223
    %v4305 = vunpack.c.l.b16 %v4224
    %v4306 = vunpack.c.h.b16 %v4224
    %v4307 = vunpack.c.l.b16 %v4225
    %v4308 = vunpack.c.h.b16 %v4225
    %v4309 = vunpack.c.l.b16 %v4226
    %v4310 = vunpack.c.h.b16 %v4226
    %v4311 = vunpack.c.l.b16 %v4227
    %v4312 = vunpack.c.h.b16 %v4227
    %v4313 = vunpack.c.l.b16 %v4228
    %v4314 = vunpack.c.h.b16 %v4228
    %v4315 = vunpack.c.l.b16 %v4229
    %v4316 = vunpack.c.h.b16 %v4229
    %v4317 = vunpack.c.l.b16 %v4230
    %v4318 = vunpack.c.h.b16 %v4230
    %v4319 = vunpack.c.l.b16 %v4231
    %v4320 = vunpack.c.h.b16 %v4231
    %v4321 = vunpack.c.l.b16 %v4232
    %v4322 = vunpack.c.h.b16 %v4232
    %v4323 = vunpack.c.l.b16 %v4233
    %v4324 = vunpack.c.h.b16 %v4233
    %v4325 = vunpack.c.l.b16 %v4234
    %v4326 = vunpack.c.h.b16 %v4234
    %v4327 = vunpack.c.l.b16 %v4235
    %v4328 = vunpack.c.h.b16 %v4235
    %v4329 = vunpack.c.l.b16 %v4236
    %v4330 = vunpack.c.h.b16 %v4236
    %v4331 = vunpack.c.l.b16 %v4237
    %v4332 = vunpack.c.h.b16 %v4237
    %v4333 = vunpack.c.l.b16 %v4238
    %v4334 = vunpack.c.h.b16 %v4238
    %v4335 = vpack.c.b16 %v4275, %v4271
    %v4336 = vpack.c.b16 %v4276, %v4272
    %v4337 = vpack.c.b16 %v4277, %v4273
    %v4338 = vpack.c.b16 %v4278, %v4274
    %v4339 = vpack.c.b16 %v4283, %v4279
    %v4340 = vpack.c.b16 %v4284, %v4280
    %v4341 = vpack.c.b16 %v4285, %v4281
    %v4342 = vpack.c.b16 %v4286, %v4282
    %v4343 = vpack.c.b16 %v4291, %v4287
    %v4344 = vpack.c.b16 %v4292, %v4288
    %v4345 = vpack.c.b16 %v4293, %v4289
    %v4346 = vpack.c.b16 %v4294, %v4290
    %v4347 = vpack.c.b16 %v4299, %v4295
    %v4348 = vpack.c.b16 %v4300, %v4296
    %v4349 = vpack.c.b16 %v4301, %v4297
    %v4350 = vpack.c.b16 %v4302, %v4298
    %v4351 = vpack.c.b16 %v4307, %v4303
    %v4352 = vpack.c.b16 %v4308, %v4304
    %v4353 = vpack.c.b16 %v4309, %v4305
    %v4354 = vpack.c.b16 %v4310, %v4306
    %v4355 = vpack.c.b16 %v4315, %v4311
    %v4356 = vpack.c.b16 %v4316, %v4312
    %v4357 = vpack.c.b16 %v4317, %v4313
    %v4358 = vpack.c.b16 %v4318, %v4314
    %v4359 = vpack.c.b16 %v4323, %v4319
    %v4360 = vpack.c.b16 %v4324, %v4320
    %v4361 = vpack.c.b16 %v4325, %v4321
    %v4362 = vpack.c.b16 %v4326, %v4322
    %v4363 = vpack.c.b16 %v4331, %v4327
    %v4364 = vpack.c.b16 %v4332, %v4328
    %v4365 = vpack.c.b16 %v4333, %v4329
    %v4366 = vpack.c.b16 %v4334, %v4330
    %4399 = vmatpush.bf16.msra.mxu0 %v4363
    %4400 = vmatpush.bf16.msra.mxu0 %v4359
    %4401 = vmatpush.bf16.msra.mxu0 %v4355
    %4402 = vmatpush.bf16.msra.mxu0 %v4351
    %4403 = vmatpush.bf16.msra.mxu0 %v4347
    %4404 = vmatpush.bf16.msra.mxu0 %v4343
    %4405 = vmatpush.bf16.msra.mxu0 %v4339
    %4406 = vmatpush.bf16.msra.mxu0 %v4335
    %4407 = vmatmul.bf16.gmra.mxu0 %v4206
    %v4408 = vpop.f32.mrf.mxu0
    %v4409 = vadd.f32 0.0, %v4408
    %v4410 = vpop.f32.mrf.mxu0
    %4411 = vdwg.mxu0
    %4412 = vmatpush.bf16.msra.mxu0 %v4364
    %4413 = vmatpush.bf16.msra.mxu0 %v4360
    %4414 = vmatpush.bf16.msra.mxu0 %v4356
    %4415 = vmatpush.bf16.msra.mxu0 %v4352
    %4416 = vmatpush.bf16.msra.mxu0 %v4348
    %4417 = vmatpush.bf16.msra.mxu0 %v4344
    %4418 = vmatpush.bf16.msra.mxu0 %v4340
    %4419 = vmatpush.bf16.msra.mxu0 %v4336
    %4420 = vmatmul.bf16.gmra.mxu0 %v4206
    %v4421 = vpop.f32.mrf.mxu0
    %v4422 = vadd.f32 0.0, %v4421
    %v4423 = vpop.f32.mrf.mxu0
    %4424 = vdwg.mxu0
    %4425 = vmatpush.bf16.msra.mxu0 %v4365
    %4426 = vmatpush.bf16.msra.mxu0 %v4361
    %4427 = vmatpush.bf16.msra.mxu0 %v4357
    %4428 = vmatpush.bf16.msra.mxu0 %v4353
    %4429 = vmatpush.bf16.msra.mxu0 %v4349
    %4430 = vmatpush.bf16.msra.mxu0 %v4345
    %4431 = vmatpush.bf16.msra.mxu0 %v4341
    %4432 = vmatpush.bf16.msra.mxu0 %v4337
    %4433 = vmatmul.bf16.gmra.mxu0 %v4206
    %v4434 = vpop.f32.mrf.mxu0
    %v4435 = vadd.f32 0.0, %v4434
    %v4436 = vpop.f32.mrf.mxu0
    %4437 = vdwg.mxu0
    %4438 = vmatpush.bf16.msra.mxu0 %v4366
    %4439 = vmatpush.bf16.msra.mxu0 %v4362
    %4440 = vmatpush.bf16.msra.mxu0 %v4358
    %4441 = vmatpush.bf16.msra.mxu0 %v4354
    %4442 = vmatpush.bf16.msra.mxu0 %v4350
    %4443 = vmatpush.bf16.msra.mxu0 %v4346
    %4444 = vmatpush.bf16.msra.mxu0 %v4342
    %4445 = vmatpush.bf16.msra.mxu0 %v4338
    %4446 = vmatmul.bf16.gmra.mxu0 %v4206
    %v4447 = vpop.f32.mrf.mxu0
    %v4448 = vadd.f32 0.0, %v4447
    %v4449 = vpop.f32.mrf.mxu0
    %4450 = vdwg.mxu0
    %v4451 = vadd.f32 %v4202, %v4409
    %v4452 = vadd.f32 %v4203, %v4422
    %v4453 = vadd.f32 %v4204, %v4435
    %v4454 = vadd.f32 %v4205, %v4448
    %v4455 = vxor.u32 %v4451, 2147483648
    %v4456 = vxor.u32 %v4452, 2147483648
    %v4457 = vxor.u32 %v4453, 2147483648
    %v4458 = vmul.f32 %v4455, 1.442695
    %v4459 = vpow.pop %v4458
    %v4460 = vmul.f32 %v4456, 1.442695
    %v4461 = vpow.pop %v4460
    %v4462 = vmul.f32 %v4457, 1.442695
    %v4463 = vpow.pop %v4462
    %v4464 = vadd.f32 %v4459, 1.0
    %v4465 = vadd.f32 %v4461, 1.0
    %v4466 = vadd.f32 %v4463, 1.0
    %v4467 = vrcp.pop %v4464
    %v4468 = vmul.f32 %v4464, %v4467
    %v4469 = vsub.f32 1.0, %v4468
    %v4470 = vmul.f32 %v4467, %v4469
    %v4471 = vadd.f32 %v4467, %v4470
    %vm4472 = vweird.f32 %v4464
    %vm4473 = vweird.f32 %v4467
    %vm4474 = vmor %vm4472, %vm4473
    %v4475 = vsel %vm4474, %v4467, %v4471
    %v4476 = vand.u32 2147483647, %v4464
    %vm4477 = vcmp.eq.f32.partialorder %v4476, 8.507059e+37
    %v4478 = vand.u32 %v4464, 2147483648
    %v4479 = vor.u32 1.1754944e-38, %v4478
    %v4480 = vsel %vm4477, %v4479, %v4475
    %v4481 = vmul.f32 1.0, %v4480
    %v4482 = vrcp.pop %v4465
    %v4483 = vmul.f32 %v4465, %v4482
    %v4484 = vsub.f32 1.0, %v4483
    %v4485 = vmul.f32 %v4482, %v4484
    %v4486 = vadd.f32 %v4482, %v4485
    %vm4487 = vweird.f32 %v4465
    %vm4488 = vweird.f32 %v4482
    %vm4489 = vmor %vm4487, %vm4488
    %v4490 = vsel %vm4489, %v4482, %v4486
    %v4491 = vand.u32 2147483647, %v4465
    %vm4492 = vcmp.eq.f32.partialorder %v4491, 8.507059e+37
    %v4493 = vand.u32 %v4465, 2147483648
    %v4494 = vor.u32 1.1754944e-38, %v4493
    %v4495 = vsel %vm4492, %v4494, %v4490
    %v4496 = vmul.f32 1.0, %v4495
    %v4497 = vrcp.pop %v4466
    %v4498 = vmul.f32 %v4466, %v4497
    %v4499 = vsub.f32 1.0, %v4498
    %v4500 = vmul.f32 %v4497, %v4499
    %v4501 = vadd.f32 %v4497, %v4500
    %vm4502 = vweird.f32 %v4466
    %vm4503 = vweird.f32 %v4497
    %vm4504 = vmor %vm4502, %vm4503
    %v4505 = vsel %vm4504, %v4497, %v4501
    %v4506 = vand.u32 2147483647, %v4466
    %vm4507 = vcmp.eq.f32.partialorder %v4506, 8.507059e+37
    %v4508 = vand.u32 %v4466, 2147483648
    %v4509 = vor.u32 1.1754944e-38, %v4508
    %v4510 = vsel %vm4507, %v4509, %v4505
    %v4511 = vmul.f32 1.0, %v4510
    %v4512 = vtanh.pop %v4454
    %v4513 = vmul.f32 %v4496, %v3635
    %v4514 = vmul.f32 %v4481, %v4512
    %v4515 = vadd.f32 %v4513, %v4514
    %v4516 = vtanh.pop %v4515
    %v4517 = vmul.f32 %v4511, %v4516
    %v4518 = vpack.c.bf16 %v4199, %v4199
    %v4519 = vld [vmem:[#allocation8] sm:$0xff]
    %v4520 = vld [vmem:[#allocation8 + $0x8] sm:$0xff]
    %v4521 = vld [vmem:[#allocation8 + $0x10] sm:$0xff]
    %v4522 = vld [vmem:[#allocation8 + $0x18] sm:$0xff]
    %v4523 = vld [vmem:[#allocation8 + $0x20] sm:$0xff]
    %v4524 = vld [vmem:[#allocation8 + $0x28] sm:$0xff]
    %v4525 = vld [vmem:[#allocation8 + $0x30] sm:$0xff]
    %v4526 = vld [vmem:[#allocation8 + $0x38] sm:$0xff]
    %v4527 = vld [vmem:[#allocation8 + $0x40] sm:$0xff]
    %v4528 = vld [vmem:[#allocation8 + $0x48] sm:$0xff]
    %v4529 = vld [vmem:[#allocation8 + $0x50] sm:$0xff]
    %v4530 = vld [vmem:[#allocation8 + $0x58] sm:$0xff]
    %v4531 = vld [vmem:[#allocation8 + $0x60] sm:$0xff]
    %v4532 = vld [vmem:[#allocation8 + $0x68] sm:$0xff]
    %v4533 = vld [vmem:[#allocation8 + $0x70] sm:$0xff]
    %v4534 = vld [vmem:[#allocation8 + $0x78] sm:$0xff]
    %v4535 = vld [vmem:[#allocation8 + $0x80] sm:$0xff]
    %v4536 = vld [vmem:[#allocation8 + $0x88] sm:$0xff]
    %v4537 = vld [vmem:[#allocation8 + $0x90] sm:$0xff]
    %v4538 = vld [vmem:[#allocation8 + $0x98] sm:$0xff]
    %v4539 = vld [vmem:[#allocation8 + $0xa0] sm:$0xff]
    %v4540 = vld [vmem:[#allocation8 + $0xa8] sm:$0xff]
    %v4541 = vld [vmem:[#allocation8 + $0xb0] sm:$0xff]
    %v4542 = vld [vmem:[#allocation8 + $0xb8] sm:$0xff]
    %v4543 = vld [vmem:[#allocation8 + $0xc0] sm:$0xff]
    %v4544 = vld [vmem:[#allocation8 + $0xc8] sm:$0xff]
    %v4545 = vld [vmem:[#allocation8 + $0xd0] sm:$0xff]
    %v4546 = vld [vmem:[#allocation8 + $0xd8] sm:$0xff]
    %v4547 = vld [vmem:[#allocation8 + $0xe0] sm:$0xff]
    %v4548 = vld [vmem:[#allocation8 + $0xe8] sm:$0xff]
    %v4549 = vld [vmem:[#allocation8 + $0xf0] sm:$0xff]
    %v4550 = vld [vmem:[#allocation8 + $0xf8] sm:$0xff]
    %v4551 = vld [vmem:[#allocation8 + $0x100] sm:$0xff]
    %v4552 = vld [vmem:[#allocation8 + $0x108] sm:$0xff]
    %v4553 = vld [vmem:[#allocation8 + $0x110] sm:$0xff]
    %v4554 = vld [vmem:[#allocation8 + $0x118] sm:$0xff]
    %v4555 = vld [vmem:[#allocation8 + $0x120] sm:$0xff]
    %v4556 = vld [vmem:[#allocation8 + $0x128] sm:$0xff]
    %v4557 = vld [vmem:[#allocation8 + $0x130] sm:$0xff]
    %v4558 = vld [vmem:[#allocation8 + $0x138] sm:$0xff]
    %v4559 = vld [vmem:[#allocation8 + $0x140] sm:$0xff]
    %v4560 = vld [vmem:[#allocation8 + $0x148] sm:$0xff]
    %v4561 = vld [vmem:[#allocation8 + $0x150] sm:$0xff]
    %v4562 = vld [vmem:[#allocation8 + $0x158] sm:$0xff]
    %v4563 = vld [vmem:[#allocation8 + $0x160] sm:$0xff]
    %v4564 = vld [vmem:[#allocation8 + $0x168] sm:$0xff]
    %v4565 = vld [vmem:[#allocation8 + $0x170] sm:$0xff]
    %v4566 = vld [vmem:[#allocation8 + $0x178] sm:$0xff]
    %v4567 = vld [vmem:[#allocation8 + $0x180] sm:$0xff]
    %v4568 = vld [vmem:[#allocation8 + $0x188] sm:$0xff]
    %v4569 = vld [vmem:[#allocation8 + $0x190] sm:$0xff]
    %v4570 = vld [vmem:[#allocation8 + $0x198] sm:$0xff]
    %v4571 = vld [vmem:[#allocation8 + $0x1a0] sm:$0xff]
    %v4572 = vld [vmem:[#allocation8 + $0x1a8] sm:$0xff]
    %v4573 = vld [vmem:[#allocation8 + $0x1b0] sm:$0xff]
    %v4574 = vld [vmem:[#allocation8 + $0x1b8] sm:$0xff]
    %v4575 = vld [vmem:[#allocation8 + $0x1c0] sm:$0xff]
    %v4576 = vld [vmem:[#allocation8 + $0x1c8] sm:$0xff]
    %v4577 = vld [vmem:[#allocation8 + $0x1d0] sm:$0xff]
    %v4578 = vld [vmem:[#allocation8 + $0x1d8] sm:$0xff]
    %v4579 = vld [vmem:[#allocation8 + $0x1e0] sm:$0xff]
    %v4580 = vld [vmem:[#allocation8 + $0x1e8] sm:$0xff]
    %v4581 = vld [vmem:[#allocation8 + $0x1f0] sm:$0xff]
    %v4582 = vld [vmem:[#allocation8 + $0x1f8] sm:$0xff]
    %v4583 = vld [vmem:[%s6] sm:$0xf]
    %v4585 = vperm.slane %v4583, 0
    %v4586 = vperm.slane %v4583, 1
    %v4587 = vperm.slane %v4583, 2
    %v4588 = vperm.slane %v4583, 3
    %v4657 = vunpack.c.l.b16 %v4519
    %v4658 = vunpack.c.h.b16 %v4519
    %v4659 = vunpack.c.l.b16 %v4520
    %v4660 = vunpack.c.h.b16 %v4520
    %v4661 = vunpack.c.l.b16 %v4521
    %v4662 = vunpack.c.h.b16 %v4521
    %v4663 = vunpack.c.l.b16 %v4522
    %v4664 = vunpack.c.h.b16 %v4522
    %v4665 = vunpack.c.l.b16 %v4523
    %v4666 = vunpack.c.h.b16 %v4523
    %v4667 = vunpack.c.l.b16 %v4524
    %v4668 = vunpack.c.h.b16 %v4524
    %v4669 = vunpack.c.l.b16 %v4525
    %v4670 = vunpack.c.h.b16 %v4525
    %v4671 = vunpack.c.l.b16 %v4526
    %v4672 = vunpack.c.h.b16 %v4526
    %v4673 = vunpack.c.l.b16 %v4527
    %v4674 = vunpack.c.h.b16 %v4527
    %v4675 = vunpack.c.l.b16 %v4528
    %v4676 = vunpack.c.h.b16 %v4528
    %v4677 = vunpack.c.l.b16 %v4529
    %v4678 = vunpack.c.h.b16 %v4529
    %v4679 = vunpack.c.l.b16 %v4530
    %v4680 = vunpack.c.h.b16 %v4530
    %v4681 = vunpack.c.l.b16 %v4531
    %v4682 = vunpack.c.h.b16 %v4531
    %v4683 = vunpack.c.l.b16 %v4532
    %v4684 = vunpack.c.h.b16 %v4532
    %v4685 = vunpack.c.l.b16 %v4533
    %v4686 = vunpack.c.h.b16 %v4533
    %v4687 = vunpack.c.l.b16 %v4534
    %v4688 = vunpack.c.h.b16 %v4534
    %v4689 = vunpack.c.l.b16 %v4535
    %v4690 = vunpack.c.h.b16 %v4535
    %v4691 = vunpack.c.l.b16 %v4536
    %v4692 = vunpack.c.h.b16 %v4536
    %v4693 = vunpack.c.l.b16 %v4537
    %v4694 = vunpack.c.h.b16 %v4537
    %v4695 = vunpack.c.l.b16 %v4538
    %v4696 = vunpack.c.h.b16 %v4538
    %v4697 = vunpack.c.l.b16 %v4539
    %v4698 = vunpack.c.h.b16 %v4539
    %v4699 = vunpack.c.l.b16 %v4540
    %v4700 = vunpack.c.h.b16 %v4540
    %v4701 = vunpack.c.l.b16 %v4541
    %v4702 = vunpack.c.h.b16 %v4541
    %v4703 = vunpack.c.l.b16 %v4542
    %v4704 = vunpack.c.h.b16 %v4542
    %v4705 = vunpack.c.l.b16 %v4543
    %v4706 = vunpack.c.h.b16 %v4543
    %v4707 = vunpack.c.l.b16 %v4544
    %v4708 = vunpack.c.h.b16 %v4544
    %v4709 = vunpack.c.l.b16 %v4545
    %v4710 = vunpack.c.h.b16 %v4545
    %v4711 = vunpack.c.l.b16 %v4546
    %v4712 = vunpack.c.h.b16 %v4546
    %v4713 = vunpack.c.l.b16 %v4547
    %v4714 = vunpack.c.h.b16 %v4547
    %v4715 = vunpack.c.l.b16 %v4548
    %v4716 = vunpack.c.h.b16 %v4548
    %v4717 = vunpack.c.l.b16 %v4549
    %v4718 = vunpack.c.h.b16 %v4549
    %v4719 = vunpack.c.l.b16 %v4550
    %v4720 = vunpack.c.h.b16 %v4550
    %v4721 = vunpack.c.l.b16 %v4551
    %v4722 = vunpack.c.h.b16 %v4551
    %v4723 = vunpack.c.l.b16 %v4552
    %v4724 = vunpack.c.h.b16 %v4552
    %v4725 = vunpack.c.l.b16 %v4553
    %v4726 = vunpack.c.h.b16 %v4553
    %v4727 = vunpack.c.l.b16 %v4554
    %v4728 = vunpack.c.h.b16 %v4554
    %v4729 = vunpack.c.l.b16 %v4555
    %v4730 = vunpack.c.h.b16 %v4555
    %v4731 = vunpack.c.l.b16 %v4556
    %v4732 = vunpack.c.h.b16 %v4556
    %v4733 = vunpack.c.l.b16 %v4557
    %v4734 = vunpack.c.h.b16 %v4557
    %v4735 = vunpack.c.l.b16 %v4558
    %v4736 = vunpack.c.h.b16 %v4558
    %v4737 = vunpack.c.l.b16 %v4559
    %v4738 = vunpack.c.h.b16 %v4559
    %v4739 = vunpack.c.l.b16 %v4560
    %v4740 = vunpack.c.h.b16 %v4560
    %v4741 = vunpack.c.l.b16 %v4561
    %v4742 = vunpack.c.h.b16 %v4561
    %v4743 = vunpack.c.l.b16 %v4562
    %v4744 = vunpack.c.h.b16 %v4562
    %v4745 = vunpack.c.l.b16 %v4563
    %v4746 = vunpack.c.h.b16 %v4563
    %v4747 = vunpack.c.l.b16 %v4564
    %v4748 = vunpack.c.h.b16 %v4564
    %v4749 = vunpack.c.l.b16 %v4565
    %v4750 = vunpack.c.h.b16 %v4565
    %v4751 = vunpack.c.l.b16 %v4566
    %v4752 = vunpack.c.h.b16 %v4566
    %v4753 = vunpack.c.l.b16 %v4567
    %v4754 = vunpack.c.h.b16 %v4567
    %v4755 = vunpack.c.l.b16 %v4568
    %v4756 = vunpack.c.h.b16 %v4568
    %v4757 = vunpack.c.l.b16 %v4569
    %v4758 = vunpack.c.h.b16 %v4569
    %v4759 = vunpack.c.l.b16 %v4570
    %v4760 = vunpack.c.h.b16 %v4570
    %v4761 = vunpack.c.l.b16 %v4571
    %v4762 = vunpack.c.h.b16 %v4571
    %v4763 = vunpack.c.l.b16 %v4572
    %v4764 = vunpack.c.h.b16 %v4572
    %v4765 = vunpack.c.l.b16 %v4573
    %v4766 = vunpack.c.h.b16 %v4573
    %v4767 = vunpack.c.l.b16 %v4574
    %v4768 = vunpack.c.h.b16 %v4574
    %v4769 = vunpack.c.l.b16 %v4575
    %v4770 = vunpack.c.h.b16 %v4575
    %v4771 = vunpack.c.l.b16 %v4576
    %v4772 = vunpack.c.h.b16 %v4576
    %v4773 = vunpack.c.l.b16 %v4577
    %v4774 = vunpack.c.h.b16 %v4577
    %v4775 = vunpack.c.l.b16 %v4578
    %v4776 = vunpack.c.h.b16 %v4578
    %v4777 = vunpack.c.l.b16 %v4579
    %v4778 = vunpack.c.h.b16 %v4579
    %v4779 = vunpack.c.l.b16 %v4580
    %v4780 = vunpack.c.h.b16 %v4580
    %v4781 = vunpack.c.l.b16 %v4581
    %v4782 = vunpack.c.h.b16 %v4581
    %v4783 = vunpack.c.l.b16 %v4582
    %v4784 = vunpack.c.h.b16 %v4582
    %v4785 = vpack.c.b16 %v4661, %v4657
    %v4786 = vpack.c.b16 %v4662, %v4658
    %v4787 = vpack.c.b16 %v4663, %v4659
    %v4788 = vpack.c.b16 %v4664, %v4660
    %v4789 = vpack.c.b16 %v4669, %v4665
    %v4790 = vpack.c.b16 %v4670, %v4666
    %v4791 = vpack.c.b16 %v4671, %v4667
    %v4792 = vpack.c.b16 %v4672, %v4668
    %v4793 = vpack.c.b16 %v4677, %v4673
    %v4794 = vpack.c.b16 %v4678, %v4674
    %v4795 = vpack.c.b16 %v4679, %v4675
    %v4796 = vpack.c.b16 %v4680, %v4676
    %v4797 = vpack.c.b16 %v4685, %v4681
    %v4798 = vpack.c.b16 %v4686, %v4682
    %v4799 = vpack.c.b16 %v4687, %v4683
    %v4800 = vpack.c.b16 %v4688, %v4684
    %v4801 = vpack.c.b16 %v4693, %v4689
    %v4802 = vpack.c.b16 %v4694, %v4690
    %v4803 = vpack.c.b16 %v4695, %v4691
    %v4804 = vpack.c.b16 %v4696, %v4692
    %v4805 = vpack.c.b16 %v4701, %v4697
    %v4806 = vpack.c.b16 %v4702, %v4698
    %v4807 = vpack.c.b16 %v4703, %v4699
    %v4808 = vpack.c.b16 %v4704, %v4700
    %v4809 = vpack.c.b16 %v4709, %v4705
    %v4810 = vpack.c.b16 %v4710, %v4706
    %v4811 = vpack.c.b16 %v4711, %v4707
    %v4812 = vpack.c.b16 %v4712, %v4708
    %v4813 = vpack.c.b16 %v4717, %v4713
    %v4814 = vpack.c.b16 %v4718, %v4714
    %v4815 = vpack.c.b16 %v4719, %v4715
    %v4816 = vpack.c.b16 %v4720, %v4716
    %v4817 = vpack.c.b16 %v4725, %v4721
    %v4818 = vpack.c.b16 %v4726, %v4722
    %v4819 = vpack.c.b16 %v4727, %v4723
    %v4820 = vpack.c.b16 %v4728, %v4724
    %v4821 = vpack.c.b16 %v4733, %v4729
    %v4822 = vpack.c.b16 %v4734, %v4730
    %v4823 = vpack.c.b16 %v4735, %v4731
    %v4824 = vpack.c.b16 %v4736, %v4732
    %v4825 = vpack.c.b16 %v4741, %v4737
    %v4826 = vpack.c.b16 %v4742, %v4738
    %v4827 = vpack.c.b16 %v4743, %v4739
    %v4828 = vpack.c.b16 %v4744, %v4740
    %v4829 = vpack.c.b16 %v4749, %v4745
    %v4830 = vpack.c.b16 %v4750, %v4746
    %v4831 = vpack.c.b16 %v4751, %v4747
    %v4832 = vpack.c.b16 %v4752, %v4748
    %v4833 = vpack.c.b16 %v4757, %v4753
    %v4834 = vpack.c.b16 %v4758, %v4754
    %v4835 = vpack.c.b16 %v4759, %v4755
    %v4836 = vpack.c.b16 %v4760, %v4756
    %v4837 = vpack.c.b16 %v4765, %v4761
    %v4838 = vpack.c.b16 %v4766, %v4762
    %v4839 = vpack.c.b16 %v4767, %v4763
    %v4840 = vpack.c.b16 %v4768, %v4764
    %v4841 = vpack.c.b16 %v4773, %v4769
    %v4842 = vpack.c.b16 %v4774, %v4770
    %v4843 = vpack.c.b16 %v4775, %v4771
    %v4844 = vpack.c.b16 %v4776, %v4772
    %v4845 = vpack.c.b16 %v4781, %v4777
    %v4846 = vpack.c.b16 %v4782, %v4778
    %v4847 = vpack.c.b16 %v4783, %v4779
    %v4848 = vpack.c.b16 %v4784, %v4780
    %4913 = vmatpush.bf16.msra.mxu0 %v4813
    %4914 = vmatpush.bf16.msra.mxu0 %v4809
    %4915 = vmatpush.bf16.msra.mxu0 %v4805
    %4916 = vmatpush.bf16.msra.mxu0 %v4801
    %4917 = vmatpush.bf16.msra.mxu0 %v4797
    %4918 = vmatpush.bf16.msra.mxu0 %v4793
    %4919 = vmatpush.bf16.msra.mxu0 %v4789
    %4920 = vmatpush.bf16.msra.mxu0 %v4785
    %4921 = vmatmul.bf16.gmra.mxu0 %v4206
    %v4922 = vpop.f32.mrf.mxu0
    %v4923 = vadd.f32 %v4585, %v4922
    %v4924 = vpop.f32.mrf.mxu0
    %4925 = vdwg.mxu0
    %4926 = vmatpush.bf16.msra.mxu0 %v4845
    %4927 = vmatpush.bf16.msra.mxu0 %v4841
    %4928 = vmatpush.bf16.msra.mxu0 %v4837
    %4929 = vmatpush.bf16.msra.mxu0 %v4833
    %4930 = vmatpush.bf16.msra.mxu0 %v4829
    %4931 = vmatpush.bf16.msra.mxu0 %v4825
    %4932 = vmatpush.bf16.msra.mxu0 %v4821
    %4933 = vmatpush.bf16.msra.mxu0 %v4817
    %4934 = vmatmul.bf16.gmra.mxu0 %v4518
    %v4935 = vpop.f32.mrf.mxu0
    %v4936 = vadd.f32 %v4923, %v4935
    %v4937 = vpop.f32.mrf.mxu0
    %4938 = vdwg.mxu0
    %4939 = vmatpush.bf16.msra.mxu0 %v4814
    %4940 = vmatpush.bf16.msra.mxu0 %v4810
    %4941 = vmatpush.bf16.msra.mxu0 %v4806
    %4942 = vmatpush.bf16.msra.mxu0 %v4802
    %4943 = vmatpush.bf16.msra.mxu0 %v4798
    %4944 = vmatpush.bf16.msra.mxu0 %v4794
    %4945 = vmatpush.bf16.msra.mxu0 %v4790
    %4946 = vmatpush.bf16.msra.mxu0 %v4786
    %4947 = vmatmul.bf16.gmra.mxu0 %v4206
    %v4948 = vpop.f32.mrf.mxu0
    %v4949 = vadd.f32 %v4586, %v4948
    %v4950 = vpop.f32.mrf.mxu0
    %4951 = vdwg.mxu0
    %4952 = vmatpush.bf16.msra.mxu0 %v4846
    %4953 = vmatpush.bf16.msra.mxu0 %v4842
    %4954 = vmatpush.bf16.msra.mxu0 %v4838
    %4955 = vmatpush.bf16.msra.mxu0 %v4834
    %4956 = vmatpush.bf16.msra.mxu0 %v4830
    %4957 = vmatpush.bf16.msra.mxu0 %v4826
    %4958 = vmatpush.bf16.msra.mxu0 %v4822
    %4959 = vmatpush.bf16.msra.mxu0 %v4818
    %4960 = vmatmul.bf16.gmra.mxu0 %v4518
    %v4961 = vpop.f32.mrf.mxu0
    %v4962 = vadd.f32 %v4949, %v4961
    %v4963 = vpop.f32.mrf.mxu0
    %4964 = vdwg.mxu0
    %4965 = vmatpush.bf16.msra.mxu0 %v4815
    %4966 = vmatpush.bf16.msra.mxu0 %v4811
    %4967 = vmatpush.bf16.msra.mxu0 %v4807
    %4968 = vmatpush.bf16.msra.mxu0 %v4803
    %4969 = vmatpush.bf16.msra.mxu0 %v4799
    %4970 = vmatpush.bf16.msra.mxu0 %v4795
    %4971 = vmatpush.bf16.msra.mxu0 %v4791
    %4972 = vmatpush.bf16.msra.mxu0 %v4787
    %4973 = vmatmul.bf16.gmra.mxu0 %v4206
    %v4974 = vpop.f32.mrf.mxu0
    %v4975 = vadd.f32 %v4587, %v4974
    %v4976 = vpop.f32.mrf.mxu0
    %4977 = vdwg.mxu0
    %4978 = vmatpush.bf16.msra.mxu0 %v4847
    %4979 = vmatpush.bf16.msra.mxu0 %v4843
    %4980 = vmatpush.bf16.msra.mxu0 %v4839
    %4981 = vmatpush.bf16.msra.mxu0 %v4835
    %4982 = vmatpush.bf16.msra.mxu0 %v4831
    %4983 = vmatpush.bf16.msra.mxu0 %v4827
    %4984 = vmatpush.bf16.msra.mxu0 %v4823
    %4985 = vmatpush.bf16.msra.mxu0 %v4819
    %4986 = vmatmul.bf16.gmra.mxu0 %v4518
    %v4987 = vpop.f32.mrf.mxu0
    %v4988 = vadd.f32 %v4975, %v4987
    %v4989 = vpop.f32.mrf.mxu0
    %4990 = vdwg.mxu0
    %4991 = vmatpush.bf16.msra.mxu0 %v4816
    %4992 = vmatpush.bf16.msra.mxu0 %v4812
    %4993 = vmatpush.bf16.msra.mxu0 %v4808
    %4994 = vmatpush.bf16.msra.mxu0 %v4804
    %4995 = vmatpush.bf16.msra.mxu0 %v4800
    %4996 = vmatpush.bf16.msra.mxu0 %v4796
    %4997 = vmatpush.bf16.msra.mxu0 %v4792
    %4998 = vmatpush.bf16.msra.mxu0 %v4788
    %4999 = vmatmul.bf16.gmra.mxu0 %v4206
    %v5000 = vpop.f32.mrf.mxu0
    %v5001 = vadd.f32 %v4588, %v5000
    %v5002 = vpop.f32.mrf.mxu0
    %5003 = vdwg.mxu0
    %5004 = vmatpush.bf16.msra.mxu0 %v4848
    %5005 = vmatpush.bf16.msra.mxu0 %v4844
    %5006 = vmatpush.bf16.msra.mxu0 %v4840
    %5007 = vmatpush.bf16.msra.mxu0 %v4836
    %5008 = vmatpush.bf16.msra.mxu0 %v4832
    %5009 = vmatpush.bf16.msra.mxu0 %v4828
    %5010 = vmatpush.bf16.msra.mxu0 %v4824
    %5011 = vmatpush.bf16.msra.mxu0 %v4820
    %5012 = vmatmul.bf16.gmra.mxu0 %v4518
    %v5013 = vpop.f32.mrf.mxu0
    %v5014 = vadd.f32 %v5001, %v5013
    %v5015 = vpop.f32.mrf.mxu0
    %5016 = vdwg.mxu0
    %v5017 = vxor.u32 %v4936, 2147483648
    %v5018 = vxor.u32 %v4962, 2147483648
    %v5019 = vxor.u32 %v4988, 2147483648
    %v5020 = vmul.f32 %v5017, 1.442695
    %v5021 = vpow.pop %v5020
    %v5022 = vmul.f32 %v5018, 1.442695
    %v5023 = vpow.pop %v5022
    %v5024 = vmul.f32 %v5019, 1.442695
    %v5025 = vpow.pop %v5024
    %v5026 = vadd.f32 %v5021, 1.0
    %v5027 = vadd.f32 %v5023, 1.0
    %v5028 = vadd.f32 %v5025, 1.0
    %v5029 = vrcp.pop %v5026
    %v5030 = vmul.f32 %v5026, %v5029
    %v5031 = vsub.f32 1.0, %v5030
    %v5032 = vmul.f32 %v5029, %v5031
    %v5033 = vadd.f32 %v5029, %v5032
    %vm5034 = vweird.f32 %v5026
    %vm5035 = vweird.f32 %v5029
    %vm5036 = vmor %vm5034, %vm5035
    %v5037 = vsel %vm5036, %v5029, %v5033
    %v5038 = vand.u32 2147483647, %v5026
    %vm5039 = vcmp.eq.f32.partialorder %v5038, 8.507059e+37
    %v5040 = vand.u32 %v5026, 2147483648
    %v5041 = vor.u32 1.1754944e-38, %v5040
    %v5042 = vsel %vm5039, %v5041, %v5037
    %v5043 = vmul.f32 1.0, %v5042
    %v5044 = vrcp.pop %v5027
    %v5045 = vmul.f32 %v5027, %v5044
    %v5046 = vsub.f32 1.0, %v5045
    %v5047 = vmul.f32 %v5044, %v5046
    %v5048 = vadd.f32 %v5044, %v5047
    %vm5049 = vweird.f32 %v5027
    %vm5050 = vweird.f32 %v5044
    %vm5051 = vmor %vm5049, %vm5050
    %v5052 = vsel %vm5051, %v5044, %v5048
    %v5053 = vand.u32 2147483647, %v5027
    %vm5054 = vcmp.eq.f32.partialorder %v5053, 8.507059e+37
    %v5055 = vand.u32 %v5027, 2147483648
    %v5056 = vor.u32 1.1754944e-38, %v5055
    %v5057 = vsel %vm5054, %v5056, %v5052
    %v5058 = vmul.f32 1.0, %v5057
    %v5059 = vrcp.pop %v5028
    %v5060 = vmul.f32 %v5028, %v5059
    %v5061 = vsub.f32 1.0, %v5060
    %v5062 = vmul.f32 %v5059, %v5061
    %v5063 = vadd.f32 %v5059, %v5062
    %vm5064 = vweird.f32 %v5028
    %vm5065 = vweird.f32 %v5059
    %vm5066 = vmor %vm5064, %vm5065
    %v5067 = vsel %vm5066, %v5059, %v5063
    %v5068 = vand.u32 2147483647, %v5028
    %vm5069 = vcmp.eq.f32.partialorder %v5068, 8.507059e+37
    %v5070 = vand.u32 %v5028, 2147483648
    %v5071 = vor.u32 1.1754944e-38, %v5070
    %v5072 = vsel %vm5069, %v5071, %v5067
    %v5073 = vmul.f32 1.0, %v5072
    %v5074 = vtanh.pop %v5014
    %v5075 = vmul.f32 %v5058, %v4197
    %v5076 = vmul.f32 %v5043, %v5074
    %v5077 = vadd.f32 %v5075, %v5076
    %v5078 = vtanh.pop %v5077
    %v5079 = vmul.f32 %v5073, %v5078
    %s5080 = scalar_lea.vmem %s7, 32
    %5081 = vst [vmem:[%s5080] sm:$0xff] %v5079
    %v5082 = vld [vmem:[#allocation2 + $0xc0] sm:$0xff]
    %v5083 = vld [vmem:[#allocation2 + $0xc8] sm:$0xff]
    %v5084 = vld [vmem:[#allocation2 + $0xd0] sm:$0xff]
    %v5085 = vld [vmem:[#allocation2 + $0xd8] sm:$0xff]
    %v5086 = vpack.c.bf16 %v4517, %v4517
    %v5087 = vld [vmem:[#allocation6] sm:$0xff]
    %v5088 = vld [vmem:[#allocation6 + $0x8] sm:$0xff]
    %v5089 = vld [vmem:[#allocation6 + $0x10] sm:$0xff]
    %v5090 = vld [vmem:[#allocation6 + $0x18] sm:$0xff]
    %v5091 = vld [vmem:[#allocation6 + $0x20] sm:$0xff]
    %v5092 = vld [vmem:[#allocation6 + $0x28] sm:$0xff]
    %v5093 = vld [vmem:[#allocation6 + $0x30] sm:$0xff]
    %v5094 = vld [vmem:[#allocation6 + $0x38] sm:$0xff]
    %v5095 = vld [vmem:[#allocation6 + $0x40] sm:$0xff]
    %v5096 = vld [vmem:[#allocation6 + $0x48] sm:$0xff]
    %v5097 = vld [vmem:[#allocation6 + $0x50] sm:$0xff]
    %v5098 = vld [vmem:[#allocation6 + $0x58] sm:$0xff]
    %v5099 = vld [vmem:[#allocation6 + $0x60] sm:$0xff]
    %v5100 = vld [vmem:[#allocation6 + $0x68] sm:$0xff]
    %v5101 = vld [vmem:[#allocation6 + $0x70] sm:$0xff]
    %v5102 = vld [vmem:[#allocation6 + $0x78] sm:$0xff]
    %v5103 = vld [vmem:[#allocation6 + $0x80] sm:$0xff]
    %v5104 = vld [vmem:[#allocation6 + $0x88] sm:$0xff]
    %v5105 = vld [vmem:[#allocation6 + $0x90] sm:$0xff]
    %v5106 = vld [vmem:[#allocation6 + $0x98] sm:$0xff]
    %v5107 = vld [vmem:[#allocation6 + $0xa0] sm:$0xff]
    %v5108 = vld [vmem:[#allocation6 + $0xa8] sm:$0xff]
    %v5109 = vld [vmem:[#allocation6 + $0xb0] sm:$0xff]
    %v5110 = vld [vmem:[#allocation6 + $0xb8] sm:$0xff]
    %v5111 = vld [vmem:[#allocation6 + $0xc0] sm:$0xff]
    %v5112 = vld [vmem:[#allocation6 + $0xc8] sm:$0xff]
    %v5113 = vld [vmem:[#allocation6 + $0xd0] sm:$0xff]
    %v5114 = vld [vmem:[#allocation6 + $0xd8] sm:$0xff]
    %v5115 = vld [vmem:[#allocation6 + $0xe0] sm:$0xff]
    %v5116 = vld [vmem:[#allocation6 + $0xe8] sm:$0xff]
    %v5117 = vld [vmem:[#allocation6 + $0xf0] sm:$0xff]
    %v5118 = vld [vmem:[#allocation6 + $0xf8] sm:$0xff]
    %v5151 = vunpack.c.l.b16 %v5087
    %v5152 = vunpack.c.h.b16 %v5087
    %v5153 = vunpack.c.l.b16 %v5088
    %v5154 = vunpack.c.h.b16 %v5088
    %v5155 = vunpack.c.l.b16 %v5089
    %v5156 = vunpack.c.h.b16 %v5089
    %v5157 = vunpack.c.l.b16 %v5090
    %v5158 = vunpack.c.h.b16 %v5090
    %v5159 = vunpack.c.l.b16 %v5091
    %v5160 = vunpack.c.h.b16 %v5091
    %v5161 = vunpack.c.l.b16 %v5092
    %v5162 = vunpack.c.h.b16 %v5092
    %v5163 = vunpack.c.l.b16 %v5093
    %v5164 = vunpack.c.h.b16 %v5093
    %v5165 = vunpack.c.l.b16 %v5094
    %v5166 = vunpack.c.h.b16 %v5094
    %v5167 = vunpack.c.l.b16 %v5095
    %v5168 = vunpack.c.h.b16 %v5095
    %v5169 = vunpack.c.l.b16 %v5096
    %v5170 = vunpack.c.h.b16 %v5096
    %v5171 = vunpack.c.l.b16 %v5097
    %v5172 = vunpack.c.h.b16 %v5097
    %v5173 = vunpack.c.l.b16 %v5098
    %v5174 = vunpack.c.h.b16 %v5098
    %v5175 = vunpack.c.l.b16 %v5099
    %v5176 = vunpack.c.h.b16 %v5099
    %v5177 = vunpack.c.l.b16 %v5100
    %v5178 = vunpack.c.h.b16 %v5100
    %v5179 = vunpack.c.l.b16 %v5101
    %v5180 = vunpack.c.h.b16 %v5101
    %v5181 = vunpack.c.l.b16 %v5102
    %v5182 = vunpack.c.h.b16 %v5102
    %v5183 = vunpack.c.l.b16 %v5103
    %v5184 = vunpack.c.h.b16 %v5103
    %v5185 = vunpack.c.l.b16 %v5104
    %v5186 = vunpack.c.h.b16 %v5104
    %v5187 = vunpack.c.l.b16 %v5105
    %v5188 = vunpack.c.h.b16 %v5105
    %v5189 = vunpack.c.l.b16 %v5106
    %v5190 = vunpack.c.h.b16 %v5106
    %v5191 = vunpack.c.l.b16 %v5107
    %v5192 = vunpack.c.h.b16 %v5107
    %v5193 = vunpack.c.l.b16 %v5108
    %v5194 = vunpack.c.h.b16 %v5108
    %v5195 = vunpack.c.l.b16 %v5109
    %v5196 = vunpack.c.h.b16 %v5109
    %v5197 = vunpack.c.l.b16 %v5110
    %v5198 = vunpack.c.h.b16 %v5110
    %v5199 = vunpack.c.l.b16 %v5111
    %v5200 = vunpack.c.h.b16 %v5111
    %v5201 = vunpack.c.l.b16 %v5112
    %v5202 = vunpack.c.h.b16 %v5112
    %v5203 = vunpack.c.l.b16 %v5113
    %v5204 = vunpack.c.h.b16 %v5113
    %v5205 = vunpack.c.l.b16 %v5114
    %v5206 = vunpack.c.h.b16 %v5114
    %v5207 = vunpack.c.l.b16 %v5115
    %v5208 = vunpack.c.h.b16 %v5115
    %v5209 = vunpack.c.l.b16 %v5116
    %v5210 = vunpack.c.h.b16 %v5116
    %v5211 = vunpack.c.l.b16 %v5117
    %v5212 = vunpack.c.h.b16 %v5117
    %v5213 = vunpack.c.l.b16 %v5118
    %v5214 = vunpack.c.h.b16 %v5118
    %v5215 = vpack.c.b16 %v5155, %v5151
    %v5216 = vpack.c.b16 %v5156, %v5152
    %v5217 = vpack.c.b16 %v5157, %v5153
    %v5218 = vpack.c.b16 %v5158, %v5154
    %v5219 = vpack.c.b16 %v5163, %v5159
    %v5220 = vpack.c.b16 %v5164, %v5160
    %v5221 = vpack.c.b16 %v5165, %v5161
    %v5222 = vpack.c.b16 %v5166, %v5162
    %v5223 = vpack.c.b16 %v5171, %v5167
    %v5224 = vpack.c.b16 %v5172, %v5168
    %v5225 = vpack.c.b16 %v5173, %v5169
    %v5226 = vpack.c.b16 %v5174, %v5170
    %v5227 = vpack.c.b16 %v5179, %v5175
    %v5228 = vpack.c.b16 %v5180, %v5176
    %v5229 = vpack.c.b16 %v5181, %v5177
    %v5230 = vpack.c.b16 %v5182, %v5178
    %v5231 = vpack.c.b16 %v5187, %v5183
    %v5232 = vpack.c.b16 %v5188, %v5184
    %v5233 = vpack.c.b16 %v5189, %v5185
    %v5234 = vpack.c.b16 %v5190, %v5186
    %v5235 = vpack.c.b16 %v5195, %v5191
    %v5236 = vpack.c.b16 %v5196, %v5192
    %v5237 = vpack.c.b16 %v5197, %v5193
    %v5238 = vpack.c.b16 %v5198, %v5194
    %v5239 = vpack.c.b16 %v5203, %v5199
    %v5240 = vpack.c.b16 %v5204, %v5200
    %v5241 = vpack.c.b16 %v5205, %v5201
    %v5242 = vpack.c.b16 %v5206, %v5202
    %v5243 = vpack.c.b16 %v5211, %v5207
    %v5244 = vpack.c.b16 %v5212, %v5208
    %v5245 = vpack.c.b16 %v5213, %v5209
    %v5246 = vpack.c.b16 %v5214, %v5210
    %5279 = vmatpush.bf16.msra.mxu0 %v5243
    %5280 = vmatpush.bf16.msra.mxu0 %v5239
    %5281 = vmatpush.bf16.msra.mxu0 %v5235
    %5282 = vmatpush.bf16.msra.mxu0 %v5231
    %5283 = vmatpush.bf16.msra.mxu0 %v5227
    %5284 = vmatpush.bf16.msra.mxu0 %v5223
    %5285 = vmatpush.bf16.msra.mxu0 %v5219
    %5286 = vmatpush.bf16.msra.mxu0 %v5215
    %5287 = vmatmul.bf16.gmra.mxu0 %v5086
    %v5288 = vpop.f32.mrf.mxu0
    %v5289 = vadd.f32 0.0, %v5288
    %v5290 = vpop.f32.mrf.mxu0
    %5291 = vdwg.mxu0
    %5292 = vmatpush.bf16.msra.mxu0 %v5244
    %5293 = vmatpush.bf16.msra.mxu0 %v5240
    %5294 = vmatpush.bf16.msra.mxu0 %v5236
    %5295 = vmatpush.bf16.msra.mxu0 %v5232
    %5296 = vmatpush.bf16.msra.mxu0 %v5228
    %5297 = vmatpush.bf16.msra.mxu0 %v5224
    %5298 = vmatpush.bf16.msra.mxu0 %v5220
    %5299 = vmatpush.bf16.msra.mxu0 %v5216
    %5300 = vmatmul.bf16.gmra.mxu0 %v5086
    %v5301 = vpop.f32.mrf.mxu0
    %v5302 = vadd.f32 0.0, %v5301
    %v5303 = vpop.f32.mrf.mxu0
    %5304 = vdwg.mxu0
    %5305 = vmatpush.bf16.msra.mxu0 %v5245
    %5306 = vmatpush.bf16.msra.mxu0 %v5241
    %5307 = vmatpush.bf16.msra.mxu0 %v5237
    %5308 = vmatpush.bf16.msra.mxu0 %v5233
    %5309 = vmatpush.bf16.msra.mxu0 %v5229
    %5310 = vmatpush.bf16.msra.mxu0 %v5225
    %5311 = vmatpush.bf16.msra.mxu0 %v5221
    %5312 = vmatpush.bf16.msra.mxu0 %v5217
    %5313 = vmatmul.bf16.gmra.mxu0 %v5086
    %v5314 = vpop.f32.mrf.mxu0
    %v5315 = vadd.f32 0.0, %v5314
    %v5316 = vpop.f32.mrf.mxu0
    %5317 = vdwg.mxu0
    %5318 = vmatpush.bf16.msra.mxu0 %v5246
    %5319 = vmatpush.bf16.msra.mxu0 %v5242
    %5320 = vmatpush.bf16.msra.mxu0 %v5238
    %5321 = vmatpush.bf16.msra.mxu0 %v5234
    %5322 = vmatpush.bf16.msra.mxu0 %v5230
    %5323 = vmatpush.bf16.msra.mxu0 %v5226
    %5324 = vmatpush.bf16.msra.mxu0 %v5222
    %5325 = vmatpush.bf16.msra.mxu0 %v5218
    %5326 = vmatmul.bf16.gmra.mxu0 %v5086
    %v5327 = vpop.f32.mrf.mxu0
    %v5328 = vadd.f32 0.0, %v5327
    %v5329 = vpop.f32.mrf.mxu0
    %5330 = vdwg.mxu0
    %v5331 = vadd.f32 %v5082, %v5289
    %v5332 = vadd.f32 %v5083, %v5302
    %v5333 = vadd.f32 %v5084, %v5315
    %v5334 = vadd.f32 %v5085, %v5328
    %v5335 = vxor.u32 %v5331, 2147483648
    %v5336 = vxor.u32 %v5332, 2147483648
    %v5337 = vxor.u32 %v5333, 2147483648
    %v5338 = vmul.f32 %v5335, 1.442695
    %v5339 = vpow.pop %v5338
    %v5340 = vmul.f32 %v5336, 1.442695
    %v5341 = vpow.pop %v5340
    %v5342 = vmul.f32 %v5337, 1.442695
    %v5343 = vpow.pop %v5342
    %v5344 = vadd.f32 %v5339, 1.0
    %v5345 = vadd.f32 %v5341, 1.0
    %v5346 = vadd.f32 %v5343, 1.0
    %v5347 = vrcp.pop %v5344
    %v5348 = vmul.f32 %v5344, %v5347
    %v5349 = vsub.f32 1.0, %v5348
    %v5350 = vmul.f32 %v5347, %v5349
    %v5351 = vadd.f32 %v5347, %v5350
    %vm5352 = vweird.f32 %v5344
    %vm5353 = vweird.f32 %v5347
    %vm5354 = vmor %vm5352, %vm5353
    %v5355 = vsel %vm5354, %v5347, %v5351
    %v5356 = vand.u32 2147483647, %v5344
    %vm5357 = vcmp.eq.f32.partialorder %v5356, 8.507059e+37
    %v5358 = vand.u32 %v5344, 2147483648
    %v5359 = vor.u32 1.1754944e-38, %v5358
    %v5360 = vsel %vm5357, %v5359, %v5355
    %v5361 = vmul.f32 1.0, %v5360
    %v5362 = vrcp.pop %v5345
    %v5363 = vmul.f32 %v5345, %v5362
    %v5364 = vsub.f32 1.0, %v5363
    %v5365 = vmul.f32 %v5362, %v5364
    %v5366 = vadd.f32 %v5362, %v5365
    %vm5367 = vweird.f32 %v5345
    %vm5368 = vweird.f32 %v5362
    %vm5369 = vmor %vm5367, %vm5368
    %v5370 = vsel %vm5369, %v5362, %v5366
    %v5371 = vand.u32 2147483647, %v5345
    %vm5372 = vcmp.eq.f32.partialorder %v5371, 8.507059e+37
    %v5373 = vand.u32 %v5345, 2147483648
    %v5374 = vor.u32 1.1754944e-38, %v5373
    %v5375 = vsel %vm5372, %v5374, %v5370
    %v5376 = vmul.f32 1.0, %v5375
    %v5377 = vrcp.pop %v5346
    %v5378 = vmul.f32 %v5346, %v5377
    %v5379 = vsub.f32 1.0, %v5378
    %v5380 = vmul.f32 %v5377, %v5379
    %v5381 = vadd.f32 %v5377, %v5380
    %vm5382 = vweird.f32 %v5346
    %vm5383 = vweird.f32 %v5377
    %vm5384 = vmor %vm5382, %vm5383
    %v5385 = vsel %vm5384, %v5377, %v5381
    %v5386 = vand.u32 2147483647, %v5346
    %vm5387 = vcmp.eq.f32.partialorder %v5386, 8.507059e+37
    %v5388 = vand.u32 %v5346, 2147483648
    %v5389 = vor.u32 1.1754944e-38, %v5388
    %v5390 = vsel %vm5387, %v5389, %v5385
    %v5391 = vmul.f32 1.0, %v5390
    %v5392 = vtanh.pop %v5334
    %v5393 = vmul.f32 %v5376, %v4515
    %v5394 = vmul.f32 %v5361, %v5392
    %v5395 = vadd.f32 %v5393, %v5394
    %v5396 = vtanh.pop %v5395
    %v5397 = vmul.f32 %v5391, %v5396
    %v5398 = vpack.c.bf16 %v5079, %v5079
    %v5399 = vld [vmem:[#allocation8] sm:$0xff]
    %v5400 = vld [vmem:[#allocation8 + $0x8] sm:$0xff]
    %v5401 = vld [vmem:[#allocation8 + $0x10] sm:$0xff]
    %v5402 = vld [vmem:[#allocation8 + $0x18] sm:$0xff]
    %v5403 = vld [vmem:[#allocation8 + $0x20] sm:$0xff]
    %v5404 = vld [vmem:[#allocation8 + $0x28] sm:$0xff]
    %v5405 = vld [vmem:[#allocation8 + $0x30] sm:$0xff]
    %v5406 = vld [vmem:[#allocation8 + $0x38] sm:$0xff]
    %v5407 = vld [vmem:[#allocation8 + $0x40] sm:$0xff]
    %v5408 = vld [vmem:[#allocation8 + $0x48] sm:$0xff]
    %v5409 = vld [vmem:[#allocation8 + $0x50] sm:$0xff]
    %v5410 = vld [vmem:[#allocation8 + $0x58] sm:$0xff]
    %v5411 = vld [vmem:[#allocation8 + $0x60] sm:$0xff]
    %v5412 = vld [vmem:[#allocation8 + $0x68] sm:$0xff]
    %v5413 = vld [vmem:[#allocation8 + $0x70] sm:$0xff]
    %v5414 = vld [vmem:[#allocation8 + $0x78] sm:$0xff]
    %v5415 = vld [vmem:[#allocation8 + $0x80] sm:$0xff]
    %v5416 = vld [vmem:[#allocation8 + $0x88] sm:$0xff]
    %v5417 = vld [vmem:[#allocation8 + $0x90] sm:$0xff]
    %v5418 = vld [vmem:[#allocation8 + $0x98] sm:$0xff]
    %v5419 = vld [vmem:[#allocation8 + $0xa0] sm:$0xff]
    %v5420 = vld [vmem:[#allocation8 + $0xa8] sm:$0xff]
    %v5421 = vld [vmem:[#allocation8 + $0xb0] sm:$0xff]
    %v5422 = vld [vmem:[#allocation8 + $0xb8] sm:$0xff]
    %v5423 = vld [vmem:[#allocation8 + $0xc0] sm:$0xff]
    %v5424 = vld [vmem:[#allocation8 + $0xc8] sm:$0xff]
    %v5425 = vld [vmem:[#allocation8 + $0xd0] sm:$0xff]
    %v5426 = vld [vmem:[#allocation8 + $0xd8] sm:$0xff]
    %v5427 = vld [vmem:[#allocation8 + $0xe0] sm:$0xff]
    %v5428 = vld [vmem:[#allocation8 + $0xe8] sm:$0xff]
    %v5429 = vld [vmem:[#allocation8 + $0xf0] sm:$0xff]
    %v5430 = vld [vmem:[#allocation8 + $0xf8] sm:$0xff]
    %v5431 = vld [vmem:[#allocation8 + $0x100] sm:$0xff]
    %v5432 = vld [vmem:[#allocation8 + $0x108] sm:$0xff]
    %v5433 = vld [vmem:[#allocation8 + $0x110] sm:$0xff]
    %v5434 = vld [vmem:[#allocation8 + $0x118] sm:$0xff]
    %v5435 = vld [vmem:[#allocation8 + $0x120] sm:$0xff]
    %v5436 = vld [vmem:[#allocation8 + $0x128] sm:$0xff]
    %v5437 = vld [vmem:[#allocation8 + $0x130] sm:$0xff]
    %v5438 = vld [vmem:[#allocation8 + $0x138] sm:$0xff]
    %v5439 = vld [vmem:[#allocation8 + $0x140] sm:$0xff]
    %v5440 = vld [vmem:[#allocation8 + $0x148] sm:$0xff]
    %v5441 = vld [vmem:[#allocation8 + $0x150] sm:$0xff]
    %v5442 = vld [vmem:[#allocation8 + $0x158] sm:$0xff]
    %v5443 = vld [vmem:[#allocation8 + $0x160] sm:$0xff]
    %v5444 = vld [vmem:[#allocation8 + $0x168] sm:$0xff]
    %v5445 = vld [vmem:[#allocation8 + $0x170] sm:$0xff]
    %v5446 = vld [vmem:[#allocation8 + $0x178] sm:$0xff]
    %v5447 = vld [vmem:[#allocation8 + $0x180] sm:$0xff]
    %v5448 = vld [vmem:[#allocation8 + $0x188] sm:$0xff]
    %v5449 = vld [vmem:[#allocation8 + $0x190] sm:$0xff]
    %v5450 = vld [vmem:[#allocation8 + $0x198] sm:$0xff]
    %v5451 = vld [vmem:[#allocation8 + $0x1a0] sm:$0xff]
    %v5452 = vld [vmem:[#allocation8 + $0x1a8] sm:$0xff]
    %v5453 = vld [vmem:[#allocation8 + $0x1b0] sm:$0xff]
    %v5454 = vld [vmem:[#allocation8 + $0x1b8] sm:$0xff]
    %v5455 = vld [vmem:[#allocation8 + $0x1c0] sm:$0xff]
    %v5456 = vld [vmem:[#allocation8 + $0x1c8] sm:$0xff]
    %v5457 = vld [vmem:[#allocation8 + $0x1d0] sm:$0xff]
    %v5458 = vld [vmem:[#allocation8 + $0x1d8] sm:$0xff]
    %v5459 = vld [vmem:[#allocation8 + $0x1e0] sm:$0xff]
    %v5460 = vld [vmem:[#allocation8 + $0x1e8] sm:$0xff]
    %v5461 = vld [vmem:[#allocation8 + $0x1f0] sm:$0xff]
    %v5462 = vld [vmem:[#allocation8 + $0x1f8] sm:$0xff]
    %v5463 = vld [vmem:[%s6] sm:$0xf]
    %v5465 = vperm.slane %v5463, 0
    %v5466 = vperm.slane %v5463, 1
    %v5467 = vperm.slane %v5463, 2
    %v5468 = vperm.slane %v5463, 3
    %v5537 = vunpack.c.l.b16 %v5399
    %v5538 = vunpack.c.h.b16 %v5399
    %v5539 = vunpack.c.l.b16 %v5400
    %v5540 = vunpack.c.h.b16 %v5400
    %v5541 = vunpack.c.l.b16 %v5401
    %v5542 = vunpack.c.h.b16 %v5401
    %v5543 = vunpack.c.l.b16 %v5402
    %v5544 = vunpack.c.h.b16 %v5402
    %v5545 = vunpack.c.l.b16 %v5403
    %v5546 = vunpack.c.h.b16 %v5403
    %v5547 = vunpack.c.l.b16 %v5404
    %v5548 = vunpack.c.h.b16 %v5404
    %v5549 = vunpack.c.l.b16 %v5405
    %v5550 = vunpack.c.h.b16 %v5405
    %v5551 = vunpack.c.l.b16 %v5406
    %v5552 = vunpack.c.h.b16 %v5406
    %v5553 = vunpack.c.l.b16 %v5407
    %v5554 = vunpack.c.h.b16 %v5407
    %v5555 = vunpack.c.l.b16 %v5408
    %v5556 = vunpack.c.h.b16 %v5408
    %v5557 = vunpack.c.l.b16 %v5409
    %v5558 = vunpack.c.h.b16 %v5409
    %v5559 = vunpack.c.l.b16 %v5410
    %v5560 = vunpack.c.h.b16 %v5410
    %v5561 = vunpack.c.l.b16 %v5411
    %v5562 = vunpack.c.h.b16 %v5411
    %v5563 = vunpack.c.l.b16 %v5412
    %v5564 = vunpack.c.h.b16 %v5412
    %v5565 = vunpack.c.l.b16 %v5413
    %v5566 = vunpack.c.h.b16 %v5413
    %v5567 = vunpack.c.l.b16 %v5414
    %v5568 = vunpack.c.h.b16 %v5414
    %v5569 = vunpack.c.l.b16 %v5415
    %v5570 = vunpack.c.h.b16 %v5415
    %v5571 = vunpack.c.l.b16 %v5416
    %v5572 = vunpack.c.h.b16 %v5416
    %v5573 = vunpack.c.l.b16 %v5417
    %v5574 = vunpack.c.h.b16 %v5417
    %v5575 = vunpack.c.l.b16 %v5418
    %v5576 = vunpack.c.h.b16 %v5418
    %v5577 = vunpack.c.l.b16 %v5419
    %v5578 = vunpack.c.h.b16 %v5419
    %v5579 = vunpack.c.l.b16 %v5420
    %v5580 = vunpack.c.h.b16 %v5420
    %v5581 = vunpack.c.l.b16 %v5421
    %v5582 = vunpack.c.h.b16 %v5421
    %v5583 = vunpack.c.l.b16 %v5422
    %v5584 = vunpack.c.h.b16 %v5422
    %v5585 = vunpack.c.l.b16 %v5423
    %v5586 = vunpack.c.h.b16 %v5423
    %v5587 = vunpack.c.l.b16 %v5424
    %v5588 = vunpack.c.h.b16 %v5424
    %v5589 = vunpack.c.l.b16 %v5425
    %v5590 = vunpack.c.h.b16 %v5425
    %v5591 = vunpack.c.l.b16 %v5426
    %v5592 = vunpack.c.h.b16 %v5426
    %v5593 = vunpack.c.l.b16 %v5427
    %v5594 = vunpack.c.h.b16 %v5427
    %v5595 = vunpack.c.l.b16 %v5428
    %v5596 = vunpack.c.h.b16 %v5428
    %v5597 = vunpack.c.l.b16 %v5429
    %v5598 = vunpack.c.h.b16 %v5429
    %v5599 = vunpack.c.l.b16 %v5430
    %v5600 = vunpack.c.h.b16 %v5430
    %v5601 = vunpack.c.l.b16 %v5431
    %v5602 = vunpack.c.h.b16 %v5431
    %v5603 = vunpack.c.l.b16 %v5432
    %v5604 = vunpack.c.h.b16 %v5432
    %v5605 = vunpack.c.l.b16 %v5433
    %v5606 = vunpack.c.h.b16 %v5433
    %v5607 = vunpack.c.l.b16 %v5434
    %v5608 = vunpack.c.h.b16 %v5434
    %v5609 = vunpack.c.l.b16 %v5435
    %v5610 = vunpack.c.h.b16 %v5435
    %v5611 = vunpack.c.l.b16 %v5436
    %v5612 = vunpack.c.h.b16 %v5436
    %v5613 = vunpack.c.l.b16 %v5437
    %v5614 = vunpack.c.h.b16 %v5437
    %v5615 = vunpack.c.l.b16 %v5438
    %v5616 = vunpack.c.h.b16 %v5438
    %v5617 = vunpack.c.l.b16 %v5439
    %v5618 = vunpack.c.h.b16 %v5439
    %v5619 = vunpack.c.l.b16 %v5440
    %v5620 = vunpack.c.h.b16 %v5440
    %v5621 = vunpack.c.l.b16 %v5441
    %v5622 = vunpack.c.h.b16 %v5441
    %v5623 = vunpack.c.l.b16 %v5442
    %v5624 = vunpack.c.h.b16 %v5442
    %v5625 = vunpack.c.l.b16 %v5443
    %v5626 = vunpack.c.h.b16 %v5443
    %v5627 = vunpack.c.l.b16 %v5444
    %v5628 = vunpack.c.h.b16 %v5444
    %v5629 = vunpack.c.l.b16 %v5445
    %v5630 = vunpack.c.h.b16 %v5445
    %v5631 = vunpack.c.l.b16 %v5446
    %v5632 = vunpack.c.h.b16 %v5446
    %v5633 = vunpack.c.l.b16 %v5447
    %v5634 = vunpack.c.h.b16 %v5447
    %v5635 = vunpack.c.l.b16 %v5448
    %v5636 = vunpack.c.h.b16 %v5448
    %v5637 = vunpack.c.l.b16 %v5449
    %v5638 = vunpack.c.h.b16 %v5449
    %v5639 = vunpack.c.l.b16 %v5450
    %v5640 = vunpack.c.h.b16 %v5450
    %v5641 = vunpack.c.l.b16 %v5451
    %v5642 = vunpack.c.h.b16 %v5451
    %v5643 = vunpack.c.l.b16 %v5452
    %v5644 = vunpack.c.h.b16 %v5452
    %v5645 = vunpack.c.l.b16 %v5453
    %v5646 = vunpack.c.h.b16 %v5453
    %v5647 = vunpack.c.l.b16 %v5454
    %v5648 = vunpack.c.h.b16 %v5454
    %v5649 = vunpack.c.l.b16 %v5455
    %v5650 = vunpack.c.h.b16 %v5455
    %v5651 = vunpack.c.l.b16 %v5456
    %v5652 = vunpack.c.h.b16 %v5456
    %v5653 = vunpack.c.l.b16 %v5457
    %v5654 = vunpack.c.h.b16 %v5457
    %v5655 = vunpack.c.l.b16 %v5458
    %v5656 = vunpack.c.h.b16 %v5458
    %v5657 = vunpack.c.l.b16 %v5459
    %v5658 = vunpack.c.h.b16 %v5459
    %v5659 = vunpack.c.l.b16 %v5460
    %v5660 = vunpack.c.h.b16 %v5460
    %v5661 = vunpack.c.l.b16 %v5461
    %v5662 = vunpack.c.h.b16 %v5461
    %v5663 = vunpack.c.l.b16 %v5462
    %v5664 = vunpack.c.h.b16 %v5462
    %v5665 = vpack.c.b16 %v5541, %v5537
    %v5666 = vpack.c.b16 %v5542, %v5538
    %v5667 = vpack.c.b16 %v5543, %v5539
    %v5668 = vpack.c.b16 %v5544, %v5540
    %v5669 = vpack.c.b16 %v5549, %v5545
    %v5670 = vpack.c.b16 %v5550, %v5546
    %v5671 = vpack.c.b16 %v5551, %v5547
    %v5672 = vpack.c.b16 %v5552, %v5548
    %v5673 = vpack.c.b16 %v5557, %v5553
    %v5674 = vpack.c.b16 %v5558, %v5554
    %v5675 = vpack.c.b16 %v5559, %v5555
    %v5676 = vpack.c.b16 %v5560, %v5556
    %v5677 = vpack.c.b16 %v5565, %v5561
    %v5678 = vpack.c.b16 %v5566, %v5562
    %v5679 = vpack.c.b16 %v5567, %v5563
    %v5680 = vpack.c.b16 %v5568, %v5564
    %v5681 = vpack.c.b16 %v5573, %v5569
    %v5682 = vpack.c.b16 %v5574, %v5570
    %v5683 = vpack.c.b16 %v5575, %v5571
    %v5684 = vpack.c.b16 %v5576, %v5572
    %v5685 = vpack.c.b16 %v5581, %v5577
    %v5686 = vpack.c.b16 %v5582, %v5578
    %v5687 = vpack.c.b16 %v5583, %v5579
    %v5688 = vpack.c.b16 %v5584, %v5580
    %v5689 = vpack.c.b16 %v5589, %v5585
    %v5690 = vpack.c.b16 %v5590, %v5586
    %v5691 = vpack.c.b16 %v5591, %v5587
    %v5692 = vpack.c.b16 %v5592, %v5588
    %v5693 = vpack.c.b16 %v5597, %v5593
    %v5694 = vpack.c.b16 %v5598, %v5594
    %v5695 = vpack.c.b16 %v5599, %v5595
    %v5696 = vpack.c.b16 %v5600, %v5596
    %v5697 = vpack.c.b16 %v5605, %v5601
    %v5698 = vpack.c.b16 %v5606, %v5602
    %v5699 = vpack.c.b16 %v5607, %v5603
    %v5700 = vpack.c.b16 %v5608, %v5604
    %v5701 = vpack.c.b16 %v5613, %v5609
    %v5702 = vpack.c.b16 %v5614, %v5610
    %v5703 = vpack.c.b16 %v5615, %v5611
    %v5704 = vpack.c.b16 %v5616, %v5612
    %v5705 = vpack.c.b16 %v5621, %v5617
    %v5706 = vpack.c.b16 %v5622, %v5618
    %v5707 = vpack.c.b16 %v5623, %v5619
    %v5708 = vpack.c.b16 %v5624, %v5620
    %v5709 = vpack.c.b16 %v5629, %v5625
    %v5710 = vpack.c.b16 %v5630, %v5626
    %v5711 = vpack.c.b16 %v5631, %v5627
    %v5712 = vpack.c.b16 %v5632, %v5628
    %v5713 = vpack.c.b16 %v5637, %v5633
    %v5714 = vpack.c.b16 %v5638, %v5634
    %v5715 = vpack.c.b16 %v5639, %v5635
    %v5716 = vpack.c.b16 %v5640, %v5636
    %v5717 = vpack.c.b16 %v5645, %v5641
    %v5718 = vpack.c.b16 %v5646, %v5642
    %v5719 = vpack.c.b16 %v5647, %v5643
    %v5720 = vpack.c.b16 %v5648, %v5644
    %v5721 = vpack.c.b16 %v5653, %v5649
    %v5722 = vpack.c.b16 %v5654, %v5650
    %v5723 = vpack.c.b16 %v5655, %v5651
    %v5724 = vpack.c.b16 %v5656, %v5652
    %v5725 = vpack.c.b16 %v5661, %v5657
    %v5726 = vpack.c.b16 %v5662, %v5658
    %v5727 = vpack.c.b16 %v5663, %v5659
    %v5728 = vpack.c.b16 %v5664, %v5660
    %5793 = vmatpush.bf16.msra.mxu0 %v5693
    %5794 = vmatpush.bf16.msra.mxu0 %v5689
    %5795 = vmatpush.bf16.msra.mxu0 %v5685
    %5796 = vmatpush.bf16.msra.mxu0 %v5681
    %5797 = vmatpush.bf16.msra.mxu0 %v5677
    %5798 = vmatpush.bf16.msra.mxu0 %v5673
    %5799 = vmatpush.bf16.msra.mxu0 %v5669
    %5800 = vmatpush.bf16.msra.mxu0 %v5665
    %5801 = vmatmul.bf16.gmra.mxu0 %v5086
    %v5802 = vpop.f32.mrf.mxu0
    %v5803 = vadd.f32 %v5465, %v5802
    %v5804 = vpop.f32.mrf.mxu0
    %5805 = vdwg.mxu0
    %5806 = vmatpush.bf16.msra.mxu0 %v5725
    %5807 = vmatpush.bf16.msra.mxu0 %v5721
    %5808 = vmatpush.bf16.msra.mxu0 %v5717
    %5809 = vmatpush.bf16.msra.mxu0 %v5713
    %5810 = vmatpush.bf16.msra.mxu0 %v5709
    %5811 = vmatpush.bf16.msra.mxu0 %v5705
    %5812 = vmatpush.bf16.msra.mxu0 %v5701
    %5813 = vmatpush.bf16.msra.mxu0 %v5697
    %5814 = vmatmul.bf16.gmra.mxu0 %v5398
    %v5815 = vpop.f32.mrf.mxu0
    %v5816 = vadd.f32 %v5803, %v5815
    %v5817 = vpop.f32.mrf.mxu0
    %5818 = vdwg.mxu0
    %5819 = vmatpush.bf16.msra.mxu0 %v5694
    %5820 = vmatpush.bf16.msra.mxu0 %v5690
    %5821 = vmatpush.bf16.msra.mxu0 %v5686
    %5822 = vmatpush.bf16.msra.mxu0 %v5682
    %5823 = vmatpush.bf16.msra.mxu0 %v5678
    %5824 = vmatpush.bf16.msra.mxu0 %v5674
    %5825 = vmatpush.bf16.msra.mxu0 %v5670
    %5826 = vmatpush.bf16.msra.mxu0 %v5666
    %5827 = vmatmul.bf16.gmra.mxu0 %v5086
    %v5828 = vpop.f32.mrf.mxu0
    %v5829 = vadd.f32 %v5466, %v5828
    %v5830 = vpop.f32.mrf.mxu0
    %5831 = vdwg.mxu0
    %5832 = vmatpush.bf16.msra.mxu0 %v5726
    %5833 = vmatpush.bf16.msra.mxu0 %v5722
    %5834 = vmatpush.bf16.msra.mxu0 %v5718
    %5835 = vmatpush.bf16.msra.mxu0 %v5714
    %5836 = vmatpush.bf16.msra.mxu0 %v5710
    %5837 = vmatpush.bf16.msra.mxu0 %v5706
    %5838 = vmatpush.bf16.msra.mxu0 %v5702
    %5839 = vmatpush.bf16.msra.mxu0 %v5698
    %5840 = vmatmul.bf16.gmra.mxu0 %v5398
    %v5841 = vpop.f32.mrf.mxu0
    %v5842 = vadd.f32 %v5829, %v5841
    %v5843 = vpop.f32.mrf.mxu0
    %5844 = vdwg.mxu0
    %5845 = vmatpush.bf16.msra.mxu0 %v5695
    %5846 = vmatpush.bf16.msra.mxu0 %v5691
    %5847 = vmatpush.bf16.msra.mxu0 %v5687
    %5848 = vmatpush.bf16.msra.mxu0 %v5683
    %5849 = vmatpush.bf16.msra.mxu0 %v5679
    %5850 = vmatpush.bf16.msra.mxu0 %v5675
    %5851 = vmatpush.bf16.msra.mxu0 %v5671
    %5852 = vmatpush.bf16.msra.mxu0 %v5667
    %5853 = vmatmul.bf16.gmra.mxu0 %v5086
    %v5854 = vpop.f32.mrf.mxu0
    %v5855 = vadd.f32 %v5467, %v5854
    %v5856 = vpop.f32.mrf.mxu0
    %5857 = vdwg.mxu0
    %5858 = vmatpush.bf16.msra.mxu0 %v5727
    %5859 = vmatpush.bf16.msra.mxu0 %v5723
    %5860 = vmatpush.bf16.msra.mxu0 %v5719
    %5861 = vmatpush.bf16.msra.mxu0 %v5715
    %5862 = vmatpush.bf16.msra.mxu0 %v5711
    %5863 = vmatpush.bf16.msra.mxu0 %v5707
    %5864 = vmatpush.bf16.msra.mxu0 %v5703
    %5865 = vmatpush.bf16.msra.mxu0 %v5699
    %5866 = vmatmul.bf16.gmra.mxu0 %v5398
    %v5867 = vpop.f32.mrf.mxu0
    %v5868 = vadd.f32 %v5855, %v5867
    %v5869 = vpop.f32.mrf.mxu0
    %5870 = vdwg.mxu0
    %5871 = vmatpush.bf16.msra.mxu0 %v5696
    %5872 = vmatpush.bf16.msra.mxu0 %v5692
    %5873 = vmatpush.bf16.msra.mxu0 %v5688
    %5874 = vmatpush.bf16.msra.mxu0 %v5684
    %5875 = vmatpush.bf16.msra.mxu0 %v5680
    %5876 = vmatpush.bf16.msra.mxu0 %v5676
    %5877 = vmatpush.bf16.msra.mxu0 %v5672
    %5878 = vmatpush.bf16.msra.mxu0 %v5668
    %5879 = vmatmul.bf16.gmra.mxu0 %v5086
    %v5880 = vpop.f32.mrf.mxu0
    %v5881 = vadd.f32 %v5468, %v5880
    %v5882 = vpop.f32.mrf.mxu0
    %5883 = vdwg.mxu0
    %5884 = vmatpush.bf16.msra.mxu0 %v5728
    %5885 = vmatpush.bf16.msra.mxu0 %v5724
    %5886 = vmatpush.bf16.msra.mxu0 %v5720
    %5887 = vmatpush.bf16.msra.mxu0 %v5716
    %5888 = vmatpush.bf16.msra.mxu0 %v5712
    %5889 = vmatpush.bf16.msra.mxu0 %v5708
    %5890 = vmatpush.bf16.msra.mxu0 %v5704
    %5891 = vmatpush.bf16.msra.mxu0 %v5700
    %5892 = vmatmul.bf16.gmra.mxu0 %v5398
    %v5893 = vpop.f32.mrf.mxu0
    %v5894 = vadd.f32 %v5881, %v5893
    %v5895 = vpop.f32.mrf.mxu0
    %5896 = vdwg.mxu0
    %v5897 = vxor.u32 %v5816, 2147483648
    %v5898 = vxor.u32 %v5842, 2147483648
    %v5899 = vxor.u32 %v5868, 2147483648
    %v5900 = vmul.f32 %v5897, 1.442695
    %v5901 = vpow.pop %v5900
    %v5902 = vmul.f32 %v5898, 1.442695
    %v5903 = vpow.pop %v5902
    %v5904 = vmul.f32 %v5899, 1.442695
    %v5905 = vpow.pop %v5904
    %v5906 = vadd.f32 %v5901, 1.0
    %v5907 = vadd.f32 %v5903, 1.0
    %v5908 = vadd.f32 %v5905, 1.0
    %v5909 = vrcp.pop %v5906
    %v5910 = vmul.f32 %v5906, %v5909
    %v5911 = vsub.f32 1.0, %v5910
    %v5912 = vmul.f32 %v5909, %v5911
    %v5913 = vadd.f32 %v5909, %v5912
    %vm5914 = vweird.f32 %v5906
    %vm5915 = vweird.f32 %v5909
    %vm5916 = vmor %vm5914, %vm5915
    %v5917 = vsel %vm5916, %v5909, %v5913
    %v5918 = vand.u32 2147483647, %v5906
    %vm5919 = vcmp.eq.f32.partialorder %v5918, 8.507059e+37
    %v5920 = vand.u32 %v5906, 2147483648
    %v5921 = vor.u32 1.1754944e-38, %v5920
    %v5922 = vsel %vm5919, %v5921, %v5917
    %v5923 = vmul.f32 1.0, %v5922
    %v5924 = vrcp.pop %v5907
    %v5925 = vmul.f32 %v5907, %v5924
    %v5926 = vsub.f32 1.0, %v5925
    %v5927 = vmul.f32 %v5924, %v5926
    %v5928 = vadd.f32 %v5924, %v5927
    %vm5929 = vweird.f32 %v5907
    %vm5930 = vweird.f32 %v5924
    %vm5931 = vmor %vm5929, %vm5930
    %v5932 = vsel %vm5931, %v5924, %v5928
    %v5933 = vand.u32 2147483647, %v5907
    %vm5934 = vcmp.eq.f32.partialorder %v5933, 8.507059e+37
    %v5935 = vand.u32 %v5907, 2147483648
    %v5936 = vor.u32 1.1754944e-38, %v5935
    %v5937 = vsel %vm5934, %v5936, %v5932
    %v5938 = vmul.f32 1.0, %v5937
    %v5939 = vrcp.pop %v5908
    %v5940 = vmul.f32 %v5908, %v5939
    %v5941 = vsub.f32 1.0, %v5940
    %v5942 = vmul.f32 %v5939, %v5941
    %v5943 = vadd.f32 %v5939, %v5942
    %vm5944 = vweird.f32 %v5908
    %vm5945 = vweird.f32 %v5939
    %vm5946 = vmor %vm5944, %vm5945
    %v5947 = vsel %vm5946, %v5939, %v5943
    %v5948 = vand.u32 2147483647, %v5908
    %vm5949 = vcmp.eq.f32.partialorder %v5948, 8.507059e+37
    %v5950 = vand.u32 %v5908, 2147483648
    %v5951 = vor.u32 1.1754944e-38, %v5950
    %v5952 = vsel %vm5949, %v5951, %v5947
    %v5953 = vmul.f32 1.0, %v5952
    %v5954 = vtanh.pop %v5894
    %v5955 = vmul.f32 %v5938, %v5077
    %v5956 = vmul.f32 %v5923, %v5954
    %v5957 = vadd.f32 %v5955, %v5956
    %v5958 = vtanh.pop %v5957
    %v5959 = vmul.f32 %v5953, %v5958
    %s5960 = scalar_lea.vmem %s7, 40
    %5961 = vst [vmem:[%s5960] sm:$0xff] %v5959
    %v5962 = vld [vmem:[#allocation2 + $0xe0] sm:$0xff]
    %v5963 = vld [vmem:[#allocation2 + $0xe8] sm:$0xff]
    %v5964 = vld [vmem:[#allocation2 + $0xf0] sm:$0xff]
    %v5965 = vld [vmem:[#allocation2 + $0xf8] sm:$0xff]
    %v5966 = vpack.c.bf16 %v5397, %v5397
    %v5967 = vld [vmem:[#allocation6] sm:$0xff]
    %v5968 = vld [vmem:[#allocation6 + $0x8] sm:$0xff]
    %v5969 = vld [vmem:[#allocation6 + $0x10] sm:$0xff]
    %v5970 = vld [vmem:[#allocation6 + $0x18] sm:$0xff]
    %v5971 = vld [vmem:[#allocation6 + $0x20] sm:$0xff]
    %v5972 = vld [vmem:[#allocation6 + $0x28] sm:$0xff]
    %v5973 = vld [vmem:[#allocation6 + $0x30] sm:$0xff]
    %v5974 = vld [vmem:[#allocation6 + $0x38] sm:$0xff]
    %v5975 = vld [vmem:[#allocation6 + $0x40] sm:$0xff]
    %v5976 = vld [vmem:[#allocation6 + $0x48] sm:$0xff]
    %v5977 = vld [vmem:[#allocation6 + $0x50] sm:$0xff]
    %v5978 = vld [vmem:[#allocation6 + $0x58] sm:$0xff]
    %v5979 = vld [vmem:[#allocation6 + $0x60] sm:$0xff]
    %v5980 = vld [vmem:[#allocation6 + $0x68] sm:$0xff]
    %v5981 = vld [vmem:[#allocation6 + $0x70] sm:$0xff]
    %v5982 = vld [vmem:[#allocation6 + $0x78] sm:$0xff]
    %v5983 = vld [vmem:[#allocation6 + $0x80] sm:$0xff]
    %v5984 = vld [vmem:[#allocation6 + $0x88] sm:$0xff]
    %v5985 = vld [vmem:[#allocation6 + $0x90] sm:$0xff]
    %v5986 = vld [vmem:[#allocation6 + $0x98] sm:$0xff]
    %v5987 = vld [vmem:[#allocation6 + $0xa0] sm:$0xff]
    %v5988 = vld [vmem:[#allocation6 + $0xa8] sm:$0xff]
    %v5989 = vld [vmem:[#allocation6 + $0xb0] sm:$0xff]
    %v5990 = vld [vmem:[#allocation6 + $0xb8] sm:$0xff]
    %v5991 = vld [vmem:[#allocation6 + $0xc0] sm:$0xff]
    %v5992 = vld [vmem:[#allocation6 + $0xc8] sm:$0xff]
    %v5993 = vld [vmem:[#allocation6 + $0xd0] sm:$0xff]
    %v5994 = vld [vmem:[#allocation6 + $0xd8] sm:$0xff]
    %v5995 = vld [vmem:[#allocation6 + $0xe0] sm:$0xff]
    %v5996 = vld [vmem:[#allocation6 + $0xe8] sm:$0xff]
    %v5997 = vld [vmem:[#allocation6 + $0xf0] sm:$0xff]
    %v5998 = vld [vmem:[#allocation6 + $0xf8] sm:$0xff]
    %v6031 = vunpack.c.l.b16 %v5967
    %v6032 = vunpack.c.h.b16 %v5967
    %v6033 = vunpack.c.l.b16 %v5968
    %v6034 = vunpack.c.h.b16 %v5968
    %v6035 = vunpack.c.l.b16 %v5969
    %v6036 = vunpack.c.h.b16 %v5969
    %v6037 = vunpack.c.l.b16 %v5970
    %v6038 = vunpack.c.h.b16 %v5970
    %v6039 = vunpack.c.l.b16 %v5971
    %v6040 = vunpack.c.h.b16 %v5971
    %v6041 = vunpack.c.l.b16 %v5972
    %v6042 = vunpack.c.h.b16 %v5972
    %v6043 = vunpack.c.l.b16 %v5973
    %v6044 = vunpack.c.h.b16 %v5973
    %v6045 = vunpack.c.l.b16 %v5974
    %v6046 = vunpack.c.h.b16 %v5974
    %v6047 = vunpack.c.l.b16 %v5975
    %v6048 = vunpack.c.h.b16 %v5975
    %v6049 = vunpack.c.l.b16 %v5976
    %v6050 = vunpack.c.h.b16 %v5976
    %v6051 = vunpack.c.l.b16 %v5977
    %v6052 = vunpack.c.h.b16 %v5977
    %v6053 = vunpack.c.l.b16 %v5978
    %v6054 = vunpack.c.h.b16 %v5978
    %v6055 = vunpack.c.l.b16 %v5979
    %v6056 = vunpack.c.h.b16 %v5979
    %v6057 = vunpack.c.l.b16 %v5980
    %v6058 = vunpack.c.h.b16 %v5980
    %v6059 = vunpack.c.l.b16 %v5981
    %v6060 = vunpack.c.h.b16 %v5981
    %v6061 = vunpack.c.l.b16 %v5982
    %v6062 = vunpack.c.h.b16 %v5982
    %v6063 = vunpack.c.l.b16 %v5983
    %v6064 = vunpack.c.h.b16 %v5983
    %v6065 = vunpack.c.l.b16 %v5984
    %v6066 = vunpack.c.h.b16 %v5984
    %v6067 = vunpack.c.l.b16 %v5985
    %v6068 = vunpack.c.h.b16 %v5985
    %v6069 = vunpack.c.l.b16 %v5986
    %v6070 = vunpack.c.h.b16 %v5986
    %v6071 = vunpack.c.l.b16 %v5987
    %v6072 = vunpack.c.h.b16 %v5987
    %v6073 = vunpack.c.l.b16 %v5988
    %v6074 = vunpack.c.h.b16 %v5988
    %v6075 = vunpack.c.l.b16 %v5989
    %v6076 = vunpack.c.h.b16 %v5989
    %v6077 = vunpack.c.l.b16 %v5990
    %v6078 = vunpack.c.h.b16 %v5990
    %v6079 = vunpack.c.l.b16 %v5991
    %v6080 = vunpack.c.h.b16 %v5991
    %v6081 = vunpack.c.l.b16 %v5992
    %v6082 = vunpack.c.h.b16 %v5992
    %v6083 = vunpack.c.l.b16 %v5993
    %v6084 = vunpack.c.h.b16 %v5993
    %v6085 = vunpack.c.l.b16 %v5994
    %v6086 = vunpack.c.h.b16 %v5994
    %v6087 = vunpack.c.l.b16 %v5995
    %v6088 = vunpack.c.h.b16 %v5995
    %v6089 = vunpack.c.l.b16 %v5996
    %v6090 = vunpack.c.h.b16 %v5996
    %v6091 = vunpack.c.l.b16 %v5997
    %v6092 = vunpack.c.h.b16 %v5997
    %v6093 = vunpack.c.l.b16 %v5998
    %v6094 = vunpack.c.h.b16 %v5998
    %v6095 = vpack.c.b16 %v6035, %v6031
    %v6096 = vpack.c.b16 %v6036, %v6032
    %v6097 = vpack.c.b16 %v6037, %v6033
    %v6098 = vpack.c.b16 %v6038, %v6034
    %v6099 = vpack.c.b16 %v6043, %v6039
    %v6100 = vpack.c.b16 %v6044, %v6040
    %v6101 = vpack.c.b16 %v6045, %v6041
    %v6102 = vpack.c.b16 %v6046, %v6042
    %v6103 = vpack.c.b16 %v6051, %v6047
    %v6104 = vpack.c.b16 %v6052, %v6048
    %v6105 = vpack.c.b16 %v6053, %v6049
    %v6106 = vpack.c.b16 %v6054, %v6050
    %v6107 = vpack.c.b16 %v6059, %v6055
    %v6108 = vpack.c.b16 %v6060, %v6056
    %v6109 = vpack.c.b16 %v6061, %v6057
    %v6110 = vpack.c.b16 %v6062, %v6058
    %v6111 = vpack.c.b16 %v6067, %v6063
    %v6112 = vpack.c.b16 %v6068, %v6064
    %v6113 = vpack.c.b16 %v6069, %v6065
    %v6114 = vpack.c.b16 %v6070, %v6066
    %v6115 = vpack.c.b16 %v6075, %v6071
    %v6116 = vpack.c.b16 %v6076, %v6072
    %v6117 = vpack.c.b16 %v6077, %v6073
    %v6118 = vpack.c.b16 %v6078, %v6074
    %v6119 = vpack.c.b16 %v6083, %v6079
    %v6120 = vpack.c.b16 %v6084, %v6080
    %v6121 = vpack.c.b16 %v6085, %v6081
    %v6122 = vpack.c.b16 %v6086, %v6082
    %v6123 = vpack.c.b16 %v6091, %v6087
    %v6124 = vpack.c.b16 %v6092, %v6088
    %v6125 = vpack.c.b16 %v6093, %v6089
    %v6126 = vpack.c.b16 %v6094, %v6090
    %6159 = vmatpush.bf16.msra.mxu0 %v6123
    %6160 = vmatpush.bf16.msra.mxu0 %v6119
    %6161 = vmatpush.bf16.msra.mxu0 %v6115
    %6162 = vmatpush.bf16.msra.mxu0 %v6111
    %6163 = vmatpush.bf16.msra.mxu0 %v6107
    %6164 = vmatpush.bf16.msra.mxu0 %v6103
    %6165 = vmatpush.bf16.msra.mxu0 %v6099
    %6166 = vmatpush.bf16.msra.mxu0 %v6095
    %6167 = vmatmul.bf16.gmra.mxu0 %v5966
    %v6168 = vpop.f32.mrf.mxu0
    %v6169 = vadd.f32 0.0, %v6168
    %v6170 = vpop.f32.mrf.mxu0
    %6171 = vdwg.mxu0
    %6172 = vmatpush.bf16.msra.mxu0 %v6124
    %6173 = vmatpush.bf16.msra.mxu0 %v6120
    %6174 = vmatpush.bf16.msra.mxu0 %v6116
    %6175 = vmatpush.bf16.msra.mxu0 %v6112
    %6176 = vmatpush.bf16.msra.mxu0 %v6108
    %6177 = vmatpush.bf16.msra.mxu0 %v6104
    %6178 = vmatpush.bf16.msra.mxu0 %v6100
    %6179 = vmatpush.bf16.msra.mxu0 %v6096
    %6180 = vmatmul.bf16.gmra.mxu0 %v5966
    %v6181 = vpop.f32.mrf.mxu0
    %v6182 = vadd.f32 0.0, %v6181
    %v6183 = vpop.f32.mrf.mxu0
    %6184 = vdwg.mxu0
    %6185 = vmatpush.bf16.msra.mxu0 %v6125
    %6186 = vmatpush.bf16.msra.mxu0 %v6121
    %6187 = vmatpush.bf16.msra.mxu0 %v6117
    %6188 = vmatpush.bf16.msra.mxu0 %v6113
    %6189 = vmatpush.bf16.msra.mxu0 %v6109
    %6190 = vmatpush.bf16.msra.mxu0 %v6105
    %6191 = vmatpush.bf16.msra.mxu0 %v6101
    %6192 = vmatpush.bf16.msra.mxu0 %v6097
    %6193 = vmatmul.bf16.gmra.mxu0 %v5966
    %v6194 = vpop.f32.mrf.mxu0
    %v6195 = vadd.f32 0.0, %v6194
    %v6196 = vpop.f32.mrf.mxu0
    %6197 = vdwg.mxu0
    %6198 = vmatpush.bf16.msra.mxu0 %v6126
    %6199 = vmatpush.bf16.msra.mxu0 %v6122
    %6200 = vmatpush.bf16.msra.mxu0 %v6118
    %6201 = vmatpush.bf16.msra.mxu0 %v6114
    %6202 = vmatpush.bf16.msra.mxu0 %v6110
    %6203 = vmatpush.bf16.msra.mxu0 %v6106
    %6204 = vmatpush.bf16.msra.mxu0 %v6102
    %6205 = vmatpush.bf16.msra.mxu0 %v6098
    %6206 = vmatmul.bf16.gmra.mxu0 %v5966
    %v6207 = vpop.f32.mrf.mxu0
    %v6208 = vadd.f32 0.0, %v6207
    %v6209 = vpop.f32.mrf.mxu0
    %6210 = vdwg.mxu0
    %v6211 = vadd.f32 %v5962, %v6169
    %v6212 = vadd.f32 %v5963, %v6182
    %v6213 = vadd.f32 %v5964, %v6195
    %v6214 = vadd.f32 %v5965, %v6208
    %v6215 = vxor.u32 %v6211, 2147483648
    %v6216 = vxor.u32 %v6212, 2147483648
    %v6217 = vxor.u32 %v6213, 2147483648
    %v6218 = vmul.f32 %v6215, 1.442695
    %v6219 = vpow.pop %v6218
    %v6220 = vmul.f32 %v6216, 1.442695
    %v6221 = vpow.pop %v6220
    %v6222 = vmul.f32 %v6217, 1.442695
    %v6223 = vpow.pop %v6222
    %v6224 = vadd.f32 %v6219, 1.0
    %v6225 = vadd.f32 %v6221, 1.0
    %v6226 = vadd.f32 %v6223, 1.0
    %v6227 = vrcp.pop %v6224
    %v6228 = vmul.f32 %v6224, %v6227
    %v6229 = vsub.f32 1.0, %v6228
    %v6230 = vmul.f32 %v6227, %v6229
    %v6231 = vadd.f32 %v6227, %v6230
    %vm6232 = vweird.f32 %v6224
    %vm6233 = vweird.f32 %v6227
    %vm6234 = vmor %vm6232, %vm6233
    %v6235 = vsel %vm6234, %v6227, %v6231
    %v6236 = vand.u32 2147483647, %v6224
    %vm6237 = vcmp.eq.f32.partialorder %v6236, 8.507059e+37
    %v6238 = vand.u32 %v6224, 2147483648
    %v6239 = vor.u32 1.1754944e-38, %v6238
    %v6240 = vsel %vm6237, %v6239, %v6235
    %v6241 = vmul.f32 1.0, %v6240
    %v6242 = vrcp.pop %v6225
    %v6243 = vmul.f32 %v6225, %v6242
    %v6244 = vsub.f32 1.0, %v6243
    %v6245 = vmul.f32 %v6242, %v6244
    %v6246 = vadd.f32 %v6242, %v6245
    %vm6247 = vweird.f32 %v6225
    %vm6248 = vweird.f32 %v6242
    %vm6249 = vmor %vm6247, %vm6248
    %v6250 = vsel %vm6249, %v6242, %v6246
    %v6251 = vand.u32 2147483647, %v6225
    %vm6252 = vcmp.eq.f32.partialorder %v6251, 8.507059e+37
    %v6253 = vand.u32 %v6225, 2147483648
    %v6254 = vor.u32 1.1754944e-38, %v6253
    %v6255 = vsel %vm6252, %v6254, %v6250
    %v6256 = vmul.f32 1.0, %v6255
    %v6257 = vrcp.pop %v6226
    %v6258 = vmul.f32 %v6226, %v6257
    %v6259 = vsub.f32 1.0, %v6258
    %v6260 = vmul.f32 %v6257, %v6259
    %v6261 = vadd.f32 %v6257, %v6260
    %vm6262 = vweird.f32 %v6226
    %vm6263 = vweird.f32 %v6257
    %vm6264 = vmor %vm6262, %vm6263
    %v6265 = vsel %vm6264, %v6257, %v6261
    %v6266 = vand.u32 2147483647, %v6226
    %vm6267 = vcmp.eq.f32.partialorder %v6266, 8.507059e+37
    %v6268 = vand.u32 %v6226, 2147483648
    %v6269 = vor.u32 1.1754944e-38, %v6268
    %v6270 = vsel %vm6267, %v6269, %v6265
    %v6271 = vmul.f32 1.0, %v6270
    %v6272 = vtanh.pop %v6214
    %v6273 = vmul.f32 %v6256, %v5395
    %v6274 = vmul.f32 %v6241, %v6272
    %v6275 = vadd.f32 %v6273, %v6274
    %v6276 = vtanh.pop %v6275
    %v6277 = vmul.f32 %v6271, %v6276
    %v6278 = vpack.c.bf16 %v5959, %v5959
    %v6279 = vld [vmem:[#allocation8] sm:$0xff]
    %v6280 = vld [vmem:[#allocation8 + $0x8] sm:$0xff]
    %v6281 = vld [vmem:[#allocation8 + $0x10] sm:$0xff]
    %v6282 = vld [vmem:[#allocation8 + $0x18] sm:$0xff]
    %v6283 = vld [vmem:[#allocation8 + $0x20] sm:$0xff]
    %v6284 = vld [vmem:[#allocation8 + $0x28] sm:$0xff]
    %v6285 = vld [vmem:[#allocation8 + $0x30] sm:$0xff]
    %v6286 = vld [vmem:[#allocation8 + $0x38] sm:$0xff]
    %v6287 = vld [vmem:[#allocation8 + $0x40] sm:$0xff]
    %v6288 = vld [vmem:[#allocation8 + $0x48] sm:$0xff]
    %v6289 = vld [vmem:[#allocation8 + $0x50] sm:$0xff]
    %v6290 = vld [vmem:[#allocation8 + $0x58] sm:$0xff]
    %v6291 = vld [vmem:[#allocation8 + $0x60] sm:$0xff]
    %v6292 = vld [vmem:[#allocation8 + $0x68] sm:$0xff]
    %v6293 = vld [vmem:[#allocation8 + $0x70] sm:$0xff]
    %v6294 = vld [vmem:[#allocation8 + $0x78] sm:$0xff]
    %v6295 = vld [vmem:[#allocation8 + $0x80] sm:$0xff]
    %v6296 = vld [vmem:[#allocation8 + $0x88] sm:$0xff]
    %v6297 = vld [vmem:[#allocation8 + $0x90] sm:$0xff]
    %v6298 = vld [vmem:[#allocation8 + $0x98] sm:$0xff]
    %v6299 = vld [vmem:[#allocation8 + $0xa0] sm:$0xff]
    %v6300 = vld [vmem:[#allocation8 + $0xa8] sm:$0xff]
    %v6301 = vld [vmem:[#allocation8 + $0xb0] sm:$0xff]
    %v6302 = vld [vmem:[#allocation8 + $0xb8] sm:$0xff]
    %v6303 = vld [vmem:[#allocation8 + $0xc0] sm:$0xff]
    %v6304 = vld [vmem:[#allocation8 + $0xc8] sm:$0xff]
    %v6305 = vld [vmem:[#allocation8 + $0xd0] sm:$0xff]
    %v6306 = vld [vmem:[#allocation8 + $0xd8] sm:$0xff]
    %v6307 = vld [vmem:[#allocation8 + $0xe0] sm:$0xff]
    %v6308 = vld [vmem:[#allocation8 + $0xe8] sm:$0xff]
    %v6309 = vld [vmem:[#allocation8 + $0xf0] sm:$0xff]
    %v6310 = vld [vmem:[#allocation8 + $0xf8] sm:$0xff]
    %v6311 = vld [vmem:[#allocation8 + $0x100] sm:$0xff]
    %v6312 = vld [vmem:[#allocation8 + $0x108] sm:$0xff]
    %v6313 = vld [vmem:[#allocation8 + $0x110] sm:$0xff]
    %v6314 = vld [vmem:[#allocation8 + $0x118] sm:$0xff]
    %v6315 = vld [vmem:[#allocation8 + $0x120] sm:$0xff]
    %v6316 = vld [vmem:[#allocation8 + $0x128] sm:$0xff]
    %v6317 = vld [vmem:[#allocation8 + $0x130] sm:$0xff]
    %v6318 = vld [vmem:[#allocation8 + $0x138] sm:$0xff]
    %v6319 = vld [vmem:[#allocation8 + $0x140] sm:$0xff]
    %v6320 = vld [vmem:[#allocation8 + $0x148] sm:$0xff]
    %v6321 = vld [vmem:[#allocation8 + $0x150] sm:$0xff]
    %v6322 = vld [vmem:[#allocation8 + $0x158] sm:$0xff]
    %v6323 = vld [vmem:[#allocation8 + $0x160] sm:$0xff]
    %v6324 = vld [vmem:[#allocation8 + $0x168] sm:$0xff]
    %v6325 = vld [vmem:[#allocation8 + $0x170] sm:$0xff]
    %v6326 = vld [vmem:[#allocation8 + $0x178] sm:$0xff]
    %v6327 = vld [vmem:[#allocation8 + $0x180] sm:$0xff]
    %v6328 = vld [vmem:[#allocation8 + $0x188] sm:$0xff]
    %v6329 = vld [vmem:[#allocation8 + $0x190] sm:$0xff]
    %v6330 = vld [vmem:[#allocation8 + $0x198] sm:$0xff]
    %v6331 = vld [vmem:[#allocation8 + $0x1a0] sm:$0xff]
    %v6332 = vld [vmem:[#allocation8 + $0x1a8] sm:$0xff]
    %v6333 = vld [vmem:[#allocation8 + $0x1b0] sm:$0xff]
    %v6334 = vld [vmem:[#allocation8 + $0x1b8] sm:$0xff]
    %v6335 = vld [vmem:[#allocation8 + $0x1c0] sm:$0xff]
    %v6336 = vld [vmem:[#allocation8 + $0x1c8] sm:$0xff]
    %v6337 = vld [vmem:[#allocation8 + $0x1d0] sm:$0xff]
    %v6338 = vld [vmem:[#allocation8 + $0x1d8] sm:$0xff]
    %v6339 = vld [vmem:[#allocation8 + $0x1e0] sm:$0xff]
    %v6340 = vld [vmem:[#allocation8 + $0x1e8] sm:$0xff]
    %v6341 = vld [vmem:[#allocation8 + $0x1f0] sm:$0xff]
    %v6342 = vld [vmem:[#allocation8 + $0x1f8] sm:$0xff]
    %v6343 = vld [vmem:[%s6] sm:$0xf]
    %v6345 = vperm.slane %v6343, 0
    %v6346 = vperm.slane %v6343, 1
    %v6347 = vperm.slane %v6343, 2
    %v6348 = vperm.slane %v6343, 3
    %v6417 = vunpack.c.l.b16 %v6279
    %v6418 = vunpack.c.h.b16 %v6279
    %v6419 = vunpack.c.l.b16 %v6280
    %v6420 = vunpack.c.h.b16 %v6280
    %v6421 = vunpack.c.l.b16 %v6281
    %v6422 = vunpack.c.h.b16 %v6281
    %v6423 = vunpack.c.l.b16 %v6282
    %v6424 = vunpack.c.h.b16 %v6282
    %v6425 = vunpack.c.l.b16 %v6283
    %v6426 = vunpack.c.h.b16 %v6283
    %v6427 = vunpack.c.l.b16 %v6284
    %v6428 = vunpack.c.h.b16 %v6284
    %v6429 = vunpack.c.l.b16 %v6285
    %v6430 = vunpack.c.h.b16 %v6285
    %v6431 = vunpack.c.l.b16 %v6286
    %v6432 = vunpack.c.h.b16 %v6286
    %v6433 = vunpack.c.l.b16 %v6287
    %v6434 = vunpack.c.h.b16 %v6287
    %v6435 = vunpack.c.l.b16 %v6288
    %v6436 = vunpack.c.h.b16 %v6288
    %v6437 = vunpack.c.l.b16 %v6289
    %v6438 = vunpack.c.h.b16 %v6289
    %v6439 = vunpack.c.l.b16 %v6290
    %v6440 = vunpack.c.h.b16 %v6290
    %v6441 = vunpack.c.l.b16 %v6291
    %v6442 = vunpack.c.h.b16 %v6291
    %v6443 = vunpack.c.l.b16 %v6292
    %v6444 = vunpack.c.h.b16 %v6292
    %v6445 = vunpack.c.l.b16 %v6293
    %v6446 = vunpack.c.h.b16 %v6293
    %v6447 = vunpack.c.l.b16 %v6294
    %v6448 = vunpack.c.h.b16 %v6294
    %v6449 = vunpack.c.l.b16 %v6295
    %v6450 = vunpack.c.h.b16 %v6295
    %v6451 = vunpack.c.l.b16 %v6296
    %v6452 = vunpack.c.h.b16 %v6296
    %v6453 = vunpack.c.l.b16 %v6297
    %v6454 = vunpack.c.h.b16 %v6297
    %v6455 = vunpack.c.l.b16 %v6298
    %v6456 = vunpack.c.h.b16 %v6298
    %v6457 = vunpack.c.l.b16 %v6299
    %v6458 = vunpack.c.h.b16 %v6299
    %v6459 = vunpack.c.l.b16 %v6300
    %v6460 = vunpack.c.h.b16 %v6300
    %v6461 = vunpack.c.l.b16 %v6301
    %v6462 = vunpack.c.h.b16 %v6301
    %v6463 = vunpack.c.l.b16 %v6302
    %v6464 = vunpack.c.h.b16 %v6302
    %v6465 = vunpack.c.l.b16 %v6303
    %v6466 = vunpack.c.h.b16 %v6303
    %v6467 = vunpack.c.l.b16 %v6304
    %v6468 = vunpack.c.h.b16 %v6304
    %v6469 = vunpack.c.l.b16 %v6305
    %v6470 = vunpack.c.h.b16 %v6305
    %v6471 = vunpack.c.l.b16 %v6306
    %v6472 = vunpack.c.h.b16 %v6306
    %v6473 = vunpack.c.l.b16 %v6307
    %v6474 = vunpack.c.h.b16 %v6307
    %v6475 = vunpack.c.l.b16 %v6308
    %v6476 = vunpack.c.h.b16 %v6308
    %v6477 = vunpack.c.l.b16 %v6309
    %v6478 = vunpack.c.h.b16 %v6309
    %v6479 = vunpack.c.l.b16 %v6310
    %v6480 = vunpack.c.h.b16 %v6310
    %v6481 = vunpack.c.l.b16 %v6311
    %v6482 = vunpack.c.h.b16 %v6311
    %v6483 = vunpack.c.l.b16 %v6312
    %v6484 = vunpack.c.h.b16 %v6312
    %v6485 = vunpack.c.l.b16 %v6313
    %v6486 = vunpack.c.h.b16 %v6313
    %v6487 = vunpack.c.l.b16 %v6314
    %v6488 = vunpack.c.h.b16 %v6314
    %v6489 = vunpack.c.l.b16 %v6315
    %v6490 = vunpack.c.h.b16 %v6315
    %v6491 = vunpack.c.l.b16 %v6316
    %v6492 = vunpack.c.h.b16 %v6316
    %v6493 = vunpack.c.l.b16 %v6317
    %v6494 = vunpack.c.h.b16 %v6317
    %v6495 = vunpack.c.l.b16 %v6318
    %v6496 = vunpack.c.h.b16 %v6318
    %v6497 = vunpack.c.l.b16 %v6319
    %v6498 = vunpack.c.h.b16 %v6319
    %v6499 = vunpack.c.l.b16 %v6320
    %v6500 = vunpack.c.h.b16 %v6320
    %v6501 = vunpack.c.l.b16 %v6321
    %v6502 = vunpack.c.h.b16 %v6321
    %v6503 = vunpack.c.l.b16 %v6322
    %v6504 = vunpack.c.h.b16 %v6322
    %v6505 = vunpack.c.l.b16 %v6323
    %v6506 = vunpack.c.h.b16 %v6323
    %v6507 = vunpack.c.l.b16 %v6324
    %v6508 = vunpack.c.h.b16 %v6324
    %v6509 = vunpack.c.l.b16 %v6325
    %v6510 = vunpack.c.h.b16 %v6325
    %v6511 = vunpack.c.l.b16 %v6326
    %v6512 = vunpack.c.h.b16 %v6326
    %v6513 = vunpack.c.l.b16 %v6327
    %v6514 = vunpack.c.h.b16 %v6327
    %v6515 = vunpack.c.l.b16 %v6328
    %v6516 = vunpack.c.h.b16 %v6328
    %v6517 = vunpack.c.l.b16 %v6329
    %v6518 = vunpack.c.h.b16 %v6329
    %v6519 = vunpack.c.l.b16 %v6330
    %v6520 = vunpack.c.h.b16 %v6330
    %v6521 = vunpack.c.l.b16 %v6331
    %v6522 = vunpack.c.h.b16 %v6331
    %v6523 = vunpack.c.l.b16 %v6332
    %v6524 = vunpack.c.h.b16 %v6332
    %v6525 = vunpack.c.l.b16 %v6333
    %v6526 = vunpack.c.h.b16 %v6333
    %v6527 = vunpack.c.l.b16 %v6334
    %v6528 = vunpack.c.h.b16 %v6334
    %v6529 = vunpack.c.l.b16 %v6335
    %v6530 = vunpack.c.h.b16 %v6335
    %v6531 = vunpack.c.l.b16 %v6336
    %v6532 = vunpack.c.h.b16 %v6336
    %v6533 = vunpack.c.l.b16 %v6337
    %v6534 = vunpack.c.h.b16 %v6337
    %v6535 = vunpack.c.l.b16 %v6338
    %v6536 = vunpack.c.h.b16 %v6338
    %v6537 = vunpack.c.l.b16 %v6339
    %v6538 = vunpack.c.h.b16 %v6339
    %v6539 = vunpack.c.l.b16 %v6340
    %v6540 = vunpack.c.h.b16 %v6340
    %v6541 = vunpack.c.l.b16 %v6341
    %v6542 = vunpack.c.h.b16 %v6341
    %v6543 = vunpack.c.l.b16 %v6342
    %v6544 = vunpack.c.h.b16 %v6342
    %v6545 = vpack.c.b16 %v6421, %v6417
    %v6546 = vpack.c.b16 %v6422, %v6418
    %v6547 = vpack.c.b16 %v6423, %v6419
    %v6548 = vpack.c.b16 %v6424, %v6420
    %v6549 = vpack.c.b16 %v6429, %v6425
    %v6550 = vpack.c.b16 %v6430, %v6426
    %v6551 = vpack.c.b16 %v6431, %v6427
    %v6552 = vpack.c.b16 %v6432, %v6428
    %v6553 = vpack.c.b16 %v6437, %v6433
    %v6554 = vpack.c.b16 %v6438, %v6434
    %v6555 = vpack.c.b16 %v6439, %v6435
    %v6556 = vpack.c.b16 %v6440, %v6436
    %v6557 = vpack.c.b16 %v6445, %v6441
    %v6558 = vpack.c.b16 %v6446, %v6442
    %v6559 = vpack.c.b16 %v6447, %v6443
    %v6560 = vpack.c.b16 %v6448, %v6444
    %v6561 = vpack.c.b16 %v6453, %v6449
    %v6562 = vpack.c.b16 %v6454, %v6450
    %v6563 = vpack.c.b16 %v6455, %v6451
    %v6564 = vpack.c.b16 %v6456, %v6452
    %v6565 = vpack.c.b16 %v6461, %v6457
    %v6566 = vpack.c.b16 %v6462, %v6458
    %v6567 = vpack.c.b16 %v6463, %v6459
    %v6568 = vpack.c.b16 %v6464, %v6460
    %v6569 = vpack.c.b16 %v6469, %v6465
    %v6570 = vpack.c.b16 %v6470, %v6466
    %v6571 = vpack.c.b16 %v6471, %v6467
    %v6572 = vpack.c.b16 %v6472, %v6468
    %v6573 = vpack.c.b16 %v6477, %v6473
    %v6574 = vpack.c.b16 %v6478, %v6474
    %v6575 = vpack.c.b16 %v6479, %v6475
    %v6576 = vpack.c.b16 %v6480, %v6476
    %v6577 = vpack.c.b16 %v6485, %v6481
    %v6578 = vpack.c.b16 %v6486, %v6482
    %v6579 = vpack.c.b16 %v6487, %v6483
    %v6580 = vpack.c.b16 %v6488, %v6484
    %v6581 = vpack.c.b16 %v6493, %v6489
    %v6582 = vpack.c.b16 %v6494, %v6490
    %v6583 = vpack.c.b16 %v6495, %v6491
    %v6584 = vpack.c.b16 %v6496, %v6492
    %v6585 = vpack.c.b16 %v6501, %v6497
    %v6586 = vpack.c.b16 %v6502, %v6498
    %v6587 = vpack.c.b16 %v6503, %v6499
    %v6588 = vpack.c.b16 %v6504, %v6500
    %v6589 = vpack.c.b16 %v6509, %v6505
    %v6590 = vpack.c.b16 %v6510, %v6506
    %v6591 = vpack.c.b16 %v6511, %v6507
    %v6592 = vpack.c.b16 %v6512, %v6508
    %v6593 = vpack.c.b16 %v6517, %v6513
    %v6594 = vpack.c.b16 %v6518, %v6514
    %v6595 = vpack.c.b16 %v6519, %v6515
    %v6596 = vpack.c.b16 %v6520, %v6516
    %v6597 = vpack.c.b16 %v6525, %v6521
    %v6598 = vpack.c.b16 %v6526, %v6522
    %v6599 = vpack.c.b16 %v6527, %v6523
    %v6600 = vpack.c.b16 %v6528, %v6524
    %v6601 = vpack.c.b16 %v6533, %v6529
    %v6602 = vpack.c.b16 %v6534, %v6530
    %v6603 = vpack.c.b16 %v6535, %v6531
    %v6604 = vpack.c.b16 %v6536, %v6532
    %v6605 = vpack.c.b16 %v6541, %v6537
    %v6606 = vpack.c.b16 %v6542, %v6538
    %v6607 = vpack.c.b16 %v6543, %v6539
    %v6608 = vpack.c.b16 %v6544, %v6540
    %6673 = vmatpush.bf16.msra.mxu0 %v6573
    %6674 = vmatpush.bf16.msra.mxu0 %v6569
    %6675 = vmatpush.bf16.msra.mxu0 %v6565
    %6676 = vmatpush.bf16.msra.mxu0 %v6561
    %6677 = vmatpush.bf16.msra.mxu0 %v6557
    %6678 = vmatpush.bf16.msra.mxu0 %v6553
    %6679 = vmatpush.bf16.msra.mxu0 %v6549
    %6680 = vmatpush.bf16.msra.mxu0 %v6545
    %6681 = vmatmul.bf16.gmra.mxu0 %v5966
    %v6682 = vpop.f32.mrf.mxu0
    %v6683 = vadd.f32 %v6345, %v6682
    %v6684 = vpop.f32.mrf.mxu0
    %6685 = vdwg.mxu0
    %6686 = vmatpush.bf16.msra.mxu0 %v6605
    %6687 = vmatpush.bf16.msra.mxu0 %v6601
    %6688 = vmatpush.bf16.msra.mxu0 %v6597
    %6689 = vmatpush.bf16.msra.mxu0 %v6593
    %6690 = vmatpush.bf16.msra.mxu0 %v6589
    %6691 = vmatpush.bf16.msra.mxu0 %v6585
    %6692 = vmatpush.bf16.msra.mxu0 %v6581
    %6693 = vmatpush.bf16.msra.mxu0 %v6577
    %6694 = vmatmul.bf16.gmra.mxu0 %v6278
    %v6695 = vpop.f32.mrf.mxu0
    %v6696 = vadd.f32 %v6683, %v6695
    %v6697 = vpop.f32.mrf.mxu0
    %6698 = vdwg.mxu0
    %6699 = vmatpush.bf16.msra.mxu0 %v6574
    %6700 = vmatpush.bf16.msra.mxu0 %v6570
    %6701 = vmatpush.bf16.msra.mxu0 %v6566
    %6702 = vmatpush.bf16.msra.mxu0 %v6562
    %6703 = vmatpush.bf16.msra.mxu0 %v6558
    %6704 = vmatpush.bf16.msra.mxu0 %v6554
    %6705 = vmatpush.bf16.msra.mxu0 %v6550
    %6706 = vmatpush.bf16.msra.mxu0 %v6546
    %6707 = vmatmul.bf16.gmra.mxu0 %v5966
    %v6708 = vpop.f32.mrf.mxu0
    %v6709 = vadd.f32 %v6346, %v6708
    %v6710 = vpop.f32.mrf.mxu0
    %6711 = vdwg.mxu0
    %6712 = vmatpush.bf16.msra.mxu0 %v6606
    %6713 = vmatpush.bf16.msra.mxu0 %v6602
    %6714 = vmatpush.bf16.msra.mxu0 %v6598
    %6715 = vmatpush.bf16.msra.mxu0 %v6594
    %6716 = vmatpush.bf16.msra.mxu0 %v6590
    %6717 = vmatpush.bf16.msra.mxu0 %v6586
    %6718 = vmatpush.bf16.msra.mxu0 %v6582
    %6719 = vmatpush.bf16.msra.mxu0 %v6578
    %6720 = vmatmul.bf16.gmra.mxu0 %v6278
    %v6721 = vpop.f32.mrf.mxu0
    %v6722 = vadd.f32 %v6709, %v6721
    %v6723 = vpop.f32.mrf.mxu0
    %6724 = vdwg.mxu0
    %6725 = vmatpush.bf16.msra.mxu0 %v6575
    %6726 = vmatpush.bf16.msra.mxu0 %v6571
    %6727 = vmatpush.bf16.msra.mxu0 %v6567
    %6728 = vmatpush.bf16.msra.mxu0 %v6563
    %6729 = vmatpush.bf16.msra.mxu0 %v6559
    %6730 = vmatpush.bf16.msra.mxu0 %v6555
    %6731 = vmatpush.bf16.msra.mxu0 %v6551
    %6732 = vmatpush.bf16.msra.mxu0 %v6547
    %6733 = vmatmul.bf16.gmra.mxu0 %v5966
    %v6734 = vpop.f32.mrf.mxu0
    %v6735 = vadd.f32 %v6347, %v6734
    %v6736 = vpop.f32.mrf.mxu0
    %6737 = vdwg.mxu0
    %6738 = vmatpush.bf16.msra.mxu0 %v6607
    %6739 = vmatpush.bf16.msra.mxu0 %v6603
    %6740 = vmatpush.bf16.msra.mxu0 %v6599
    %6741 = vmatpush.bf16.msra.mxu0 %v6595
    %6742 = vmatpush.bf16.msra.mxu0 %v6591
    %6743 = vmatpush.bf16.msra.mxu0 %v6587
    %6744 = vmatpush.bf16.msra.mxu0 %v6583
    %6745 = vmatpush.bf16.msra.mxu0 %v6579
    %6746 = vmatmul.bf16.gmra.mxu0 %v6278
    %v6747 = vpop.f32.mrf.mxu0
    %v6748 = vadd.f32 %v6735, %v6747
    %v6749 = vpop.f32.mrf.mxu0
    %6750 = vdwg.mxu0
    %6751 = vmatpush.bf16.msra.mxu0 %v6576
    %6752 = vmatpush.bf16.msra.mxu0 %v6572
    %6753 = vmatpush.bf16.msra.mxu0 %v6568
    %6754 = vmatpush.bf16.msra.mxu0 %v6564
    %6755 = vmatpush.bf16.msra.mxu0 %v6560
    %6756 = vmatpush.bf16.msra.mxu0 %v6556
    %6757 = vmatpush.bf16.msra.mxu0 %v6552
    %6758 = vmatpush.bf16.msra.mxu0 %v6548
    %6759 = vmatmul.bf16.gmra.mxu0 %v5966
    %v6760 = vpop.f32.mrf.mxu0
    %v6761 = vadd.f32 %v6348, %v6760
    %v6762 = vpop.f32.mrf.mxu0
    %6763 = vdwg.mxu0
    %6764 = vmatpush.bf16.msra.mxu0 %v6608
    %6765 = vmatpush.bf16.msra.mxu0 %v6604
    %6766 = vmatpush.bf16.msra.mxu0 %v6600
    %6767 = vmatpush.bf16.msra.mxu0 %v6596
    %6768 = vmatpush.bf16.msra.mxu0 %v6592
    %6769 = vmatpush.bf16.msra.mxu0 %v6588
    %6770 = vmatpush.bf16.msra.mxu0 %v6584
    %6771 = vmatpush.bf16.msra.mxu0 %v6580
    %6772 = vmatmul.bf16.gmra.mxu0 %v6278
    %v6773 = vpop.f32.mrf.mxu0
    %v6774 = vadd.f32 %v6761, %v6773
    %v6775 = vpop.f32.mrf.mxu0
    %6776 = vdwg.mxu0
    %v6777 = vxor.u32 %v6696, 2147483648
    %v6778 = vxor.u32 %v6722, 2147483648
    %v6779 = vxor.u32 %v6748, 2147483648
    %v6780 = vmul.f32 %v6777, 1.442695
    %v6781 = vpow.pop %v6780
    %v6782 = vmul.f32 %v6778, 1.442695
    %v6783 = vpow.pop %v6782
    %v6784 = vmul.f32 %v6779, 1.442695
    %v6785 = vpow.pop %v6784
    %v6786 = vadd.f32 %v6781, 1.0
    %v6787 = vadd.f32 %v6783, 1.0
    %v6788 = vadd.f32 %v6785, 1.0
    %v6789 = vrcp.pop %v6786
    %v6790 = vmul.f32 %v6786, %v6789
    %v6791 = vsub.f32 1.0, %v6790
    %v6792 = vmul.f32 %v6789, %v6791
    %v6793 = vadd.f32 %v6789, %v6792
    %vm6794 = vweird.f32 %v6786
    %vm6795 = vweird.f32 %v6789
    %vm6796 = vmor %vm6794, %vm6795
    %v6797 = vsel %vm6796, %v6789, %v6793
    %v6798 = vand.u32 2147483647, %v6786
    %vm6799 = vcmp.eq.f32.partialorder %v6798, 8.507059e+37
    %v6800 = vand.u32 %v6786, 2147483648
    %v6801 = vor.u32 1.1754944e-38, %v6800
    %v6802 = vsel %vm6799, %v6801, %v6797
    %v6803 = vmul.f32 1.0, %v6802
    %v6804 = vrcp.pop %v6787
    %v6805 = vmul.f32 %v6787, %v6804
    %v6806 = vsub.f32 1.0, %v6805
    %v6807 = vmul.f32 %v6804, %v6806
    %v6808 = vadd.f32 %v6804, %v6807
    %vm6809 = vweird.f32 %v6787
    %vm6810 = vweird.f32 %v6804
    %vm6811 = vmor %vm6809, %vm6810
    %v6812 = vsel %vm6811, %v6804, %v6808
    %v6813 = vand.u32 2147483647, %v6787
    %vm6814 = vcmp.eq.f32.partialorder %v6813, 8.507059e+37
    %v6815 = vand.u32 %v6787, 2147483648
    %v6816 = vor.u32 1.1754944e-38, %v6815
    %v6817 = vsel %vm6814, %v6816, %v6812
    %v6818 = vmul.f32 1.0, %v6817
    %v6819 = vrcp.pop %v6788
    %v6820 = vmul.f32 %v6788, %v6819
    %v6821 = vsub.f32 1.0, %v6820
    %v6822 = vmul.f32 %v6819, %v6821
    %v6823 = vadd.f32 %v6819, %v6822
    %vm6824 = vweird.f32 %v6788
    %vm6825 = vweird.f32 %v6819
    %vm6826 = vmor %vm6824, %vm6825
    %v6827 = vsel %vm6826, %v6819, %v6823
    %v6828 = vand.u32 2147483647, %v6788
    %vm6829 = vcmp.eq.f32.partialorder %v6828, 8.507059e+37
    %v6830 = vand.u32 %v6788, 2147483648
    %v6831 = vor.u32 1.1754944e-38, %v6830
    %v6832 = vsel %vm6829, %v6831, %v6827
    %v6833 = vmul.f32 1.0, %v6832
    %v6834 = vtanh.pop %v6774
    %v6835 = vmul.f32 %v6818, %v5957
    %v6836 = vmul.f32 %v6803, %v6834
    %v6837 = vadd.f32 %v6835, %v6836
    %v6838 = vtanh.pop %v6837
    %v6839 = vmul.f32 %v6833, %v6838
    %s6840 = scalar_lea.vmem %s7, 48
    %6841 = vst [vmem:[%s6840] sm:$0xff] %v6839
    %v6842 = vpack.c.bf16 %v6277, %v6277
    %v6843 = vpack.c.bf16 %v6839, %v6839
    %v6844 = vld [vmem:[#allocation8] sm:$0xff]
    %v6845 = vld [vmem:[#allocation8 + $0x8] sm:$0xff]
    %v6846 = vld [vmem:[#allocation8 + $0x10] sm:$0xff]
    %v6847 = vld [vmem:[#allocation8 + $0x18] sm:$0xff]
    %v6848 = vld [vmem:[#allocation8 + $0x20] sm:$0xff]
    %v6849 = vld [vmem:[#allocation8 + $0x28] sm:$0xff]
    %v6850 = vld [vmem:[#allocation8 + $0x30] sm:$0xff]
    %v6851 = vld [vmem:[#allocation8 + $0x38] sm:$0xff]
    %v6852 = vld [vmem:[#allocation8 + $0x40] sm:$0xff]
    %v6853 = vld [vmem:[#allocation8 + $0x48] sm:$0xff]
    %v6854 = vld [vmem:[#allocation8 + $0x50] sm:$0xff]
    %v6855 = vld [vmem:[#allocation8 + $0x58] sm:$0xff]
    %v6856 = vld [vmem:[#allocation8 + $0x60] sm:$0xff]
    %v6857 = vld [vmem:[#allocation8 + $0x68] sm:$0xff]
    %v6858 = vld [vmem:[#allocation8 + $0x70] sm:$0xff]
    %v6859 = vld [vmem:[#allocation8 + $0x78] sm:$0xff]
    %v6860 = vld [vmem:[#allocation8 + $0x80] sm:$0xff]
    %v6861 = vld [vmem:[#allocation8 + $0x88] sm:$0xff]
    %v6862 = vld [vmem:[#allocation8 + $0x90] sm:$0xff]
    %v6863 = vld [vmem:[#allocation8 + $0x98] sm:$0xff]
    %v6864 = vld [vmem:[#allocation8 + $0xa0] sm:$0xff]
    %v6865 = vld [vmem:[#allocation8 + $0xa8] sm:$0xff]
    %v6866 = vld [vmem:[#allocation8 + $0xb0] sm:$0xff]
    %v6867 = vld [vmem:[#allocation8 + $0xb8] sm:$0xff]
    %v6868 = vld [vmem:[#allocation8 + $0xc0] sm:$0xff]
    %v6869 = vld [vmem:[#allocation8 + $0xc8] sm:$0xff]
    %v6870 = vld [vmem:[#allocation8 + $0xd0] sm:$0xff]
    %v6871 = vld [vmem:[#allocation8 + $0xd8] sm:$0xff]
    %v6872 = vld [vmem:[#allocation8 + $0xe0] sm:$0xff]
    %v6873 = vld [vmem:[#allocation8 + $0xe8] sm:$0xff]
    %v6874 = vld [vmem:[#allocation8 + $0xf0] sm:$0xff]
    %v6875 = vld [vmem:[#allocation8 + $0xf8] sm:$0xff]
    %v6876 = vld [vmem:[#allocation8 + $0x100] sm:$0xff]
    %v6877 = vld [vmem:[#allocation8 + $0x108] sm:$0xff]
    %v6878 = vld [vmem:[#allocation8 + $0x110] sm:$0xff]
    %v6879 = vld [vmem:[#allocation8 + $0x118] sm:$0xff]
    %v6880 = vld [vmem:[#allocation8 + $0x120] sm:$0xff]
    %v6881 = vld [vmem:[#allocation8 + $0x128] sm:$0xff]
    %v6882 = vld [vmem:[#allocation8 + $0x130] sm:$0xff]
    %v6883 = vld [vmem:[#allocation8 + $0x138] sm:$0xff]
    %v6884 = vld [vmem:[#allocation8 + $0x140] sm:$0xff]
    %v6885 = vld [vmem:[#allocation8 + $0x148] sm:$0xff]
    %v6886 = vld [vmem:[#allocation8 + $0x150] sm:$0xff]
    %v6887 = vld [vmem:[#allocation8 + $0x158] sm:$0xff]
    %v6888 = vld [vmem:[#allocation8 + $0x160] sm:$0xff]
    %v6889 = vld [vmem:[#allocation8 + $0x168] sm:$0xff]
    %v6890 = vld [vmem:[#allocation8 + $0x170] sm:$0xff]
    %v6891 = vld [vmem:[#allocation8 + $0x178] sm:$0xff]
    %v6892 = vld [vmem:[#allocation8 + $0x180] sm:$0xff]
    %v6893 = vld [vmem:[#allocation8 + $0x188] sm:$0xff]
    %v6894 = vld [vmem:[#allocation8 + $0x190] sm:$0xff]
    %v6895 = vld [vmem:[#allocation8 + $0x198] sm:$0xff]
    %v6896 = vld [vmem:[#allocation8 + $0x1a0] sm:$0xff]
    %v6897 = vld [vmem:[#allocation8 + $0x1a8] sm:$0xff]
    %v6898 = vld [vmem:[#allocation8 + $0x1b0] sm:$0xff]
    %v6899 = vld [vmem:[#allocation8 + $0x1b8] sm:$0xff]
    %v6900 = vld [vmem:[#allocation8 + $0x1c0] sm:$0xff]
    %v6901 = vld [vmem:[#allocation8 + $0x1c8] sm:$0xff]
    %v6902 = vld [vmem:[#allocation8 + $0x1d0] sm:$0xff]
    %v6903 = vld [vmem:[#allocation8 + $0x1d8] sm:$0xff]
    %v6904 = vld [vmem:[#allocation8 + $0x1e0] sm:$0xff]
    %v6905 = vld [vmem:[#allocation8 + $0x1e8] sm:$0xff]
    %v6906 = vld [vmem:[#allocation8 + $0x1f0] sm:$0xff]
    %v6907 = vld [vmem:[#allocation8 + $0x1f8] sm:$0xff]
    %v6908 = vld [vmem:[%s6] sm:$0xf]
    %v6910 = vperm.slane %v6908, 0
    %v6911 = vperm.slane %v6908, 1
    %v6912 = vperm.slane %v6908, 2
    %v6913 = vperm.slane %v6908, 3
    %v6982 = vunpack.c.l.b16 %v6844
    %v6983 = vunpack.c.h.b16 %v6844
    %v6984 = vunpack.c.l.b16 %v6845
    %v6985 = vunpack.c.h.b16 %v6845
    %v6986 = vunpack.c.l.b16 %v6846
    %v6987 = vunpack.c.h.b16 %v6846
    %v6988 = vunpack.c.l.b16 %v6847
    %v6989 = vunpack.c.h.b16 %v6847
    %v6990 = vunpack.c.l.b16 %v6848
    %v6991 = vunpack.c.h.b16 %v6848
    %v6992 = vunpack.c.l.b16 %v6849
    %v6993 = vunpack.c.h.b16 %v6849
    %v6994 = vunpack.c.l.b16 %v6850
    %v6995 = vunpack.c.h.b16 %v6850
    %v6996 = vunpack.c.l.b16 %v6851
    %v6997 = vunpack.c.h.b16 %v6851
    %v6998 = vunpack.c.l.b16 %v6852
    %v6999 = vunpack.c.h.b16 %v6852
    %v7000 = vunpack.c.l.b16 %v6853
    %v7001 = vunpack.c.h.b16 %v6853
    %v7002 = vunpack.c.l.b16 %v6854
    %v7003 = vunpack.c.h.b16 %v6854
    %v7004 = vunpack.c.l.b16 %v6855
    %v7005 = vunpack.c.h.b16 %v6855
    %v7006 = vunpack.c.l.b16 %v6856
    %v7007 = vunpack.c.h.b16 %v6856
    %v7008 = vunpack.c.l.b16 %v6857
    %v7009 = vunpack.c.h.b16 %v6857
    %v7010 = vunpack.c.l.b16 %v6858
    %v7011 = vunpack.c.h.b16 %v6858
    %v7012 = vunpack.c.l.b16 %v6859
    %v7013 = vunpack.c.h.b16 %v6859
    %v7014 = vunpack.c.l.b16 %v6860
    %v7015 = vunpack.c.h.b16 %v6860
    %v7016 = vunpack.c.l.b16 %v6861
    %v7017 = vunpack.c.h.b16 %v6861
    %v7018 = vunpack.c.l.b16 %v6862
    %v7019 = vunpack.c.h.b16 %v6862
    %v7020 = vunpack.c.l.b16 %v6863
    %v7021 = vunpack.c.h.b16 %v6863
    %v7022 = vunpack.c.l.b16 %v6864
    %v7023 = vunpack.c.h.b16 %v6864
    %v7024 = vunpack.c.l.b16 %v6865
    %v7025 = vunpack.c.h.b16 %v6865
    %v7026 = vunpack.c.l.b16 %v6866
    %v7027 = vunpack.c.h.b16 %v6866
    %v7028 = vunpack.c.l.b16 %v6867
    %v7029 = vunpack.c.h.b16 %v6867
    %v7030 = vunpack.c.l.b16 %v6868
    %v7031 = vunpack.c.h.b16 %v6868
    %v7032 = vunpack.c.l.b16 %v6869
    %v7033 = vunpack.c.h.b16 %v6869
    %v7034 = vunpack.c.l.b16 %v6870
    %v7035 = vunpack.c.h.b16 %v6870
    %v7036 = vunpack.c.l.b16 %v6871
    %v7037 = vunpack.c.h.b16 %v6871
    %v7038 = vunpack.c.l.b16 %v6872
    %v7039 = vunpack.c.h.b16 %v6872
    %v7040 = vunpack.c.l.b16 %v6873
    %v7041 = vunpack.c.h.b16 %v6873
    %v7042 = vunpack.c.l.b16 %v6874
    %v7043 = vunpack.c.h.b16 %v6874
    %v7044 = vunpack.c.l.b16 %v6875
    %v7045 = vunpack.c.h.b16 %v6875
    %v7046 = vunpack.c.l.b16 %v6876
    %v7047 = vunpack.c.h.b16 %v6876
    %v7048 = vunpack.c.l.b16 %v6877
    %v7049 = vunpack.c.h.b16 %v6877
    %v7050 = vunpack.c.l.b16 %v6878
    %v7051 = vunpack.c.h.b16 %v6878
    %v7052 = vunpack.c.l.b16 %v6879
    %v7053 = vunpack.c.h.b16 %v6879
    %v7054 = vunpack.c.l.b16 %v6880
    %v7055 = vunpack.c.h.b16 %v6880
    %v7056 = vunpack.c.l.b16 %v6881
    %v7057 = vunpack.c.h.b16 %v6881
    %v7058 = vunpack.c.l.b16 %v6882
    %v7059 = vunpack.c.h.b16 %v6882
    %v7060 = vunpack.c.l.b16 %v6883
    %v7061 = vunpack.c.h.b16 %v6883
    %v7062 = vunpack.c.l.b16 %v6884
    %v7063 = vunpack.c.h.b16 %v6884
    %v7064 = vunpack.c.l.b16 %v6885
    %v7065 = vunpack.c.h.b16 %v6885
    %v7066 = vunpack.c.l.b16 %v6886
    %v7067 = vunpack.c.h.b16 %v6886
    %v7068 = vunpack.c.l.b16 %v6887
    %v7069 = vunpack.c.h.b16 %v6887
    %v7070 = vunpack.c.l.b16 %v6888
    %v7071 = vunpack.c.h.b16 %v6888
    %v7072 = vunpack.c.l.b16 %v6889
    %v7073 = vunpack.c.h.b16 %v6889
    %v7074 = vunpack.c.l.b16 %v6890
    %v7075 = vunpack.c.h.b16 %v6890
    %v7076 = vunpack.c.l.b16 %v6891
    %v7077 = vunpack.c.h.b16 %v6891
    %v7078 = vunpack.c.l.b16 %v6892
    %v7079 = vunpack.c.h.b16 %v6892
    %v7080 = vunpack.c.l.b16 %v6893
    %v7081 = vunpack.c.h.b16 %v6893
    %v7082 = vunpack.c.l.b16 %v6894
    %v7083 = vunpack.c.h.b16 %v6894
    %v7084 = vunpack.c.l.b16 %v6895
    %v7085 = vunpack.c.h.b16 %v6895
    %v7086 = vunpack.c.l.b16 %v6896
    %v7087 = vunpack.c.h.b16 %v6896
    %v7088 = vunpack.c.l.b16 %v6897
    %v7089 = vunpack.c.h.b16 %v6897
    %v7090 = vunpack.c.l.b16 %v6898
    %v7091 = vunpack.c.h.b16 %v6898
    %v7092 = vunpack.c.l.b16 %v6899
    %v7093 = vunpack.c.h.b16 %v6899
    %v7094 = vunpack.c.l.b16 %v6900
    %v7095 = vunpack.c.h.b16 %v6900
    %v7096 = vunpack.c.l.b16 %v6901
    %v7097 = vunpack.c.h.b16 %v6901
    %v7098 = vunpack.c.l.b16 %v6902
    %v7099 = vunpack.c.h.b16 %v6902
    %v7100 = vunpack.c.l.b16 %v6903
    %v7101 = vunpack.c.h.b16 %v6903
    %v7102 = vunpack.c.l.b16 %v6904
    %v7103 = vunpack.c.h.b16 %v6904
    %v7104 = vunpack.c.l.b16 %v6905
    %v7105 = vunpack.c.h.b16 %v6905
    %v7106 = vunpack.c.l.b16 %v6906
    %v7107 = vunpack.c.h.b16 %v6906
    %v7108 = vunpack.c.l.b16 %v6907
    %v7109 = vunpack.c.h.b16 %v6907
    %v7110 = vpack.c.b16 %v6986, %v6982
    %v7111 = vpack.c.b16 %v6987, %v6983
    %v7112 = vpack.c.b16 %v6988, %v6984
    %v7113 = vpack.c.b16 %v6989, %v6985
    %v7114 = vpack.c.b16 %v6994, %v6990
    %v7115 = vpack.c.b16 %v6995, %v6991
    %v7116 = vpack.c.b16 %v6996, %v6992
    %v7117 = vpack.c.b16 %v6997, %v6993
    %v7118 = vpack.c.b16 %v7002, %v6998
    %v7119 = vpack.c.b16 %v7003, %v6999
    %v7120 = vpack.c.b16 %v7004, %v7000
    %v7121 = vpack.c.b16 %v7005, %v7001
    %v7122 = vpack.c.b16 %v7010, %v7006
    %v7123 = vpack.c.b16 %v7011, %v7007
    %v7124 = vpack.c.b16 %v7012, %v7008
    %v7125 = vpack.c.b16 %v7013, %v7009
    %v7126 = vpack.c.b16 %v7018, %v7014
    %v7127 = vpack.c.b16 %v7019, %v7015
    %v7128 = vpack.c.b16 %v7020, %v7016
    %v7129 = vpack.c.b16 %v7021, %v7017
    %v7130 = vpack.c.b16 %v7026, %v7022
    %v7131 = vpack.c.b16 %v7027, %v7023
    %v7132 = vpack.c.b16 %v7028, %v7024
    %v7133 = vpack.c.b16 %v7029, %v7025
    %v7134 = vpack.c.b16 %v7034, %v7030
    %v7135 = vpack.c.b16 %v7035, %v7031
    %v7136 = vpack.c.b16 %v7036, %v7032
    %v7137 = vpack.c.b16 %v7037, %v7033
    %v7138 = vpack.c.b16 %v7042, %v7038
    %v7139 = vpack.c.b16 %v7043, %v7039
    %v7140 = vpack.c.b16 %v7044, %v7040
    %v7141 = vpack.c.b16 %v7045, %v7041
    %v7142 = vpack.c.b16 %v7050, %v7046
    %v7143 = vpack.c.b16 %v7051, %v7047
    %v7144 = vpack.c.b16 %v7052, %v7048
    %v7145 = vpack.c.b16 %v7053, %v7049
    %v7146 = vpack.c.b16 %v7058, %v7054
    %v7147 = vpack.c.b16 %v7059, %v7055
    %v7148 = vpack.c.b16 %v7060, %v7056
    %v7149 = vpack.c.b16 %v7061, %v7057
    %v7150 = vpack.c.b16 %v7066, %v7062
    %v7151 = vpack.c.b16 %v7067, %v7063
    %v7152 = vpack.c.b16 %v7068, %v7064
    %v7153 = vpack.c.b16 %v7069, %v7065
    %v7154 = vpack.c.b16 %v7074, %v7070
    %v7155 = vpack.c.b16 %v7075, %v7071
    %v7156 = vpack.c.b16 %v7076, %v7072
    %v7157 = vpack.c.b16 %v7077, %v7073
    %v7158 = vpack.c.b16 %v7082, %v7078
    %v7159 = vpack.c.b16 %v7083, %v7079
    %v7160 = vpack.c.b16 %v7084, %v7080
    %v7161 = vpack.c.b16 %v7085, %v7081
    %v7162 = vpack.c.b16 %v7090, %v7086
    %v7163 = vpack.c.b16 %v7091, %v7087
    %v7164 = vpack.c.b16 %v7092, %v7088
    %v7165 = vpack.c.b16 %v7093, %v7089
    %v7166 = vpack.c.b16 %v7098, %v7094
    %v7167 = vpack.c.b16 %v7099, %v7095
    %v7168 = vpack.c.b16 %v7100, %v7096
    %v7169 = vpack.c.b16 %v7101, %v7097
    %v7170 = vpack.c.b16 %v7106, %v7102
    %v7171 = vpack.c.b16 %v7107, %v7103
    %v7172 = vpack.c.b16 %v7108, %v7104
    %v7173 = vpack.c.b16 %v7109, %v7105
    %7238 = vmatpush.bf16.msra.mxu0 %v7138
    %7239 = vmatpush.bf16.msra.mxu0 %v7134
    %7240 = vmatpush.bf16.msra.mxu0 %v7130
    %7241 = vmatpush.bf16.msra.mxu0 %v7126
    %7242 = vmatpush.bf16.msra.mxu0 %v7122
    %7243 = vmatpush.bf16.msra.mxu0 %v7118
    %7244 = vmatpush.bf16.msra.mxu0 %v7114
    %7245 = vmatpush.bf16.msra.mxu0 %v7110
    %7246 = vmatmul.bf16.gmra.mxu0 %v6842
    %v7247 = vpop.f32.mrf.mxu0
    %v7248 = vadd.f32 %v6910, %v7247
    %v7249 = vpop.f32.mrf.mxu0
    %7250 = vdwg.mxu0
    %7251 = vmatpush.bf16.msra.mxu0 %v7170
    %7252 = vmatpush.bf16.msra.mxu0 %v7166
    %7253 = vmatpush.bf16.msra.mxu0 %v7162
    %7254 = vmatpush.bf16.msra.mxu0 %v7158
    %7255 = vmatpush.bf16.msra.mxu0 %v7154
    %7256 = vmatpush.bf16.msra.mxu0 %v7150
    %7257 = vmatpush.bf16.msra.mxu0 %v7146
    %7258 = vmatpush.bf16.msra.mxu0 %v7142
    %7259 = vmatmul.bf16.gmra.mxu0 %v6843
    %v7260 = vpop.f32.mrf.mxu0
    %v7261 = vadd.f32 %v7248, %v7260
    %v7262 = vpop.f32.mrf.mxu0
    %7263 = vdwg.mxu0
    %7264 = vmatpush.bf16.msra.mxu0 %v7139
    %7265 = vmatpush.bf16.msra.mxu0 %v7135
    %7266 = vmatpush.bf16.msra.mxu0 %v7131
    %7267 = vmatpush.bf16.msra.mxu0 %v7127
    %7268 = vmatpush.bf16.msra.mxu0 %v7123
    %7269 = vmatpush.bf16.msra.mxu0 %v7119
    %7270 = vmatpush.bf16.msra.mxu0 %v7115
    %7271 = vmatpush.bf16.msra.mxu0 %v7111
    %7272 = vmatmul.bf16.gmra.mxu0 %v6842
    %v7273 = vpop.f32.mrf.mxu0
    %v7274 = vadd.f32 %v6911, %v7273
    %v7275 = vpop.f32.mrf.mxu0
    %7276 = vdwg.mxu0
    %7277 = vmatpush.bf16.msra.mxu0 %v7171
    %7278 = vmatpush.bf16.msra.mxu0 %v7167
    %7279 = vmatpush.bf16.msra.mxu0 %v7163
    %7280 = vmatpush.bf16.msra.mxu0 %v7159
    %7281 = vmatpush.bf16.msra.mxu0 %v7155
    %7282 = vmatpush.bf16.msra.mxu0 %v7151
    %7283 = vmatpush.bf16.msra.mxu0 %v7147
    %7284 = vmatpush.bf16.msra.mxu0 %v7143
    %7285 = vmatmul.bf16.gmra.mxu0 %v6843
    %v7286 = vpop.f32.mrf.mxu0
    %v7287 = vadd.f32 %v7274, %v7286
    %v7288 = vpop.f32.mrf.mxu0
    %7289 = vdwg.mxu0
    %7290 = vmatpush.bf16.msra.mxu0 %v7140
    %7291 = vmatpush.bf16.msra.mxu0 %v7136
    %7292 = vmatpush.bf16.msra.mxu0 %v7132
    %7293 = vmatpush.bf16.msra.mxu0 %v7128
    %7294 = vmatpush.bf16.msra.mxu0 %v7124
    %7295 = vmatpush.bf16.msra.mxu0 %v7120
    %7296 = vmatpush.bf16.msra.mxu0 %v7116
    %7297 = vmatpush.bf16.msra.mxu0 %v7112
    %7298 = vmatmul.bf16.gmra.mxu0 %v6842
    %v7299 = vpop.f32.mrf.mxu0
    %v7300 = vadd.f32 %v6912, %v7299
    %v7301 = vpop.f32.mrf.mxu0
    %7302 = vdwg.mxu0
    %7303 = vmatpush.bf16.msra.mxu0 %v7172
    %7304 = vmatpush.bf16.msra.mxu0 %v7168
    %7305 = vmatpush.bf16.msra.mxu0 %v7164
    %7306 = vmatpush.bf16.msra.mxu0 %v7160
    %7307 = vmatpush.bf16.msra.mxu0 %v7156
    %7308 = vmatpush.bf16.msra.mxu0 %v7152
    %7309 = vmatpush.bf16.msra.mxu0 %v7148
    %7310 = vmatpush.bf16.msra.mxu0 %v7144
    %7311 = vmatmul.bf16.gmra.mxu0 %v6843
    %v7312 = vpop.f32.mrf.mxu0
    %v7313 = vadd.f32 %v7300, %v7312
    %v7314 = vpop.f32.mrf.mxu0
    %7315 = vdwg.mxu0
    %7316 = vmatpush.bf16.msra.mxu0 %v7141
    %7317 = vmatpush.bf16.msra.mxu0 %v7137
    %7318 = vmatpush.bf16.msra.mxu0 %v7133
    %7319 = vmatpush.bf16.msra.mxu0 %v7129
    %7320 = vmatpush.bf16.msra.mxu0 %v7125
    %7321 = vmatpush.bf16.msra.mxu0 %v7121
    %7322 = vmatpush.bf16.msra.mxu0 %v7117
    %7323 = vmatpush.bf16.msra.mxu0 %v7113
    %7324 = vmatmul.bf16.gmra.mxu0 %v6842
    %v7325 = vpop.f32.mrf.mxu0
    %v7326 = vadd.f32 %v6913, %v7325
    %v7327 = vpop.f32.mrf.mxu0
    %7328 = vdwg.mxu0
    %7329 = vmatpush.bf16.msra.mxu0 %v7173
    %7330 = vmatpush.bf16.msra.mxu0 %v7169
    %7331 = vmatpush.bf16.msra.mxu0 %v7165
    %7332 = vmatpush.bf16.msra.mxu0 %v7161
    %7333 = vmatpush.bf16.msra.mxu0 %v7157
    %7334 = vmatpush.bf16.msra.mxu0 %v7153
    %7335 = vmatpush.bf16.msra.mxu0 %v7149
    %7336 = vmatpush.bf16.msra.mxu0 %v7145
    %7337 = vmatmul.bf16.gmra.mxu0 %v6843
    %v7338 = vpop.f32.mrf.mxu0
    %v7339 = vadd.f32 %v7326, %v7338
    %v7340 = vpop.f32.mrf.mxu0
    %7341 = vdwg.mxu0
    %v7342 = vxor.u32 %v7261, 2147483648
    %v7343 = vxor.u32 %v7287, 2147483648
    %v7344 = vxor.u32 %v7313, 2147483648
    %v7345 = vmul.f32 %v7342, 1.442695
    %v7346 = vpow.pop %v7345
    %v7347 = vmul.f32 %v7343, 1.442695
    %v7348 = vpow.pop %v7347
    %v7349 = vmul.f32 %v7344, 1.442695
    %v7350 = vpow.pop %v7349
    %v7351 = vadd.f32 %v7346, 1.0
    %v7352 = vadd.f32 %v7348, 1.0
    %v7353 = vadd.f32 %v7350, 1.0
    %v7354 = vrcp.pop %v7351
    %v7355 = vmul.f32 %v7351, %v7354
    %v7356 = vsub.f32 1.0, %v7355
    %v7357 = vmul.f32 %v7354, %v7356
    %v7358 = vadd.f32 %v7354, %v7357
    %vm7359 = vweird.f32 %v7351
    %vm7360 = vweird.f32 %v7354
    %vm7361 = vmor %vm7359, %vm7360
    %v7362 = vsel %vm7361, %v7354, %v7358
    %v7363 = vand.u32 2147483647, %v7351
    %vm7364 = vcmp.eq.f32.partialorder %v7363, 8.507059e+37
    %v7365 = vand.u32 %v7351, 2147483648
    %v7366 = vor.u32 1.1754944e-38, %v7365
    %v7367 = vsel %vm7364, %v7366, %v7362
    %v7368 = vmul.f32 1.0, %v7367
    %v7369 = vrcp.pop %v7352
    %v7370 = vmul.f32 %v7352, %v7369
    %v7371 = vsub.f32 1.0, %v7370
    %v7372 = vmul.f32 %v7369, %v7371
    %v7373 = vadd.f32 %v7369, %v7372
    %vm7374 = vweird.f32 %v7352
    %vm7375 = vweird.f32 %v7369
    %vm7376 = vmor %vm7374, %vm7375
    %v7377 = vsel %vm7376, %v7369, %v7373
    %v7378 = vand.u32 2147483647, %v7352
    %vm7379 = vcmp.eq.f32.partialorder %v7378, 8.507059e+37
    %v7380 = vand.u32 %v7352, 2147483648
    %v7381 = vor.u32 1.1754944e-38, %v7380
    %v7382 = vsel %vm7379, %v7381, %v7377
    %v7383 = vmul.f32 1.0, %v7382
    %v7384 = vrcp.pop %v7353
    %v7385 = vmul.f32 %v7353, %v7384
    %v7386 = vsub.f32 1.0, %v7385
    %v7387 = vmul.f32 %v7384, %v7386
    %v7388 = vadd.f32 %v7384, %v7387
    %vm7389 = vweird.f32 %v7353
    %vm7390 = vweird.f32 %v7384
    %vm7391 = vmor %vm7389, %vm7390
    %v7392 = vsel %vm7391, %v7384, %v7388
    %v7393 = vand.u32 2147483647, %v7353
    %vm7394 = vcmp.eq.f32.partialorder %v7393, 8.507059e+37
    %v7395 = vand.u32 %v7353, 2147483648
    %v7396 = vor.u32 1.1754944e-38, %v7395
    %v7397 = vsel %vm7394, %v7396, %v7392
    %v7398 = vmul.f32 1.0, %v7397
    %v7399 = vtanh.pop %v7339
    %v7400 = vmul.f32 %v7383, %v6837
    %v7401 = vmul.f32 %v7368, %v7399
    %v7402 = vadd.f32 %v7400, %v7401
    %v7403 = vtanh.pop %v7402
    %v7404 = vmul.f32 %v7398, %v7403
    %s7405 = scalar_lea.vmem %s7, 56
    %7406 = vst [vmem:[%s7405] sm:$0xff] %v7404
    %7407 = vst [vmem:[#allocation9] sm:$0xff] %v6277
    %7408 = vst [vmem:[#allocation10] sm:$0xff] %v6275
    %s7409 = scalar_lea.vmem [#allocation9], 8
    %7410 = vst [vmem:[%s7409] sm:$0xff] %v7404
    %s7411 = scalar_lea.vmem [#allocation10], 8
    %7412 = vst [vmem:[%s7411] sm:$0xff] %v7402
    // Predicated region
    $region42: #{encoder_forward.1} parent=1 // pred_check
      _
    $region43: #{encoder_forward.1} parent=1 // pred_check_branch
      %7414 = sbr.rel (0) target = $region45
    $region44: #{encoder_forward.1} parent=1 // pred_region
      _
    $region45: #{encoder_forward.1} parent=1 // pred_fallthru
      _
    // Predicated region
    $region46: #{encoder_forward.1} parent=1 // pred_check
      _
    $region47: #{encoder_forward.1} parent=1 // pred_check_branch
      %7416 = sbr.rel (0) target = $region49
    $region48: #{encoder_forward.1} parent=1 // pred_region
      %7418 = vsyncadd [#allocation5], 0
      %s7419 = sshll.u32 [#allocation9], 4
      %s7420 = int_to_ptr.vmem [resolvable:$true] %s7419
      %s7421 = sshll.u32 %s8, 4
      %s7422 = int_to_ptr.hbm [resolvable:$true] %s7421
      %7427 = dma.vmem_to_hbm [thread:$0]  %s7420, 256, %s7422, [#allocation5], 128, 128, 8
    $region49: #{encoder_forward.1} parent=1 // pred_fallthru
      _
    // Predicated region
    $region50: #{encoder_forward.1} parent=1 // pred_check
      _
    $region51: #{encoder_forward.1} parent=1 // pred_check_branch
      %7429 = sbr.rel (0) target = $region53
    $region52: #{encoder_forward.1} parent=1 // pred_region
      %7431 = vsyncadd [#allocation11], 0
      %s7432 = sshll.u32 [#allocation10], 4
      %s7433 = int_to_ptr.vmem [resolvable:$true] %s7432
      %s7434 = sshll.u32 %s9, 4
      %s7435 = int_to_ptr.hbm [resolvable:$true] %s7434
      %7440 = dma.vmem_to_hbm [thread:$0]  %s7433, 256, %s7435, [#allocation11], 128, 128, 8
    $region53: #{encoder_forward.1} parent=1 // pred_fallthru
      _
    // Predicated region
    $region54: #{encoder_forward.1} parent=1 // pred_check
      _
    $region55: #{encoder_forward.1} parent=1 // pred_check_branch
      %7442 = sbr.rel (0) target = $region57
    $region56: #{encoder_forward.1} parent=1 // pred_region
      _
    $region57: #{encoder_forward.1} parent=1 // pred_fallthru
      _
    // Predicated region
    $region58: #{encoder_forward.1} parent=1 // pred_check
      _
    $region59: #{encoder_forward.1} parent=1 // pred_check_branch
      %7444 = sbr.rel (0) target = $region61
    $region60: #{encoder_forward.1} parent=1 // pred_region
      %7446 = dma.done [#allocation5], 256
    $region61: #{encoder_forward.1} parent=1 // pred_fallthru
      _
    // Predicated region
    $region62: #{encoder_forward.1} parent=1 // pred_check
      _
    $region63: #{encoder_forward.1} parent=1 // pred_check_branch
      %7448 = sbr.rel (0) target = $region65
    $region64: #{encoder_forward.1} parent=1 // pred_region
      %7450 = dma.done [#allocation11], 256
    $region65: #{encoder_forward.1} parent=1 // pred_fallthru
      _
    %7451 = vsyncpa [#allocation4], 1
    %7452 = vsyncpa [#allocation7], 1
    %7453 = vsyncpa [#allocation5], 1
    %7454 = vsyncpa [#allocation11], 1

</llo_original>
